<compile_context>
chip_gen: v7x
topology: tpu7x:2x2x1
jax: 0.10.0
libtpu: 0.0.40
codegen_flags: <defaults>
</compile_context>

<pallas_src>
import jax
import jax.numpy as jnp
from jax.experimental import pallas as pl
from jax.experimental.pallas import tpu as pltpu


# ----------------------------------------------------------------------------
# Fused decoder kernel (all GRU layers, both directions fused, + fc head)
# ----------------------------------------------------------------------------
def _make_decoder_kernel(T, BP, S, num_layers):
    S3 = 3 * S

    def kernel(*refs):
        # refs = [x_flat, h0_pad, (wih, whh_bd, bih, bhhn) * L, fc_w, fc_b,
        #         pred_out, hn_out, gi_scratch, seq_buf...]
        x_ref, h0_ref = refs[0], refs[1]
        rest = refs[2:]
        layer_w = [rest[4 * l:4 * l + 4] for l in range(num_layers)]
        base = 4 * num_layers
        fcw_ref, fcb_ref, pred_ref, hn_ref = rest[base:base + 4]
        gi_scr = rest[base + 4]
        seq_bufs = rest[base + 5:]

        for l in range(num_layers):
            wih_ref, whh_ref, bih_ref, bhhn_ref = layer_w[l]
            src = x_ref if l == 0 else seq_bufs[(l - 1) % len(seq_bufs)]
            dst = seq_bufs[l % len(seq_bufs)]

            # Hoisted input projection for the whole sequence, both directions
            # at once: (T*BP, d_in) @ (d_in, 6S).  b_hh (r,z) already folded in.
            gi_scr[...] = (jnp.dot(src[...], wih_ref[...],
                                   preferred_element_type=jnp.float32)
                           + bih_ref[...])

            whh = whh_ref[...]                 # (2S, 6S) block-diagonal
            bhhn_f = bhhn_ref[:, 0:S]          # (BP, S), pre-broadcast on host
            bhhn_b = bhhn_ref[:, S:2 * S]
            h_cat = h0_ref[l]                  # (BP, 2S): [h_fwd | h_bwd] slabs

            for i in range(T):                 # static unrolled time loop
                tf = i                         # forward-direction time step
                tb = T - 1 - i                 # backward-direction time step

                # One fused recurrence matmul for both directions.
                gh = jnp.dot(h_cat, whh,
                             preferred_element_type=jnp.float32)  # (BP, 6S)

                # Aligned 8-row / 128-lane-slab views of the hoisted projection.
                gi_f = gi_scr[tf * BP:(tf + 1) * BP, 0:S3]
                gi_b = gi_scr[tb * BP:(tb + 1) * BP, S3:2 * S3]

                # Forward direction gates (slabs 0..2 of gh).
                r_f = jax.nn.sigmoid(gi_f[:, 0:S] + gh[:, 0:S])
                z_f = jax.nn.sigmoid(gi_f[:, S:2 * S] + gh[:, S:2 * S])
                n_f = jnp.tanh(gi_f[:, 2 * S:3 * S]
                               + r_f * (gh[:, 2 * S:3 * S] + bhhn_f))
                h_f = n_f + z_f * (h_cat[:, 0:S] - n_f)   # = (1-z)n + z h

                # Backward direction gates (slabs 3..5 of gh).
                r_b = jax.nn.sigmoid(gi_b[:, 0:S] + gh[:, S3:S3 + S])
                z_b = jax.nn.sigmoid(gi_b[:, S:2 * S] + gh[:, S3 + S:S3 + 2 * S])
                n_b = jnp.tanh(gi_b[:, 2 * S:3 * S]
                               + r_b * (gh[:, S3 + 2 * S:S3 + 3 * S] + bhhn_b))
                h_b = n_b + z_b * (h_cat[:, S:2 * S] - n_b)

                # Aligned stores of this step's outputs into the layer buffer.
                dst[tf * BP:(tf + 1) * BP, 0:S] = h_f
                dst[tb * BP:(tb + 1) * BP, S:2 * S] = h_b

                # Slab-aligned join (128-lane boundary -> no lane shuffles).
                h_cat = jnp.concatenate([h_f, h_b], axis=-1)

            # After the interleaved loop, h_cat holds the final hidden of both
            # directions (fwd at t=T-1, bwd at t=0), PyTorch semantics.
            hn_ref[l] = h_cat

        # Fused, lane-dense fc head epilogue.
        out_buf = seq_bufs[(num_layers - 1) % len(seq_bufs)]
        pred_ref[...] = (jnp.dot(out_buf[...], fcw_ref[...],
                                 preferred_element_type=jnp.float32)
                         + fcb_ref[...])

    return kernel


def decoder_forward(params, x, h0):
    """Eval-mode Decoder forward: returns (prediction, hn)."""
    T, B, D = x.shape
    H = params["hidden_dim"]
    L = params["num_layers"]

    BP = ((B + 7) // 8) * 8            # sublane-padded batch
    S = ((H + 127) // 128) * 128       # per-gate lane slab width
    FCP = 128                          # lane-dense fc output width
    assert H <= S and B <= BP and FCP >= 3

    # ---------------- host-side weight / input prep (loop-invariant) --------
    def gate_slabs_cols(w_t):
        # (rows, 3H) with gates [r|z|n] -> (rows, 3S), each gate in its own slab
        out = jnp.zeros((w_t.shape[0], 3 * S), jnp.float32)
        for g in range(3):
            out = out.at[:, g * S:g * S + H].set(w_t[:, g * H:(g + 1) * H])
        return out

    def hidden_rows_to_slabs(w):
        # (2H, cols) -> (2S, cols): fwd-hidden rows -> 0:H, bwd -> S:S+H
        out = jnp.zeros((2 * S, w.shape[1]), jnp.float32)
        out = out.at[0:H, :].set(w[0:H])
        out = out.at[S:S + H, :].set(w[H:2 * H])
        return out

    def folded_bias(b_ih, b_hh):
        # Fold r/z parts of b_hh into b_ih (they add linearly pre-sigmoid).
        folded = jnp.concatenate([b_ih[:2 * H] + b_hh[:2 * H], b_ih[2 * H:]])
        return gate_slabs_cols(folded[None, :])          # (1, 3S)

    flat = []
    for l in range(L):
        pf = params["rnn"][(l, 0)]
        pb = params["rnn"][(l, 1)]

        wih = jnp.concatenate([gate_slabs_cols(pf["w_ih"].T),
                               gate_slabs_cols(pb["w_ih"].T)], axis=1)
        if l > 0:                                        # input = prev layer's
            wih = hidden_rows_to_slabs(wih)              # slab-laid hidden cat

        whh = jnp.zeros((2 * S, 6 * S), jnp.float32)     # block-diagonal W_hh
        whh = whh.at[0:H, 0:3 * S].set(gate_slabs_cols(pf["w_hh"].T))
        whh = whh.at[S:S + H, 3 * S:6 * S].set(gate_slabs_cols(pb["w_hh"].T))

        bih = jnp.concatenate([folded_bias(pf["b_ih"], pf["b_hh"]),
                               folded_bias(pb["b_ih"], pb["b_hh"])], axis=1)

        bhhn = jnp.zeros((1, 2 * S), jnp.float32)        # n-gate b_hh only
        bhhn = bhhn.at[0, 0:H].set(pf["b_hh"][2 * H:])
        bhhn = bhhn.at[0, S:S + H].set(pb["b_hh"][2 * H:])
        bhhn = jnp.tile(bhhn, (BP, 1))                   # hoisted broadcast

        flat += [wih, whh, bih, bhhn]

    fcw = hidden_rows_to_slabs(params["fc_w"].T)                    # (2S, 3)
    fcw = jnp.pad(fcw, ((0, 0), (0, FCP - fcw.shape[1])))           # (2S, 128)
    fcb = jnp.pad(params["fc_b"][None, :], ((0, 0), (0, FCP - 3)))  # (1, 128)

    # Pad batch to the 8-row sublane tile; padded rows are sliced off below.
    x_pad = jnp.zeros((T, BP, D), jnp.float32).at[:, :B, :].set(x)
    x_pad = x_pad.reshape(T * BP, D)
    h0_pad = jnp.zeros((L, BP, 2 * S), jnp.float32)
    h0_pad = h0_pad.at[:, :B, 0:H].set(h0[0::2])
    h0_pad = h0_pad.at[:, :B, S:S + H].set(h0[1::2])

    # ---------------- cost estimate (advisory, review item) -----------------
    S6 = 6 * S
    flops = 0
    for l in range(L):
        d_in = D if l == 0 else 2 * S
        flops += 2 * (T * BP) * d_in * S6            # hoisted input projection
        flops += 2 * T * BP * (2 * S) * S6           # fused recurrence matmuls
    flops += 2 * (T * BP) * (2 * S) * FCP            # fc head
    trans = L * T * BP * S6                          # 4 sigmoid + 2 tanh slabs
    in_arrays = [x_pad, h0_pad] + flat + [fcw, fcb]
    bytes_acc = (sum(int(a.size) for a in in_arrays)
                 + T * BP * FCP + L * BP * 2 * S) * 4

    # ---------------- pallas_call -------------------------------------------
    n_in = 2 + 4 * L + 2
    n_bufs = 2 if L > 1 else 1
    kernel = _make_decoder_kernel(T, BP, S, L)
    vmem_spec = pl.BlockSpec(memory_space=pltpu.MemorySpace.VMEM)

    # Footprint at these shapes is ~3 MiB; explicit limit keeps headroom and
    # stays under v7x's 64 MiB physical VMEM.  If scaled up, switch to a grid
    # over T / layers with BlockSpecs (and a parallel axis for v7x's 2 TCs).
    pred_pad, hn_pad = pl.pallas_call(
        kernel,
        out_shape=(jax.ShapeDtypeStruct((T * BP, FCP), jnp.float32),
                   jax.ShapeDtypeStruct((L, BP, 2 * S), jnp.float32)),
        in_specs=[vmem_spec] * n_in,
        out_specs=(vmem_spec, vmem_spec),
        scratch_shapes=[pltpu.VMEM((T * BP, 6 * S), jnp.float32)]      # gi
                       + [pltpu.VMEM((T * BP, 2 * S), jnp.float32)] * n_bufs,
        compiler_params=pltpu.CompilerParams(
            vmem_limit_bytes=32 * 1024 * 1024),
        cost_estimate=pl.CostEstimate(flops=flops, transcendentals=trans,
                                      bytes_accessed=bytes_acc),
    )(x_pad, h0_pad, *flat, fcw, fcb)

    # Slice padded batch rows / lane slabs back to the real outputs.
    pred = pred_pad.reshape(T, BP, FCP)[:, :B, :3]
    hn_f = hn_pad[:, :B, 0:H]
    hn_b = hn_pad[:, :B, S:S + H]
    hn = jnp.stack([hn_f, hn_b], axis=1).reshape(2 * L, B, H)
    return pred, hn


# ----------------------------------------------------------------------------
# Pure-JAX reference (for correctness check)
# ----------------------------------------------------------------------------
def _gru_cell_ref(x_t, h, w_ih, w_hh, b_ih, b_hh):
    gi = x_t @ w_ih.T + b_ih
    gh = h @ w_hh.T + b_hh
    H = h.shape[-1]
    r = jax.nn.sigmoid(gi[:, :H] + gh[:, :H])
    z = jax.nn.sigmoid(gi[:, H:2 * H] + gh[:, H:2 * H])
    n = jnp.tanh(gi[:, 2 * H:] + r * gh[:, 2 * H:])
    return (1.0 - z) * n + z * h


def _gru_dir_ref(x, h0, w_ih, w_hh, b_ih, b_hh, reverse):
    xs = x[::-1] if reverse else x

    def step(h, x_t):
        h_new = _gru_cell_ref(x_t, h, w_ih, w_hh, b_ih, b_hh)
        return h_new, h_new

    hn, outs = jax.lax.scan(step, h0, xs)
    if reverse:
        outs = outs[::-1]
    return outs, hn


def decoder_ref(params, x, h0):
    num_layers = params["num_layers"]
    layer_in = x
    hn_list = []
    for l in range(num_layers):
        outs = []
        for d, reverse in ((0, False), (1, True)):
            p = params["rnn"][(l, d)]
            out, hn = _gru_dir_ref(layer_in, h0[2 * l + d], p["w_ih"], p["w_hh"],
                                   p["b_ih"], p["b_hh"], reverse)
            outs.append(out)
            hn_list.append(hn)
        layer_in = jnp.concatenate(outs, axis=-1)
    pred = layer_in @ params["fc_w"].T + params["fc_b"]
    return pred, jnp.stack(hn_list, axis=0)


# ----------------------------------------------------------------------------
# Deterministic parameter init (PyTorch-style uniform(-1/sqrt(H), 1/sqrt(H)))
# ----------------------------------------------------------------------------
def init_params(key, input_dim, hidden_dim, num_layers):
    k = 1.0 / jnp.sqrt(hidden_dim)
    params = {"input_dim": input_dim, "hidden_dim": hidden_dim,
              "num_layers": num_layers, "rnn": {}}
    for l in range(num_layers):
        d_in = input_dim if l == 0 else 2 * hidden_dim
        for d in range(2):
            key, k1, k2, k3, k4 = jax.random.split(key, 5)
            params["rnn"][(l, d)] = {
                "w_ih": jax.random.uniform(k1, (3 * hidden_dim, d_in),
                                           jnp.float32, -k, k),
                "w_hh": jax.random.uniform(k2, (3 * hidden_dim, hidden_dim),
                                           jnp.float32, -k, k),
                "b_ih": jax.random.uniform(k3, (3 * hidden_dim,),
                                           jnp.float32, -k, k),
                "b_hh": jax.random.uniform(k4, (3 * hidden_dim,),
                                           jnp.float32, -k, k),
            }
    key, k1, k2 = jax.random.split(key, 3)
    kf = 1.0 / jnp.sqrt(2 * hidden_dim)
    params["fc_w"] = jax.random.uniform(k1, (3, 2 * hidden_dim),
                                        jnp.float32, -kf, kf)
    params["fc_b"] = jax.random.uniform(k2, (3,), jnp.float32, -kf, kf)
    return params


if __name__ == "__main__":
    SEQ, BATCH, INPUT_DIM, HIDDEN_DIM, NUM_LAYERS = 8, 2, 8, 16, 2

    key = jax.random.PRNGKey(0)
    key, kx, kh, kp = jax.random.split(key, 4)
    x = jax.random.normal(kx, (SEQ, BATCH, INPUT_DIM), jnp.float32)
    h0 = jax.random.normal(kh, (NUM_LAYERS * 2, BATCH, HIDDEN_DIM), jnp.float32)
    params = init_params(kp, INPUT_DIM, HIDDEN_DIM, NUM_LAYERS)

    pred, hn = decoder_forward(params, x, h0)
    pred, hn = jax.block_until_ready(pred), jax.block_until_ready(hn)

    pred_r, hn_r = decoder_ref(params, x, h0)
    assert pred.shape == (SEQ, BATCH, 3)
    assert hn.shape == (NUM_LAYERS * 2, BATCH, HIDDEN_DIM)
    assert jnp.allclose(pred, pred_r, atol=1e-4, rtol=1e-4)
    assert jnp.allclose(hn, hn_r, atol=1e-4, rtol=1e-4)

    print("KERNEL_OK")
</pallas_src>

<mosaic_0001>
module attributes {stable_mosaic.version = 11 : i64} {
  func.func @kernel(%arg0: memref<64x8xf32, #tpu.memory_space<vmem>>, %arg1: memref<2x8x256xf32, #tpu.memory_space<vmem>>, %arg2: memref<8x768xf32, #tpu.memory_space<vmem>>, %arg3: memref<256x768xf32, #tpu.memory_space<vmem>>, %arg4: memref<1x768xf32, #tpu.memory_space<vmem>>, %arg5: memref<8x256xf32, #tpu.memory_space<vmem>>, %arg6: memref<256x768xf32, #tpu.memory_space<vmem>>, %arg7: memref<256x768xf32, #tpu.memory_space<vmem>>, %arg8: memref<1x768xf32, #tpu.memory_space<vmem>>, %arg9: memref<8x256xf32, #tpu.memory_space<vmem>>, %arg10: memref<256x128xf32, #tpu.memory_space<vmem>>, %arg11: memref<1x128xf32, #tpu.memory_space<vmem>>, %arg12: memref<64x128xf32, #tpu.memory_space<vmem>>, %arg13: memref<2x8x256xf32, #tpu.memory_space<vmem>>, %arg14: memref<64x768xf32, #tpu.memory_space<vmem>>, %arg15: memref<64x256xf32, #tpu.memory_space<vmem>>, %arg16: memref<64x256xf32, #tpu.memory_space<vmem>>) attributes {dimension_semantics = [], scalar_prefetch = 0 : i64, scratch_operands = 3 : i64, tpu.core_type = #tpu.core_type<tc>} {
    %c0 = arith.constant 0 : index
    %c0_0 = arith.constant 0 : index
    %0 = vector.load %arg0[%c0, %c0_0] : memref<64x8xf32, #tpu.memory_space<vmem>>, vector<64x8xf32>
    %c0_1 = arith.constant 0 : index
    %c0_2 = arith.constant 0 : index
    %1 = vector.load %arg2[%c0_1, %c0_2] : memref<8x768xf32, #tpu.memory_space<vmem>>, vector<8x768xf32>
    %cst = arith.constant dense<0.000000e+00> : vector<64x768xf32>
    %2 = tpu.matmul %0, %1, %cst {dimension_numbers = #tpu.dot_dimension_numbers<[1], [0], [0], [1], [0, 0, 1, 1], [], []>} : vector<64x8xf32>, vector<8x768xf32>, vector<64x768xf32> -> vector<64x768xf32>
    %c0_3 = arith.constant 0 : index
    %c0_4 = arith.constant 0 : index
    %3 = vector.load %arg4[%c0_3, %c0_4] : memref<1x768xf32, #tpu.memory_space<vmem>>, vector<1x768xf32>
    %4 = vector.broadcast %3 : vector<1x768xf32> to vector<64x768xf32>
    %5 = arith.addf %2, %4 : vector<64x768xf32>
    %c0_5 = arith.constant 0 : index
    %c0_6 = arith.constant 0 : index
    %6 = vector.load %arg14[%c0_5, %c0_6] : memref<64x768xf32, #tpu.memory_space<vmem>>, vector<64x768xf32>
    tpu.vector_store %arg14[%c0_5, %c0_6], %5 {strides = array<i32>} : memref<64x768xf32, #tpu.memory_space<vmem>>, vector<64x768xf32>,
    %c0_7 = arith.constant 0 : index
    %c0_8 = arith.constant 0 : index
    %7 = vector.load %arg3[%c0_7, %c0_8] : memref<256x768xf32, #tpu.memory_space<vmem>>, vector<256x768xf32>
    %c0_9 = arith.constant 0 : index
    %c0_10 = arith.constant 0 : index
    %8 = vector.load %arg5[%c0_9, %c0_10] : memref<8x256xf32, #tpu.memory_space<vmem>>, vector<8x128xf32>
    %c0_11 = arith.constant 0 : index
    %c128 = arith.constant 128 : index
    %9 = vector.load %arg5[%c0_11, %c128] : memref<8x256xf32, #tpu.memory_space<vmem>>, vector<8x128xf32>
    %c0_12 = arith.constant 0 : index
    %c0_13 = arith.constant 0 : index
    %c0_14 = arith.constant 0 : index
    %10 = vector.load %arg1[%c0_12, %c0_13, %c0_14] : memref<2x8x256xf32, #tpu.memory_space<vmem>>, vector<1x8x256xf32>
    %11 = vector.shape_cast %10 : vector<1x8x256xf32> to vector<8x256xf32>
    %cst_15 = arith.constant dense<0.000000e+00> : vector<8x768xf32>
    %12 = tpu.matmul %11, %7, %cst_15 {dimension_numbers = #tpu.dot_dimension_numbers<[1], [0], [0], [1], [0, 0, 1, 1], [], []>} : vector<8x256xf32>, vector<256x768xf32>, vector<8x768xf32> -> vector<8x768xf32>
    %c0_16 = arith.constant 0 : index
    %c0_17 = arith.constant 0 : index
    %13 = vector.load %arg14[%c0_16, %c0_17] : memref<64x768xf32, #tpu.memory_space<vmem>>, vector<8x384xf32>
    %c56 = arith.constant 56 : index
    %c384 = arith.constant 384 : index
    %14 = vector.load %arg14[%c56, %c384] : memref<64x768xf32, #tpu.memory_space<vmem>>, vector<8x384xf32>
    %15 = vector.extract_strided_slice %13 {offsets = [0, 0], sizes = [8, 128], strides = [1, 1]} : vector<8x384xf32> to vector<8x128xf32>
    %16 = vector.extract_strided_slice %12 {offsets = [0, 0], sizes = [8, 128], strides = [1, 1]} : vector<8x768xf32> to vector<8x128xf32>
    %17 = arith.addf %15, %16 : vector<8x128xf32>
    %18 = arith.negf %17 : vector<8x128xf32>
    %19 = math.exp %18 : vector<8x128xf32>
    %cst_18 = arith.constant 1.000000e+00 : f32
    %20 = vector.broadcast %cst_18 : f32 to vector<8x128xf32>
    %21 = arith.addf %20, %19 : vector<8x128xf32>
    %22 = arith.divf %20, %21 : vector<8x128xf32>
    %23 = vector.extract_strided_slice %13 {offsets = [0, 128], sizes = [8, 128], strides = [1, 1]} : vector<8x384xf32> to vector<8x128xf32>
    %24 = vector.extract_strided_slice %12 {offsets = [0, 128], sizes = [8, 128], strides = [1, 1]} : vector<8x768xf32> to vector<8x128xf32>
    %25 = arith.addf %23, %24 : vector<8x128xf32>
    %26 = arith.negf %25 : vector<8x128xf32>
    %27 = math.exp %26 : vector<8x128xf32>
    %cst_19 = arith.constant 1.000000e+00 : f32
    %28 = vector.broadcast %cst_19 : f32 to vector<8x128xf32>
    %29 = arith.addf %28, %27 : vector<8x128xf32>
    %30 = arith.divf %28, %29 : vector<8x128xf32>
    %31 = vector.extract_strided_slice %13 {offsets = [0, 256], sizes = [8, 128], strides = [1, 1]} : vector<8x384xf32> to vector<8x128xf32>
    %32 = vector.extract_strided_slice %12 {offsets = [0, 256], sizes = [8, 128], strides = [1, 1]} : vector<8x768xf32> to vector<8x128xf32>
    %33 = arith.addf %32, %8 : vector<8x128xf32>
    %34 = arith.mulf %22, %33 : vector<8x128xf32>
    %35 = arith.addf %31, %34 : vector<8x128xf32>
    %36 = math.tanh %35 : vector<8x128xf32>
    %37 = vector.extract_strided_slice %11 {offsets = [0, 0], sizes = [8, 128], strides = [1, 1]} : vector<8x256xf32> to vector<8x128xf32>
    %38 = arith.subf %37, %36 : vector<8x128xf32>
    %39 = arith.mulf %30, %38 : vector<8x128xf32>
    %40 = arith.addf %36, %39 : vector<8x128xf32>
    %41 = vector.extract_strided_slice %14 {offsets = [0, 0], sizes = [8, 128], strides = [1, 1]} : vector<8x384xf32> to vector<8x128xf32>
    %42 = vector.extract_strided_slice %12 {offsets = [0, 384], sizes = [8, 128], strides = [1, 1]} : vector<8x768xf32> to vector<8x128xf32>
    %43 = arith.addf %41, %42 : vector<8x128xf32>
    %44 = arith.negf %43 : vector<8x128xf32>
    %45 = math.exp %44 : vector<8x128xf32>
    %cst_20 = arith.constant 1.000000e+00 : f32
    %46 = vector.broadcast %cst_20 : f32 to vector<8x128xf32>
    %47 = arith.addf %46, %45 : vector<8x128xf32>
    %48 = arith.divf %46, %47 : vector<8x128xf32>
    %49 = vector.extract_strided_slice %14 {offsets = [0, 128], sizes = [8, 128], strides = [1, 1]} : vector<8x384xf32> to vector<8x128xf32>
    %50 = vector.extract_strided_slice %12 {offsets = [0, 512], sizes = [8, 128], strides = [1, 1]} : vector<8x768xf32> to vector<8x128xf32>
    %51 = arith.addf %49, %50 : vector<8x128xf32>
    %52 = arith.negf %51 : vector<8x128xf32>
    %53 = math.exp %52 : vector<8x128xf32>
    %cst_21 = arith.constant 1.000000e+00 : f32
    %54 = vector.broadcast %cst_21 : f32 to vector<8x128xf32>
    %55 = arith.addf %54, %53 : vector<8x128xf32>
    %56 = arith.divf %54, %55 : vector<8x128xf32>
    %57 = vector.extract_strided_slice %14 {offsets = [0, 256], sizes = [8, 128], strides = [1, 1]} : vector<8x384xf32> to vector<8x128xf32>
    %58 = vector.extract_strided_slice %12 {offsets = [0, 640], sizes = [8, 128], strides = [1, 1]} : vector<8x768xf32> to vector<8x128xf32>
    %59 = arith.addf %58, %9 : vector<8x128xf32>
    %60 = arith.mulf %48, %59 : vector<8x128xf32>
    %61 = arith.addf %57, %60 : vector<8x128xf32>
    %62 = math.tanh %61 : vector<8x128xf32>
    %63 = vector.extract_strided_slice %11 {offsets = [0, 128], sizes = [8, 128], strides = [1, 1]} : vector<8x256xf32> to vector<8x128xf32>
    %64 = arith.subf %63, %62 : vector<8x128xf32>
    %65 = arith.mulf %56, %64 : vector<8x128xf32>
    %66 = arith.addf %62, %65 : vector<8x128xf32>
    %c0_22 = arith.constant 0 : index
    %c0_23 = arith.constant 0 : index
    %67 = vector.load %arg15[%c0_22, %c0_23] : memref<64x256xf32, #tpu.memory_space<vmem>>, vector<8x128xf32>
    tpu.vector_store %arg15[%c0_22, %c0_23], %40 {strides = array<i32>} : memref<64x256xf32, #tpu.memory_space<vmem>>, vector<8x128xf32>,
    %c56_24 = arith.constant 56 : index
    %c128_25 = arith.constant 128 : index
    %68 = vector.load %arg15[%c56_24, %c128_25] : memref<64x256xf32, #tpu.memory_space<vmem>>, vector<8x128xf32>
    tpu.vector_store %arg15[%c56_24, %c128_25], %66 {strides = array<i32>} : memref<64x256xf32, #tpu.memory_space<vmem>>, vector<8x128xf32>,
    %69 = tpu.concatenate %40, %66 in 1 : vector<8x128xf32>, vector<8x128xf32> -> vector<8x256xf32>
    %cst_26 = arith.constant dense<0.000000e+00> : vector<8x768xf32>
    %70 = tpu.matmul %69, %7, %cst_26 {dimension_numbers = #tpu.dot_dimension_numbers<[1], [0], [0], [1], [0, 0, 1, 1], [], []>} : vector<8x256xf32>, vector<256x768xf32>, vector<8x768xf32> -> vector<8x768xf32>
    %c8 = arith.constant 8 : index
    %c0_27 = arith.constant 0 : index
    %71 = vector.load %arg14[%c8, %c0_27] : memref<64x768xf32, #tpu.memory_space<vmem>>, vector<8x384xf32>
    %c48 = arith.constant 48 : index
    %c384_28 = arith.constant 384 : index
    %72 = vector.load %arg14[%c48, %c384_28] : memref<64x768xf32, #tpu.memory_space<vmem>>, vector<8x384xf32>
    %73 = vector.extract_strided_slice %71 {offsets = [0, 0], sizes = [8, 128], strides = [1, 1]} : vector<8x384xf32> to vector<8x128xf32>
    %74 = vector.extract_strided_slice %70 {offsets = [0, 0], sizes = [8, 128], strides = [1, 1]} : vector<8x768xf32> to vector<8x128xf32>
    %75 = arith.addf %73, %74 : vector<8x128xf32>
    %76 = arith.negf %75 : vector<8x128xf32>
    %77 = math.exp %76 : vector<8x128xf32>
    %cst_29 = arith.constant 1.000000e+00 : f32
    %78 = vector.broadcast %cst_29 : f32 to vector<8x128xf32>
    %79 = arith.addf %78, %77 : vector<8x128xf32>
    %80 = arith.divf %78, %79 : vector<8x128xf32>
    %81 = vector.extract_strided_slice %71 {offsets = [0, 128], sizes = [8, 128], strides = [1, 1]} : vector<8x384xf32> to vector<8x128xf32>
    %82 = vector.extract_strided_slice %70 {offsets = [0, 128], sizes = [8, 128], strides = [1, 1]} : vector<8x768xf32> to vector<8x128xf32>
    %83 = arith.addf %81, %82 : vector<8x128xf32>
    %84 = arith.negf %83 : vector<8x128xf32>
    %85 = math.exp %84 : vector<8x128xf32>
    %cst_30 = arith.constant 1.000000e+00 : f32
    %86 = vector.broadcast %cst_30 : f32 to vector<8x128xf32>
    %87 = arith.addf %86, %85 : vector<8x128xf32>
    %88 = arith.divf %86, %87 : vector<8x128xf32>
    %89 = vector.extract_strided_slice %71 {offsets = [0, 256], sizes = [8, 128], strides = [1, 1]} : vector<8x384xf32> to vector<8x128xf32>
    %90 = vector.extract_strided_slice %70 {offsets = [0, 256], sizes = [8, 128], strides = [1, 1]} : vector<8x768xf32> to vector<8x128xf32>
    %91 = arith.addf %90, %8 : vector<8x128xf32>
    %92 = arith.mulf %80, %91 : vector<8x128xf32>
    %93 = arith.addf %89, %92 : vector<8x128xf32>
    %94 = math.tanh %93 : vector<8x128xf32>
    %95 = vector.extract_strided_slice %69 {offsets = [0, 0], sizes = [8, 128], strides = [1, 1]} : vector<8x256xf32> to vector<8x128xf32>
    %96 = arith.subf %95, %94 : vector<8x128xf32>
    %97 = arith.mulf %88, %96 : vector<8x128xf32>
    %98 = arith.addf %94, %97 : vector<8x128xf32>
    %99 = vector.extract_strided_slice %72 {offsets = [0, 0], sizes = [8, 128], strides = [1, 1]} : vector<8x384xf32> to vector<8x128xf32>
    %100 = vector.extract_strided_slice %70 {offsets = [0, 384], sizes = [8, 128], strides = [1, 1]} : vector<8x768xf32> to vector<8x128xf32>
    %101 = arith.addf %99, %100 : vector<8x128xf32>
    %102 = arith.negf %101 : vector<8x128xf32>
    %103 = math.exp %102 : vector<8x128xf32>
    %cst_31 = arith.constant 1.000000e+00 : f32
    %104 = vector.broadcast %cst_31 : f32 to vector<8x128xf32>
    %105 = arith.addf %104, %103 : vector<8x128xf32>
    %106 = arith.divf %104, %105 : vector<8x128xf32>
    %107 = vector.extract_strided_slice %72 {offsets = [0, 128], sizes = [8, 128], strides = [1, 1]} : vector<8x384xf32> to vector<8x128xf32>
    %108 = vector.extract_strided_slice %70 {offsets = [0, 512], sizes = [8, 128], strides = [1, 1]} : vector<8x768xf32> to vector<8x128xf32>
    %109 = arith.addf %107, %108 : vector<8x128xf32>
    %110 = arith.negf %109 : vector<8x128xf32>
    %111 = math.exp %110 : vector<8x128xf32>
    %cst_32 = arith.constant 1.000000e+00 : f32
    %112 = vector.broadcast %cst_32 : f32 to vector<8x128xf32>
    %113 = arith.addf %112, %111 : vector<8x128xf32>
    %114 = arith.divf %112, %113 : vector<8x128xf32>
    %115 = vector.extract_strided_slice %72 {offsets = [0, 256], sizes = [8, 128], strides = [1, 1]} : vector<8x384xf32> to vector<8x128xf32>
    %116 = vector.extract_strided_slice %70 {offsets = [0, 640], sizes = [8, 128], strides = [1, 1]} : vector<8x768xf32> to vector<8x128xf32>
    %117 = arith.addf %116, %9 : vector<8x128xf32>
    %118 = arith.mulf %106, %117 : vector<8x128xf32>
    %119 = arith.addf %115, %118 : vector<8x128xf32>
    %120 = math.tanh %119 : vector<8x128xf32>
    %121 = vector.extract_strided_slice %69 {offsets = [0, 128], sizes = [8, 128], strides = [1, 1]} : vector<8x256xf32> to vector<8x128xf32>
    %122 = arith.subf %121, %120 : vector<8x128xf32>
    %123 = arith.mulf %114, %122 : vector<8x128xf32>
    %124 = arith.addf %120, %123 : vector<8x128xf32>
    %c8_33 = arith.constant 8 : index
    %c0_34 = arith.constant 0 : index
    %125 = vector.load %arg15[%c8_33, %c0_34] : memref<64x256xf32, #tpu.memory_space<vmem>>, vector<8x128xf32>
    tpu.vector_store %arg15[%c8_33, %c0_34], %98 {strides = array<i32>} : memref<64x256xf32, #tpu.memory_space<vmem>>, vector<8x128xf32>,
    %c48_35 = arith.constant 48 : index
    %c128_36 = arith.constant 128 : index
    %126 = vector.load %arg15[%c48_35, %c128_36] : memref<64x256xf32, #tpu.memory_space<vmem>>, vector<8x128xf32>
    tpu.vector_store %arg15[%c48_35, %c128_36], %124 {strides = array<i32>} : memref<64x256xf32, #tpu.memory_space<vmem>>, vector<8x128xf32>,
    %127 = tpu.concatenate %98, %124 in 1 : vector<8x128xf32>, vector<8x128xf32> -> vector<8x256xf32>
    %cst_37 = arith.constant dense<0.000000e+00> : vector<8x768xf32>
    %128 = tpu.matmul %127, %7, %cst_37 {dimension_numbers = #tpu.dot_dimension_numbers<[1], [0], [0], [1], [0, 0, 1, 1], [], []>} : vector<8x256xf32>, vector<256x768xf32>, vector<8x768xf32> -> vector<8x768xf32>
    %c16 = arith.constant 16 : index
    %c0_38 = arith.constant 0 : index
    %129 = vector.load %arg14[%c16, %c0_38] : memref<64x768xf32, #tpu.memory_space<vmem>>, vector<8x384xf32>
    %c40 = arith.constant 40 : index
    %c384_39 = arith.constant 384 : index
    %130 = vector.load %arg14[%c40, %c384_39] : memref<64x768xf32, #tpu.memory_space<vmem>>, vector<8x384xf32>
    %131 = vector.extract_strided_slice %129 {offsets = [0, 0], sizes = [8, 128], strides = [1, 1]} : vector<8x384xf32> to vector<8x128xf32>
    %132 = vector.extract_strided_slice %128 {offsets = [0, 0], sizes = [8, 128], strides = [1, 1]} : vector<8x768xf32> to vector<8x128xf32>
    %133 = arith.addf %131, %132 : vector<8x128xf32>
    %134 = arith.negf %133 : vector<8x128xf32>
    %135 = math.exp %134 : vector<8x128xf32>
    %cst_40 = arith.constant 1.000000e+00 : f32
    %136 = vector.broadcast %cst_40 : f32 to vector<8x128xf32>
    %137 = arith.addf %136, %135 : vector<8x128xf32>
    %138 = arith.divf %136, %137 : vector<8x128xf32>
    %139 = vector.extract_strided_slice %129 {offsets = [0, 128], sizes = [8, 128], strides = [1, 1]} : vector<8x384xf32> to vector<8x128xf32>
    %140 = vector.extract_strided_slice %128 {offsets = [0, 128], sizes = [8, 128], strides = [1, 1]} : vector<8x768xf32> to vector<8x128xf32>
    %141 = arith.addf %139, %140 : vector<8x128xf32>
    %142 = arith.negf %141 : vector<8x128xf32>
    %143 = math.exp %142 : vector<8x128xf32>
    %cst_41 = arith.constant 1.000000e+00 : f32
    %144 = vector.broadcast %cst_41 : f32 to vector<8x128xf32>
    %145 = arith.addf %144, %143 : vector<8x128xf32>
    %146 = arith.divf %144, %145 : vector<8x128xf32>
    %147 = vector.extract_strided_slice %129 {offsets = [0, 256], sizes = [8, 128], strides = [1, 1]} : vector<8x384xf32> to vector<8x128xf32>
    %148 = vector.extract_strided_slice %128 {offsets = [0, 256], sizes = [8, 128], strides = [1, 1]} : vector<8x768xf32> to vector<8x128xf32>
    %149 = arith.addf %148, %8 : vector<8x128xf32>
    %150 = arith.mulf %138, %149 : vector<8x128xf32>
    %151 = arith.addf %147, %150 : vector<8x128xf32>
    %152 = math.tanh %151 : vector<8x128xf32>
    %153 = vector.extract_strided_slice %127 {offsets = [0, 0], sizes = [8, 128], strides = [1, 1]} : vector<8x256xf32> to vector<8x128xf32>
    %154 = arith.subf %153, %152 : vector<8x128xf32>
    %155 = arith.mulf %146, %154 : vector<8x128xf32>
    %156 = arith.addf %152, %155 : vector<8x128xf32>
    %157 = vector.extract_strided_slice %130 {offsets = [0, 0], sizes = [8, 128], strides = [1, 1]} : vector<8x384xf32> to vector<8x128xf32>
    %158 = vector.extract_strided_slice %128 {offsets = [0, 384], sizes = [8, 128], strides = [1, 1]} : vector<8x768xf32> to vector<8x128xf32>
    %159 = arith.addf %157, %158 : vector<8x128xf32>
    %160 = arith.negf %159 : vector<8x128xf32>
    %161 = math.exp %160 : vector<8x128xf32>
    %cst_42 = arith.constant 1.000000e+00 : f32
    %162 = vector.broadcast %cst_42 : f32 to vector<8x128xf32>
    %163 = arith.addf %162, %161 : vector<8x128xf32>
    %164 = arith.divf %162, %163 : vector<8x128xf32>
    %165 = vector.extract_strided_slice %130 {offsets = [0, 128], sizes = [8, 128], strides = [1, 1]} : vector<8x384xf32> to vector<8x128xf32>
    %166 = vector.extract_strided_slice %128 {offsets = [0, 512], sizes = [8, 128], strides = [1, 1]} : vector<8x768xf32> to vector<8x128xf32>
    %167 = arith.addf %165, %166 : vector<8x128xf32>
    %168 = arith.negf %167 : vector<8x128xf32>
    %169 = math.exp %168 : vector<8x128xf32>
    %cst_43 = arith.constant 1.000000e+00 : f32
    %170 = vector.broadcast %cst_43 : f32 to vector<8x128xf32>
    %171 = arith.addf %170, %169 : vector<8x128xf32>
    %172 = arith.divf %170, %171 : vector<8x128xf32>
    %173 = vector.extract_strided_slice %130 {offsets = [0, 256], sizes = [8, 128], strides = [1, 1]} : vector<8x384xf32> to vector<8x128xf32>
    %174 = vector.extract_strided_slice %128 {offsets = [0, 640], sizes = [8, 128], strides = [1, 1]} : vector<8x768xf32> to vector<8x128xf32>
    %175 = arith.addf %174, %9 : vector<8x128xf32>
    %176 = arith.mulf %164, %175 : vector<8x128xf32>
    %177 = arith.addf %173, %176 : vector<8x128xf32>
    %178 = math.tanh %177 : vector<8x128xf32>
    %179 = vector.extract_strided_slice %127 {offsets = [0, 128], sizes = [8, 128], strides = [1, 1]} : vector<8x256xf32> to vector<8x128xf32>
    %180 = arith.subf %179, %178 : vector<8x128xf32>
    %181 = arith.mulf %172, %180 : vector<8x128xf32>
    %182 = arith.addf %178, %181 : vector<8x128xf32>
    %c16_44 = arith.constant 16 : index
    %c0_45 = arith.constant 0 : index
    %183 = vector.load %arg15[%c16_44, %c0_45] : memref<64x256xf32, #tpu.memory_space<vmem>>, vector<8x128xf32>
    tpu.vector_store %arg15[%c16_44, %c0_45], %156 {strides = array<i32>} : memref<64x256xf32, #tpu.memory_space<vmem>>, vector<8x128xf32>,
    %c40_46 = arith.constant 40 : index
    %c128_47 = arith.constant 128 : index
    %184 = vector.load %arg15[%c40_46, %c128_47] : memref<64x256xf32, #tpu.memory_space<vmem>>, vector<8x128xf32>
    tpu.vector_store %arg15[%c40_46, %c128_47], %182 {strides = array<i32>} : memref<64x256xf32, #tpu.memory_space<vmem>>, vector<8x128xf32>,
    %185 = tpu.concatenate %156, %182 in 1 : vector<8x128xf32>, vector<8x128xf32> -> vector<8x256xf32>
    %cst_48 = arith.constant dense<0.000000e+00> : vector<8x768xf32>
    %186 = tpu.matmul %185, %7, %cst_48 {dimension_numbers = #tpu.dot_dimension_numbers<[1], [0], [0], [1], [0, 0, 1, 1], [], []>} : vector<8x256xf32>, vector<256x768xf32>, vector<8x768xf32> -> vector<8x768xf32>
    %c24 = arith.constant 24 : index
    %c0_49 = arith.constant 0 : index
    %187 = vector.load %arg14[%c24, %c0_49] : memref<64x768xf32, #tpu.memory_space<vmem>>, vector<8x384xf32>
    %c32 = arith.constant 32 : index
    %c384_50 = arith.constant 384 : index
    %188 = vector.load %arg14[%c32, %c384_50] : memref<64x768xf32, #tpu.memory_space<vmem>>, vector<8x384xf32>
    %189 = vector.extract_strided_slice %187 {offsets = [0, 0], sizes = [8, 128], strides = [1, 1]} : vector<8x384xf32> to vector<8x128xf32>
    %190 = vector.extract_strided_slice %186 {offsets = [0, 0], sizes = [8, 128], strides = [1, 1]} : vector<8x768xf32> to vector<8x128xf32>
    %191 = arith.addf %189, %190 : vector<8x128xf32>
    %192 = arith.negf %191 : vector<8x128xf32>
    %193 = math.exp %192 : vector<8x128xf32>
    %cst_51 = arith.constant 1.000000e+00 : f32
    %194 = vector.broadcast %cst_51 : f32 to vector<8x128xf32>
    %195 = arith.addf %194, %193 : vector<8x128xf32>
    %196 = arith.divf %194, %195 : vector<8x128xf32>
    %197 = vector.extract_strided_slice %187 {offsets = [0, 128], sizes = [8, 128], strides = [1, 1]} : vector<8x384xf32> to vector<8x128xf32>
    %198 = vector.extract_strided_slice %186 {offsets = [0, 128], sizes = [8, 128], strides = [1, 1]} : vector<8x768xf32> to vector<8x128xf32>
    %199 = arith.addf %197, %198 : vector<8x128xf32>
    %200 = arith.negf %199 : vector<8x128xf32>
    %201 = math.exp %200 : vector<8x128xf32>
    %cst_52 = arith.constant 1.000000e+00 : f32
    %202 = vector.broadcast %cst_52 : f32 to vector<8x128xf32>
    %203 = arith.addf %202, %201 : vector<8x128xf32>
    %204 = arith.divf %202, %203 : vector<8x128xf32>
    %205 = vector.extract_strided_slice %187 {offsets = [0, 256], sizes = [8, 128], strides = [1, 1]} : vector<8x384xf32> to vector<8x128xf32>
    %206 = vector.extract_strided_slice %186 {offsets = [0, 256], sizes = [8, 128], strides = [1, 1]} : vector<8x768xf32> to vector<8x128xf32>
    %207 = arith.addf %206, %8 : vector<8x128xf32>
    %208 = arith.mulf %196, %207 : vector<8x128xf32>
    %209 = arith.addf %205, %208 : vector<8x128xf32>
    %210 = math.tanh %209 : vector<8x128xf32>
    %211 = vector.extract_strided_slice %185 {offsets = [0, 0], sizes = [8, 128], strides = [1, 1]} : vector<8x256xf32> to vector<8x128xf32>
    %212 = arith.subf %211, %210 : vector<8x128xf32>
    %213 = arith.mulf %204, %212 : vector<8x128xf32>
    %214 = arith.addf %210, %213 : vector<8x128xf32>
    %215 = vector.extract_strided_slice %188 {offsets = [0, 0], sizes = [8, 128], strides = [1, 1]} : vector<8x384xf32> to vector<8x128xf32>
    %216 = vector.extract_strided_slice %186 {offsets = [0, 384], sizes = [8, 128], strides = [1, 1]} : vector<8x768xf32> to vector<8x128xf32>
    %217 = arith.addf %215, %216 : vector<8x128xf32>
    %218 = arith.negf %217 : vector<8x128xf32>
    %219 = math.exp %218 : vector<8x128xf32>
    %cst_53 = arith.constant 1.000000e+00 : f32
    %220 = vector.broadcast %cst_53 : f32 to vector<8x128xf32>
    %221 = arith.addf %220, %219 : vector<8x128xf32>
    %222 = arith.divf %220, %221 : vector<8x128xf32>
    %223 = vector.extract_strided_slice %188 {offsets = [0, 128], sizes = [8, 128], strides = [1, 1]} : vector<8x384xf32> to vector<8x128xf32>
    %224 = vector.extract_strided_slice %186 {offsets = [0, 512], sizes = [8, 128], strides = [1, 1]} : vector<8x768xf32> to vector<8x128xf32>
    %225 = arith.addf %223, %224 : vector<8x128xf32>
    %226 = arith.negf %225 : vector<8x128xf32>
    %227 = math.exp %226 : vector<8x128xf32>
    %cst_54 = arith.constant 1.000000e+00 : f32
    %228 = vector.broadcast %cst_54 : f32 to vector<8x128xf32>
    %229 = arith.addf %228, %227 : vector<8x128xf32>
    %230 = arith.divf %228, %229 : vector<8x128xf32>
    %231 = vector.extract_strided_slice %188 {offsets = [0, 256], sizes = [8, 128], strides = [1, 1]} : vector<8x384xf32> to vector<8x128xf32>
    %232 = vector.extract_strided_slice %186 {offsets = [0, 640], sizes = [8, 128], strides = [1, 1]} : vector<8x768xf32> to vector<8x128xf32>
    %233 = arith.addf %232, %9 : vector<8x128xf32>
    %234 = arith.mulf %222, %233 : vector<8x128xf32>
    %235 = arith.addf %231, %234 : vector<8x128xf32>
    %236 = math.tanh %235 : vector<8x128xf32>
    %237 = vector.extract_strided_slice %185 {offsets = [0, 128], sizes = [8, 128], strides = [1, 1]} : vector<8x256xf32> to vector<8x128xf32>
    %238 = arith.subf %237, %236 : vector<8x128xf32>
    %239 = arith.mulf %230, %238 : vector<8x128xf32>
    %240 = arith.addf %236, %239 : vector<8x128xf32>
    %c24_55 = arith.constant 24 : index
    %c0_56 = arith.constant 0 : index
    %241 = vector.load %arg15[%c24_55, %c0_56] : memref<64x256xf32, #tpu.memory_space<vmem>>, vector<8x128xf32>
    tpu.vector_store %arg15[%c24_55, %c0_56], %214 {strides = array<i32>} : memref<64x256xf32, #tpu.memory_space<vmem>>, vector<8x128xf32>,
    %c32_57 = arith.constant 32 : index
    %c128_58 = arith.constant 128 : index
    %242 = vector.load %arg15[%c32_57, %c128_58] : memref<64x256xf32, #tpu.memory_space<vmem>>, vector<8x128xf32>
    tpu.vector_store %arg15[%c32_57, %c128_58], %240 {strides = array<i32>} : memref<64x256xf32, #tpu.memory_space<vmem>>, vector<8x128xf32>,
    %243 = tpu.concatenate %214, %240 in 1 : vector<8x128xf32>, vector<8x128xf32> -> vector<8x256xf32>
    %cst_59 = arith.constant dense<0.000000e+00> : vector<8x768xf32>
    %244 = tpu.matmul %243, %7, %cst_59 {dimension_numbers = #tpu.dot_dimension_numbers<[1], [0], [0], [1], [0, 0, 1, 1], [], []>} : vector<8x256xf32>, vector<256x768xf32>, vector<8x768xf32> -> vector<8x768xf32>
    %c32_60 = arith.constant 32 : index
    %c0_61 = arith.constant 0 : index
    %245 = vector.load %arg14[%c32_60, %c0_61] : memref<64x768xf32, #tpu.memory_space<vmem>>, vector<8x384xf32>
    %c24_62 = arith.constant 24 : index
    %c384_63 = arith.constant 384 : index
    %246 = vector.load %arg14[%c24_62, %c384_63] : memref<64x768xf32, #tpu.memory_space<vmem>>, vector<8x384xf32>
    %247 = vector.extract_strided_slice %245 {offsets = [0, 0], sizes = [8, 128], strides = [1, 1]} : vector<8x384xf32> to vector<8x128xf32>
    %248 = vector.extract_strided_slice %244 {offsets = [0, 0], sizes = [8, 128], strides = [1, 1]} : vector<8x768xf32> to vector<8x128xf32>
    %249 = arith.addf %247, %248 : vector<8x128xf32>
    %250 = arith.negf %249 : vector<8x128xf32>
    %251 = math.exp %250 : vector<8x128xf32>
    %cst_64 = arith.constant 1.000000e+00 : f32
    %252 = vector.broadcast %cst_64 : f32 to vector<8x128xf32>
    %253 = arith.addf %252, %251 : vector<8x128xf32>
    %254 = arith.divf %252, %253 : vector<8x128xf32>
    %255 = vector.extract_strided_slice %245 {offsets = [0, 128], sizes = [8, 128], strides = [1, 1]} : vector<8x384xf32> to vector<8x128xf32>
    %256 = vector.extract_strided_slice %244 {offsets = [0, 128], sizes = [8, 128], strides = [1, 1]} : vector<8x768xf32> to vector<8x128xf32>
    %257 = arith.addf %255, %256 : vector<8x128xf32>
    %258 = arith.negf %257 : vector<8x128xf32>
    %259 = math.exp %258 : vector<8x128xf32>
    %cst_65 = arith.constant 1.000000e+00 : f32
    %260 = vector.broadcast %cst_65 : f32 to vector<8x128xf32>
    %261 = arith.addf %260, %259 : vector<8x128xf32>
    %262 = arith.divf %260, %261 : vector<8x128xf32>
    %263 = vector.extract_strided_slice %245 {offsets = [0, 256], sizes = [8, 128], strides = [1, 1]} : vector<8x384xf32> to vector<8x128xf32>
    %264 = vector.extract_strided_slice %244 {offsets = [0, 256], sizes = [8, 128], strides = [1, 1]} : vector<8x768xf32> to vector<8x128xf32>
    %265 = arith.addf %264, %8 : vector<8x128xf32>
    %266 = arith.mulf %254, %265 : vector<8x128xf32>
    %267 = arith.addf %263, %266 : vector<8x128xf32>
    %268 = math.tanh %267 : vector<8x128xf32>
    %269 = vector.extract_strided_slice %243 {offsets = [0, 0], sizes = [8, 128], strides = [1, 1]} : vector<8x256xf32> to vector<8x128xf32>
    %270 = arith.subf %269, %268 : vector<8x128xf32>
    %271 = arith.mulf %262, %270 : vector<8x128xf32>
    %272 = arith.addf %268, %271 : vector<8x128xf32>
    %273 = vector.extract_strided_slice %246 {offsets = [0, 0], sizes = [8, 128], strides = [1, 1]} : vector<8x384xf32> to vector<8x128xf32>
    %274 = vector.extract_strided_slice %244 {offsets = [0, 384], sizes = [8, 128], strides = [1, 1]} : vector<8x768xf32> to vector<8x128xf32>
    %275 = arith.addf %273, %274 : vector<8x128xf32>
    %276 = arith.negf %275 : vector<8x128xf32>
    %277 = math.exp %276 : vector<8x128xf32>
    %cst_66 = arith.constant 1.000000e+00 : f32
    %278 = vector.broadcast %cst_66 : f32 to vector<8x128xf32>
    %279 = arith.addf %278, %277 : vector<8x128xf32>
    %280 = arith.divf %278, %279 : vector<8x128xf32>
    %281 = vector.extract_strided_slice %246 {offsets = [0, 128], sizes = [8, 128], strides = [1, 1]} : vector<8x384xf32> to vector<8x128xf32>
    %282 = vector.extract_strided_slice %244 {offsets = [0, 512], sizes = [8, 128], strides = [1, 1]} : vector<8x768xf32> to vector<8x128xf32>
    %283 = arith.addf %281, %282 : vector<8x128xf32>
    %284 = arith.negf %283 : vector<8x128xf32>
    %285 = math.exp %284 : vector<8x128xf32>
    %cst_67 = arith.constant 1.000000e+00 : f32
    %286 = vector.broadcast %cst_67 : f32 to vector<8x128xf32>
    %287 = arith.addf %286, %285 : vector<8x128xf32>
    %288 = arith.divf %286, %287 : vector<8x128xf32>
    %289 = vector.extract_strided_slice %246 {offsets = [0, 256], sizes = [8, 128], strides = [1, 1]} : vector<8x384xf32> to vector<8x128xf32>
    %290 = vector.extract_strided_slice %244 {offsets = [0, 640], sizes = [8, 128], strides = [1, 1]} : vector<8x768xf32> to vector<8x128xf32>
    %291 = arith.addf %290, %9 : vector<8x128xf32>
    %292 = arith.mulf %280, %291 : vector<8x128xf32>
    %293 = arith.addf %289, %292 : vector<8x128xf32>
    %294 = math.tanh %293 : vector<8x128xf32>
    %295 = vector.extract_strided_slice %243 {offsets = [0, 128], sizes = [8, 128], strides = [1, 1]} : vector<8x256xf32> to vector<8x128xf32>
    %296 = arith.subf %295, %294 : vector<8x128xf32>
    %297 = arith.mulf %288, %296 : vector<8x128xf32>
    %298 = arith.addf %294, %297 : vector<8x128xf32>
    %c32_68 = arith.constant 32 : index
    %c0_69 = arith.constant 0 : index
    %299 = vector.load %arg15[%c32_68, %c0_69] : memref<64x256xf32, #tpu.memory_space<vmem>>, vector<8x128xf32>
    tpu.vector_store %arg15[%c32_68, %c0_69], %272 {strides = array<i32>} : memref<64x256xf32, #tpu.memory_space<vmem>>, vector<8x128xf32>,
    %c24_70 = arith.constant 24 : index
    %c128_71 = arith.constant 128 : index
    %300 = vector.load %arg15[%c24_70, %c128_71] : memref<64x256xf32, #tpu.memory_space<vmem>>, vector<8x128xf32>
    tpu.vector_store %arg15[%c24_70, %c128_71], %298 {strides = array<i32>} : memref<64x256xf32, #tpu.memory_space<vmem>>, vector<8x128xf32>,
    %301 = tpu.concatenate %272, %298 in 1 : vector<8x128xf32>, vector<8x128xf32> -> vector<8x256xf32>
    %cst_72 = arith.constant dense<0.000000e+00> : vector<8x768xf32>
    %302 = tpu.matmul %301, %7, %cst_72 {dimension_numbers = #tpu.dot_dimension_numbers<[1], [0], [0], [1], [0, 0, 1, 1], [], []>} : vector<8x256xf32>, vector<256x768xf32>, vector<8x768xf32> -> vector<8x768xf32>
    %c40_73 = arith.constant 40 : index
    %c0_74 = arith.constant 0 : index
    %303 = vector.load %arg14[%c40_73, %c0_74] : memref<64x768xf32, #tpu.memory_space<vmem>>, vector<8x384xf32>
    %c16_75 = arith.constant 16 : index
    %c384_76 = arith.constant 384 : index
    %304 = vector.load %arg14[%c16_75, %c384_76] : memref<64x768xf32, #tpu.memory_space<vmem>>, vector<8x384xf32>
    %305 = vector.extract_strided_slice %303 {offsets = [0, 0], sizes = [8, 128], strides = [1, 1]} : vector<8x384xf32> to vector<8x128xf32>
    %306 = vector.extract_strided_slice %302 {offsets = [0, 0], sizes = [8, 128], strides = [1, 1]} : vector<8x768xf32> to vector<8x128xf32>
    %307 = arith.addf %305, %306 : vector<8x128xf32>
    %308 = arith.negf %307 : vector<8x128xf32>
    %309 = math.exp %308 : vector<8x128xf32>
    %cst_77 = arith.constant 1.000000e+00 : f32
    %310 = vector.broadcast %cst_77 : f32 to vector<8x128xf32>
    %311 = arith.addf %310, %309 : vector<8x128xf32>
    %312 = arith.divf %310, %311 : vector<8x128xf32>
    %313 = vector.extract_strided_slice %303 {offsets = [0, 128], sizes = [8, 128], strides = [1, 1]} : vector<8x384xf32> to vector<8x128xf32>
    %314 = vector.extract_strided_slice %302 {offsets = [0, 128], sizes = [8, 128], strides = [1, 1]} : vector<8x768xf32> to vector<8x128xf32>
    %315 = arith.addf %313, %314 : vector<8x128xf32>
    %316 = arith.negf %315 : vector<8x128xf32>
    %317 = math.exp %316 : vector<8x128xf32>
    %cst_78 = arith.constant 1.000000e+00 : f32
    %318 = vector.broadcast %cst_78 : f32 to vector<8x128xf32>
    %319 = arith.addf %318, %317 : vector<8x128xf32>
    %320 = arith.divf %318, %319 : vector<8x128xf32>
    %321 = vector.extract_strided_slice %303 {offsets = [0, 256], sizes = [8, 128], strides = [1, 1]} : vector<8x384xf32> to vector<8x128xf32>
    %322 = vector.extract_strided_slice %302 {offsets = [0, 256], sizes = [8, 128], strides = [1, 1]} : vector<8x768xf32> to vector<8x128xf32>
    %323 = arith.addf %322, %8 : vector<8x128xf32>
    %324 = arith.mulf %312, %323 : vector<8x128xf32>
    %325 = arith.addf %321, %324 : vector<8x128xf32>
    %326 = math.tanh %325 : vector<8x128xf32>
    %327 = vector.extract_strided_slice %301 {offsets = [0, 0], sizes = [8, 128], strides = [1, 1]} : vector<8x256xf32> to vector<8x128xf32>
    %328 = arith.subf %327, %326 : vector<8x128xf32>
    %329 = arith.mulf %320, %328 : vector<8x128xf32>
    %330 = arith.addf %326, %329 : vector<8x128xf32>
    %331 = vector.extract_strided_slice %304 {offsets = [0, 0], sizes = [8, 128], strides = [1, 1]} : vector<8x384xf32> to vector<8x128xf32>
    %332 = vector.extract_strided_slice %302 {offsets = [0, 384], sizes = [8, 128], strides = [1, 1]} : vector<8x768xf32> to vector<8x128xf32>
    %333 = arith.addf %331, %332 : vector<8x128xf32>
    %334 = arith.negf %333 : vector<8x128xf32>
    %335 = math.exp %334 : vector<8x128xf32>
    %cst_79 = arith.constant 1.000000e+00 : f32
    %336 = vector.broadcast %cst_79 : f32 to vector<8x128xf32>
    %337 = arith.addf %336, %335 : vector<8x128xf32>
    %338 = arith.divf %336, %337 : vector<8x128xf32>
    %339 = vector.extract_strided_slice %304 {offsets = [0, 128], sizes = [8, 128], strides = [1, 1]} : vector<8x384xf32> to vector<8x128xf32>
    %340 = vector.extract_strided_slice %302 {offsets = [0, 512], sizes = [8, 128], strides = [1, 1]} : vector<8x768xf32> to vector<8x128xf32>
    %341 = arith.addf %339, %340 : vector<8x128xf32>
    %342 = arith.negf %341 : vector<8x128xf32>
    %343 = math.exp %342 : vector<8x128xf32>
    %cst_80 = arith.constant 1.000000e+00 : f32
    %344 = vector.broadcast %cst_80 : f32 to vector<8x128xf32>
    %345 = arith.addf %344, %343 : vector<8x128xf32>
    %346 = arith.divf %344, %345 : vector<8x128xf32>
    %347 = vector.extract_strided_slice %304 {offsets = [0, 256], sizes = [8, 128], strides = [1, 1]} : vector<8x384xf32> to vector<8x128xf32>
    %348 = vector.extract_strided_slice %302 {offsets = [0, 640], sizes = [8, 128], strides = [1, 1]} : vector<8x768xf32> to vector<8x128xf32>
    %349 = arith.addf %348, %9 : vector<8x128xf32>
    %350 = arith.mulf %338, %349 : vector<8x128xf32>
    %351 = arith.addf %347, %350 : vector<8x128xf32>
    %352 = math.tanh %351 : vector<8x128xf32>
    %353 = vector.extract_strided_slice %301 {offsets = [0, 128], sizes = [8, 128], strides = [1, 1]} : vector<8x256xf32> to vector<8x128xf32>
    %354 = arith.subf %353, %352 : vector<8x128xf32>
    %355 = arith.mulf %346, %354 : vector<8x128xf32>
    %356 = arith.addf %352, %355 : vector<8x128xf32>
    %c40_81 = arith.constant 40 : index
    %c0_82 = arith.constant 0 : index
    %357 = vector.load %arg15[%c40_81, %c0_82] : memref<64x256xf32, #tpu.memory_space<vmem>>, vector<8x128xf32>
    tpu.vector_store %arg15[%c40_81, %c0_82], %330 {strides = array<i32>} : memref<64x256xf32, #tpu.memory_space<vmem>>, vector<8x128xf32>,
    %c16_83 = arith.constant 16 : index
    %c128_84 = arith.constant 128 : index
    %358 = vector.load %arg15[%c16_83, %c128_84] : memref<64x256xf32, #tpu.memory_space<vmem>>, vector<8x128xf32>
    tpu.vector_store %arg15[%c16_83, %c128_84], %356 {strides = array<i32>} : memref<64x256xf32, #tpu.memory_space<vmem>>, vector<8x128xf32>,
    %359 = tpu.concatenate %330, %356 in 1 : vector<8x128xf32>, vector<8x128xf32> -> vector<8x256xf32>
    %cst_85 = arith.constant dense<0.000000e+00> : vector<8x768xf32>
    %360 = tpu.matmul %359, %7, %cst_85 {dimension_numbers = #tpu.dot_dimension_numbers<[1], [0], [0], [1], [0, 0, 1, 1], [], []>} : vector<8x256xf32>, vector<256x768xf32>, vector<8x768xf32> -> vector<8x768xf32>
    %c48_86 = arith.constant 48 : index
    %c0_87 = arith.constant 0 : index
    %361 = vector.load %arg14[%c48_86, %c0_87] : memref<64x768xf32, #tpu.memory_space<vmem>>, vector<8x384xf32>
    %c8_88 = arith.constant 8 : index
    %c384_89 = arith.constant 384 : index
    %362 = vector.load %arg14[%c8_88, %c384_89] : memref<64x768xf32, #tpu.memory_space<vmem>>, vector<8x384xf32>
    %363 = vector.extract_strided_slice %361 {offsets = [0, 0], sizes = [8, 128], strides = [1, 1]} : vector<8x384xf32> to vector<8x128xf32>
    %364 = vector.extract_strided_slice %360 {offsets = [0, 0], sizes = [8, 128], strides = [1, 1]} : vector<8x768xf32> to vector<8x128xf32>
    %365 = arith.addf %363, %364 : vector<8x128xf32>
    %366 = arith.negf %365 : vector<8x128xf32>
    %367 = math.exp %366 : vector<8x128xf32>
    %cst_90 = arith.constant 1.000000e+00 : f32
    %368 = vector.broadcast %cst_90 : f32 to vector<8x128xf32>
    %369 = arith.addf %368, %367 : vector<8x128xf32>
    %370 = arith.divf %368, %369 : vector<8x128xf32>
    %371 = vector.extract_strided_slice %361 {offsets = [0, 128], sizes = [8, 128], strides = [1, 1]} : vector<8x384xf32> to vector<8x128xf32>
    %372 = vector.extract_strided_slice %360 {offsets = [0, 128], sizes = [8, 128], strides = [1, 1]} : vector<8x768xf32> to vector<8x128xf32>
    %373 = arith.addf %371, %372 : vector<8x128xf32>
    %374 = arith.negf %373 : vector<8x128xf32>
    %375 = math.exp %374 : vector<8x128xf32>
    %cst_91 = arith.constant 1.000000e+00 : f32
    %376 = vector.broadcast %cst_91 : f32 to vector<8x128xf32>
    %377 = arith.addf %376, %375 : vector<8x128xf32>
    %378 = arith.divf %376, %377 : vector<8x128xf32>
    %379 = vector.extract_strided_slice %361 {offsets = [0, 256], sizes = [8, 128], strides = [1, 1]} : vector<8x384xf32> to vector<8x128xf32>
    %380 = vector.extract_strided_slice %360 {offsets = [0, 256], sizes = [8, 128], strides = [1, 1]} : vector<8x768xf32> to vector<8x128xf32>
    %381 = arith.addf %380, %8 : vector<8x128xf32>
    %382 = arith.mulf %370, %381 : vector<8x128xf32>
    %383 = arith.addf %379, %382 : vector<8x128xf32>
    %384 = math.tanh %383 : vector<8x128xf32>
    %385 = vector.extract_strided_slice %359 {offsets = [0, 0], sizes = [8, 128], strides = [1, 1]} : vector<8x256xf32> to vector<8x128xf32>
    %386 = arith.subf %385, %384 : vector<8x128xf32>
    %387 = arith.mulf %378, %386 : vector<8x128xf32>
    %388 = arith.addf %384, %387 : vector<8x128xf32>
    %389 = vector.extract_strided_slice %362 {offsets = [0, 0], sizes = [8, 128], strides = [1, 1]} : vector<8x384xf32> to vector<8x128xf32>
    %390 = vector.extract_strided_slice %360 {offsets = [0, 384], sizes = [8, 128], strides = [1, 1]} : vector<8x768xf32> to vector<8x128xf32>
    %391 = arith.addf %389, %390 : vector<8x128xf32>
    %392 = arith.negf %391 : vector<8x128xf32>
    %393 = math.exp %392 : vector<8x128xf32>
    %cst_92 = arith.constant 1.000000e+00 : f32
    %394 = vector.broadcast %cst_92 : f32 to vector<8x128xf32>
    %395 = arith.addf %394, %393 : vector<8x128xf32>
    %396 = arith.divf %394, %395 : vector<8x128xf32>
    %397 = vector.extract_strided_slice %362 {offsets = [0, 128], sizes = [8, 128], strides = [1, 1]} : vector<8x384xf32> to vector<8x128xf32>
    %398 = vector.extract_strided_slice %360 {offsets = [0, 512], sizes = [8, 128], strides = [1, 1]} : vector<8x768xf32> to vector<8x128xf32>
    %399 = arith.addf %397, %398 : vector<8x128xf32>
    %400 = arith.negf %399 : vector<8x128xf32>
    %401 = math.exp %400 : vector<8x128xf32>
    %cst_93 = arith.constant 1.000000e+00 : f32
    %402 = vector.broadcast %cst_93 : f32 to vector<8x128xf32>
    %403 = arith.addf %402, %401 : vector<8x128xf32>
    %404 = arith.divf %402, %403 : vector<8x128xf32>
    %405 = vector.extract_strided_slice %362 {offsets = [0, 256], sizes = [8, 128], strides = [1, 1]} : vector<8x384xf32> to vector<8x128xf32>
    %406 = vector.extract_strided_slice %360 {offsets = [0, 640], sizes = [8, 128], strides = [1, 1]} : vector<8x768xf32> to vector<8x128xf32>
    %407 = arith.addf %406, %9 : vector<8x128xf32>
    %408 = arith.mulf %396, %407 : vector<8x128xf32>
    %409 = arith.addf %405, %408 : vector<8x128xf32>
    %410 = math.tanh %409 : vector<8x128xf32>
    %411 = vector.extract_strided_slice %359 {offsets = [0, 128], sizes = [8, 128], strides = [1, 1]} : vector<8x256xf32> to vector<8x128xf32>
    %412 = arith.subf %411, %410 : vector<8x128xf32>
    %413 = arith.mulf %404, %412 : vector<8x128xf32>
    %414 = arith.addf %410, %413 : vector<8x128xf32>
    %c48_94 = arith.constant 48 : index
    %c0_95 = arith.constant 0 : index
    %415 = vector.load %arg15[%c48_94, %c0_95] : memref<64x256xf32, #tpu.memory_space<vmem>>, vector<8x128xf32>
    tpu.vector_store %arg15[%c48_94, %c0_95], %388 {strides = array<i32>} : memref<64x256xf32, #tpu.memory_space<vmem>>, vector<8x128xf32>,
    %c8_96 = arith.constant 8 : index
    %c128_97 = arith.constant 128 : index
    %416 = vector.load %arg15[%c8_96, %c128_97] : memref<64x256xf32, #tpu.memory_space<vmem>>, vector<8x128xf32>
    tpu.vector_store %arg15[%c8_96, %c128_97], %414 {strides = array<i32>} : memref<64x256xf32, #tpu.memory_space<vmem>>, vector<8x128xf32>,
    %417 = tpu.concatenate %388, %414 in 1 : vector<8x128xf32>, vector<8x128xf32> -> vector<8x256xf32>
    %cst_98 = arith.constant dense<0.000000e+00> : vector<8x768xf32>
    %418 = tpu.matmul %417, %7, %cst_98 {dimension_numbers = #tpu.dot_dimension_numbers<[1], [0], [0], [1], [0, 0, 1, 1], [], []>} : vector<8x256xf32>, vector<256x768xf32>, vector<8x768xf32> -> vector<8x768xf32>
    %c56_99 = arith.constant 56 : index
    %c0_100 = arith.constant 0 : index
    %419 = vector.load %arg14[%c56_99, %c0_100] : memref<64x768xf32, #tpu.memory_space<vmem>>, vector<8x384xf32>
    %c0_101 = arith.constant 0 : index
    %c384_102 = arith.constant 384 : index
    %420 = vector.load %arg14[%c0_101, %c384_102] : memref<64x768xf32, #tpu.memory_space<vmem>>, vector<8x384xf32>
    %421 = vector.extract_strided_slice %419 {offsets = [0, 0], sizes = [8, 128], strides = [1, 1]} : vector<8x384xf32> to vector<8x128xf32>
    %422 = vector.extract_strided_slice %418 {offsets = [0, 0], sizes = [8, 128], strides = [1, 1]} : vector<8x768xf32> to vector<8x128xf32>
    %423 = arith.addf %421, %422 : vector<8x128xf32>
    %424 = arith.negf %423 : vector<8x128xf32>
    %425 = math.exp %424 : vector<8x128xf32>
    %cst_103 = arith.constant 1.000000e+00 : f32
    %426 = vector.broadcast %cst_103 : f32 to vector<8x128xf32>
    %427 = arith.addf %426, %425 : vector<8x128xf32>
    %428 = arith.divf %426, %427 : vector<8x128xf32>
    %429 = vector.extract_strided_slice %419 {offsets = [0, 128], sizes = [8, 128], strides = [1, 1]} : vector<8x384xf32> to vector<8x128xf32>
    %430 = vector.extract_strided_slice %418 {offsets = [0, 128], sizes = [8, 128], strides = [1, 1]} : vector<8x768xf32> to vector<8x128xf32>
    %431 = arith.addf %429, %430 : vector<8x128xf32>
    %432 = arith.negf %431 : vector<8x128xf32>
    %433 = math.exp %432 : vector<8x128xf32>
    %cst_104 = arith.constant 1.000000e+00 : f32
    %434 = vector.broadcast %cst_104 : f32 to vector<8x128xf32>
    %435 = arith.addf %434, %433 : vector<8x128xf32>
    %436 = arith.divf %434, %435 : vector<8x128xf32>
    %437 = vector.extract_strided_slice %419 {offsets = [0, 256], sizes = [8, 128], strides = [1, 1]} : vector<8x384xf32> to vector<8x128xf32>
    %438 = vector.extract_strided_slice %418 {offsets = [0, 256], sizes = [8, 128], strides = [1, 1]} : vector<8x768xf32> to vector<8x128xf32>
    %439 = arith.addf %438, %8 : vector<8x128xf32>
    %440 = arith.mulf %428, %439 : vector<8x128xf32>
    %441 = arith.addf %437, %440 : vector<8x128xf32>
    %442 = math.tanh %441 : vector<8x128xf32>
    %443 = vector.extract_strided_slice %417 {offsets = [0, 0], sizes = [8, 128], strides = [1, 1]} : vector<8x256xf32> to vector<8x128xf32>
    %444 = arith.subf %443, %442 : vector<8x128xf32>
    %445 = arith.mulf %436, %444 : vector<8x128xf32>
    %446 = arith.addf %442, %445 : vector<8x128xf32>
    %447 = vector.extract_strided_slice %420 {offsets = [0, 0], sizes = [8, 128], strides = [1, 1]} : vector<8x384xf32> to vector<8x128xf32>
    %448 = vector.extract_strided_slice %418 {offsets = [0, 384], sizes = [8, 128], strides = [1, 1]} : vector<8x768xf32> to vector<8x128xf32>
    %449 = arith.addf %447, %448 : vector<8x128xf32>
    %450 = arith.negf %449 : vector<8x128xf32>
    %451 = math.exp %450 : vector<8x128xf32>
    %cst_105 = arith.constant 1.000000e+00 : f32
    %452 = vector.broadcast %cst_105 : f32 to vector<8x128xf32>
    %453 = arith.addf %452, %451 : vector<8x128xf32>
    %454 = arith.divf %452, %453 : vector<8x128xf32>
    %455 = vector.extract_strided_slice %420 {offsets = [0, 128], sizes = [8, 128], strides = [1, 1]} : vector<8x384xf32> to vector<8x128xf32>
    %456 = vector.extract_strided_slice %418 {offsets = [0, 512], sizes = [8, 128], strides = [1, 1]} : vector<8x768xf32> to vector<8x128xf32>
    %457 = arith.addf %455, %456 : vector<8x128xf32>
    %458 = arith.negf %457 : vector<8x128xf32>
    %459 = math.exp %458 : vector<8x128xf32>
    %cst_106 = arith.constant 1.000000e+00 : f32
    %460 = vector.broadcast %cst_106 : f32 to vector<8x128xf32>
    %461 = arith.addf %460, %459 : vector<8x128xf32>
    %462 = arith.divf %460, %461 : vector<8x128xf32>
    %463 = vector.extract_strided_slice %420 {offsets = [0, 256], sizes = [8, 128], strides = [1, 1]} : vector<8x384xf32> to vector<8x128xf32>
    %464 = vector.extract_strided_slice %418 {offsets = [0, 640], sizes = [8, 128], strides = [1, 1]} : vector<8x768xf32> to vector<8x128xf32>
    %465 = arith.addf %464, %9 : vector<8x128xf32>
    %466 = arith.mulf %454, %465 : vector<8x128xf32>
    %467 = arith.addf %463, %466 : vector<8x128xf32>
    %468 = math.tanh %467 : vector<8x128xf32>
    %469 = vector.extract_strided_slice %417 {offsets = [0, 128], sizes = [8, 128], strides = [1, 1]} : vector<8x256xf32> to vector<8x128xf32>
    %470 = arith.subf %469, %468 : vector<8x128xf32>
    %471 = arith.mulf %462, %470 : vector<8x128xf32>
    %472 = arith.addf %468, %471 : vector<8x128xf32>
    %c56_107 = arith.constant 56 : index
    %c0_108 = arith.constant 0 : index
    %473 = vector.load %arg15[%c56_107, %c0_108] : memref<64x256xf32, #tpu.memory_space<vmem>>, vector<8x128xf32>
    tpu.vector_store %arg15[%c56_107, %c0_108], %446 {strides = array<i32>} : memref<64x256xf32, #tpu.memory_space<vmem>>, vector<8x128xf32>,
    %c0_109 = arith.constant 0 : index
    %c128_110 = arith.constant 128 : index
    %474 = vector.load %arg15[%c0_109, %c128_110] : memref<64x256xf32, #tpu.memory_space<vmem>>, vector<8x128xf32>
    tpu.vector_store %arg15[%c0_109, %c128_110], %472 {strides = array<i32>} : memref<64x256xf32, #tpu.memory_space<vmem>>, vector<8x128xf32>,
    %475 = tpu.concatenate %446, %472 in 1 : vector<8x128xf32>, vector<8x128xf32> -> vector<8x256xf32>
    %c0_111 = arith.constant 0 : index
    %c0_112 = arith.constant 0 : index
    %c0_113 = arith.constant 0 : index
    %476 = vector.load %arg13[%c0_111, %c0_112, %c0_113] : memref<2x8x256xf32, #tpu.memory_space<vmem>>, vector<1x8x256xf32>
    %477 = vector.shape_cast %476 : vector<1x8x256xf32> to vector<8x256xf32>
    %478 = vector.shape_cast %475 : vector<8x256xf32> to vector<1x8x256xf32>
    tpu.vector_store %arg13[%c0_111, %c0_112, %c0_113], %478 {strides = array<i32>} : memref<2x8x256xf32, #tpu.memory_space<vmem>>, vector<1x8x256xf32>,
    %c0_114 = arith.constant 0 : index
    %c0_115 = arith.constant 0 : index
    %479 = vector.load %arg15[%c0_114, %c0_115] : memref<64x256xf32, #tpu.memory_space<vmem>>, vector<64x256xf32>
    %c0_116 = arith.constant 0 : index
    %c0_117 = arith.constant 0 : index
    %480 = vector.load %arg6[%c0_116, %c0_117] : memref<256x768xf32, #tpu.memory_space<vmem>>, vector<256x768xf32>
    %cst_118 = arith.constant dense<0.000000e+00> : vector<64x768xf32>
    %481 = tpu.matmul %479, %480, %cst_118 {dimension_numbers = #tpu.dot_dimension_numbers<[1], [0], [0], [1], [0, 0, 1, 1], [], []>} : vector<64x256xf32>, vector<256x768xf32>, vector<64x768xf32> -> vector<64x768xf32>
    %c0_119 = arith.constant 0 : index
    %c0_120 = arith.constant 0 : index
    %482 = vector.load %arg8[%c0_119, %c0_120] : memref<1x768xf32, #tpu.memory_space<vmem>>, vector<1x768xf32>
    %483 = vector.broadcast %482 : vector<1x768xf32> to vector<64x768xf32>
    %484 = arith.addf %481, %483 : vector<64x768xf32>
    %c0_121 = arith.constant 0 : index
    %c0_122 = arith.constant 0 : index
    %485 = vector.load %arg14[%c0_121, %c0_122] : memref<64x768xf32, #tpu.memory_space<vmem>>, vector<64x768xf32>
    tpu.vector_store %arg14[%c0_121, %c0_122], %484 {strides = array<i32>} : memref<64x768xf32, #tpu.memory_space<vmem>>, vector<64x768xf32>,
    %c0_123 = arith.constant 0 : index
    %c0_124 = arith.constant 0 : index
    %486 = vector.load %arg7[%c0_123, %c0_124] : memref<256x768xf32, #tpu.memory_space<vmem>>, vector<256x768xf32>
    %c0_125 = arith.constant 0 : index
    %c0_126 = arith.constant 0 : index
    %487 = vector.load %arg9[%c0_125, %c0_126] : memref<8x256xf32, #tpu.memory_space<vmem>>, vector<8x128xf32>
    %c0_127 = arith.constant 0 : index
    %c128_128 = arith.constant 128 : index
    %488 = vector.load %arg9[%c0_127, %c128_128] : memref<8x256xf32, #tpu.memory_space<vmem>>, vector<8x128xf32>
    %c1 = arith.constant 1 : index
    %c0_129 = arith.constant 0 : index
    %c0_130 = arith.constant 0 : index
    %489 = vector.load %arg1[%c1, %c0_129, %c0_130] : memref<2x8x256xf32, #tpu.memory_space<vmem>>, vector<1x8x256xf32>
    %490 = vector.shape_cast %489 : vector<1x8x256xf32> to vector<8x256xf32>
    %cst_131 = arith.constant dense<0.000000e+00> : vector<8x768xf32>
    %491 = tpu.matmul %490, %486, %cst_131 {dimension_numbers = #tpu.dot_dimension_numbers<[1], [0], [0], [1], [0, 0, 1, 1], [], []>} : vector<8x256xf32>, vector<256x768xf32>, vector<8x768xf32> -> vector<8x768xf32>
    %c0_132 = arith.constant 0 : index
    %c0_133 = arith.constant 0 : index
    %492 = vector.load %arg14[%c0_132, %c0_133] : memref<64x768xf32, #tpu.memory_space<vmem>>, vector<8x384xf32>
    %c56_134 = arith.constant 56 : index
    %c384_135 = arith.constant 384 : index
    %493 = vector.load %arg14[%c56_134, %c384_135] : memref<64x768xf32, #tpu.memory_space<vmem>>, vector<8x384xf32>
    %494 = vector.extract_strided_slice %492 {offsets = [0, 0], sizes = [8, 128], strides = [1, 1]} : vector<8x384xf32> to vector<8x128xf32>
    %495 = vector.extract_strided_slice %491 {offsets = [0, 0], sizes = [8, 128], strides = [1, 1]} : vector<8x768xf32> to vector<8x128xf32>
    %496 = arith.addf %494, %495 : vector<8x128xf32>
    %497 = arith.negf %496 : vector<8x128xf32>
    %498 = math.exp %497 : vector<8x128xf32>
    %cst_136 = arith.constant 1.000000e+00 : f32
    %499 = vector.broadcast %cst_136 : f32 to vector<8x128xf32>
    %500 = arith.addf %499, %498 : vector<8x128xf32>
    %501 = arith.divf %499, %500 : vector<8x128xf32>
    %502 = vector.extract_strided_slice %492 {offsets = [0, 128], sizes = [8, 128], strides = [1, 1]} : vector<8x384xf32> to vector<8x128xf32>
    %503 = vector.extract_strided_slice %491 {offsets = [0, 128], sizes = [8, 128], strides = [1, 1]} : vector<8x768xf32> to vector<8x128xf32>
    %504 = arith.addf %502, %503 : vector<8x128xf32>
    %505 = arith.negf %504 : vector<8x128xf32>
    %506 = math.exp %505 : vector<8x128xf32>
    %cst_137 = arith.constant 1.000000e+00 : f32
    %507 = vector.broadcast %cst_137 : f32 to vector<8x128xf32>
    %508 = arith.addf %507, %506 : vector<8x128xf32>
    %509 = arith.divf %507, %508 : vector<8x128xf32>
    %510 = vector.extract_strided_slice %492 {offsets = [0, 256], sizes = [8, 128], strides = [1, 1]} : vector<8x384xf32> to vector<8x128xf32>
    %511 = vector.extract_strided_slice %491 {offsets = [0, 256], sizes = [8, 128], strides = [1, 1]} : vector<8x768xf32> to vector<8x128xf32>
    %512 = arith.addf %511, %487 : vector<8x128xf32>
    %513 = arith.mulf %501, %512 : vector<8x128xf32>
    %514 = arith.addf %510, %513 : vector<8x128xf32>
    %515 = math.tanh %514 : vector<8x128xf32>
    %516 = vector.extract_strided_slice %490 {offsets = [0, 0], sizes = [8, 128], strides = [1, 1]} : vector<8x256xf32> to vector<8x128xf32>
    %517 = arith.subf %516, %515 : vector<8x128xf32>
    %518 = arith.mulf %509, %517 : vector<8x128xf32>
    %519 = arith.addf %515, %518 : vector<8x128xf32>
    %520 = vector.extract_strided_slice %493 {offsets = [0, 0], sizes = [8, 128], strides = [1, 1]} : vector<8x384xf32> to vector<8x128xf32>
    %521 = vector.extract_strided_slice %491 {offsets = [0, 384], sizes = [8, 128], strides = [1, 1]} : vector<8x768xf32> to vector<8x128xf32>
    %522 = arith.addf %520, %521 : vector<8x128xf32>
    %523 = arith.negf %522 : vector<8x128xf32>
    %524 = math.exp %523 : vector<8x128xf32>
    %cst_138 = arith.constant 1.000000e+00 : f32
    %525 = vector.broadcast %cst_138 : f32 to vector<8x128xf32>
    %526 = arith.addf %525, %524 : vector<8x128xf32>
    %527 = arith.divf %525, %526 : vector<8x128xf32>
    %528 = vector.extract_strided_slice %493 {offsets = [0, 128], sizes = [8, 128], strides = [1, 1]} : vector<8x384xf32> to vector<8x128xf32>
    %529 = vector.extract_strided_slice %491 {offsets = [0, 512], sizes = [8, 128], strides = [1, 1]} : vector<8x768xf32> to vector<8x128xf32>
    %530 = arith.addf %528, %529 : vector<8x128xf32>
    %531 = arith.negf %530 : vector<8x128xf32>
    %532 = math.exp %531 : vector<8x128xf32>
    %cst_139 = arith.constant 1.000000e+00 : f32
    %533 = vector.broadcast %cst_139 : f32 to vector<8x128xf32>
    %534 = arith.addf %533, %532 : vector<8x128xf32>
    %535 = arith.divf %533, %534 : vector<8x128xf32>
    %536 = vector.extract_strided_slice %493 {offsets = [0, 256], sizes = [8, 128], strides = [1, 1]} : vector<8x384xf32> to vector<8x128xf32>
    %537 = vector.extract_strided_slice %491 {offsets = [0, 640], sizes = [8, 128], strides = [1, 1]} : vector<8x768xf32> to vector<8x128xf32>
    %538 = arith.addf %537, %488 : vector<8x128xf32>
    %539 = arith.mulf %527, %538 : vector<8x128xf32>
    %540 = arith.addf %536, %539 : vector<8x128xf32>
    %541 = math.tanh %540 : vector<8x128xf32>
    %542 = vector.extract_strided_slice %490 {offsets = [0, 128], sizes = [8, 128], strides = [1, 1]} : vector<8x256xf32> to vector<8x128xf32>
    %543 = arith.subf %542, %541 : vector<8x128xf32>
    %544 = arith.mulf %535, %543 : vector<8x128xf32>
    %545 = arith.addf %541, %544 : vector<8x128xf32>
    %c0_140 = arith.constant 0 : index
    %c0_141 = arith.constant 0 : index
    %546 = vector.load %arg16[%c0_140, %c0_141] : memref<64x256xf32, #tpu.memory_space<vmem>>, vector<8x128xf32>
    tpu.vector_store %arg16[%c0_140, %c0_141], %519 {strides = array<i32>} : memref<64x256xf32, #tpu.memory_space<vmem>>, vector<8x128xf32>,
    %c56_142 = arith.constant 56 : index
    %c128_143 = arith.constant 128 : index
    %547 = vector.load %arg16[%c56_142, %c128_143] : memref<64x256xf32, #tpu.memory_space<vmem>>, vector<8x128xf32>
    tpu.vector_store %arg16[%c56_142, %c128_143], %545 {strides = array<i32>} : memref<64x256xf32, #tpu.memory_space<vmem>>, vector<8x128xf32>,
    %548 = tpu.concatenate %519, %545 in 1 : vector<8x128xf32>, vector<8x128xf32> -> vector<8x256xf32>
    %cst_144 = arith.constant dense<0.000000e+00> : vector<8x768xf32>
    %549 = tpu.matmul %548, %486, %cst_144 {dimension_numbers = #tpu.dot_dimension_numbers<[1], [0], [0], [1], [0, 0, 1, 1], [], []>} : vector<8x256xf32>, vector<256x768xf32>, vector<8x768xf32> -> vector<8x768xf32>
    %c8_145 = arith.constant 8 : index
    %c0_146 = arith.constant 0 : index
    %550 = vector.load %arg14[%c8_145, %c0_146] : memref<64x768xf32, #tpu.memory_space<vmem>>, vector<8x384xf32>
    %c48_147 = arith.constant 48 : index
    %c384_148 = arith.constant 384 : index
    %551 = vector.load %arg14[%c48_147, %c384_148] : memref<64x768xf32, #tpu.memory_space<vmem>>, vector<8x384xf32>
    %552 = vector.extract_strided_slice %550 {offsets = [0, 0], sizes = [8, 128], strides = [1, 1]} : vector<8x384xf32> to vector<8x128xf32>
    %553 = vector.extract_strided_slice %549 {offsets = [0, 0], sizes = [8, 128], strides = [1, 1]} : vector<8x768xf32> to vector<8x128xf32>
    %554 = arith.addf %552, %553 : vector<8x128xf32>
    %555 = arith.negf %554 : vector<8x128xf32>
    %556 = math.exp %555 : vector<8x128xf32>
    %cst_149 = arith.constant 1.000000e+00 : f32
    %557 = vector.broadcast %cst_149 : f32 to vector<8x128xf32>
    %558 = arith.addf %557, %556 : vector<8x128xf32>
    %559 = arith.divf %557, %558 : vector<8x128xf32>
    %560 = vector.extract_strided_slice %550 {offsets = [0, 128], sizes = [8, 128], strides = [1, 1]} : vector<8x384xf32> to vector<8x128xf32>
    %561 = vector.extract_strided_slice %549 {offsets = [0, 128], sizes = [8, 128], strides = [1, 1]} : vector<8x768xf32> to vector<8x128xf32>
    %562 = arith.addf %560, %561 : vector<8x128xf32>
    %563 = arith.negf %562 : vector<8x128xf32>
    %564 = math.exp %563 : vector<8x128xf32>
    %cst_150 = arith.constant 1.000000e+00 : f32
    %565 = vector.broadcast %cst_150 : f32 to vector<8x128xf32>
    %566 = arith.addf %565, %564 : vector<8x128xf32>
    %567 = arith.divf %565, %566 : vector<8x128xf32>
    %568 = vector.extract_strided_slice %550 {offsets = [0, 256], sizes = [8, 128], strides = [1, 1]} : vector<8x384xf32> to vector<8x128xf32>
    %569 = vector.extract_strided_slice %549 {offsets = [0, 256], sizes = [8, 128], strides = [1, 1]} : vector<8x768xf32> to vector<8x128xf32>
    %570 = arith.addf %569, %487 : vector<8x128xf32>
    %571 = arith.mulf %559, %570 : vector<8x128xf32>
    %572 = arith.addf %568, %571 : vector<8x128xf32>
    %573 = math.tanh %572 : vector<8x128xf32>
    %574 = vector.extract_strided_slice %548 {offsets = [0, 0], sizes = [8, 128], strides = [1, 1]} : vector<8x256xf32> to vector<8x128xf32>
    %575 = arith.subf %574, %573 : vector<8x128xf32>
    %576 = arith.mulf %567, %575 : vector<8x128xf32>
    %577 = arith.addf %573, %576 : vector<8x128xf32>
    %578 = vector.extract_strided_slice %551 {offsets = [0, 0], sizes = [8, 128], strides = [1, 1]} : vector<8x384xf32> to vector<8x128xf32>
    %579 = vector.extract_strided_slice %549 {offsets = [0, 384], sizes = [8, 128], strides = [1, 1]} : vector<8x768xf32> to vector<8x128xf32>
    %580 = arith.addf %578, %579 : vector<8x128xf32>
    %581 = arith.negf %580 : vector<8x128xf32>
    %582 = math.exp %581 : vector<8x128xf32>
    %cst_151 = arith.constant 1.000000e+00 : f32
    %583 = vector.broadcast %cst_151 : f32 to vector<8x128xf32>
    %584 = arith.addf %583, %582 : vector<8x128xf32>
    %585 = arith.divf %583, %584 : vector<8x128xf32>
    %586 = vector.extract_strided_slice %551 {offsets = [0, 128], sizes = [8, 128], strides = [1, 1]} : vector<8x384xf32> to vector<8x128xf32>
    %587 = vector.extract_strided_slice %549 {offsets = [0, 512], sizes = [8, 128], strides = [1, 1]} : vector<8x768xf32> to vector<8x128xf32>
    %588 = arith.addf %586, %587 : vector<8x128xf32>
    %589 = arith.negf %588 : vector<8x128xf32>
    %590 = math.exp %589 : vector<8x128xf32>
    %cst_152 = arith.constant 1.000000e+00 : f32
    %591 = vector.broadcast %cst_152 : f32 to vector<8x128xf32>
    %592 = arith.addf %591, %590 : vector<8x128xf32>
    %593 = arith.divf %591, %592 : vector<8x128xf32>
    %594 = vector.extract_strided_slice %551 {offsets = [0, 256], sizes = [8, 128], strides = [1, 1]} : vector<8x384xf32> to vector<8x128xf32>
    %595 = vector.extract_strided_slice %549 {offsets = [0, 640], sizes = [8, 128], strides = [1, 1]} : vector<8x768xf32> to vector<8x128xf32>
    %596 = arith.addf %595, %488 : vector<8x128xf32>
    %597 = arith.mulf %585, %596 : vector<8x128xf32>
    %598 = arith.addf %594, %597 : vector<8x128xf32>
    %599 = math.tanh %598 : vector<8x128xf32>
    %600 = vector.extract_strided_slice %548 {offsets = [0, 128], sizes = [8, 128], strides = [1, 1]} : vector<8x256xf32> to vector<8x128xf32>
    %601 = arith.subf %600, %599 : vector<8x128xf32>
    %602 = arith.mulf %593, %601 : vector<8x128xf32>
    %603 = arith.addf %599, %602 : vector<8x128xf32>
    %c8_153 = arith.constant 8 : index
    %c0_154 = arith.constant 0 : index
    %604 = vector.load %arg16[%c8_153, %c0_154] : memref<64x256xf32, #tpu.memory_space<vmem>>, vector<8x128xf32>
    tpu.vector_store %arg16[%c8_153, %c0_154], %577 {strides = array<i32>} : memref<64x256xf32, #tpu.memory_space<vmem>>, vector<8x128xf32>,
    %c48_155 = arith.constant 48 : index
    %c128_156 = arith.constant 128 : index
    %605 = vector.load %arg16[%c48_155, %c128_156] : memref<64x256xf32, #tpu.memory_space<vmem>>, vector<8x128xf32>
    tpu.vector_store %arg16[%c48_155, %c128_156], %603 {strides = array<i32>} : memref<64x256xf32, #tpu.memory_space<vmem>>, vector<8x128xf32>,
    %606 = tpu.concatenate %577, %603 in 1 : vector<8x128xf32>, vector<8x128xf32> -> vector<8x256xf32>
    %cst_157 = arith.constant dense<0.000000e+00> : vector<8x768xf32>
    %607 = tpu.matmul %606, %486, %cst_157 {dimension_numbers = #tpu.dot_dimension_numbers<[1], [0], [0], [1], [0, 0, 1, 1], [], []>} : vector<8x256xf32>, vector<256x768xf32>, vector<8x768xf32> -> vector<8x768xf32>
    %c16_158 = arith.constant 16 : index
    %c0_159 = arith.constant 0 : index
    %608 = vector.load %arg14[%c16_158, %c0_159] : memref<64x768xf32, #tpu.memory_space<vmem>>, vector<8x384xf32>
    %c40_160 = arith.constant 40 : index
    %c384_161 = arith.constant 384 : index
    %609 = vector.load %arg14[%c40_160, %c384_161] : memref<64x768xf32, #tpu.memory_space<vmem>>, vector<8x384xf32>
    %610 = vector.extract_strided_slice %608 {offsets = [0, 0], sizes = [8, 128], strides = [1, 1]} : vector<8x384xf32> to vector<8x128xf32>
    %611 = vector.extract_strided_slice %607 {offsets = [0, 0], sizes = [8, 128], strides = [1, 1]} : vector<8x768xf32> to vector<8x128xf32>
    %612 = arith.addf %610, %611 : vector<8x128xf32>
    %613 = arith.negf %612 : vector<8x128xf32>
    %614 = math.exp %613 : vector<8x128xf32>
    %cst_162 = arith.constant 1.000000e+00 : f32
    %615 = vector.broadcast %cst_162 : f32 to vector<8x128xf32>
    %616 = arith.addf %615, %614 : vector<8x128xf32>
    %617 = arith.divf %615, %616 : vector<8x128xf32>
    %618 = vector.extract_strided_slice %608 {offsets = [0, 128], sizes = [8, 128], strides = [1, 1]} : vector<8x384xf32> to vector<8x128xf32>
    %619 = vector.extract_strided_slice %607 {offsets = [0, 128], sizes = [8, 128], strides = [1, 1]} : vector<8x768xf32> to vector<8x128xf32>
    %620 = arith.addf %618, %619 : vector<8x128xf32>
    %621 = arith.negf %620 : vector<8x128xf32>
    %622 = math.exp %621 : vector<8x128xf32>
    %cst_163 = arith.constant 1.000000e+00 : f32
    %623 = vector.broadcast %cst_163 : f32 to vector<8x128xf32>
    %624 = arith.addf %623, %622 : vector<8x128xf32>
    %625 = arith.divf %623, %624 : vector<8x128xf32>
    %626 = vector.extract_strided_slice %608 {offsets = [0, 256], sizes = [8, 128], strides = [1, 1]} : vector<8x384xf32> to vector<8x128xf32>
    %627 = vector.extract_strided_slice %607 {offsets = [0, 256], sizes = [8, 128], strides = [1, 1]} : vector<8x768xf32> to vector<8x128xf32>
    %628 = arith.addf %627, %487 : vector<8x128xf32>
    %629 = arith.mulf %617, %628 : vector<8x128xf32>
    %630 = arith.addf %626, %629 : vector<8x128xf32>
    %631 = math.tanh %630 : vector<8x128xf32>
    %632 = vector.extract_strided_slice %606 {offsets = [0, 0], sizes = [8, 128], strides = [1, 1]} : vector<8x256xf32> to vector<8x128xf32>
    %633 = arith.subf %632, %631 : vector<8x128xf32>
    %634 = arith.mulf %625, %633 : vector<8x128xf32>
    %635 = arith.addf %631, %634 : vector<8x128xf32>
    %636 = vector.extract_strided_slice %609 {offsets = [0, 0], sizes = [8, 128], strides = [1, 1]} : vector<8x384xf32> to vector<8x128xf32>
    %637 = vector.extract_strided_slice %607 {offsets = [0, 384], sizes = [8, 128], strides = [1, 1]} : vector<8x768xf32> to vector<8x128xf32>
    %638 = arith.addf %636, %637 : vector<8x128xf32>
    %639 = arith.negf %638 : vector<8x128xf32>
    %640 = math.exp %639 : vector<8x128xf32>
    %cst_164 = arith.constant 1.000000e+00 : f32
    %641 = vector.broadcast %cst_164 : f32 to vector<8x128xf32>
    %642 = arith.addf %641, %640 : vector<8x128xf32>
    %643 = arith.divf %641, %642 : vector<8x128xf32>
    %644 = vector.extract_strided_slice %609 {offsets = [0, 128], sizes = [8, 128], strides = [1, 1]} : vector<8x384xf32> to vector<8x128xf32>
    %645 = vector.extract_strided_slice %607 {offsets = [0, 512], sizes = [8, 128], strides = [1, 1]} : vector<8x768xf32> to vector<8x128xf32>
    %646 = arith.addf %644, %645 : vector<8x128xf32>
    %647 = arith.negf %646 : vector<8x128xf32>
    %648 = math.exp %647 : vector<8x128xf32>
    %cst_165 = arith.constant 1.000000e+00 : f32
    %649 = vector.broadcast %cst_165 : f32 to vector<8x128xf32>
    %650 = arith.addf %649, %648 : vector<8x128xf32>
    %651 = arith.divf %649, %650 : vector<8x128xf32>
    %652 = vector.extract_strided_slice %609 {offsets = [0, 256], sizes = [8, 128], strides = [1, 1]} : vector<8x384xf32> to vector<8x128xf32>
    %653 = vector.extract_strided_slice %607 {offsets = [0, 640], sizes = [8, 128], strides = [1, 1]} : vector<8x768xf32> to vector<8x128xf32>
    %654 = arith.addf %653, %488 : vector<8x128xf32>
    %655 = arith.mulf %643, %654 : vector<8x128xf32>
    %656 = arith.addf %652, %655 : vector<8x128xf32>
    %657 = math.tanh %656 : vector<8x128xf32>
    %658 = vector.extract_strided_slice %606 {offsets = [0, 128], sizes = [8, 128], strides = [1, 1]} : vector<8x256xf32> to vector<8x128xf32>
    %659 = arith.subf %658, %657 : vector<8x128xf32>
    %660 = arith.mulf %651, %659 : vector<8x128xf32>
    %661 = arith.addf %657, %660 : vector<8x128xf32>
    %c16_166 = arith.constant 16 : index
    %c0_167 = arith.constant 0 : index
    %662 = vector.load %arg16[%c16_166, %c0_167] : memref<64x256xf32, #tpu.memory_space<vmem>>, vector<8x128xf32>
    tpu.vector_store %arg16[%c16_166, %c0_167], %635 {strides = array<i32>} : memref<64x256xf32, #tpu.memory_space<vmem>>, vector<8x128xf32>,
    %c40_168 = arith.constant 40 : index
    %c128_169 = arith.constant 128 : index
    %663 = vector.load %arg16[%c40_168, %c128_169] : memref<64x256xf32, #tpu.memory_space<vmem>>, vector<8x128xf32>
    tpu.vector_store %arg16[%c40_168, %c128_169], %661 {strides = array<i32>} : memref<64x256xf32, #tpu.memory_space<vmem>>, vector<8x128xf32>,
    %664 = tpu.concatenate %635, %661 in 1 : vector<8x128xf32>, vector<8x128xf32> -> vector<8x256xf32>
    %cst_170 = arith.constant dense<0.000000e+00> : vector<8x768xf32>
    %665 = tpu.matmul %664, %486, %cst_170 {dimension_numbers = #tpu.dot_dimension_numbers<[1], [0], [0], [1], [0, 0, 1, 1], [], []>} : vector<8x256xf32>, vector<256x768xf32>, vector<8x768xf32> -> vector<8x768xf32>
    %c24_171 = arith.constant 24 : index
    %c0_172 = arith.constant 0 : index
    %666 = vector.load %arg14[%c24_171, %c0_172] : memref<64x768xf32, #tpu.memory_space<vmem>>, vector<8x384xf32>
    %c32_173 = arith.constant 32 : index
    %c384_174 = arith.constant 384 : index
    %667 = vector.load %arg14[%c32_173, %c384_174] : memref<64x768xf32, #tpu.memory_space<vmem>>, vector<8x384xf32>
    %668 = vector.extract_strided_slice %666 {offsets = [0, 0], sizes = [8, 128], strides = [1, 1]} : vector<8x384xf32> to vector<8x128xf32>
    %669 = vector.extract_strided_slice %665 {offsets = [0, 0], sizes = [8, 128], strides = [1, 1]} : vector<8x768xf32> to vector<8x128xf32>
    %670 = arith.addf %668, %669 : vector<8x128xf32>
    %671 = arith.negf %670 : vector<8x128xf32>
    %672 = math.exp %671 : vector<8x128xf32>
    %cst_175 = arith.constant 1.000000e+00 : f32
    %673 = vector.broadcast %cst_175 : f32 to vector<8x128xf32>
    %674 = arith.addf %673, %672 : vector<8x128xf32>
    %675 = arith.divf %673, %674 : vector<8x128xf32>
    %676 = vector.extract_strided_slice %666 {offsets = [0, 128], sizes = [8, 128], strides = [1, 1]} : vector<8x384xf32> to vector<8x128xf32>
    %677 = vector.extract_strided_slice %665 {offsets = [0, 128], sizes = [8, 128], strides = [1, 1]} : vector<8x768xf32> to vector<8x128xf32>
    %678 = arith.addf %676, %677 : vector<8x128xf32>
    %679 = arith.negf %678 : vector<8x128xf32>
    %680 = math.exp %679 : vector<8x128xf32>
    %cst_176 = arith.constant 1.000000e+00 : f32
    %681 = vector.broadcast %cst_176 : f32 to vector<8x128xf32>
    %682 = arith.addf %681, %680 : vector<8x128xf32>
    %683 = arith.divf %681, %682 : vector<8x128xf32>
    %684 = vector.extract_strided_slice %666 {offsets = [0, 256], sizes = [8, 128], strides = [1, 1]} : vector<8x384xf32> to vector<8x128xf32>
    %685 = vector.extract_strided_slice %665 {offsets = [0, 256], sizes = [8, 128], strides = [1, 1]} : vector<8x768xf32> to vector<8x128xf32>
    %686 = arith.addf %685, %487 : vector<8x128xf32>
    %687 = arith.mulf %675, %686 : vector<8x128xf32>
    %688 = arith.addf %684, %687 : vector<8x128xf32>
    %689 = math.tanh %688 : vector<8x128xf32>
    %690 = vector.extract_strided_slice %664 {offsets = [0, 0], sizes = [8, 128], strides = [1, 1]} : vector<8x256xf32> to vector<8x128xf32>
    %691 = arith.subf %690, %689 : vector<8x128xf32>
    %692 = arith.mulf %683, %691 : vector<8x128xf32>
    %693 = arith.addf %689, %692 : vector<8x128xf32>
    %694 = vector.extract_strided_slice %667 {offsets = [0, 0], sizes = [8, 128], strides = [1, 1]} : vector<8x384xf32> to vector<8x128xf32>
    %695 = vector.extract_strided_slice %665 {offsets = [0, 384], sizes = [8, 128], strides = [1, 1]} : vector<8x768xf32> to vector<8x128xf32>
    %696 = arith.addf %694, %695 : vector<8x128xf32>
    %697 = arith.negf %696 : vector<8x128xf32>
    %698 = math.exp %697 : vector<8x128xf32>
    %cst_177 = arith.constant 1.000000e+00 : f32
    %699 = vector.broadcast %cst_177 : f32 to vector<8x128xf32>
    %700 = arith.addf %699, %698 : vector<8x128xf32>
    %701 = arith.divf %699, %700 : vector<8x128xf32>
    %702 = vector.extract_strided_slice %667 {offsets = [0, 128], sizes = [8, 128], strides = [1, 1]} : vector<8x384xf32> to vector<8x128xf32>
    %703 = vector.extract_strided_slice %665 {offsets = [0, 512], sizes = [8, 128], strides = [1, 1]} : vector<8x768xf32> to vector<8x128xf32>
    %704 = arith.addf %702, %703 : vector<8x128xf32>
    %705 = arith.negf %704 : vector<8x128xf32>
    %706 = math.exp %705 : vector<8x128xf32>
    %cst_178 = arith.constant 1.000000e+00 : f32
    %707 = vector.broadcast %cst_178 : f32 to vector<8x128xf32>
    %708 = arith.addf %707, %706 : vector<8x128xf32>
    %709 = arith.divf %707, %708 : vector<8x128xf32>
    %710 = vector.extract_strided_slice %667 {offsets = [0, 256], sizes = [8, 128], strides = [1, 1]} : vector<8x384xf32> to vector<8x128xf32>
    %711 = vector.extract_strided_slice %665 {offsets = [0, 640], sizes = [8, 128], strides = [1, 1]} : vector<8x768xf32> to vector<8x128xf32>
    %712 = arith.addf %711, %488 : vector<8x128xf32>
    %713 = arith.mulf %701, %712 : vector<8x128xf32>
    %714 = arith.addf %710, %713 : vector<8x128xf32>
    %715 = math.tanh %714 : vector<8x128xf32>
    %716 = vector.extract_strided_slice %664 {offsets = [0, 128], sizes = [8, 128], strides = [1, 1]} : vector<8x256xf32> to vector<8x128xf32>
    %717 = arith.subf %716, %715 : vector<8x128xf32>
    %718 = arith.mulf %709, %717 : vector<8x128xf32>
    %719 = arith.addf %715, %718 : vector<8x128xf32>
    %c24_179 = arith.constant 24 : index
    %c0_180 = arith.constant 0 : index
    %720 = vector.load %arg16[%c24_179, %c0_180] : memref<64x256xf32, #tpu.memory_space<vmem>>, vector<8x128xf32>
    tpu.vector_store %arg16[%c24_179, %c0_180], %693 {strides = array<i32>} : memref<64x256xf32, #tpu.memory_space<vmem>>, vector<8x128xf32>,
    %c32_181 = arith.constant 32 : index
    %c128_182 = arith.constant 128 : index
    %721 = vector.load %arg16[%c32_181, %c128_182] : memref<64x256xf32, #tpu.memory_space<vmem>>, vector<8x128xf32>
    tpu.vector_store %arg16[%c32_181, %c128_182], %719 {strides = array<i32>} : memref<64x256xf32, #tpu.memory_space<vmem>>, vector<8x128xf32>,
    %722 = tpu.concatenate %693, %719 in 1 : vector<8x128xf32>, vector<8x128xf32> -> vector<8x256xf32>
    %cst_183 = arith.constant dense<0.000000e+00> : vector<8x768xf32>
    %723 = tpu.matmul %722, %486, %cst_183 {dimension_numbers = #tpu.dot_dimension_numbers<[1], [0], [0], [1], [0, 0, 1, 1], [], []>} : vector<8x256xf32>, vector<256x768xf32>, vector<8x768xf32> -> vector<8x768xf32>
    %c32_184 = arith.constant 32 : index
    %c0_185 = arith.constant 0 : index
    %724 = vector.load %arg14[%c32_184, %c0_185] : memref<64x768xf32, #tpu.memory_space<vmem>>, vector<8x384xf32>
    %c24_186 = arith.constant 24 : index
    %c384_187 = arith.constant 384 : index
    %725 = vector.load %arg14[%c24_186, %c384_187] : memref<64x768xf32, #tpu.memory_space<vmem>>, vector<8x384xf32>
    %726 = vector.extract_strided_slice %724 {offsets = [0, 0], sizes = [8, 128], strides = [1, 1]} : vector<8x384xf32> to vector<8x128xf32>
    %727 = vector.extract_strided_slice %723 {offsets = [0, 0], sizes = [8, 128], strides = [1, 1]} : vector<8x768xf32> to vector<8x128xf32>
    %728 = arith.addf %726, %727 : vector<8x128xf32>
    %729 = arith.negf %728 : vector<8x128xf32>
    %730 = math.exp %729 : vector<8x128xf32>
    %cst_188 = arith.constant 1.000000e+00 : f32
    %731 = vector.broadcast %cst_188 : f32 to vector<8x128xf32>
    %732 = arith.addf %731, %730 : vector<8x128xf32>
    %733 = arith.divf %731, %732 : vector<8x128xf32>
    %734 = vector.extract_strided_slice %724 {offsets = [0, 128], sizes = [8, 128], strides = [1, 1]} : vector<8x384xf32> to vector<8x128xf32>
    %735 = vector.extract_strided_slice %723 {offsets = [0, 128], sizes = [8, 128], strides = [1, 1]} : vector<8x768xf32> to vector<8x128xf32>
    %736 = arith.addf %734, %735 : vector<8x128xf32>
    %737 = arith.negf %736 : vector<8x128xf32>
    %738 = math.exp %737 : vector<8x128xf32>
    %cst_189 = arith.constant 1.000000e+00 : f32
    %739 = vector.broadcast %cst_189 : f32 to vector<8x128xf32>
    %740 = arith.addf %739, %738 : vector<8x128xf32>
    %741 = arith.divf %739, %740 : vector<8x128xf32>
    %742 = vector.extract_strided_slice %724 {offsets = [0, 256], sizes = [8, 128], strides = [1, 1]} : vector<8x384xf32> to vector<8x128xf32>
    %743 = vector.extract_strided_slice %723 {offsets = [0, 256], sizes = [8, 128], strides = [1, 1]} : vector<8x768xf32> to vector<8x128xf32>
    %744 = arith.addf %743, %487 : vector<8x128xf32>
    %745 = arith.mulf %733, %744 : vector<8x128xf32>
    %746 = arith.addf %742, %745 : vector<8x128xf32>
    %747 = math.tanh %746 : vector<8x128xf32>
    %748 = vector.extract_strided_slice %722 {offsets = [0, 0], sizes = [8, 128], strides = [1, 1]} : vector<8x256xf32> to vector<8x128xf32>
    %749 = arith.subf %748, %747 : vector<8x128xf32>
    %750 = arith.mulf %741, %749 : vector<8x128xf32>
    %751 = arith.addf %747, %750 : vector<8x128xf32>
    %752 = vector.extract_strided_slice %725 {offsets = [0, 0], sizes = [8, 128], strides = [1, 1]} : vector<8x384xf32> to vector<8x128xf32>
    %753 = vector.extract_strided_slice %723 {offsets = [0, 384], sizes = [8, 128], strides = [1, 1]} : vector<8x768xf32> to vector<8x128xf32>
    %754 = arith.addf %752, %753 : vector<8x128xf32>
    %755 = arith.negf %754 : vector<8x128xf32>
    %756 = math.exp %755 : vector<8x128xf32>
    %cst_190 = arith.constant 1.000000e+00 : f32
    %757 = vector.broadcast %cst_190 : f32 to vector<8x128xf32>
    %758 = arith.addf %757, %756 : vector<8x128xf32>
    %759 = arith.divf %757, %758 : vector<8x128xf32>
    %760 = vector.extract_strided_slice %725 {offsets = [0, 128], sizes = [8, 128], strides = [1, 1]} : vector<8x384xf32> to vector<8x128xf32>
    %761 = vector.extract_strided_slice %723 {offsets = [0, 512], sizes = [8, 128], strides = [1, 1]} : vector<8x768xf32> to vector<8x128xf32>
    %762 = arith.addf %760, %761 : vector<8x128xf32>
    %763 = arith.negf %762 : vector<8x128xf32>
    %764 = math.exp %763 : vector<8x128xf32>
    %cst_191 = arith.constant 1.000000e+00 : f32
    %765 = vector.broadcast %cst_191 : f32 to vector<8x128xf32>
    %766 = arith.addf %765, %764 : vector<8x128xf32>
    %767 = arith.divf %765, %766 : vector<8x128xf32>
    %768 = vector.extract_strided_slice %725 {offsets = [0, 256], sizes = [8, 128], strides = [1, 1]} : vector<8x384xf32> to vector<8x128xf32>
    %769 = vector.extract_strided_slice %723 {offsets = [0, 640], sizes = [8, 128], strides = [1, 1]} : vector<8x768xf32> to vector<8x128xf32>
    %770 = arith.addf %769, %488 : vector<8x128xf32>
    %771 = arith.mulf %759, %770 : vector<8x128xf32>
    %772 = arith.addf %768, %771 : vector<8x128xf32>
    %773 = math.tanh %772 : vector<8x128xf32>
    %774 = vector.extract_strided_slice %722 {offsets = [0, 128], sizes = [8, 128], strides = [1, 1]} : vector<8x256xf32> to vector<8x128xf32>
    %775 = arith.subf %774, %773 : vector<8x128xf32>
    %776 = arith.mulf %767, %775 : vector<8x128xf32>
    %777 = arith.addf %773, %776 : vector<8x128xf32>
    %c32_192 = arith.constant 32 : index
    %c0_193 = arith.constant 0 : index
    %778 = vector.load %arg16[%c32_192, %c0_193] : memref<64x256xf32, #tpu.memory_space<vmem>>, vector<8x128xf32>
    tpu.vector_store %arg16[%c32_192, %c0_193], %751 {strides = array<i32>} : memref<64x256xf32, #tpu.memory_space<vmem>>, vector<8x128xf32>,
    %c24_194 = arith.constant 24 : index
    %c128_195 = arith.constant 128 : index
    %779 = vector.load %arg16[%c24_194, %c128_195] : memref<64x256xf32, #tpu.memory_space<vmem>>, vector<8x128xf32>
    tpu.vector_store %arg16[%c24_194, %c128_195], %777 {strides = array<i32>} : memref<64x256xf32, #tpu.memory_space<vmem>>, vector<8x128xf32>,
    %780 = tpu.concatenate %751, %777 in 1 : vector<8x128xf32>, vector<8x128xf32> -> vector<8x256xf32>
    %cst_196 = arith.constant dense<0.000000e+00> : vector<8x768xf32>
    %781 = tpu.matmul %780, %486, %cst_196 {dimension_numbers = #tpu.dot_dimension_numbers<[1], [0], [0], [1], [0, 0, 1, 1], [], []>} : vector<8x256xf32>, vector<256x768xf32>, vector<8x768xf32> -> vector<8x768xf32>
    %c40_197 = arith.constant 40 : index
    %c0_198 = arith.constant 0 : index
    %782 = vector.load %arg14[%c40_197, %c0_198] : memref<64x768xf32, #tpu.memory_space<vmem>>, vector<8x384xf32>
    %c16_199 = arith.constant 16 : index
    %c384_200 = arith.constant 384 : index
    %783 = vector.load %arg14[%c16_199, %c384_200] : memref<64x768xf32, #tpu.memory_space<vmem>>, vector<8x384xf32>
    %784 = vector.extract_strided_slice %782 {offsets = [0, 0], sizes = [8, 128], strides = [1, 1]} : vector<8x384xf32> to vector<8x128xf32>
    %785 = vector.extract_strided_slice %781 {offsets = [0, 0], sizes = [8, 128], strides = [1, 1]} : vector<8x768xf32> to vector<8x128xf32>
    %786 = arith.addf %784, %785 : vector<8x128xf32>
    %787 = arith.negf %786 : vector<8x128xf32>
    %788 = math.exp %787 : vector<8x128xf32>
    %cst_201 = arith.constant 1.000000e+00 : f32
    %789 = vector.broadcast %cst_201 : f32 to vector<8x128xf32>
    %790 = arith.addf %789, %788 : vector<8x128xf32>
    %791 = arith.divf %789, %790 : vector<8x128xf32>
    %792 = vector.extract_strided_slice %782 {offsets = [0, 128], sizes = [8, 128], strides = [1, 1]} : vector<8x384xf32> to vector<8x128xf32>
    %793 = vector.extract_strided_slice %781 {offsets = [0, 128], sizes = [8, 128], strides = [1, 1]} : vector<8x768xf32> to vector<8x128xf32>
    %794 = arith.addf %792, %793 : vector<8x128xf32>
    %795 = arith.negf %794 : vector<8x128xf32>
    %796 = math.exp %795 : vector<8x128xf32>
    %cst_202 = arith.constant 1.000000e+00 : f32
    %797 = vector.broadcast %cst_202 : f32 to vector<8x128xf32>
    %798 = arith.addf %797, %796 : vector<8x128xf32>
    %799 = arith.divf %797, %798 : vector<8x128xf32>
    %800 = vector.extract_strided_slice %782 {offsets = [0, 256], sizes = [8, 128], strides = [1, 1]} : vector<8x384xf32> to vector<8x128xf32>
    %801 = vector.extract_strided_slice %781 {offsets = [0, 256], sizes = [8, 128], strides = [1, 1]} : vector<8x768xf32> to vector<8x128xf32>
    %802 = arith.addf %801, %487 : vector<8x128xf32>
    %803 = arith.mulf %791, %802 : vector<8x128xf32>
    %804 = arith.addf %800, %803 : vector<8x128xf32>
    %805 = math.tanh %804 : vector<8x128xf32>
    %806 = vector.extract_strided_slice %780 {offsets = [0, 0], sizes = [8, 128], strides = [1, 1]} : vector<8x256xf32> to vector<8x128xf32>
    %807 = arith.subf %806, %805 : vector<8x128xf32>
    %808 = arith.mulf %799, %807 : vector<8x128xf32>
    %809 = arith.addf %805, %808 : vector<8x128xf32>
    %810 = vector.extract_strided_slice %783 {offsets = [0, 0], sizes = [8, 128], strides = [1, 1]} : vector<8x384xf32> to vector<8x128xf32>
    %811 = vector.extract_strided_slice %781 {offsets = [0, 384], sizes = [8, 128], strides = [1, 1]} : vector<8x768xf32> to vector<8x128xf32>
    %812 = arith.addf %810, %811 : vector<8x128xf32>
    %813 = arith.negf %812 : vector<8x128xf32>
    %814 = math.exp %813 : vector<8x128xf32>
    %cst_203 = arith.constant 1.000000e+00 : f32
    %815 = vector.broadcast %cst_203 : f32 to vector<8x128xf32>
    %816 = arith.addf %815, %814 : vector<8x128xf32>
    %817 = arith.divf %815, %816 : vector<8x128xf32>
    %818 = vector.extract_strided_slice %783 {offsets = [0, 128], sizes = [8, 128], strides = [1, 1]} : vector<8x384xf32> to vector<8x128xf32>
    %819 = vector.extract_strided_slice %781 {offsets = [0, 512], sizes = [8, 128], strides = [1, 1]} : vector<8x768xf32> to vector<8x128xf32>
    %820 = arith.addf %818, %819 : vector<8x128xf32>
    %821 = arith.negf %820 : vector<8x128xf32>
    %822 = math.exp %821 : vector<8x128xf32>
    %cst_204 = arith.constant 1.000000e+00 : f32
    %823 = vector.broadcast %cst_204 : f32 to vector<8x128xf32>
    %824 = arith.addf %823, %822 : vector<8x128xf32>
    %825 = arith.divf %823, %824 : vector<8x128xf32>
    %826 = vector.extract_strided_slice %783 {offsets = [0, 256], sizes = [8, 128], strides = [1, 1]} : vector<8x384xf32> to vector<8x128xf32>
    %827 = vector.extract_strided_slice %781 {offsets = [0, 640], sizes = [8, 128], strides = [1, 1]} : vector<8x768xf32> to vector<8x128xf32>
    %828 = arith.addf %827, %488 : vector<8x128xf32>
    %829 = arith.mulf %817, %828 : vector<8x128xf32>
    %830 = arith.addf %826, %829 : vector<8x128xf32>
    %831 = math.tanh %830 : vector<8x128xf32>
    %832 = vector.extract_strided_slice %780 {offsets = [0, 128], sizes = [8, 128], strides = [1, 1]} : vector<8x256xf32> to vector<8x128xf32>
    %833 = arith.subf %832, %831 : vector<8x128xf32>
    %834 = arith.mulf %825, %833 : vector<8x128xf32>
    %835 = arith.addf %831, %834 : vector<8x128xf32>
    %c40_205 = arith.constant 40 : index
    %c0_206 = arith.constant 0 : index
    %836 = vector.load %arg16[%c40_205, %c0_206] : memref<64x256xf32, #tpu.memory_space<vmem>>, vector<8x128xf32>
    tpu.vector_store %arg16[%c40_205, %c0_206], %809 {strides = array<i32>} : memref<64x256xf32, #tpu.memory_space<vmem>>, vector<8x128xf32>,
    %c16_207 = arith.constant 16 : index
    %c128_208 = arith.constant 128 : index
    %837 = vector.load %arg16[%c16_207, %c128_208] : memref<64x256xf32, #tpu.memory_space<vmem>>, vector<8x128xf32>
    tpu.vector_store %arg16[%c16_207, %c128_208], %835 {strides = array<i32>} : memref<64x256xf32, #tpu.memory_space<vmem>>, vector<8x128xf32>,
    %838 = tpu.concatenate %809, %835 in 1 : vector<8x128xf32>, vector<8x128xf32> -> vector<8x256xf32>
    %cst_209 = arith.constant dense<0.000000e+00> : vector<8x768xf32>
    %839 = tpu.matmul %838, %486, %cst_209 {dimension_numbers = #tpu.dot_dimension_numbers<[1], [0], [0], [1], [0, 0, 1, 1], [], []>} : vector<8x256xf32>, vector<256x768xf32>, vector<8x768xf32> -> vector<8x768xf32>
    %c48_210 = arith.constant 48 : index
    %c0_211 = arith.constant 0 : index
    %840 = vector.load %arg14[%c48_210, %c0_211] : memref<64x768xf32, #tpu.memory_space<vmem>>, vector<8x384xf32>
    %c8_212 = arith.constant 8 : index
    %c384_213 = arith.constant 384 : index
    %841 = vector.load %arg14[%c8_212, %c384_213] : memref<64x768xf32, #tpu.memory_space<vmem>>, vector<8x384xf32>
    %842 = vector.extract_strided_slice %840 {offsets = [0, 0], sizes = [8, 128], strides = [1, 1]} : vector<8x384xf32> to vector<8x128xf32>
    %843 = vector.extract_strided_slice %839 {offsets = [0, 0], sizes = [8, 128], strides = [1, 1]} : vector<8x768xf32> to vector<8x128xf32>
    %844 = arith.addf %842, %843 : vector<8x128xf32>
    %845 = arith.negf %844 : vector<8x128xf32>
    %846 = math.exp %845 : vector<8x128xf32>
    %cst_214 = arith.constant 1.000000e+00 : f32
    %847 = vector.broadcast %cst_214 : f32 to vector<8x128xf32>
    %848 = arith.addf %847, %846 : vector<8x128xf32>
    %849 = arith.divf %847, %848 : vector<8x128xf32>
    %850 = vector.extract_strided_slice %840 {offsets = [0, 128], sizes = [8, 128], strides = [1, 1]} : vector<8x384xf32> to vector<8x128xf32>
    %851 = vector.extract_strided_slice %839 {offsets = [0, 128], sizes = [8, 128], strides = [1, 1]} : vector<8x768xf32> to vector<8x128xf32>
    %852 = arith.addf %850, %851 : vector<8x128xf32>
    %853 = arith.negf %852 : vector<8x128xf32>
    %854 = math.exp %853 : vector<8x128xf32>
    %cst_215 = arith.constant 1.000000e+00 : f32
    %855 = vector.broadcast %cst_215 : f32 to vector<8x128xf32>
    %856 = arith.addf %855, %854 : vector<8x128xf32>
    %857 = arith.divf %855, %856 : vector<8x128xf32>
    %858 = vector.extract_strided_slice %840 {offsets = [0, 256], sizes = [8, 128], strides = [1, 1]} : vector<8x384xf32> to vector<8x128xf32>
    %859 = vector.extract_strided_slice %839 {offsets = [0, 256], sizes = [8, 128], strides = [1, 1]} : vector<8x768xf32> to vector<8x128xf32>
    %860 = arith.addf %859, %487 : vector<8x128xf32>
    %861 = arith.mulf %849, %860 : vector<8x128xf32>
    %862 = arith.addf %858, %861 : vector<8x128xf32>
    %863 = math.tanh %862 : vector<8x128xf32>
    %864 = vector.extract_strided_slice %838 {offsets = [0, 0], sizes = [8, 128], strides = [1, 1]} : vector<8x256xf32> to vector<8x128xf32>
    %865 = arith.subf %864, %863 : vector<8x128xf32>
    %866 = arith.mulf %857, %865 : vector<8x128xf32>
    %867 = arith.addf %863, %866 : vector<8x128xf32>
    %868 = vector.extract_strided_slice %841 {offsets = [0, 0], sizes = [8, 128], strides = [1, 1]} : vector<8x384xf32> to vector<8x128xf32>
    %869 = vector.extract_strided_slice %839 {offsets = [0, 384], sizes = [8, 128], strides = [1, 1]} : vector<8x768xf32> to vector<8x128xf32>
    %870 = arith.addf %868, %869 : vector<8x128xf32>
    %871 = arith.negf %870 : vector<8x128xf32>
    %872 = math.exp %871 : vector<8x128xf32>
    %cst_216 = arith.constant 1.000000e+00 : f32
    %873 = vector.broadcast %cst_216 : f32 to vector<8x128xf32>
    %874 = arith.addf %873, %872 : vector<8x128xf32>
    %875 = arith.divf %873, %874 : vector<8x128xf32>
    %876 = vector.extract_strided_slice %841 {offsets = [0, 128], sizes = [8, 128], strides = [1, 1]} : vector<8x384xf32> to vector<8x128xf32>
    %877 = vector.extract_strided_slice %839 {offsets = [0, 512], sizes = [8, 128], strides = [1, 1]} : vector<8x768xf32> to vector<8x128xf32>
    %878 = arith.addf %876, %877 : vector<8x128xf32>
    %879 = arith.negf %878 : vector<8x128xf32>
    %880 = math.exp %879 : vector<8x128xf32>
    %cst_217 = arith.constant 1.000000e+00 : f32
    %881 = vector.broadcast %cst_217 : f32 to vector<8x128xf32>
    %882 = arith.addf %881, %880 : vector<8x128xf32>
    %883 = arith.divf %881, %882 : vector<8x128xf32>
    %884 = vector.extract_strided_slice %841 {offsets = [0, 256], sizes = [8, 128], strides = [1, 1]} : vector<8x384xf32> to vector<8x128xf32>
    %885 = vector.extract_strided_slice %839 {offsets = [0, 640], sizes = [8, 128], strides = [1, 1]} : vector<8x768xf32> to vector<8x128xf32>
    %886 = arith.addf %885, %488 : vector<8x128xf32>
    %887 = arith.mulf %875, %886 : vector<8x128xf32>
    %888 = arith.addf %884, %887 : vector<8x128xf32>
    %889 = math.tanh %888 : vector<8x128xf32>
    %890 = vector.extract_strided_slice %838 {offsets = [0, 128], sizes = [8, 128], strides = [1, 1]} : vector<8x256xf32> to vector<8x128xf32>
    %891 = arith.subf %890, %889 : vector<8x128xf32>
    %892 = arith.mulf %883, %891 : vector<8x128xf32>
    %893 = arith.addf %889, %892 : vector<8x128xf32>
    %c48_218 = arith.constant 48 : index
    %c0_219 = arith.constant 0 : index
    %894 = vector.load %arg16[%c48_218, %c0_219] : memref<64x256xf32, #tpu.memory_space<vmem>>, vector<8x128xf32>
    tpu.vector_store %arg16[%c48_218, %c0_219], %867 {strides = array<i32>} : memref<64x256xf32, #tpu.memory_space<vmem>>, vector<8x128xf32>,
    %c8_220 = arith.constant 8 : index
    %c128_221 = arith.constant 128 : index
    %895 = vector.load %arg16[%c8_220, %c128_221] : memref<64x256xf32, #tpu.memory_space<vmem>>, vector<8x128xf32>
    tpu.vector_store %arg16[%c8_220, %c128_221], %893 {strides = array<i32>} : memref<64x256xf32, #tpu.memory_space<vmem>>, vector<8x128xf32>,
    %896 = tpu.concatenate %867, %893 in 1 : vector<8x128xf32>, vector<8x128xf32> -> vector<8x256xf32>
    %cst_222 = arith.constant dense<0.000000e+00> : vector<8x768xf32>
    %897 = tpu.matmul %896, %486, %cst_222 {dimension_numbers = #tpu.dot_dimension_numbers<[1], [0], [0], [1], [0, 0, 1, 1], [], []>} : vector<8x256xf32>, vector<256x768xf32>, vector<8x768xf32> -> vector<8x768xf32>
    %c56_223 = arith.constant 56 : index
    %c0_224 = arith.constant 0 : index
    %898 = vector.load %arg14[%c56_223, %c0_224] : memref<64x768xf32, #tpu.memory_space<vmem>>, vector<8x384xf32>
    %c0_225 = arith.constant 0 : index
    %c384_226 = arith.constant 384 : index
    %899 = vector.load %arg14[%c0_225, %c384_226] : memref<64x768xf32, #tpu.memory_space<vmem>>, vector<8x384xf32>
    %900 = vector.extract_strided_slice %898 {offsets = [0, 0], sizes = [8, 128], strides = [1, 1]} : vector<8x384xf32> to vector<8x128xf32>
    %901 = vector.extract_strided_slice %897 {offsets = [0, 0], sizes = [8, 128], strides = [1, 1]} : vector<8x768xf32> to vector<8x128xf32>
    %902 = arith.addf %900, %901 : vector<8x128xf32>
    %903 = arith.negf %902 : vector<8x128xf32>
    %904 = math.exp %903 : vector<8x128xf32>
    %cst_227 = arith.constant 1.000000e+00 : f32
    %905 = vector.broadcast %cst_227 : f32 to vector<8x128xf32>
    %906 = arith.addf %905, %904 : vector<8x128xf32>
    %907 = arith.divf %905, %906 : vector<8x128xf32>
    %908 = vector.extract_strided_slice %898 {offsets = [0, 128], sizes = [8, 128], strides = [1, 1]} : vector<8x384xf32> to vector<8x128xf32>
    %909 = vector.extract_strided_slice %897 {offsets = [0, 128], sizes = [8, 128], strides = [1, 1]} : vector<8x768xf32> to vector<8x128xf32>
    %910 = arith.addf %908, %909 : vector<8x128xf32>
    %911 = arith.negf %910 : vector<8x128xf32>
    %912 = math.exp %911 : vector<8x128xf32>
    %cst_228 = arith.constant 1.000000e+00 : f32
    %913 = vector.broadcast %cst_228 : f32 to vector<8x128xf32>
    %914 = arith.addf %913, %912 : vector<8x128xf32>
    %915 = arith.divf %913, %914 : vector<8x128xf32>
    %916 = vector.extract_strided_slice %898 {offsets = [0, 256], sizes = [8, 128], strides = [1, 1]} : vector<8x384xf32> to vector<8x128xf32>
    %917 = vector.extract_strided_slice %897 {offsets = [0, 256], sizes = [8, 128], strides = [1, 1]} : vector<8x768xf32> to vector<8x128xf32>
    %918 = arith.addf %917, %487 : vector<8x128xf32>
    %919 = arith.mulf %907, %918 : vector<8x128xf32>
    %920 = arith.addf %916, %919 : vector<8x128xf32>
    %921 = math.tanh %920 : vector<8x128xf32>
    %922 = vector.extract_strided_slice %896 {offsets = [0, 0], sizes = [8, 128], strides = [1, 1]} : vector<8x256xf32> to vector<8x128xf32>
    %923 = arith.subf %922, %921 : vector<8x128xf32>
    %924 = arith.mulf %915, %923 : vector<8x128xf32>
    %925 = arith.addf %921, %924 : vector<8x128xf32>
    %926 = vector.extract_strided_slice %899 {offsets = [0, 0], sizes = [8, 128], strides = [1, 1]} : vector<8x384xf32> to vector<8x128xf32>
    %927 = vector.extract_strided_slice %897 {offsets = [0, 384], sizes = [8, 128], strides = [1, 1]} : vector<8x768xf32> to vector<8x128xf32>
    %928 = arith.addf %926, %927 : vector<8x128xf32>
    %929 = arith.negf %928 : vector<8x128xf32>
    %930 = math.exp %929 : vector<8x128xf32>
    %cst_229 = arith.constant 1.000000e+00 : f32
    %931 = vector.broadcast %cst_229 : f32 to vector<8x128xf32>
    %932 = arith.addf %931, %930 : vector<8x128xf32>
    %933 = arith.divf %931, %932 : vector<8x128xf32>
    %934 = vector.extract_strided_slice %899 {offsets = [0, 128], sizes = [8, 128], strides = [1, 1]} : vector<8x384xf32> to vector<8x128xf32>
    %935 = vector.extract_strided_slice %897 {offsets = [0, 512], sizes = [8, 128], strides = [1, 1]} : vector<8x768xf32> to vector<8x128xf32>
    %936 = arith.addf %934, %935 : vector<8x128xf32>
    %937 = arith.negf %936 : vector<8x128xf32>
    %938 = math.exp %937 : vector<8x128xf32>
    %cst_230 = arith.constant 1.000000e+00 : f32
    %939 = vector.broadcast %cst_230 : f32 to vector<8x128xf32>
    %940 = arith.addf %939, %938 : vector<8x128xf32>
    %941 = arith.divf %939, %940 : vector<8x128xf32>
    %942 = vector.extract_strided_slice %899 {offsets = [0, 256], sizes = [8, 128], strides = [1, 1]} : vector<8x384xf32> to vector<8x128xf32>
    %943 = vector.extract_strided_slice %897 {offsets = [0, 640], sizes = [8, 128], strides = [1, 1]} : vector<8x768xf32> to vector<8x128xf32>
    %944 = arith.addf %943, %488 : vector<8x128xf32>
    %945 = arith.mulf %933, %944 : vector<8x128xf32>
    %946 = arith.addf %942, %945 : vector<8x128xf32>
    %947 = math.tanh %946 : vector<8x128xf32>
    %948 = vector.extract_strided_slice %896 {offsets = [0, 128], sizes = [8, 128], strides = [1, 1]} : vector<8x256xf32> to vector<8x128xf32>
    %949 = arith.subf %948, %947 : vector<8x128xf32>
    %950 = arith.mulf %941, %949 : vector<8x128xf32>
    %951 = arith.addf %947, %950 : vector<8x128xf32>
    %c56_231 = arith.constant 56 : index
    %c0_232 = arith.constant 0 : index
    %952 = vector.load %arg16[%c56_231, %c0_232] : memref<64x256xf32, #tpu.memory_space<vmem>>, vector<8x128xf32>
    tpu.vector_store %arg16[%c56_231, %c0_232], %925 {strides = array<i32>} : memref<64x256xf32, #tpu.memory_space<vmem>>, vector<8x128xf32>,
    %c0_233 = arith.constant 0 : index
    %c128_234 = arith.constant 128 : index
    %953 = vector.load %arg16[%c0_233, %c128_234] : memref<64x256xf32, #tpu.memory_space<vmem>>, vector<8x128xf32>
    tpu.vector_store %arg16[%c0_233, %c128_234], %951 {strides = array<i32>} : memref<64x256xf32, #tpu.memory_space<vmem>>, vector<8x128xf32>,
    %954 = tpu.concatenate %925, %951 in 1 : vector<8x128xf32>, vector<8x128xf32> -> vector<8x256xf32>
    %c1_235 = arith.constant 1 : index
    %c0_236 = arith.constant 0 : index
    %c0_237 = arith.constant 0 : index
    %955 = vector.load %arg13[%c1_235, %c0_236, %c0_237] : memref<2x8x256xf32, #tpu.memory_space<vmem>>, vector<1x8x256xf32>
    %956 = vector.shape_cast %955 : vector<1x8x256xf32> to vector<8x256xf32>
    %957 = vector.shape_cast %954 : vector<8x256xf32> to vector<1x8x256xf32>
    tpu.vector_store %arg13[%c1_235, %c0_236, %c0_237], %957 {strides = array<i32>} : memref<2x8x256xf32, #tpu.memory_space<vmem>>, vector<1x8x256xf32>,
    %c0_238 = arith.constant 0 : index
    %c0_239 = arith.constant 0 : index
    %958 = vector.load %arg16[%c0_238, %c0_239] : memref<64x256xf32, #tpu.memory_space<vmem>>, vector<64x256xf32>
    %c0_240 = arith.constant 0 : index
    %c0_241 = arith.constant 0 : index
    %959 = vector.load %arg10[%c0_240, %c0_241] : memref<256x128xf32, #tpu.memory_space<vmem>>, vector<256x128xf32>
    %cst_242 = arith.constant dense<0.000000e+00> : vector<64x128xf32>
    %960 = tpu.matmul %958, %959, %cst_242 {dimension_numbers = #tpu.dot_dimension_numbers<[1], [0], [0], [1], [0, 0, 1, 1], [], []>} : vector<64x256xf32>, vector<256x128xf32>, vector<64x128xf32> -> vector<64x128xf32>
    %c0_243 = arith.constant 0 : index
    %c0_244 = arith.constant 0 : index
    %961 = vector.load %arg11[%c0_243, %c0_244] : memref<1x128xf32, #tpu.memory_space<vmem>>, vector<1x128xf32>
    %962 = vector.broadcast %961 : vector<1x128xf32> to vector<64x128xf32>
    %963 = arith.addf %960, %962 : vector<64x128xf32>
    %c0_245 = arith.constant 0 : index
    %c0_246 = arith.constant 0 : index
    %964 = vector.load %arg12[%c0_245, %c0_246] : memref<64x128xf32, #tpu.memory_space<vmem>>, vector<64x128xf32>
    tpu.vector_store %arg12[%c0_245, %c0_246], %963 {strides = array<i32>} : memref<64x128xf32, #tpu.memory_space<vmem>>, vector<64x128xf32>,
    return
  }
}

</mosaic_0001>

<llo_original>
// kernel: tpu_custom_call.1
$region0: #{tpu_custom_call.1}
  #allocation0 [shape = 'u32[]', space=smem, size = 0x4, offset = 0x4, fixed_abs, tag = 'smem constant byte address 0x4 - core index']
  #allocation1 [shape = 'u32[144,128]{1,0:T(1,128)}', space=vmem, size = 0x12000, scoped, tag = 'internal scratch']
  #allocation2 [shape = 'f32[64,768]{1,0:T(8,128)}', space=vmem, size = 0x30000, scoped, tag = 'scratch operand']
  #allocation3 [shape = 'f32[64,256]{1,0:T(8,128)}', space=vmem, size = 0x10000, scoped, tag = 'scratch operand']
  #allocation4 [shape = 'f32[64,256]{1,0:T(8,128)}', space=vmem, size = 0x10000, scoped, tag = 'scratch operand']
  %s0 = inlined_call_operand.vmem [shape: f32[64,8], index: 0, kind: input, shape index: {}]
  %s1 = inlined_call_operand.hbm [shape: f32[2,8,256], index: 1, kind: input, shape index: {}]
  %s2 = inlined_call_operand.vmem [shape: f32[8,768], index: 2, kind: input, shape index: {}]
  %s3 = inlined_call_operand.hbm [shape: f32[256,768], index: 3, kind: input, shape index: {}]
  %s4 = inlined_call_operand.vmem [shape: f32[1,768], index: 4, kind: input, shape index: {}]
  %s5 = inlined_call_operand.vmem [shape: f32[8,256], index: 5, kind: input, shape index: {}]
  %s6 = inlined_call_operand.hbm [shape: f32[256,768], index: 6, kind: input, shape index: {}]
  %s7 = inlined_call_operand.hbm [shape: f32[256,768], index: 7, kind: input, shape index: {}]
  %s8 = inlined_call_operand.vmem [shape: f32[1,768], index: 8, kind: input, shape index: {}]
  %s9 = inlined_call_operand.vmem [shape: f32[8,256], index: 9, kind: input, shape index: {}]
  %s10 = inlined_call_operand.hbm [shape: f32[256,128], index: 10, kind: input, shape index: {}]
  %s11 = inlined_call_operand.vmem [shape: f32[1,128], index: 11, kind: input, shape index: {}]
  %s12 = inlined_call_operand.hbm [shape: f32[64,128], index: 12, kind: output, shape index: {0}]
  %s13 = inlined_call_operand.hbm [shape: f32[2,8,256], index: 13, kind: output, shape index: {1}]
  %14 = xla_tuple %s12, %s13
  %s15 = sld [smem:[#allocation0]]
  $region86: #{tpu_custom_call.1} parent=0
    _
  %s17 = ssub.s32 1, %s15
  %s18 = scalar_select 0, %s17, %s15
  $region1: #{tpu_custom_call.1} parent=0
    #allocation5 [shape = 'u8[16384]{0}', space=vmem, size = 0x4000, scoped, tag = 'input window, operand 1, single buffered']
    #allocation6 [shape = 's32[1]{0}', space=sflag, size = 0x4, scoped, tag = 'scoped memory for tpu_custom_call.1']
    #allocation7 [shape = 's32[1]{0}', space=sflag, size = 0x4, scoped, tag = 'scoped memory for tpu_custom_call.1']
    #allocation8 [shape = 'u8[786432]{0}', space=vmem, size = 0xc0000, scoped, tag = 'input window, operand 3, single buffered']
    #allocation9 [shape = 's32[1]{0}', space=sflag, size = 0x4, scoped, tag = 'scoped memory for tpu_custom_call.1']
    #allocation10 [shape = 'u8[786432]{0}', space=vmem, size = 0xc0000, scoped, tag = 'input window, operand 6, single buffered']
    #allocation11 [shape = 'u8[786432]{0}', space=vmem, size = 0xc0000, scoped, tag = 'input window, operand 7, single buffered']
    #allocation12 [shape = 's32[1]{0}', space=sflag, size = 0x4, scoped, tag = 'scoped memory for tpu_custom_call.1']
    #allocation13 [shape = 'u8[131072]{0}', space=vmem, size = 0x20000, scoped, tag = 'input window, operand 10, single buffered']
    #allocation14 [shape = 'u8[32768]{0}', space=vmem, size = 0x8000, scoped, tag = 'output window, operand 0, single buffered']
    #allocation15 [shape = 'u8[16384]{0}', space=vmem, size = 0x4000, scoped, tag = 'output window, operand 1, single buffered']
    #allocation16 [shape = 's32[1]{0}', space=sflag, size = 0x4, scoped, tag = 'scoped memory for tpu_custom_call.1']
    %19 = vsyncpa [#allocation6], 0
    %20 = vsyncpa [#allocation9], 0
    %21 = vsyncpa [#allocation12], 0
    %22 = vsyncpa [#allocation7], 0
    %23 = vsyncpa [#allocation16], 0
    // Predicated region
    $region2: #{tpu_custom_call.1} parent=1 // pred_check
      _
    $region3: #{tpu_custom_call.1} parent=1 // pred_check_branch
      %25 = sbr.rel (0) target = $region5
    $region4: #{tpu_custom_call.1} parent=1 // pred_region
      _
    $region5: #{tpu_custom_call.1} parent=1 // pred_fallthru
      _
    // Predicated region
    $region6: #{tpu_custom_call.1} parent=1 // pred_check
      _
    $region7: #{tpu_custom_call.1} parent=1 // pred_check_branch
      %27 = sbr.rel (0) target = $region9
    $region8: #{tpu_custom_call.1} parent=1 // pred_region
      %s29 = ssub.s32 512, 512
      %30 = vsyncadd [#allocation6], %s29
      %s31 = sshll.u32 [#allocation5], 4
      %s32 = int_to_ptr.vmem [resolvable:$true] %s31
      %37 = dma.hbm_to_vmem [thread:$0]  %s1, 512, %s32, [#allocation6], 256, 256, 16
    $region9: #{tpu_custom_call.1} parent=1 // pred_fallthru
      _
    // Predicated region
    $region10: #{tpu_custom_call.1} parent=1 // pred_check
      _
    $region11: #{tpu_custom_call.1} parent=1 // pred_check_branch
      %39 = sbr.rel (0) target = $region13
    $region12: #{tpu_custom_call.1} parent=1 // pred_region
      _
    $region13: #{tpu_custom_call.1} parent=1 // pred_fallthru
      _
    // Predicated region
    $region14: #{tpu_custom_call.1} parent=1 // pred_check
      _
    $region15: #{tpu_custom_call.1} parent=1 // pred_check_branch
      %41 = sbr.rel (0) target = $region17
    $region16: #{tpu_custom_call.1} parent=1 // pred_region
      %s43 = ssub.s32 24576, 24576
      %44 = vsyncadd [#allocation9], %s43
      %s45 = sshll.u32 [#allocation8], 4
      %s46 = int_to_ptr.vmem [resolvable:$true] %s45
      %51 = dma.hbm_to_vmem [thread:$0]  %s3, 24576, %s46, [#allocation9], 768, 768, 48
    $region17: #{tpu_custom_call.1} parent=1 // pred_fallthru
      _
    // Predicated region
    $region18: #{tpu_custom_call.1} parent=1 // pred_check
      _
    $region19: #{tpu_custom_call.1} parent=1 // pred_check_branch
      %53 = sbr.rel (0) target = $region21
    $region20: #{tpu_custom_call.1} parent=1 // pred_region
      _
    $region21: #{tpu_custom_call.1} parent=1 // pred_fallthru
      _
    // Predicated region
    $region22: #{tpu_custom_call.1} parent=1 // pred_check
      _
    $region23: #{tpu_custom_call.1} parent=1 // pred_check_branch
      %55 = sbr.rel (0) target = $region25
    $region24: #{tpu_custom_call.1} parent=1 // pred_region
      _
    $region25: #{tpu_custom_call.1} parent=1 // pred_fallthru
      _
    // Predicated region
    $region26: #{tpu_custom_call.1} parent=1 // pred_check
      _
    $region27: #{tpu_custom_call.1} parent=1 // pred_check_branch
      %57 = sbr.rel (0) target = $region29
    $region28: #{tpu_custom_call.1} parent=1 // pred_region
      %s59 = ssub.s32 24576, 24576
      %60 = vsyncadd [#allocation9], %s59
      %s61 = sshll.u32 [#allocation10], 4
      %s62 = int_to_ptr.vmem [resolvable:$true] %s61
      %67 = dma.hbm_to_vmem [thread:$0]  %s6, 24576, %s62, [#allocation9], 768, 768, 48
    $region29: #{tpu_custom_call.1} parent=1 // pred_fallthru
      _
    // Predicated region
    $region30: #{tpu_custom_call.1} parent=1 // pred_check
      _
    $region31: #{tpu_custom_call.1} parent=1 // pred_check_branch
      %69 = sbr.rel (0) target = $region33
    $region32: #{tpu_custom_call.1} parent=1 // pred_region
      %s71 = ssub.s32 24576, 24576
      %72 = vsyncadd [#allocation12], %s71
      %s73 = sshll.u32 [#allocation11], 4
      %s74 = int_to_ptr.vmem [resolvable:$true] %s73
      %79 = dma.hbm_to_vmem [thread:$0]  %s7, 24576, %s74, [#allocation12], 768, 768, 48
    $region33: #{tpu_custom_call.1} parent=1 // pred_fallthru
      _
    // Predicated region
    $region34: #{tpu_custom_call.1} parent=1 // pred_check
      _
    $region35: #{tpu_custom_call.1} parent=1 // pred_check_branch
      %81 = sbr.rel (0) target = $region37
    $region36: #{tpu_custom_call.1} parent=1 // pred_region
      _
    $region37: #{tpu_custom_call.1} parent=1 // pred_fallthru
      _
    // Predicated region
    $region38: #{tpu_custom_call.1} parent=1 // pred_check
      _
    $region39: #{tpu_custom_call.1} parent=1 // pred_check_branch
      %83 = sbr.rel (0) target = $region41
    $region40: #{tpu_custom_call.1} parent=1 // pred_region
      _
    $region41: #{tpu_custom_call.1} parent=1 // pred_fallthru
      _
    // Predicated region
    $region42: #{tpu_custom_call.1} parent=1 // pred_check
      _
    $region43: #{tpu_custom_call.1} parent=1 // pred_check_branch
      %85 = sbr.rel (0) target = $region45
    $region44: #{tpu_custom_call.1} parent=1 // pred_region
      %s87 = ssub.s32 4096, 4096
      %88 = vsyncadd [#allocation12], %s87
      %s89 = sshll.u32 [#allocation13], 4
      %s90 = int_to_ptr.vmem [resolvable:$true] %s89
      %95 = dma.hbm_to_vmem [thread:$0]  %s10, 4096, %s90, [#allocation12], 128, 128, 8
    $region45: #{tpu_custom_call.1} parent=1 // pred_fallthru
      _
    // Predicated region
    $region46: #{tpu_custom_call.1} parent=1 // pred_check
      _
    $region47: #{tpu_custom_call.1} parent=1 // pred_check_branch
      %97 = sbr.rel (0) target = $region49
    $region48: #{tpu_custom_call.1} parent=1 // pred_region
      _
    $region49: #{tpu_custom_call.1} parent=1 // pred_fallthru
      _
    // Predicated region
    $region50: #{tpu_custom_call.1} parent=1 // pred_check
      _
    $region51: #{tpu_custom_call.1} parent=1 // pred_check_branch
      %99 = sbr.rel (0) target = $region53
    $region52: #{tpu_custom_call.1} parent=1 // pred_region
      %100 = dma.done [#allocation6], 512
    $region53: #{tpu_custom_call.1} parent=1 // pred_fallthru
      _
    // Predicated region
    $region54: #{tpu_custom_call.1} parent=1 // pred_check
      _
    $region55: #{tpu_custom_call.1} parent=1 // pred_check_branch
      %102 = sbr.rel (0) target = $region57
    $region56: #{tpu_custom_call.1} parent=1 // pred_region
      %103 = dma.done [#allocation9], 24576
    $region57: #{tpu_custom_call.1} parent=1 // pred_fallthru
      _
    // Predicated region
    $region58: #{tpu_custom_call.1} parent=1 // pred_check
      _
    $region59: #{tpu_custom_call.1} parent=1 // pred_check_branch
      %105 = sbr.rel (0) target = $region61
    $region60: #{tpu_custom_call.1} parent=1 // pred_region
      %106 = dma.done [#allocation9], 24576
    $region61: #{tpu_custom_call.1} parent=1 // pred_fallthru
      _
    // Predicated region
    $region62: #{tpu_custom_call.1} parent=1 // pred_check
      _
    $region63: #{tpu_custom_call.1} parent=1 // pred_check_branch
      %108 = sbr.rel (0) target = $region65
    $region64: #{tpu_custom_call.1} parent=1 // pred_region
      %109 = dma.done [#allocation12], 24576
    $region65: #{tpu_custom_call.1} parent=1 // pred_fallthru
      _
    // Predicated region
    $region66: #{tpu_custom_call.1} parent=1 // pred_check
      _
    $region67: #{tpu_custom_call.1} parent=1 // pred_check_branch
      %111 = sbr.rel (0) target = $region69
    $region68: #{tpu_custom_call.1} parent=1 // pred_region
      %112 = dma.done [#allocation12], 4096
    $region69: #{tpu_custom_call.1} parent=1 // pred_fallthru
      _
    %v113 = vld [vmem:[%s0] sm:$0xff]
    %v114 = vld [vmem:[%s0 + $0x8] sm:$0xff]
    %v115 = vld [vmem:[%s0 + $0x10] sm:$0xff]
    %v116 = vld [vmem:[%s0 + $0x18] sm:$0xff]
    %v117 = vld [vmem:[%s0 + $0x20] sm:$0xff]
    %v118 = vld [vmem:[%s0 + $0x28] sm:$0xff]
    %v119 = vld [vmem:[%s0 + $0x30] sm:$0xff]
    %v120 = vld [vmem:[%s0 + $0x38] sm:$0xff]
    %v121 = vld [vmem:[%s2] sm:$0xff]
    %v122 = vld [vmem:[%s2 + $0x8] sm:$0xff]
    %v123 = vld [vmem:[%s2 + $0x10] sm:$0xff]
    %v124 = vld [vmem:[%s2 + $0x18] sm:$0xff]
    %v125 = vld [vmem:[%s2 + $0x20] sm:$0xff]
    %v126 = vld [vmem:[%s2 + $0x28] sm:$0xff]
    %v127 = vld [vmem:[%s4] sm:$0x3f]
    %v129 = vlaneseq
    %v130 = vshrl.u32 %v129, 7
    %v131 = vsub.s32 0, %v130
    %v132 = vrot.slane %v127, %v131
    %v133 = vlaneseq
    %v134 = vshrl.u32 %v133, 7
    %v135 = vsub.s32 1, %v134
    %v136 = vrot.slane %v127, %v135
    %v137 = vlaneseq
    %v138 = vshrl.u32 %v137, 7
    %v139 = vsub.s32 2, %v138
    %v140 = vrot.slane %v127, %v139
    %v141 = vlaneseq
    %v142 = vshrl.u32 %v141, 7
    %v143 = vsub.s32 3, %v142
    %v144 = vrot.slane %v127, %v143
    %v145 = vlaneseq
    %v146 = vshrl.u32 %v145, 7
    %v147 = vsub.s32 4, %v146
    %v148 = vrot.slane %v127, %v147
    %v149 = vlaneseq
    %v150 = vshrl.u32 %v149, 7
    %v151 = vsub.s32 5, %v150
    %v152 = vrot.slane %v127, %v151
    %vm159 = vcmask 64512
    %v161 = vsel %vm159, %v113, 0
    %v164 = vsel %vm159, %v114, 0
    %v167 = vsel %vm159, %v115, 0
    %v170 = vsel %vm159, %v116, 0
    %v173 = vsel %vm159, %v117, 0
    %v176 = vsel %vm159, %v118, 0
    %v179 = vsel %vm159, %v119, 0
    %v182 = vsel %vm159, %v120, 0
    %184 = vmatprep.subr.mxu0 %v122
    %185 = vmatpush1.msra.mxu0 %v121
    %186 = vmatprep.subr.mxu0 0.0
    %187 = vmatpush1.msra.mxu0 0.0
    %188 = vmatprep.subr.mxu0 0.0
    %189 = vmatpush1.msra.mxu0 0.0
    %190 = vmatprep.subr.mxu0 0.0
    %191 = vmatpush1.msra.mxu0 0.0
    %192 = vmatprep.subr.mxu0 0.0
    %193 = vmatpush1.msra.mxu0 0.0
    %194 = vmatprep.subr.mxu0 0.0
    %195 = vmatpush1.msra.mxu0 0.0
    %196 = vmatprep.subr.mxu0 0.0
    %197 = vmatpush1.msra.mxu0 0.0
    %198 = vmatprep.subr.mxu0 0.0
    %199 = vmatpush1.msra.mxu0 0.0
    %200 = vmatprep.subr.mxu0 0.0
    %201 = vmatpush1.msra.mxu0 0.0
    %202 = vmatprep.subr.mxu0 0.0
    %203 = vmatpush1.msra.mxu0 0.0
    %204 = vmatprep.subr.mxu0 0.0
    %205 = vmatpush1.msra.mxu0 0.0
    %206 = vmatprep.subr.mxu0 0.0
    %207 = vmatpush1.msra.mxu0 0.0
    %208 = vmatprep.subr.mxu0 0.0
    %209 = vmatpush1.msra.mxu0 0.0
    %210 = vmatprep.subr.mxu0 0.0
    %211 = vmatpush1.msra.mxu0 0.0
    %212 = vmatprep.subr.mxu0 0.0
    %213 = vmatpush1.msra.mxu0 0.0
    %214 = vmatprep.subr.mxu0 0.0
    %215 = vmatpush1.msra.mxu0 0.0
    %216 = vmatprep.subr.mxu0 0.0
    %217 = vmatpush1.msra.mxu0 0.0
    %218 = vmatprep.subr.mxu0 0.0
    %219 = vmatpush1.msra.mxu0 0.0
    %220 = vmatprep.subr.mxu0 0.0
    %221 = vmatpush1.msra.mxu0 0.0
    %222 = vmatprep.subr.mxu0 0.0
    %223 = vmatpush1.msra.mxu0 0.0
    %224 = vmatprep.subr.mxu0 0.0
    %225 = vmatpush1.msra.mxu0 0.0
    %226 = vmatprep.subr.mxu0 0.0
    %227 = vmatpush1.msra.mxu0 0.0
    %228 = vmatprep.subr.mxu0 0.0
    %229 = vmatpush1.msra.mxu0 0.0
    %230 = vmatprep.subr.mxu0 0.0
    %231 = vmatpush1.msra.mxu0 0.0
    %232 = vmatprep.subr.mxu0 0.0
    %233 = vmatpush1.msra.mxu0 0.0
    %234 = vmatprep.subr.mxu0 0.0
    %235 = vmatpush1.msra.mxu0 0.0
    %236 = vmatprep.subr.mxu0 0.0
    %237 = vmatpush1.msra.mxu0 0.0
    %238 = vmatprep.subr.mxu0 0.0
    %239 = vmatpush1.msra.mxu0 0.0
    %240 = vmatprep.subr.mxu0 0.0
    %241 = vmatpush1.msra.mxu0 0.0
    %242 = vmatprep.subr.mxu0 0.0
    %243 = vmatpush1.msra.mxu0 0.0
    %244 = vmatprep.subr.mxu0 0.0
    %245 = vmatpush1.msra.mxu0 0.0
    %246 = vmatprep.subr.mxu0 0.0
    %247 = vmatpush1.msra.mxu0 0.0
    %248 = vmatprep.mubr.f32.mxu0 0.0
    %249 = vmatmul.mubr.f32.gmra.mrb[0].mxu0 %v161
    %v250 = vpop.f32.mrb[0].mxu0
    %v251 = vadd.f32 %v132, %v250
    %v252 = vpop.f32.mrb[0].mxu0
    %v253 = vadd.f32 %v136, %v252
    %254 = vmatprep.mubr.f32.mxu0 0.0
    %255 = vmatmul.mubr.f32.gmra.mrb[0].mxu0 %v164
    %v256 = vpop.f32.mrb[0].mxu0
    %v257 = vadd.f32 %v132, %v256
    %v258 = vpop.f32.mrb[0].mxu0
    %v259 = vadd.f32 %v136, %v258
    %260 = vmatprep.mubr.f32.mxu0 0.0
    %261 = vmatmul.mubr.f32.gmra.mrb[0].mxu0 %v167
    %v262 = vpop.f32.mrb[0].mxu0
    %v263 = vadd.f32 %v132, %v262
    %v264 = vpop.f32.mrb[0].mxu0
    %v265 = vadd.f32 %v136, %v264
    %266 = vmatprep.mubr.f32.mxu0 0.0
    %267 = vmatmul.mubr.f32.gmra.mrb[0].mxu0 %v170
    %v268 = vpop.f32.mrb[0].mxu0
    %v269 = vadd.f32 %v132, %v268
    %v270 = vpop.f32.mrb[0].mxu0
    %v271 = vadd.f32 %v136, %v270
    %272 = vmatprep.mubr.f32.mxu0 0.0
    %273 = vmatmul.mubr.f32.gmra.mrb[0].mxu0 %v173
    %v274 = vpop.f32.mrb[0].mxu0
    %v275 = vadd.f32 %v132, %v274
    %v276 = vpop.f32.mrb[0].mxu0
    %v277 = vadd.f32 %v136, %v276
    %278 = vmatprep.mubr.f32.mxu0 0.0
    %279 = vmatmul.mubr.f32.gmra.mrb[0].mxu0 %v176
    %v280 = vpop.f32.mrb[0].mxu0
    %v281 = vadd.f32 %v132, %v280
    %v282 = vpop.f32.mrb[0].mxu0
    %v283 = vadd.f32 %v136, %v282
    %284 = vmatprep.mubr.f32.mxu0 0.0
    %285 = vmatmul.mubr.f32.gmra.mrb[0].mxu0 %v179
    %v286 = vpop.f32.mrb[0].mxu0
    %v287 = vadd.f32 %v132, %v286
    %v288 = vpop.f32.mrb[0].mxu0
    %v289 = vadd.f32 %v136, %v288
    %290 = vmatprep.mubr.f32.mxu0 0.0
    %291 = vmatmul.mubr.f32.gmra.mrb[0].mxu0 %v182
    %v292 = vpop.f32.mrb[0].mxu0
    %v293 = vadd.f32 %v132, %v292
    %v294 = vpop.f32.mrb[0].mxu0
    %v295 = vadd.f32 %v136, %v294
    %296 = vdwg.mxu0
    %297 = vmatprep.subr.mxu0 %v124
    %298 = vmatpush1.msra.mxu0 %v123
    %299 = vmatprep.subr.mxu0 0.0
    %300 = vmatpush1.msra.mxu0 0.0
    %301 = vmatprep.subr.mxu0 0.0
    %302 = vmatpush1.msra.mxu0 0.0
    %303 = vmatprep.subr.mxu0 0.0
    %304 = vmatpush1.msra.mxu0 0.0
    %305 = vmatprep.subr.mxu0 0.0
    %306 = vmatpush1.msra.mxu0 0.0
    %307 = vmatprep.subr.mxu0 0.0
    %308 = vmatpush1.msra.mxu0 0.0
    %309 = vmatprep.subr.mxu0 0.0
    %310 = vmatpush1.msra.mxu0 0.0
    %311 = vmatprep.subr.mxu0 0.0
    %312 = vmatpush1.msra.mxu0 0.0
    %313 = vmatprep.subr.mxu0 0.0
    %314 = vmatpush1.msra.mxu0 0.0
    %315 = vmatprep.subr.mxu0 0.0
    %316 = vmatpush1.msra.mxu0 0.0
    %317 = vmatprep.subr.mxu0 0.0
    %318 = vmatpush1.msra.mxu0 0.0
    %319 = vmatprep.subr.mxu0 0.0
    %320 = vmatpush1.msra.mxu0 0.0
    %321 = vmatprep.subr.mxu0 0.0
    %322 = vmatpush1.msra.mxu0 0.0
    %323 = vmatprep.subr.mxu0 0.0
    %324 = vmatpush1.msra.mxu0 0.0
    %325 = vmatprep.subr.mxu0 0.0
    %326 = vmatpush1.msra.mxu0 0.0
    %327 = vmatprep.subr.mxu0 0.0
    %328 = vmatpush1.msra.mxu0 0.0
    %329 = vmatprep.subr.mxu0 0.0
    %330 = vmatpush1.msra.mxu0 0.0
    %331 = vmatprep.subr.mxu0 0.0
    %332 = vmatpush1.msra.mxu0 0.0
    %333 = vmatprep.subr.mxu0 0.0
    %334 = vmatpush1.msra.mxu0 0.0
    %335 = vmatprep.subr.mxu0 0.0
    %336 = vmatpush1.msra.mxu0 0.0
    %337 = vmatprep.subr.mxu0 0.0
    %338 = vmatpush1.msra.mxu0 0.0
    %339 = vmatprep.subr.mxu0 0.0
    %340 = vmatpush1.msra.mxu0 0.0
    %341 = vmatprep.subr.mxu0 0.0
    %342 = vmatpush1.msra.mxu0 0.0
    %343 = vmatprep.subr.mxu0 0.0
    %344 = vmatpush1.msra.mxu0 0.0
    %345 = vmatprep.subr.mxu0 0.0
    %346 = vmatpush1.msra.mxu0 0.0
    %347 = vmatprep.subr.mxu0 0.0
    %348 = vmatpush1.msra.mxu0 0.0
    %349 = vmatprep.subr.mxu0 0.0
    %350 = vmatpush1.msra.mxu0 0.0
    %351 = vmatprep.subr.mxu0 0.0
    %352 = vmatpush1.msra.mxu0 0.0
    %353 = vmatprep.subr.mxu0 0.0
    %354 = vmatpush1.msra.mxu0 0.0
    %355 = vmatprep.subr.mxu0 0.0
    %356 = vmatpush1.msra.mxu0 0.0
    %357 = vmatprep.subr.mxu0 0.0
    %358 = vmatpush1.msra.mxu0 0.0
    %359 = vmatprep.subr.mxu0 0.0
    %360 = vmatpush1.msra.mxu0 0.0
    %361 = vmatprep.mubr.f32.mxu0 0.0
    %362 = vmatmul.mubr.f32.gmra.mrb[0].mxu0 %v161
    %v363 = vpop.f32.mrb[0].mxu0
    %v364 = vadd.f32 %v140, %v363
    %v365 = vpop.f32.mrb[0].mxu0
    %v366 = vadd.f32 %v144, %v365
    %367 = vmatprep.mubr.f32.mxu0 0.0
    %368 = vmatmul.mubr.f32.gmra.mrb[0].mxu0 %v164
    %v369 = vpop.f32.mrb[0].mxu0
    %v370 = vadd.f32 %v140, %v369
    %v371 = vpop.f32.mrb[0].mxu0
    %v372 = vadd.f32 %v144, %v371
    %373 = vmatprep.mubr.f32.mxu0 0.0
    %374 = vmatmul.mubr.f32.gmra.mrb[0].mxu0 %v167
    %v375 = vpop.f32.mrb[0].mxu0
    %v376 = vadd.f32 %v140, %v375
    %v377 = vpop.f32.mrb[0].mxu0
    %v378 = vadd.f32 %v144, %v377
    %379 = vmatprep.mubr.f32.mxu0 0.0
    %380 = vmatmul.mubr.f32.gmra.mrb[0].mxu0 %v170
    %v381 = vpop.f32.mrb[0].mxu0
    %v382 = vadd.f32 %v140, %v381
    %v383 = vpop.f32.mrb[0].mxu0
    %v384 = vadd.f32 %v144, %v383
    %385 = vmatprep.mubr.f32.mxu0 0.0
    %386 = vmatmul.mubr.f32.gmra.mrb[0].mxu0 %v173
    %v387 = vpop.f32.mrb[0].mxu0
    %v388 = vadd.f32 %v140, %v387
    %v389 = vpop.f32.mrb[0].mxu0
    %v390 = vadd.f32 %v144, %v389
    %391 = vmatprep.mubr.f32.mxu0 0.0
    %392 = vmatmul.mubr.f32.gmra.mrb[0].mxu0 %v176
    %v393 = vpop.f32.mrb[0].mxu0
    %v394 = vadd.f32 %v140, %v393
    %v395 = vpop.f32.mrb[0].mxu0
    %v396 = vadd.f32 %v144, %v395
    %397 = vmatprep.mubr.f32.mxu0 0.0
    %398 = vmatmul.mubr.f32.gmra.mrb[0].mxu0 %v179
    %v399 = vpop.f32.mrb[0].mxu0
    %v400 = vadd.f32 %v140, %v399
    %v401 = vpop.f32.mrb[0].mxu0
    %v402 = vadd.f32 %v144, %v401
    %403 = vmatprep.mubr.f32.mxu0 0.0
    %404 = vmatmul.mubr.f32.gmra.mrb[0].mxu0 %v182
    %v405 = vpop.f32.mrb[0].mxu0
    %v406 = vadd.f32 %v140, %v405
    %v407 = vpop.f32.mrb[0].mxu0
    %v408 = vadd.f32 %v144, %v407
    %409 = vdwg.mxu0
    %410 = vmatprep.subr.mxu0 %v126
    %411 = vmatpush1.msra.mxu0 %v125
    %412 = vmatprep.subr.mxu0 0.0
    %413 = vmatpush1.msra.mxu0 0.0
    %414 = vmatprep.subr.mxu0 0.0
    %415 = vmatpush1.msra.mxu0 0.0
    %416 = vmatprep.subr.mxu0 0.0
    %417 = vmatpush1.msra.mxu0 0.0
    %418 = vmatprep.subr.mxu0 0.0
    %419 = vmatpush1.msra.mxu0 0.0
    %420 = vmatprep.subr.mxu0 0.0
    %421 = vmatpush1.msra.mxu0 0.0
    %422 = vmatprep.subr.mxu0 0.0
    %423 = vmatpush1.msra.mxu0 0.0
    %424 = vmatprep.subr.mxu0 0.0
    %425 = vmatpush1.msra.mxu0 0.0
    %426 = vmatprep.subr.mxu0 0.0
    %427 = vmatpush1.msra.mxu0 0.0
    %428 = vmatprep.subr.mxu0 0.0
    %429 = vmatpush1.msra.mxu0 0.0
    %430 = vmatprep.subr.mxu0 0.0
    %431 = vmatpush1.msra.mxu0 0.0
    %432 = vmatprep.subr.mxu0 0.0
    %433 = vmatpush1.msra.mxu0 0.0
    %434 = vmatprep.subr.mxu0 0.0
    %435 = vmatpush1.msra.mxu0 0.0
    %436 = vmatprep.subr.mxu0 0.0
    %437 = vmatpush1.msra.mxu0 0.0
    %438 = vmatprep.subr.mxu0 0.0
    %439 = vmatpush1.msra.mxu0 0.0
    %440 = vmatprep.subr.mxu0 0.0
    %441 = vmatpush1.msra.mxu0 0.0
    %442 = vmatprep.subr.mxu0 0.0
    %443 = vmatpush1.msra.mxu0 0.0
    %444 = vmatprep.subr.mxu0 0.0
    %445 = vmatpush1.msra.mxu0 0.0
    %446 = vmatprep.subr.mxu0 0.0
    %447 = vmatpush1.msra.mxu0 0.0
    %448 = vmatprep.subr.mxu0 0.0
    %449 = vmatpush1.msra.mxu0 0.0
    %450 = vmatprep.subr.mxu0 0.0
    %451 = vmatpush1.msra.mxu0 0.0
    %452 = vmatprep.subr.mxu0 0.0
    %453 = vmatpush1.msra.mxu0 0.0
    %454 = vmatprep.subr.mxu0 0.0
    %455 = vmatpush1.msra.mxu0 0.0
    %456 = vmatprep.subr.mxu0 0.0
    %457 = vmatpush1.msra.mxu0 0.0
    %458 = vmatprep.subr.mxu0 0.0
    %459 = vmatpush1.msra.mxu0 0.0
    %460 = vmatprep.subr.mxu0 0.0
    %461 = vmatpush1.msra.mxu0 0.0
    %462 = vmatprep.subr.mxu0 0.0
    %463 = vmatpush1.msra.mxu0 0.0
    %464 = vmatprep.subr.mxu0 0.0
    %465 = vmatpush1.msra.mxu0 0.0
    %466 = vmatprep.subr.mxu0 0.0
    %467 = vmatpush1.msra.mxu0 0.0
    %468 = vmatprep.subr.mxu0 0.0
    %469 = vmatpush1.msra.mxu0 0.0
    %470 = vmatprep.subr.mxu0 0.0
    %471 = vmatpush1.msra.mxu0 0.0
    %472 = vmatprep.subr.mxu0 0.0
    %473 = vmatpush1.msra.mxu0 0.0
    %474 = vmatprep.mubr.f32.mxu0 0.0
    %475 = vmatmul.mubr.f32.gmra.mrb[0].mxu0 %v161
    %v476 = vpop.f32.mrb[0].mxu0
    %v477 = vadd.f32 %v148, %v476
    %v478 = vpop.f32.mrb[0].mxu0
    %v479 = vadd.f32 %v152, %v478
    %480 = vmatprep.mubr.f32.mxu0 0.0
    %481 = vmatmul.mubr.f32.gmra.mrb[0].mxu0 %v164
    %v482 = vpop.f32.mrb[0].mxu0
    %v483 = vadd.f32 %v148, %v482
    %v484 = vpop.f32.mrb[0].mxu0
    %v485 = vadd.f32 %v152, %v484
    %486 = vmatprep.mubr.f32.mxu0 0.0
    %487 = vmatmul.mubr.f32.gmra.mrb[0].mxu0 %v167
    %v488 = vpop.f32.mrb[0].mxu0
    %v489 = vadd.f32 %v148, %v488
    %v490 = vpop.f32.mrb[0].mxu0
    %v491 = vadd.f32 %v152, %v490
    %492 = vmatprep.mubr.f32.mxu0 0.0
    %493 = vmatmul.mubr.f32.gmra.mrb[0].mxu0 %v170
    %v494 = vpop.f32.mrb[0].mxu0
    %v495 = vadd.f32 %v148, %v494
    %v496 = vpop.f32.mrb[0].mxu0
    %v497 = vadd.f32 %v152, %v496
    %498 = vmatprep.mubr.f32.mxu0 0.0
    %499 = vmatmul.mubr.f32.gmra.mrb[0].mxu0 %v173
    %v500 = vpop.f32.mrb[0].mxu0
    %v501 = vadd.f32 %v148, %v500
    %v502 = vpop.f32.mrb[0].mxu0
    %v503 = vadd.f32 %v152, %v502
    %504 = vmatprep.mubr.f32.mxu0 0.0
    %505 = vmatmul.mubr.f32.gmra.mrb[0].mxu0 %v176
    %v506 = vpop.f32.mrb[0].mxu0
    %v507 = vadd.f32 %v148, %v506
    %v508 = vpop.f32.mrb[0].mxu0
    %v509 = vadd.f32 %v152, %v508
    %510 = vmatprep.mubr.f32.mxu0 0.0
    %511 = vmatmul.mubr.f32.gmra.mrb[0].mxu0 %v179
    %v512 = vpop.f32.mrb[0].mxu0
    %v513 = vadd.f32 %v148, %v512
    %v514 = vpop.f32.mrb[0].mxu0
    %v515 = vadd.f32 %v152, %v514
    %516 = vmatprep.mubr.f32.mxu0 0.0
    %517 = vmatmul.mubr.f32.gmra.mrb[0].mxu0 %v182
    %v518 = vpop.f32.mrb[0].mxu0
    %v519 = vadd.f32 %v148, %v518
    %v520 = vpop.f32.mrb[0].mxu0
    %v521 = vadd.f32 %v152, %v520
    %522 = vdwg.mxu0
    %523 = vst [vmem:[#allocation2] sm:$0xff] %v251
    %524 = vst [vmem:[#allocation2 + $0x8] sm:$0xff] %v253
    %525 = vst [vmem:[#allocation2 + $0x10] sm:$0xff] %v364
    %526 = vst [vmem:[#allocation2 + $0x18] sm:$0xff] %v366
    %527 = vst [vmem:[#allocation2 + $0x20] sm:$0xff] %v477
    %528 = vst [vmem:[#allocation2 + $0x28] sm:$0xff] %v479
    %529 = vst [vmem:[#allocation2 + $0x30] sm:$0xff] %v257
    %530 = vst [vmem:[#allocation2 + $0x38] sm:$0xff] %v259
    %531 = vst [vmem:[#allocation2 + $0x40] sm:$0xff] %v370
    %532 = vst [vmem:[#allocation2 + $0x48] sm:$0xff] %v372
    %533 = vst [vmem:[#allocation2 + $0x50] sm:$0xff] %v483
    %534 = vst [vmem:[#allocation2 + $0x58] sm:$0xff] %v485
    %535 = vst [vmem:[#allocation2 + $0x60] sm:$0xff] %v263
    %536 = vst [vmem:[#allocation2 + $0x68] sm:$0xff] %v265
    %537 = vst [vmem:[#allocation2 + $0x70] sm:$0xff] %v376
    %538 = vst [vmem:[#allocation2 + $0x78] sm:$0xff] %v378
    %539 = vst [vmem:[#allocation2 + $0x80] sm:$0xff] %v489
    %540 = vst [vmem:[#allocation2 + $0x88] sm:$0xff] %v491
    %541 = vst [vmem:[#allocation2 + $0x90] sm:$0xff] %v269
    %542 = vst [vmem:[#allocation2 + $0x98] sm:$0xff] %v271
    %543 = vst [vmem:[#allocation2 + $0xa0] sm:$0xff] %v382
    %544 = vst [vmem:[#allocation2 + $0xa8] sm:$0xff] %v384
    %545 = vst [vmem:[#allocation2 + $0xb0] sm:$0xff] %v495
    %546 = vst [vmem:[#allocation2 + $0xb8] sm:$0xff] %v497
    %547 = vst [vmem:[#allocation2 + $0xc0] sm:$0xff] %v275
    %548 = vst [vmem:[#allocation2 + $0xc8] sm:$0xff] %v277
    %549 = vst [vmem:[#allocation2 + $0xd0] sm:$0xff] %v388
    %550 = vst [vmem:[#allocation2 + $0xd8] sm:$0xff] %v390
    %551 = vst [vmem:[#allocation2 + $0xe0] sm:$0xff] %v501
    %552 = vst [vmem:[#allocation2 + $0xe8] sm:$0xff] %v503
    %553 = vst [vmem:[#allocation2 + $0xf0] sm:$0xff] %v281
    %554 = vst [vmem:[#allocation2 + $0xf8] sm:$0xff] %v283
    %555 = vst [vmem:[#allocation2 + $0x100] sm:$0xff] %v394
    %556 = vst [vmem:[#allocation2 + $0x108] sm:$0xff] %v396
    %557 = vst [vmem:[#allocation2 + $0x110] sm:$0xff] %v507
    %558 = vst [vmem:[#allocation2 + $0x118] sm:$0xff] %v509
    %559 = vst [vmem:[#allocation2 + $0x120] sm:$0xff] %v287
    %560 = vst [vmem:[#allocation2 + $0x128] sm:$0xff] %v289
    %561 = vst [vmem:[#allocation2 + $0x130] sm:$0xff] %v400
    %562 = vst [vmem:[#allocation2 + $0x138] sm:$0xff] %v402
    %563 = vst [vmem:[#allocation2 + $0x140] sm:$0xff] %v513
    %564 = vst [vmem:[#allocation2 + $0x148] sm:$0xff] %v515
    %565 = vst [vmem:[#allocation2 + $0x150] sm:$0xff] %v293
    %566 = vst [vmem:[#allocation2 + $0x158] sm:$0xff] %v295
    %567 = vst [vmem:[#allocation2 + $0x160] sm:$0xff] %v406
    %568 = vst [vmem:[#allocation2 + $0x168] sm:$0xff] %v408
    %569 = vst [vmem:[#allocation2 + $0x170] sm:$0xff] %v519
    %570 = vst [vmem:[#allocation2 + $0x178] sm:$0xff] %v521
    %v571 = vld [vmem:[#allocation8] sm:$0xff]
    %v572 = vld [vmem:[#allocation8 + $0x8] sm:$0xff]
    %v573 = vld [vmem:[#allocation8 + $0x10] sm:$0xff]
    %v574 = vld [vmem:[#allocation8 + $0x18] sm:$0xff]
    %v575 = vld [vmem:[#allocation8 + $0x20] sm:$0xff]
    %v576 = vld [vmem:[#allocation8 + $0x28] sm:$0xff]
    %v577 = vld [vmem:[#allocation8 + $0x30] sm:$0xff]
    %v578 = vld [vmem:[#allocation8 + $0x38] sm:$0xff]
    %v579 = vld [vmem:[#allocation8 + $0x40] sm:$0xff]
    %v580 = vld [vmem:[#allocation8 + $0x48] sm:$0xff]
    %v581 = vld [vmem:[#allocation8 + $0x50] sm:$0xff]
    %v582 = vld [vmem:[#allocation8 + $0x58] sm:$0xff]
    %v583 = vld [vmem:[#allocation8 + $0x60] sm:$0xff]
    %v584 = vld [vmem:[#allocation8 + $0x68] sm:$0xff]
    %v585 = vld [vmem:[#allocation8 + $0x70] sm:$0xff]
    %v586 = vld [vmem:[#allocation8 + $0x78] sm:$0xff]
    %v587 = vld [vmem:[#allocation8 + $0x80] sm:$0xff]
    %v588 = vld [vmem:[#allocation8 + $0x88] sm:$0xff]
    %v589 = vld [vmem:[#allocation8 + $0x90] sm:$0xff]
    %v590 = vld [vmem:[#allocation8 + $0x98] sm:$0xff]
    %v591 = vld [vmem:[#allocation8 + $0xa0] sm:$0xff]
    %v592 = vld [vmem:[#allocation8 + $0xa8] sm:$0xff]
    %v593 = vld [vmem:[#allocation8 + $0xb0] sm:$0xff]
    %v594 = vld [vmem:[#allocation8 + $0xb8] sm:$0xff]
    %v595 = vld [vmem:[#allocation8 + $0xc0] sm:$0xff]
    %v596 = vld [vmem:[#allocation8 + $0xc8] sm:$0xff]
    %v597 = vld [vmem:[#allocation8 + $0xd0] sm:$0xff]
    %v598 = vld [vmem:[#allocation8 + $0xd8] sm:$0xff]
    %v599 = vld [vmem:[#allocation8 + $0xe0] sm:$0xff]
    %v600 = vld [vmem:[#allocation8 + $0xe8] sm:$0xff]
    %v601 = vld [vmem:[#allocation8 + $0xf0] sm:$0xff]
    %v602 = vld [vmem:[#allocation8 + $0xf8] sm:$0xff]
    %v603 = vld [vmem:[#allocation8 + $0x100] sm:$0xff]
    %v604 = vld [vmem:[#allocation8 + $0x108] sm:$0xff]
    %v605 = vld [vmem:[#allocation8 + $0x110] sm:$0xff]
    %v606 = vld [vmem:[#allocation8 + $0x118] sm:$0xff]
    %v607 = vld [vmem:[#allocation8 + $0x120] sm:$0xff]
    %v608 = vld [vmem:[#allocation8 + $0x128] sm:$0xff]
    %v609 = vld [vmem:[#allocation8 + $0x130] sm:$0xff]
    %v610 = vld [vmem:[#allocation8 + $0x138] sm:$0xff]
    %v611 = vld [vmem:[#allocation8 + $0x140] sm:$0xff]
    %v612 = vld [vmem:[#allocation8 + $0x148] sm:$0xff]
    %v613 = vld [vmem:[#allocation8 + $0x150] sm:$0xff]
    %v614 = vld [vmem:[#allocation8 + $0x158] sm:$0xff]
    %v615 = vld [vmem:[#allocation8 + $0x160] sm:$0xff]
    %v616 = vld [vmem:[#allocation8 + $0x168] sm:$0xff]
    %v617 = vld [vmem:[#allocation8 + $0x170] sm:$0xff]
    %v618 = vld [vmem:[#allocation8 + $0x178] sm:$0xff]
    %v619 = vld [vmem:[#allocation8 + $0x180] sm:$0xff]
    %v620 = vld [vmem:[#allocation8 + $0x188] sm:$0xff]
    %v621 = vld [vmem:[#allocation8 + $0x190] sm:$0xff]
    %v622 = vld [vmem:[#allocation8 + $0x198] sm:$0xff]
    %v623 = vld [vmem:[#allocation8 + $0x1a0] sm:$0xff]
    %v624 = vld [vmem:[#allocation8 + $0x1a8] sm:$0xff]
    %v625 = vld [vmem:[#allocation8 + $0x1b0] sm:$0xff]
    %v626 = vld [vmem:[#allocation8 + $0x1b8] sm:$0xff]
    %v627 = vld [vmem:[#allocation8 + $0x1c0] sm:$0xff]
    %v628 = vld [vmem:[#allocation8 + $0x1c8] sm:$0xff]
    %v629 = vld [vmem:[#allocation8 + $0x1d0] sm:$0xff]
    %v630 = vld [vmem:[#allocation8 + $0x1d8] sm:$0xff]
    %v631 = vld [vmem:[#allocation8 + $0x1e0] sm:$0xff]
    %v632 = vld [vmem:[#allocation8 + $0x1e8] sm:$0xff]
    %v633 = vld [vmem:[#allocation8 + $0x1f0] sm:$0xff]
    %v634 = vld [vmem:[#allocation8 + $0x1f8] sm:$0xff]
    %v635 = vld [vmem:[#allocation8 + $0x200] sm:$0xff]
    %v636 = vld [vmem:[#allocation8 + $0x208] sm:$0xff]
    %v637 = vld [vmem:[#allocation8 + $0x210] sm:$0xff]
    %v638 = vld [vmem:[#allocation8 + $0x218] sm:$0xff]
    %v639 = vld [vmem:[#allocation8 + $0x220] sm:$0xff]
    %v640 = vld [vmem:[#allocation8 + $0x228] sm:$0xff]
    %v641 = vld [vmem:[#allocation8 + $0x230] sm:$0xff]
    %v642 = vld [vmem:[#allocation8 + $0x238] sm:$0xff]
    %v643 = vld [vmem:[#allocation8 + $0x240] sm:$0xff]
    %v644 = vld [vmem:[#allocation8 + $0x248] sm:$0xff]
    %v645 = vld [vmem:[#allocation8 + $0x250] sm:$0xff]
    %v646 = vld [vmem:[#allocation8 + $0x258] sm:$0xff]
    %v647 = vld [vmem:[#allocation8 + $0x260] sm:$0xff]
    %v648 = vld [vmem:[#allocation8 + $0x268] sm:$0xff]
    %v649 = vld [vmem:[#allocation8 + $0x270] sm:$0xff]
    %v650 = vld [vmem:[#allocation8 + $0x278] sm:$0xff]
    %v651 = vld [vmem:[#allocation8 + $0x280] sm:$0xff]
    %v652 = vld [vmem:[#allocation8 + $0x288] sm:$0xff]
    %v653 = vld [vmem:[#allocation8 + $0x290] sm:$0xff]
    %v654 = vld [vmem:[#allocation8 + $0x298] sm:$0xff]
    %v655 = vld [vmem:[#allocation8 + $0x2a0] sm:$0xff]
    %v656 = vld [vmem:[#allocation8 + $0x2a8] sm:$0xff]
    %v657 = vld [vmem:[#allocation8 + $0x2b0] sm:$0xff]
    %v658 = vld [vmem:[#allocation8 + $0x2b8] sm:$0xff]
    %v659 = vld [vmem:[#allocation8 + $0x2c0] sm:$0xff]
    %v660 = vld [vmem:[#allocation8 + $0x2c8] sm:$0xff]
    %v661 = vld [vmem:[#allocation8 + $0x2d0] sm:$0xff]
    %v662 = vld [vmem:[#allocation8 + $0x2d8] sm:$0xff]
    %v663 = vld [vmem:[#allocation8 + $0x2e0] sm:$0xff]
    %v664 = vld [vmem:[#allocation8 + $0x2e8] sm:$0xff]
    %v665 = vld [vmem:[#allocation8 + $0x2f0] sm:$0xff]
    %v666 = vld [vmem:[#allocation8 + $0x2f8] sm:$0xff]
    %v667 = vld [vmem:[#allocation8 + $0x300] sm:$0xff]
    %v668 = vld [vmem:[#allocation8 + $0x308] sm:$0xff]
    %v669 = vld [vmem:[#allocation8 + $0x310] sm:$0xff]
    %v670 = vld [vmem:[#allocation8 + $0x318] sm:$0xff]
    %v671 = vld [vmem:[#allocation8 + $0x320] sm:$0xff]
    %v672 = vld [vmem:[#allocation8 + $0x328] sm:$0xff]
    %v673 = vld [vmem:[#allocation8 + $0x330] sm:$0xff]
    %v674 = vld [vmem:[#allocation8 + $0x338] sm:$0xff]
    %v675 = vld [vmem:[#allocation8 + $0x340] sm:$0xff]
    %v676 = vld [vmem:[#allocation8 + $0x348] sm:$0xff]
    %v677 = vld [vmem:[#allocation8 + $0x350] sm:$0xff]
    %v678 = vld [vmem:[#allocation8 + $0x358] sm:$0xff]
    %v679 = vld [vmem:[#allocation8 + $0x360] sm:$0xff]
    %v680 = vld [vmem:[#allocation8 + $0x368] sm:$0xff]
    %v681 = vld [vmem:[#allocation8 + $0x370] sm:$0xff]
    %v682 = vld [vmem:[#allocation8 + $0x378] sm:$0xff]
    %v683 = vld [vmem:[#allocation8 + $0x380] sm:$0xff]
    %v684 = vld [vmem:[#allocation8 + $0x388] sm:$0xff]
    %v685 = vld [vmem:[#allocation8 + $0x390] sm:$0xff]
    %v686 = vld [vmem:[#allocation8 + $0x398] sm:$0xff]
    %v687 = vld [vmem:[#allocation8 + $0x3a0] sm:$0xff]
    %v688 = vld [vmem:[#allocation8 + $0x3a8] sm:$0xff]
    %v689 = vld [vmem:[#allocation8 + $0x3b0] sm:$0xff]
    %v690 = vld [vmem:[#allocation8 + $0x3b8] sm:$0xff]
    %v691 = vld [vmem:[#allocation8 + $0x3c0] sm:$0xff]
    %v692 = vld [vmem:[#allocation8 + $0x3c8] sm:$0xff]
    %v693 = vld [vmem:[#allocation8 + $0x3d0] sm:$0xff]
    %v694 = vld [vmem:[#allocation8 + $0x3d8] sm:$0xff]
    %v695 = vld [vmem:[#allocation8 + $0x3e0] sm:$0xff]
    %v696 = vld [vmem:[#allocation8 + $0x3e8] sm:$0xff]
    %v697 = vld [vmem:[#allocation8 + $0x3f0] sm:$0xff]
    %v698 = vld [vmem:[#allocation8 + $0x3f8] sm:$0xff]
    %v699 = vld [vmem:[#allocation8 + $0x400] sm:$0xff]
    %v700 = vld [vmem:[#allocation8 + $0x408] sm:$0xff]
    %v701 = vld [vmem:[#allocation8 + $0x410] sm:$0xff]
    %v702 = vld [vmem:[#allocation8 + $0x418] sm:$0xff]
    %v703 = vld [vmem:[#allocation8 + $0x420] sm:$0xff]
    %v704 = vld [vmem:[#allocation8 + $0x428] sm:$0xff]
    %v705 = vld [vmem:[#allocation8 + $0x430] sm:$0xff]
    %v706 = vld [vmem:[#allocation8 + $0x438] sm:$0xff]
    %v707 = vld [vmem:[#allocation8 + $0x440] sm:$0xff]
    %v708 = vld [vmem:[#allocation8 + $0x448] sm:$0xff]
    %v709 = vld [vmem:[#allocation8 + $0x450] sm:$0xff]
    %v710 = vld [vmem:[#allocation8 + $0x458] sm:$0xff]
    %v711 = vld [vmem:[#allocation8 + $0x460] sm:$0xff]
    %v712 = vld [vmem:[#allocation8 + $0x468] sm:$0xff]
    %v713 = vld [vmem:[#allocation8 + $0x470] sm:$0xff]
    %v714 = vld [vmem:[#allocation8 + $0x478] sm:$0xff]
    %v715 = vld [vmem:[#allocation8 + $0x480] sm:$0xff]
    %v716 = vld [vmem:[#allocation8 + $0x488] sm:$0xff]
    %v717 = vld [vmem:[#allocation8 + $0x490] sm:$0xff]
    %v718 = vld [vmem:[#allocation8 + $0x498] sm:$0xff]
    %v719 = vld [vmem:[#allocation8 + $0x4a0] sm:$0xff]
    %v720 = vld [vmem:[#allocation8 + $0x4a8] sm:$0xff]
    %v721 = vld [vmem:[#allocation8 + $0x4b0] sm:$0xff]
    %v722 = vld [vmem:[#allocation8 + $0x4b8] sm:$0xff]
    %v723 = vld [vmem:[#allocation8 + $0x4c0] sm:$0xff]
    %v724 = vld [vmem:[#allocation8 + $0x4c8] sm:$0xff]
    %v725 = vld [vmem:[#allocation8 + $0x4d0] sm:$0xff]
    %v726 = vld [vmem:[#allocation8 + $0x4d8] sm:$0xff]
    %v727 = vld [vmem:[#allocation8 + $0x4e0] sm:$0xff]
    %v728 = vld [vmem:[#allocation8 + $0x4e8] sm:$0xff]
    %v729 = vld [vmem:[#allocation8 + $0x4f0] sm:$0xff]
    %v730 = vld [vmem:[#allocation8 + $0x4f8] sm:$0xff]
    %v731 = vld [vmem:[#allocation8 + $0x500] sm:$0xff]
    %v732 = vld [vmem:[#allocation8 + $0x508] sm:$0xff]
    %v733 = vld [vmem:[#allocation8 + $0x510] sm:$0xff]
    %v734 = vld [vmem:[#allocation8 + $0x518] sm:$0xff]
    %v735 = vld [vmem:[#allocation8 + $0x520] sm:$0xff]
    %v736 = vld [vmem:[#allocation8 + $0x528] sm:$0xff]
    %v737 = vld [vmem:[#allocation8 + $0x530] sm:$0xff]
    %v738 = vld [vmem:[#allocation8 + $0x538] sm:$0xff]
    %v739 = vld [vmem:[#allocation8 + $0x540] sm:$0xff]
    %v740 = vld [vmem:[#allocation8 + $0x548] sm:$0xff]
    %v741 = vld [vmem:[#allocation8 + $0x550] sm:$0xff]
    %v742 = vld [vmem:[#allocation8 + $0x558] sm:$0xff]
    %v743 = vld [vmem:[#allocation8 + $0x560] sm:$0xff]
    %v744 = vld [vmem:[#allocation8 + $0x568] sm:$0xff]
    %v745 = vld [vmem:[#allocation8 + $0x570] sm:$0xff]
    %v746 = vld [vmem:[#allocation8 + $0x578] sm:$0xff]
    %v747 = vld [vmem:[#allocation8 + $0x580] sm:$0xff]
    %v748 = vld [vmem:[#allocation8 + $0x588] sm:$0xff]
    %v749 = vld [vmem:[#allocation8 + $0x590] sm:$0xff]
    %v750 = vld [vmem:[#allocation8 + $0x598] sm:$0xff]
    %v751 = vld [vmem:[#allocation8 + $0x5a0] sm:$0xff]
    %v752 = vld [vmem:[#allocation8 + $0x5a8] sm:$0xff]
    %v753 = vld [vmem:[#allocation8 + $0x5b0] sm:$0xff]
    %v754 = vld [vmem:[#allocation8 + $0x5b8] sm:$0xff]
    %v755 = vld [vmem:[#allocation8 + $0x5c0] sm:$0xff]
    %v756 = vld [vmem:[#allocation8 + $0x5c8] sm:$0xff]
    %v757 = vld [vmem:[#allocation8 + $0x5d0] sm:$0xff]
    %v758 = vld [vmem:[#allocation8 + $0x5d8] sm:$0xff]
    %v759 = vld [vmem:[#allocation8 + $0x5e0] sm:$0xff]
    %v760 = vld [vmem:[#allocation8 + $0x5e8] sm:$0xff]
    %v761 = vld [vmem:[#allocation8 + $0x5f0] sm:$0xff]
    %v762 = vld [vmem:[#allocation8 + $0x5f8] sm:$0xff]
    %v763 = vld [vmem:[%s5] sm:$0xff]
    %v764 = vld [vmem:[%s5 + $0x8] sm:$0xff]
    %v765 = vld [vmem:[#allocation5] sm:$0xff]
    %v766 = vld [vmem:[#allocation5 + $0x8] sm:$0xff]
    %767 = vmatprep.subr.mxu0 %v572
    %768 = vmatpush1.msra.mxu0 %v571
    %769 = vmatprep.subr.mxu0 %v578
    %770 = vmatpush1.msra.mxu0 %v577
    %771 = vmatprep.subr.mxu0 %v584
    %772 = vmatpush1.msra.mxu0 %v583
    %773 = vmatprep.subr.mxu0 %v590
    %774 = vmatpush1.msra.mxu0 %v589
    %775 = vmatprep.subr.mxu0 %v596
    %776 = vmatpush1.msra.mxu0 %v595
    %777 = vmatprep.subr.mxu0 %v602
    %778 = vmatpush1.msra.mxu0 %v601
    %779 = vmatprep.subr.mxu0 %v608
    %780 = vmatpush1.msra.mxu0 %v607
    %781 = vmatprep.subr.mxu0 %v614
    %782 = vmatpush1.msra.mxu0 %v613
    %783 = vmatprep.subr.mxu0 %v620
    %784 = vmatpush1.msra.mxu0 %v619
    %785 = vmatprep.subr.mxu0 %v626
    %786 = vmatpush1.msra.mxu0 %v625
    %787 = vmatprep.subr.mxu0 %v632
    %788 = vmatpush1.msra.mxu0 %v631
    %789 = vmatprep.subr.mxu0 %v638
    %790 = vmatpush1.msra.mxu0 %v637
    %791 = vmatprep.subr.mxu0 %v644
    %792 = vmatpush1.msra.mxu0 %v643
    %793 = vmatprep.subr.mxu0 %v650
    %794 = vmatpush1.msra.mxu0 %v649
    %795 = vmatprep.subr.mxu0 %v656
    %796 = vmatpush1.msra.mxu0 %v655
    %797 = vmatprep.subr.mxu0 %v662
    %798 = vmatpush1.msra.mxu0 %v661
    %799 = vmatprep.subr.mxu0 %v668
    %800 = vmatpush1.msra.mxu0 %v667
    %801 = vmatprep.subr.mxu0 %v674
    %802 = vmatpush1.msra.mxu0 %v673
    %803 = vmatprep.subr.mxu0 %v680
    %804 = vmatpush1.msra.mxu0 %v679
    %805 = vmatprep.subr.mxu0 %v686
    %806 = vmatpush1.msra.mxu0 %v685
    %807 = vmatprep.subr.mxu0 %v692
    %808 = vmatpush1.msra.mxu0 %v691
    %809 = vmatprep.subr.mxu0 %v698
    %810 = vmatpush1.msra.mxu0 %v697
    %811 = vmatprep.subr.mxu0 %v704
    %812 = vmatpush1.msra.mxu0 %v703
    %813 = vmatprep.subr.mxu0 %v710
    %814 = vmatpush1.msra.mxu0 %v709
    %815 = vmatprep.subr.mxu0 %v716
    %816 = vmatpush1.msra.mxu0 %v715
    %817 = vmatprep.subr.mxu0 %v722
    %818 = vmatpush1.msra.mxu0 %v721
    %819 = vmatprep.subr.mxu0 %v728
    %820 = vmatpush1.msra.mxu0 %v727
    %821 = vmatprep.subr.mxu0 %v734
    %822 = vmatpush1.msra.mxu0 %v733
    %823 = vmatprep.subr.mxu0 %v740
    %824 = vmatpush1.msra.mxu0 %v739
    %825 = vmatprep.subr.mxu0 %v746
    %826 = vmatpush1.msra.mxu0 %v745
    %827 = vmatprep.subr.mxu0 %v752
    %828 = vmatpush1.msra.mxu0 %v751
    %829 = vmatprep.subr.mxu0 %v758
    %830 = vmatpush1.msra.mxu0 %v757
    %831 = vmatprep.mubr.f32.mxu0 %v766
    %832 = vmatmul.mubr.f32.gmra.mrb[0].mxu0 %v765
    %v833 = vpop.f32.mrb[0].mxu0
    %v834 = vadd.f32 0.0, %v833
    %v835 = vpop.f32.mrb[0].mxu0
    %v836 = vadd.f32 0.0, %v835
    %837 = vdwg.mxu0
    %838 = vmatprep.subr.mxu0 %v574
    %839 = vmatpush1.msra.mxu0 %v573
    %840 = vmatprep.subr.mxu0 %v580
    %841 = vmatpush1.msra.mxu0 %v579
    %842 = vmatprep.subr.mxu0 %v586
    %843 = vmatpush1.msra.mxu0 %v585
    %844 = vmatprep.subr.mxu0 %v592
    %845 = vmatpush1.msra.mxu0 %v591
    %846 = vmatprep.subr.mxu0 %v598
    %847 = vmatpush1.msra.mxu0 %v597
    %848 = vmatprep.subr.mxu0 %v604
    %849 = vmatpush1.msra.mxu0 %v603
    %850 = vmatprep.subr.mxu0 %v610
    %851 = vmatpush1.msra.mxu0 %v609
    %852 = vmatprep.subr.mxu0 %v616
    %853 = vmatpush1.msra.mxu0 %v615
    %854 = vmatprep.subr.mxu0 %v622
    %855 = vmatpush1.msra.mxu0 %v621
    %856 = vmatprep.subr.mxu0 %v628
    %857 = vmatpush1.msra.mxu0 %v627
    %858 = vmatprep.subr.mxu0 %v634
    %859 = vmatpush1.msra.mxu0 %v633
    %860 = vmatprep.subr.mxu0 %v640
    %861 = vmatpush1.msra.mxu0 %v639
    %862 = vmatprep.subr.mxu0 %v646
    %863 = vmatpush1.msra.mxu0 %v645
    %864 = vmatprep.subr.mxu0 %v652
    %865 = vmatpush1.msra.mxu0 %v651
    %866 = vmatprep.subr.mxu0 %v658
    %867 = vmatpush1.msra.mxu0 %v657
    %868 = vmatprep.subr.mxu0 %v664
    %869 = vmatpush1.msra.mxu0 %v663
    %870 = vmatprep.subr.mxu0 %v670
    %871 = vmatpush1.msra.mxu0 %v669
    %872 = vmatprep.subr.mxu0 %v676
    %873 = vmatpush1.msra.mxu0 %v675
    %874 = vmatprep.subr.mxu0 %v682
    %875 = vmatpush1.msra.mxu0 %v681
    %876 = vmatprep.subr.mxu0 %v688
    %877 = vmatpush1.msra.mxu0 %v687
    %878 = vmatprep.subr.mxu0 %v694
    %879 = vmatpush1.msra.mxu0 %v693
    %880 = vmatprep.subr.mxu0 %v700
    %881 = vmatpush1.msra.mxu0 %v699
    %882 = vmatprep.subr.mxu0 %v706
    %883 = vmatpush1.msra.mxu0 %v705
    %884 = vmatprep.subr.mxu0 %v712
    %885 = vmatpush1.msra.mxu0 %v711
    %886 = vmatprep.subr.mxu0 %v718
    %887 = vmatpush1.msra.mxu0 %v717
    %888 = vmatprep.subr.mxu0 %v724
    %889 = vmatpush1.msra.mxu0 %v723
    %890 = vmatprep.subr.mxu0 %v730
    %891 = vmatpush1.msra.mxu0 %v729
    %892 = vmatprep.subr.mxu0 %v736
    %893 = vmatpush1.msra.mxu0 %v735
    %894 = vmatprep.subr.mxu0 %v742
    %895 = vmatpush1.msra.mxu0 %v741
    %896 = vmatprep.subr.mxu0 %v748
    %897 = vmatpush1.msra.mxu0 %v747
    %898 = vmatprep.subr.mxu0 %v754
    %899 = vmatpush1.msra.mxu0 %v753
    %900 = vmatprep.subr.mxu0 %v760
    %901 = vmatpush1.msra.mxu0 %v759
    %902 = vmatprep.mubr.f32.mxu0 %v766
    %903 = vmatmul.mubr.f32.gmra.mrb[0].mxu0 %v765
    %v904 = vpop.f32.mrb[0].mxu0
    %v905 = vadd.f32 0.0, %v904
    %v906 = vpop.f32.mrb[0].mxu0
    %v907 = vadd.f32 0.0, %v906
    %908 = vdwg.mxu0
    %909 = vmatprep.subr.mxu0 %v576
    %910 = vmatpush1.msra.mxu0 %v575
    %911 = vmatprep.subr.mxu0 %v582
    %912 = vmatpush1.msra.mxu0 %v581
    %913 = vmatprep.subr.mxu0 %v588
    %914 = vmatpush1.msra.mxu0 %v587
    %915 = vmatprep.subr.mxu0 %v594
    %916 = vmatpush1.msra.mxu0 %v593
    %917 = vmatprep.subr.mxu0 %v600
    %918 = vmatpush1.msra.mxu0 %v599
    %919 = vmatprep.subr.mxu0 %v606
    %920 = vmatpush1.msra.mxu0 %v605
    %921 = vmatprep.subr.mxu0 %v612
    %922 = vmatpush1.msra.mxu0 %v611
    %923 = vmatprep.subr.mxu0 %v618
    %924 = vmatpush1.msra.mxu0 %v617
    %925 = vmatprep.subr.mxu0 %v624
    %926 = vmatpush1.msra.mxu0 %v623
    %927 = vmatprep.subr.mxu0 %v630
    %928 = vmatpush1.msra.mxu0 %v629
    %929 = vmatprep.subr.mxu0 %v636
    %930 = vmatpush1.msra.mxu0 %v635
    %931 = vmatprep.subr.mxu0 %v642
    %932 = vmatpush1.msra.mxu0 %v641
    %933 = vmatprep.subr.mxu0 %v648
    %934 = vmatpush1.msra.mxu0 %v647
    %935 = vmatprep.subr.mxu0 %v654
    %936 = vmatpush1.msra.mxu0 %v653
    %937 = vmatprep.subr.mxu0 %v660
    %938 = vmatpush1.msra.mxu0 %v659
    %939 = vmatprep.subr.mxu0 %v666
    %940 = vmatpush1.msra.mxu0 %v665
    %941 = vmatprep.subr.mxu0 %v672
    %942 = vmatpush1.msra.mxu0 %v671
    %943 = vmatprep.subr.mxu0 %v678
    %944 = vmatpush1.msra.mxu0 %v677
    %945 = vmatprep.subr.mxu0 %v684
    %946 = vmatpush1.msra.mxu0 %v683
    %947 = vmatprep.subr.mxu0 %v690
    %948 = vmatpush1.msra.mxu0 %v689
    %949 = vmatprep.subr.mxu0 %v696
    %950 = vmatpush1.msra.mxu0 %v695
    %951 = vmatprep.subr.mxu0 %v702
    %952 = vmatpush1.msra.mxu0 %v701
    %953 = vmatprep.subr.mxu0 %v708
    %954 = vmatpush1.msra.mxu0 %v707
    %955 = vmatprep.subr.mxu0 %v714
    %956 = vmatpush1.msra.mxu0 %v713
    %957 = vmatprep.subr.mxu0 %v720
    %958 = vmatpush1.msra.mxu0 %v719
    %959 = vmatprep.subr.mxu0 %v726
    %960 = vmatpush1.msra.mxu0 %v725
    %961 = vmatprep.subr.mxu0 %v732
    %962 = vmatpush1.msra.mxu0 %v731
    %963 = vmatprep.subr.mxu0 %v738
    %964 = vmatpush1.msra.mxu0 %v737
    %965 = vmatprep.subr.mxu0 %v744
    %966 = vmatpush1.msra.mxu0 %v743
    %967 = vmatprep.subr.mxu0 %v750
    %968 = vmatpush1.msra.mxu0 %v749
    %969 = vmatprep.subr.mxu0 %v756
    %970 = vmatpush1.msra.mxu0 %v755
    %971 = vmatprep.subr.mxu0 %v762
    %972 = vmatpush1.msra.mxu0 %v761
    %973 = vmatprep.mubr.f32.mxu0 %v766
    %974 = vmatmul.mubr.f32.gmra.mrb[0].mxu0 %v765
    %v975 = vpop.f32.mrb[0].mxu0
    %v976 = vadd.f32 0.0, %v975
    %v977 = vpop.f32.mrb[0].mxu0
    %v978 = vadd.f32 0.0, %v977
    %979 = vdwg.mxu0
    %v980 = vld [vmem:[#allocation2] sm:$0xff]
    %v981 = vld [vmem:[#allocation2 + $0x8] sm:$0xff]
    %v982 = vld [vmem:[#allocation2 + $0x10] sm:$0xff]
    %v983 = vld [vmem:[#allocation2 + $0x168] sm:$0xff]
    %v984 = vld [vmem:[#allocation2 + $0x170] sm:$0xff]
    %v985 = vld [vmem:[#allocation2 + $0x178] sm:$0xff]
    %v986 = vadd.f32 %v980, %v834
    %v987 = vxor.u32 %v986, 2147483648
    %v988 = vmul.f32 %v987, 1.442695
    %v989 = vpow.pop %v988
    %v990 = vadd.f32 %v989, 1.0
    %v991 = vrcp.pop %v990
    %v992 = vmul.f32 1.0, %v991
    %v993 = vadd.f32 %v981, %v836
    %v994 = vxor.u32 %v993, 2147483648
    %v995 = vmul.f32 %v994, 1.442695
    %v996 = vpow.pop %v995
    %v997 = vadd.f32 %v996, 1.0
    %v998 = vrcp.pop %v997
    %v999 = vmul.f32 1.0, %v998
    %v1000 = vadd.f32 %v905, %v763
    %v1001 = vmul.f32 %v992, %v1000
    %v1002 = vadd.f32 %v982, %v1001
    %v1003 = vtanh.pop %v1002
    %v1004 = vsub.f32 %v765, %v1003
    %v1005 = vmul.f32 %v999, %v1004
    %v1006 = vadd.f32 %v1003, %v1005
    %v1007 = vadd.f32 %v983, %v907
    %v1008 = vxor.u32 %v1007, 2147483648
    %v1009 = vmul.f32 %v1008, 1.442695
    %v1010 = vpow.pop %v1009
    %v1011 = vadd.f32 %v1010, 1.0
    %v1012 = vrcp.pop %v1011
    %v1013 = vmul.f32 1.0, %v1012
    %v1014 = vadd.f32 %v984, %v976
    %v1015 = vxor.u32 %v1014, 2147483648
    %v1016 = vmul.f32 %v1015, 1.442695
    %v1017 = vpow.pop %v1016
    %v1018 = vadd.f32 %v1017, 1.0
    %v1019 = vrcp.pop %v1018
    %v1020 = vmul.f32 1.0, %v1019
    %v1021 = vadd.f32 %v978, %v764
    %v1022 = vmul.f32 %v1013, %v1021
    %v1023 = vadd.f32 %v985, %v1022
    %v1024 = vtanh.pop %v1023
    %v1025 = vsub.f32 %v766, %v1024
    %v1026 = vmul.f32 %v1020, %v1025
    %v1027 = vadd.f32 %v1024, %v1026
    %1028 = vst [vmem:[#allocation3] sm:$0xff] %v1006
    %1029 = vst [vmem:[#allocation3 + $0x78] sm:$0xff] %v1027
    %1030 = vmatprep.subr.mxu0 %v572
    %1031 = vmatpush1.msra.mxu0 %v571
    %1032 = vmatprep.subr.mxu0 %v578
    %1033 = vmatpush1.msra.mxu0 %v577
    %1034 = vmatprep.subr.mxu0 %v584
    %1035 = vmatpush1.msra.mxu0 %v583
    %1036 = vmatprep.subr.mxu0 %v590
    %1037 = vmatpush1.msra.mxu0 %v589
    %1038 = vmatprep.subr.mxu0 %v596
    %1039 = vmatpush1.msra.mxu0 %v595
    %1040 = vmatprep.subr.mxu0 %v602
    %1041 = vmatpush1.msra.mxu0 %v601
    %1042 = vmatprep.subr.mxu0 %v608
    %1043 = vmatpush1.msra.mxu0 %v607
    %1044 = vmatprep.subr.mxu0 %v614
    %1045 = vmatpush1.msra.mxu0 %v613
    %1046 = vmatprep.subr.mxu0 %v620
    %1047 = vmatpush1.msra.mxu0 %v619
    %1048 = vmatprep.subr.mxu0 %v626
    %1049 = vmatpush1.msra.mxu0 %v625
    %1050 = vmatprep.subr.mxu0 %v632
    %1051 = vmatpush1.msra.mxu0 %v631
    %1052 = vmatprep.subr.mxu0 %v638
    %1053 = vmatpush1.msra.mxu0 %v637
    %1054 = vmatprep.subr.mxu0 %v644
    %1055 = vmatpush1.msra.mxu0 %v643
    %1056 = vmatprep.subr.mxu0 %v650
    %1057 = vmatpush1.msra.mxu0 %v649
    %1058 = vmatprep.subr.mxu0 %v656
    %1059 = vmatpush1.msra.mxu0 %v655
    %1060 = vmatprep.subr.mxu0 %v662
    %1061 = vmatpush1.msra.mxu0 %v661
    %1062 = vmatprep.subr.mxu0 %v668
    %1063 = vmatpush1.msra.mxu0 %v667
    %1064 = vmatprep.subr.mxu0 %v674
    %1065 = vmatpush1.msra.mxu0 %v673
    %1066 = vmatprep.subr.mxu0 %v680
    %1067 = vmatpush1.msra.mxu0 %v679
    %1068 = vmatprep.subr.mxu0 %v686
    %1069 = vmatpush1.msra.mxu0 %v685
    %1070 = vmatprep.subr.mxu0 %v692
    %1071 = vmatpush1.msra.mxu0 %v691
    %1072 = vmatprep.subr.mxu0 %v698
    %1073 = vmatpush1.msra.mxu0 %v697
    %1074 = vmatprep.subr.mxu0 %v704
    %1075 = vmatpush1.msra.mxu0 %v703
    %1076 = vmatprep.subr.mxu0 %v710
    %1077 = vmatpush1.msra.mxu0 %v709
    %1078 = vmatprep.subr.mxu0 %v716
    %1079 = vmatpush1.msra.mxu0 %v715
    %1080 = vmatprep.subr.mxu0 %v722
    %1081 = vmatpush1.msra.mxu0 %v721
    %1082 = vmatprep.subr.mxu0 %v728
    %1083 = vmatpush1.msra.mxu0 %v727
    %1084 = vmatprep.subr.mxu0 %v734
    %1085 = vmatpush1.msra.mxu0 %v733
    %1086 = vmatprep.subr.mxu0 %v740
    %1087 = vmatpush1.msra.mxu0 %v739
    %1088 = vmatprep.subr.mxu0 %v746
    %1089 = vmatpush1.msra.mxu0 %v745
    %1090 = vmatprep.subr.mxu0 %v752
    %1091 = vmatpush1.msra.mxu0 %v751
    %1092 = vmatprep.subr.mxu0 %v758
    %1093 = vmatpush1.msra.mxu0 %v757
    %1094 = vmatprep.mubr.f32.mxu0 %v1027
    %1095 = vmatmul.mubr.f32.gmra.mrb[0].mxu0 %v1006
    %v1096 = vpop.f32.mrb[0].mxu0
    %v1097 = vadd.f32 0.0, %v1096
    %v1098 = vpop.f32.mrb[0].mxu0
    %v1099 = vadd.f32 0.0, %v1098
    %1100 = vdwg.mxu0
    %1101 = vmatprep.subr.mxu0 %v574
    %1102 = vmatpush1.msra.mxu0 %v573
    %1103 = vmatprep.subr.mxu0 %v580
    %1104 = vmatpush1.msra.mxu0 %v579
    %1105 = vmatprep.subr.mxu0 %v586
    %1106 = vmatpush1.msra.mxu0 %v585
    %1107 = vmatprep.subr.mxu0 %v592
    %1108 = vmatpush1.msra.mxu0 %v591
    %1109 = vmatprep.subr.mxu0 %v598
    %1110 = vmatpush1.msra.mxu0 %v597
    %1111 = vmatprep.subr.mxu0 %v604
    %1112 = vmatpush1.msra.mxu0 %v603
    %1113 = vmatprep.subr.mxu0 %v610
    %1114 = vmatpush1.msra.mxu0 %v609
    %1115 = vmatprep.subr.mxu0 %v616
    %1116 = vmatpush1.msra.mxu0 %v615
    %1117 = vmatprep.subr.mxu0 %v622
    %1118 = vmatpush1.msra.mxu0 %v621
    %1119 = vmatprep.subr.mxu0 %v628
    %1120 = vmatpush1.msra.mxu0 %v627
    %1121 = vmatprep.subr.mxu0 %v634
    %1122 = vmatpush1.msra.mxu0 %v633
    %1123 = vmatprep.subr.mxu0 %v640
    %1124 = vmatpush1.msra.mxu0 %v639
    %1125 = vmatprep.subr.mxu0 %v646
    %1126 = vmatpush1.msra.mxu0 %v645
    %1127 = vmatprep.subr.mxu0 %v652
    %1128 = vmatpush1.msra.mxu0 %v651
    %1129 = vmatprep.subr.mxu0 %v658
    %1130 = vmatpush1.msra.mxu0 %v657
    %1131 = vmatprep.subr.mxu0 %v664
    %1132 = vmatpush1.msra.mxu0 %v663
    %1133 = vmatprep.subr.mxu0 %v670
    %1134 = vmatpush1.msra.mxu0 %v669
    %1135 = vmatprep.subr.mxu0 %v676
    %1136 = vmatpush1.msra.mxu0 %v675
    %1137 = vmatprep.subr.mxu0 %v682
    %1138 = vmatpush1.msra.mxu0 %v681
    %1139 = vmatprep.subr.mxu0 %v688
    %1140 = vmatpush1.msra.mxu0 %v687
    %1141 = vmatprep.subr.mxu0 %v694
    %1142 = vmatpush1.msra.mxu0 %v693
    %1143 = vmatprep.subr.mxu0 %v700
    %1144 = vmatpush1.msra.mxu0 %v699
    %1145 = vmatprep.subr.mxu0 %v706
    %1146 = vmatpush1.msra.mxu0 %v705
    %1147 = vmatprep.subr.mxu0 %v712
    %1148 = vmatpush1.msra.mxu0 %v711
    %1149 = vmatprep.subr.mxu0 %v718
    %1150 = vmatpush1.msra.mxu0 %v717
    %1151 = vmatprep.subr.mxu0 %v724
    %1152 = vmatpush1.msra.mxu0 %v723
    %1153 = vmatprep.subr.mxu0 %v730
    %1154 = vmatpush1.msra.mxu0 %v729
    %1155 = vmatprep.subr.mxu0 %v736
    %1156 = vmatpush1.msra.mxu0 %v735
    %1157 = vmatprep.subr.mxu0 %v742
    %1158 = vmatpush1.msra.mxu0 %v741
    %1159 = vmatprep.subr.mxu0 %v748
    %1160 = vmatpush1.msra.mxu0 %v747
    %1161 = vmatprep.subr.mxu0 %v754
    %1162 = vmatpush1.msra.mxu0 %v753
    %1163 = vmatprep.subr.mxu0 %v760
    %1164 = vmatpush1.msra.mxu0 %v759
    %1165 = vmatprep.mubr.f32.mxu0 %v1027
    %1166 = vmatmul.mubr.f32.gmra.mrb[0].mxu0 %v1006
    %v1167 = vpop.f32.mrb[0].mxu0
    %v1168 = vadd.f32 0.0, %v1167
    %v1169 = vpop.f32.mrb[0].mxu0
    %v1170 = vadd.f32 0.0, %v1169
    %1171 = vdwg.mxu0
    %1172 = vmatprep.subr.mxu0 %v576
    %1173 = vmatpush1.msra.mxu0 %v575
    %1174 = vmatprep.subr.mxu0 %v582
    %1175 = vmatpush1.msra.mxu0 %v581
    %1176 = vmatprep.subr.mxu0 %v588
    %1177 = vmatpush1.msra.mxu0 %v587
    %1178 = vmatprep.subr.mxu0 %v594
    %1179 = vmatpush1.msra.mxu0 %v593
    %1180 = vmatprep.subr.mxu0 %v600
    %1181 = vmatpush1.msra.mxu0 %v599
    %1182 = vmatprep.subr.mxu0 %v606
    %1183 = vmatpush1.msra.mxu0 %v605
    %1184 = vmatprep.subr.mxu0 %v612
    %1185 = vmatpush1.msra.mxu0 %v611
    %1186 = vmatprep.subr.mxu0 %v618
    %1187 = vmatpush1.msra.mxu0 %v617
    %1188 = vmatprep.subr.mxu0 %v624
    %1189 = vmatpush1.msra.mxu0 %v623
    %1190 = vmatprep.subr.mxu0 %v630
    %1191 = vmatpush1.msra.mxu0 %v629
    %1192 = vmatprep.subr.mxu0 %v636
    %1193 = vmatpush1.msra.mxu0 %v635
    %1194 = vmatprep.subr.mxu0 %v642
    %1195 = vmatpush1.msra.mxu0 %v641
    %1196 = vmatprep.subr.mxu0 %v648
    %1197 = vmatpush1.msra.mxu0 %v647
    %1198 = vmatprep.subr.mxu0 %v654
    %1199 = vmatpush1.msra.mxu0 %v653
    %1200 = vmatprep.subr.mxu0 %v660
    %1201 = vmatpush1.msra.mxu0 %v659
    %1202 = vmatprep.subr.mxu0 %v666
    %1203 = vmatpush1.msra.mxu0 %v665
    %1204 = vmatprep.subr.mxu0 %v672
    %1205 = vmatpush1.msra.mxu0 %v671
    %1206 = vmatprep.subr.mxu0 %v678
    %1207 = vmatpush1.msra.mxu0 %v677
    %1208 = vmatprep.subr.mxu0 %v684
    %1209 = vmatpush1.msra.mxu0 %v683
    %1210 = vmatprep.subr.mxu0 %v690
    %1211 = vmatpush1.msra.mxu0 %v689
    %1212 = vmatprep.subr.mxu0 %v696
    %1213 = vmatpush1.msra.mxu0 %v695
    %1214 = vmatprep.subr.mxu0 %v702
    %1215 = vmatpush1.msra.mxu0 %v701
    %1216 = vmatprep.subr.mxu0 %v708
    %1217 = vmatpush1.msra.mxu0 %v707
    %1218 = vmatprep.subr.mxu0 %v714
    %1219 = vmatpush1.msra.mxu0 %v713
    %1220 = vmatprep.subr.mxu0 %v720
    %1221 = vmatpush1.msra.mxu0 %v719
    %1222 = vmatprep.subr.mxu0 %v726
    %1223 = vmatpush1.msra.mxu0 %v725
    %1224 = vmatprep.subr.mxu0 %v732
    %1225 = vmatpush1.msra.mxu0 %v731
    %1226 = vmatprep.subr.mxu0 %v738
    %1227 = vmatpush1.msra.mxu0 %v737
    %1228 = vmatprep.subr.mxu0 %v744
    %1229 = vmatpush1.msra.mxu0 %v743
    %1230 = vmatprep.subr.mxu0 %v750
    %1231 = vmatpush1.msra.mxu0 %v749
    %1232 = vmatprep.subr.mxu0 %v756
    %1233 = vmatpush1.msra.mxu0 %v755
    %1234 = vmatprep.subr.mxu0 %v762
    %1235 = vmatpush1.msra.mxu0 %v761
    %1236 = vmatprep.mubr.f32.mxu0 %v1027
    %1237 = vmatmul.mubr.f32.gmra.mrb[0].mxu0 %v1006
    %v1238 = vpop.f32.mrb[0].mxu0
    %v1239 = vadd.f32 0.0, %v1238
    %v1240 = vpop.f32.mrb[0].mxu0
    %v1241 = vadd.f32 0.0, %v1240
    %1242 = vdwg.mxu0
    %v1243 = vld [vmem:[#allocation2 + $0x30] sm:$0xff]
    %v1244 = vld [vmem:[#allocation2 + $0x38] sm:$0xff]
    %v1245 = vld [vmem:[#allocation2 + $0x40] sm:$0xff]
    %v1246 = vld [vmem:[#allocation2 + $0x138] sm:$0xff]
    %v1247 = vld [vmem:[#allocation2 + $0x140] sm:$0xff]
    %v1248 = vld [vmem:[#allocation2 + $0x148] sm:$0xff]
    %v1249 = vadd.f32 %v1243, %v1097
    %v1250 = vxor.u32 %v1249, 2147483648
    %v1251 = vmul.f32 %v1250, 1.442695
    %v1252 = vpow.pop %v1251
    %v1253 = vadd.f32 %v1252, 1.0
    %v1254 = vrcp.pop %v1253
    %v1255 = vmul.f32 1.0, %v1254
    %v1256 = vadd.f32 %v1244, %v1099
    %v1257 = vxor.u32 %v1256, 2147483648
    %v1258 = vmul.f32 %v1257, 1.442695
    %v1259 = vpow.pop %v1258
    %v1260 = vadd.f32 %v1259, 1.0
    %v1261 = vrcp.pop %v1260
    %v1262 = vmul.f32 1.0, %v1261
    %v1263 = vadd.f32 %v1168, %v763
    %v1264 = vmul.f32 %v1255, %v1263
    %v1265 = vadd.f32 %v1245, %v1264
    %v1266 = vtanh.pop %v1265
    %v1267 = vsub.f32 %v1006, %v1266
    %v1268 = vmul.f32 %v1262, %v1267
    %v1269 = vadd.f32 %v1266, %v1268
    %v1270 = vadd.f32 %v1246, %v1170
    %v1271 = vxor.u32 %v1270, 2147483648
    %v1272 = vmul.f32 %v1271, 1.442695
    %v1273 = vpow.pop %v1272
    %v1274 = vadd.f32 %v1273, 1.0
    %v1275 = vrcp.pop %v1274
    %v1276 = vmul.f32 1.0, %v1275
    %v1277 = vadd.f32 %v1247, %v1239
    %v1278 = vxor.u32 %v1277, 2147483648
    %v1279 = vmul.f32 %v1278, 1.442695
    %v1280 = vpow.pop %v1279
    %v1281 = vadd.f32 %v1280, 1.0
    %v1282 = vrcp.pop %v1281
    %v1283 = vmul.f32 1.0, %v1282
    %v1284 = vadd.f32 %v1241, %v764
    %v1285 = vmul.f32 %v1276, %v1284
    %v1286 = vadd.f32 %v1248, %v1285
    %v1287 = vtanh.pop %v1286
    %v1288 = vsub.f32 %v1027, %v1287
    %v1289 = vmul.f32 %v1283, %v1288
    %v1290 = vadd.f32 %v1287, %v1289
    %1291 = vst [vmem:[#allocation3 + $0x10] sm:$0xff] %v1269
    %1292 = vst [vmem:[#allocation3 + $0x68] sm:$0xff] %v1290
    %1293 = vmatprep.subr.mxu0 %v572
    %1294 = vmatpush1.msra.mxu0 %v571
    %1295 = vmatprep.subr.mxu0 %v578
    %1296 = vmatpush1.msra.mxu0 %v577
    %1297 = vmatprep.subr.mxu0 %v584
    %1298 = vmatpush1.msra.mxu0 %v583
    %1299 = vmatprep.subr.mxu0 %v590
    %1300 = vmatpush1.msra.mxu0 %v589
    %1301 = vmatprep.subr.mxu0 %v596
    %1302 = vmatpush1.msra.mxu0 %v595
    %1303 = vmatprep.subr.mxu0 %v602
    %1304 = vmatpush1.msra.mxu0 %v601
    %1305 = vmatprep.subr.mxu0 %v608
    %1306 = vmatpush1.msra.mxu0 %v607
    %1307 = vmatprep.subr.mxu0 %v614
    %1308 = vmatpush1.msra.mxu0 %v613
    %1309 = vmatprep.subr.mxu0 %v620
    %1310 = vmatpush1.msra.mxu0 %v619
    %1311 = vmatprep.subr.mxu0 %v626
    %1312 = vmatpush1.msra.mxu0 %v625
    %1313 = vmatprep.subr.mxu0 %v632
    %1314 = vmatpush1.msra.mxu0 %v631
    %1315 = vmatprep.subr.mxu0 %v638
    %1316 = vmatpush1.msra.mxu0 %v637
    %1317 = vmatprep.subr.mxu0 %v644
    %1318 = vmatpush1.msra.mxu0 %v643
    %1319 = vmatprep.subr.mxu0 %v650
    %1320 = vmatpush1.msra.mxu0 %v649
    %1321 = vmatprep.subr.mxu0 %v656
    %1322 = vmatpush1.msra.mxu0 %v655
    %1323 = vmatprep.subr.mxu0 %v662
    %1324 = vmatpush1.msra.mxu0 %v661
    %1325 = vmatprep.subr.mxu0 %v668
    %1326 = vmatpush1.msra.mxu0 %v667
    %1327 = vmatprep.subr.mxu0 %v674
    %1328 = vmatpush1.msra.mxu0 %v673
    %1329 = vmatprep.subr.mxu0 %v680
    %1330 = vmatpush1.msra.mxu0 %v679
    %1331 = vmatprep.subr.mxu0 %v686
    %1332 = vmatpush1.msra.mxu0 %v685
    %1333 = vmatprep.subr.mxu0 %v692
    %1334 = vmatpush1.msra.mxu0 %v691
    %1335 = vmatprep.subr.mxu0 %v698
    %1336 = vmatpush1.msra.mxu0 %v697
    %1337 = vmatprep.subr.mxu0 %v704
    %1338 = vmatpush1.msra.mxu0 %v703
    %1339 = vmatprep.subr.mxu0 %v710
    %1340 = vmatpush1.msra.mxu0 %v709
    %1341 = vmatprep.subr.mxu0 %v716
    %1342 = vmatpush1.msra.mxu0 %v715
    %1343 = vmatprep.subr.mxu0 %v722
    %1344 = vmatpush1.msra.mxu0 %v721
    %1345 = vmatprep.subr.mxu0 %v728
    %1346 = vmatpush1.msra.mxu0 %v727
    %1347 = vmatprep.subr.mxu0 %v734
    %1348 = vmatpush1.msra.mxu0 %v733
    %1349 = vmatprep.subr.mxu0 %v740
    %1350 = vmatpush1.msra.mxu0 %v739
    %1351 = vmatprep.subr.mxu0 %v746
    %1352 = vmatpush1.msra.mxu0 %v745
    %1353 = vmatprep.subr.mxu0 %v752
    %1354 = vmatpush1.msra.mxu0 %v751
    %1355 = vmatprep.subr.mxu0 %v758
    %1356 = vmatpush1.msra.mxu0 %v757
    %1357 = vmatprep.mubr.f32.mxu0 %v1290
    %1358 = vmatmul.mubr.f32.gmra.mrb[0].mxu0 %v1269
    %v1359 = vpop.f32.mrb[0].mxu0
    %v1360 = vadd.f32 0.0, %v1359
    %v1361 = vpop.f32.mrb[0].mxu0
    %v1362 = vadd.f32 0.0, %v1361
    %1363 = vdwg.mxu0
    %1364 = vmatprep.subr.mxu0 %v574
    %1365 = vmatpush1.msra.mxu0 %v573
    %1366 = vmatprep.subr.mxu0 %v580
    %1367 = vmatpush1.msra.mxu0 %v579
    %1368 = vmatprep.subr.mxu0 %v586
    %1369 = vmatpush1.msra.mxu0 %v585
    %1370 = vmatprep.subr.mxu0 %v592
    %1371 = vmatpush1.msra.mxu0 %v591
    %1372 = vmatprep.subr.mxu0 %v598
    %1373 = vmatpush1.msra.mxu0 %v597
    %1374 = vmatprep.subr.mxu0 %v604
    %1375 = vmatpush1.msra.mxu0 %v603
    %1376 = vmatprep.subr.mxu0 %v610
    %1377 = vmatpush1.msra.mxu0 %v609
    %1378 = vmatprep.subr.mxu0 %v616
    %1379 = vmatpush1.msra.mxu0 %v615
    %1380 = vmatprep.subr.mxu0 %v622
    %1381 = vmatpush1.msra.mxu0 %v621
    %1382 = vmatprep.subr.mxu0 %v628
    %1383 = vmatpush1.msra.mxu0 %v627
    %1384 = vmatprep.subr.mxu0 %v634
    %1385 = vmatpush1.msra.mxu0 %v633
    %1386 = vmatprep.subr.mxu0 %v640
    %1387 = vmatpush1.msra.mxu0 %v639
    %1388 = vmatprep.subr.mxu0 %v646
    %1389 = vmatpush1.msra.mxu0 %v645
    %1390 = vmatprep.subr.mxu0 %v652
    %1391 = vmatpush1.msra.mxu0 %v651
    %1392 = vmatprep.subr.mxu0 %v658
    %1393 = vmatpush1.msra.mxu0 %v657
    %1394 = vmatprep.subr.mxu0 %v664
    %1395 = vmatpush1.msra.mxu0 %v663
    %1396 = vmatprep.subr.mxu0 %v670
    %1397 = vmatpush1.msra.mxu0 %v669
    %1398 = vmatprep.subr.mxu0 %v676
    %1399 = vmatpush1.msra.mxu0 %v675
    %1400 = vmatprep.subr.mxu0 %v682
    %1401 = vmatpush1.msra.mxu0 %v681
    %1402 = vmatprep.subr.mxu0 %v688
    %1403 = vmatpush1.msra.mxu0 %v687
    %1404 = vmatprep.subr.mxu0 %v694
    %1405 = vmatpush1.msra.mxu0 %v693
    %1406 = vmatprep.subr.mxu0 %v700
    %1407 = vmatpush1.msra.mxu0 %v699
    %1408 = vmatprep.subr.mxu0 %v706
    %1409 = vmatpush1.msra.mxu0 %v705
    %1410 = vmatprep.subr.mxu0 %v712
    %1411 = vmatpush1.msra.mxu0 %v711
    %1412 = vmatprep.subr.mxu0 %v718
    %1413 = vmatpush1.msra.mxu0 %v717
    %1414 = vmatprep.subr.mxu0 %v724
    %1415 = vmatpush1.msra.mxu0 %v723
    %1416 = vmatprep.subr.mxu0 %v730
    %1417 = vmatpush1.msra.mxu0 %v729
    %1418 = vmatprep.subr.mxu0 %v736
    %1419 = vmatpush1.msra.mxu0 %v735
    %1420 = vmatprep.subr.mxu0 %v742
    %1421 = vmatpush1.msra.mxu0 %v741
    %1422 = vmatprep.subr.mxu0 %v748
    %1423 = vmatpush1.msra.mxu0 %v747
    %1424 = vmatprep.subr.mxu0 %v754
    %1425 = vmatpush1.msra.mxu0 %v753
    %1426 = vmatprep.subr.mxu0 %v760
    %1427 = vmatpush1.msra.mxu0 %v759
    %1428 = vmatprep.mubr.f32.mxu0 %v1290
    %1429 = vmatmul.mubr.f32.gmra.mrb[0].mxu0 %v1269
    %v1430 = vpop.f32.mrb[0].mxu0
    %v1431 = vadd.f32 0.0, %v1430
    %v1432 = vpop.f32.mrb[0].mxu0
    %v1433 = vadd.f32 0.0, %v1432
    %1434 = vdwg.mxu0
    %1435 = vmatprep.subr.mxu0 %v576
    %1436 = vmatpush1.msra.mxu0 %v575
    %1437 = vmatprep.subr.mxu0 %v582
    %1438 = vmatpush1.msra.mxu0 %v581
    %1439 = vmatprep.subr.mxu0 %v588
    %1440 = vmatpush1.msra.mxu0 %v587
    %1441 = vmatprep.subr.mxu0 %v594
    %1442 = vmatpush1.msra.mxu0 %v593
    %1443 = vmatprep.subr.mxu0 %v600
    %1444 = vmatpush1.msra.mxu0 %v599
    %1445 = vmatprep.subr.mxu0 %v606
    %1446 = vmatpush1.msra.mxu0 %v605
    %1447 = vmatprep.subr.mxu0 %v612
    %1448 = vmatpush1.msra.mxu0 %v611
    %1449 = vmatprep.subr.mxu0 %v618
    %1450 = vmatpush1.msra.mxu0 %v617
    %1451 = vmatprep.subr.mxu0 %v624
    %1452 = vmatpush1.msra.mxu0 %v623
    %1453 = vmatprep.subr.mxu0 %v630
    %1454 = vmatpush1.msra.mxu0 %v629
    %1455 = vmatprep.subr.mxu0 %v636
    %1456 = vmatpush1.msra.mxu0 %v635
    %1457 = vmatprep.subr.mxu0 %v642
    %1458 = vmatpush1.msra.mxu0 %v641
    %1459 = vmatprep.subr.mxu0 %v648
    %1460 = vmatpush1.msra.mxu0 %v647
    %1461 = vmatprep.subr.mxu0 %v654
    %1462 = vmatpush1.msra.mxu0 %v653
    %1463 = vmatprep.subr.mxu0 %v660
    %1464 = vmatpush1.msra.mxu0 %v659
    %1465 = vmatprep.subr.mxu0 %v666
    %1466 = vmatpush1.msra.mxu0 %v665
    %1467 = vmatprep.subr.mxu0 %v672
    %1468 = vmatpush1.msra.mxu0 %v671
    %1469 = vmatprep.subr.mxu0 %v678
    %1470 = vmatpush1.msra.mxu0 %v677
    %1471 = vmatprep.subr.mxu0 %v684
    %1472 = vmatpush1.msra.mxu0 %v683
    %1473 = vmatprep.subr.mxu0 %v690
    %1474 = vmatpush1.msra.mxu0 %v689
    %1475 = vmatprep.subr.mxu0 %v696
    %1476 = vmatpush1.msra.mxu0 %v695
    %1477 = vmatprep.subr.mxu0 %v702
    %1478 = vmatpush1.msra.mxu0 %v701
    %1479 = vmatprep.subr.mxu0 %v708
    %1480 = vmatpush1.msra.mxu0 %v707
    %1481 = vmatprep.subr.mxu0 %v714
    %1482 = vmatpush1.msra.mxu0 %v713
    %1483 = vmatprep.subr.mxu0 %v720
    %1484 = vmatpush1.msra.mxu0 %v719
    %1485 = vmatprep.subr.mxu0 %v726
    %1486 = vmatpush1.msra.mxu0 %v725
    %1487 = vmatprep.subr.mxu0 %v732
    %1488 = vmatpush1.msra.mxu0 %v731
    %1489 = vmatprep.subr.mxu0 %v738
    %1490 = vmatpush1.msra.mxu0 %v737
    %1491 = vmatprep.subr.mxu0 %v744
    %1492 = vmatpush1.msra.mxu0 %v743
    %1493 = vmatprep.subr.mxu0 %v750
    %1494 = vmatpush1.msra.mxu0 %v749
    %1495 = vmatprep.subr.mxu0 %v756
    %1496 = vmatpush1.msra.mxu0 %v755
    %1497 = vmatprep.subr.mxu0 %v762
    %1498 = vmatpush1.msra.mxu0 %v761
    %1499 = vmatprep.mubr.f32.mxu0 %v1290
    %1500 = vmatmul.mubr.f32.gmra.mrb[0].mxu0 %v1269
    %v1501 = vpop.f32.mrb[0].mxu0
    %v1502 = vadd.f32 0.0, %v1501
    %v1503 = vpop.f32.mrb[0].mxu0
    %v1504 = vadd.f32 0.0, %v1503
    %1505 = vdwg.mxu0
    %v1506 = vld [vmem:[#allocation2 + $0x60] sm:$0xff]
    %v1507 = vld [vmem:[#allocation2 + $0x68] sm:$0xff]
    %v1508 = vld [vmem:[#allocation2 + $0x70] sm:$0xff]
    %v1509 = vld [vmem:[#allocation2 + $0x108] sm:$0xff]
    %v1510 = vld [vmem:[#allocation2 + $0x110] sm:$0xff]
    %v1511 = vld [vmem:[#allocation2 + $0x118] sm:$0xff]
    %v1512 = vadd.f32 %v1506, %v1360
    %v1513 = vxor.u32 %v1512, 2147483648
    %v1514 = vmul.f32 %v1513, 1.442695
    %v1515 = vpow.pop %v1514
    %v1516 = vadd.f32 %v1515, 1.0
    %v1517 = vrcp.pop %v1516
    %v1518 = vmul.f32 1.0, %v1517
    %v1519 = vadd.f32 %v1507, %v1362
    %v1520 = vxor.u32 %v1519, 2147483648
    %v1521 = vmul.f32 %v1520, 1.442695
    %v1522 = vpow.pop %v1521
    %v1523 = vadd.f32 %v1522, 1.0
    %v1524 = vrcp.pop %v1523
    %v1525 = vmul.f32 1.0, %v1524
    %v1526 = vadd.f32 %v1431, %v763
    %v1527 = vmul.f32 %v1518, %v1526
    %v1528 = vadd.f32 %v1508, %v1527
    %v1529 = vtanh.pop %v1528
    %v1530 = vsub.f32 %v1269, %v1529
    %v1531 = vmul.f32 %v1525, %v1530
    %v1532 = vadd.f32 %v1529, %v1531
    %v1533 = vadd.f32 %v1509, %v1433
    %v1534 = vxor.u32 %v1533, 2147483648
    %v1535 = vmul.f32 %v1534, 1.442695
    %v1536 = vpow.pop %v1535
    %v1537 = vadd.f32 %v1536, 1.0
    %v1538 = vrcp.pop %v1537
    %v1539 = vmul.f32 1.0, %v1538
    %v1540 = vadd.f32 %v1510, %v1502
    %v1541 = vxor.u32 %v1540, 2147483648
    %v1542 = vmul.f32 %v1541, 1.442695
    %v1543 = vpow.pop %v1542
    %v1544 = vadd.f32 %v1543, 1.0
    %v1545 = vrcp.pop %v1544
    %v1546 = vmul.f32 1.0, %v1545
    %v1547 = vadd.f32 %v1504, %v764
    %v1548 = vmul.f32 %v1539, %v1547
    %v1549 = vadd.f32 %v1511, %v1548
    %v1550 = vtanh.pop %v1549
    %v1551 = vsub.f32 %v1290, %v1550
    %v1552 = vmul.f32 %v1546, %v1551
    %v1553 = vadd.f32 %v1550, %v1552
    %1554 = vst [vmem:[#allocation3 + $0x20] sm:$0xff] %v1532
    %1555 = vst [vmem:[#allocation3 + $0x58] sm:$0xff] %v1553
    %1556 = vmatprep.subr.mxu0 %v572
    %1557 = vmatpush1.msra.mxu0 %v571
    %1558 = vmatprep.subr.mxu0 %v578
    %1559 = vmatpush1.msra.mxu0 %v577
    %1560 = vmatprep.subr.mxu0 %v584
    %1561 = vmatpush1.msra.mxu0 %v583
    %1562 = vmatprep.subr.mxu0 %v590
    %1563 = vmatpush1.msra.mxu0 %v589
    %1564 = vmatprep.subr.mxu0 %v596
    %1565 = vmatpush1.msra.mxu0 %v595
    %1566 = vmatprep.subr.mxu0 %v602
    %1567 = vmatpush1.msra.mxu0 %v601
    %1568 = vmatprep.subr.mxu0 %v608
    %1569 = vmatpush1.msra.mxu0 %v607
    %1570 = vmatprep.subr.mxu0 %v614
    %1571 = vmatpush1.msra.mxu0 %v613
    %1572 = vmatprep.subr.mxu0 %v620
    %1573 = vmatpush1.msra.mxu0 %v619
    %1574 = vmatprep.subr.mxu0 %v626
    %1575 = vmatpush1.msra.mxu0 %v625
    %1576 = vmatprep.subr.mxu0 %v632
    %1577 = vmatpush1.msra.mxu0 %v631
    %1578 = vmatprep.subr.mxu0 %v638
    %1579 = vmatpush1.msra.mxu0 %v637
    %1580 = vmatprep.subr.mxu0 %v644
    %1581 = vmatpush1.msra.mxu0 %v643
    %1582 = vmatprep.subr.mxu0 %v650
    %1583 = vmatpush1.msra.mxu0 %v649
    %1584 = vmatprep.subr.mxu0 %v656
    %1585 = vmatpush1.msra.mxu0 %v655
    %1586 = vmatprep.subr.mxu0 %v662
    %1587 = vmatpush1.msra.mxu0 %v661
    %1588 = vmatprep.subr.mxu0 %v668
    %1589 = vmatpush1.msra.mxu0 %v667
    %1590 = vmatprep.subr.mxu0 %v674
    %1591 = vmatpush1.msra.mxu0 %v673
    %1592 = vmatprep.subr.mxu0 %v680
    %1593 = vmatpush1.msra.mxu0 %v679
    %1594 = vmatprep.subr.mxu0 %v686
    %1595 = vmatpush1.msra.mxu0 %v685
    %1596 = vmatprep.subr.mxu0 %v692
    %1597 = vmatpush1.msra.mxu0 %v691
    %1598 = vmatprep.subr.mxu0 %v698
    %1599 = vmatpush1.msra.mxu0 %v697
    %1600 = vmatprep.subr.mxu0 %v704
    %1601 = vmatpush1.msra.mxu0 %v703
    %1602 = vmatprep.subr.mxu0 %v710
    %1603 = vmatpush1.msra.mxu0 %v709
    %1604 = vmatprep.subr.mxu0 %v716
    %1605 = vmatpush1.msra.mxu0 %v715
    %1606 = vmatprep.subr.mxu0 %v722
    %1607 = vmatpush1.msra.mxu0 %v721
    %1608 = vmatprep.subr.mxu0 %v728
    %1609 = vmatpush1.msra.mxu0 %v727
    %1610 = vmatprep.subr.mxu0 %v734
    %1611 = vmatpush1.msra.mxu0 %v733
    %1612 = vmatprep.subr.mxu0 %v740
    %1613 = vmatpush1.msra.mxu0 %v739
    %1614 = vmatprep.subr.mxu0 %v746
    %1615 = vmatpush1.msra.mxu0 %v745
    %1616 = vmatprep.subr.mxu0 %v752
    %1617 = vmatpush1.msra.mxu0 %v751
    %1618 = vmatprep.subr.mxu0 %v758
    %1619 = vmatpush1.msra.mxu0 %v757
    %1620 = vmatprep.mubr.f32.mxu0 %v1553
    %1621 = vmatmul.mubr.f32.gmra.mrb[0].mxu0 %v1532
    %v1622 = vpop.f32.mrb[0].mxu0
    %v1623 = vadd.f32 0.0, %v1622
    %v1624 = vpop.f32.mrb[0].mxu0
    %v1625 = vadd.f32 0.0, %v1624
    %1626 = vdwg.mxu0
    %1627 = vmatprep.subr.mxu0 %v574
    %1628 = vmatpush1.msra.mxu0 %v573
    %1629 = vmatprep.subr.mxu0 %v580
    %1630 = vmatpush1.msra.mxu0 %v579
    %1631 = vmatprep.subr.mxu0 %v586
    %1632 = vmatpush1.msra.mxu0 %v585
    %1633 = vmatprep.subr.mxu0 %v592
    %1634 = vmatpush1.msra.mxu0 %v591
    %1635 = vmatprep.subr.mxu0 %v598
    %1636 = vmatpush1.msra.mxu0 %v597
    %1637 = vmatprep.subr.mxu0 %v604
    %1638 = vmatpush1.msra.mxu0 %v603
    %1639 = vmatprep.subr.mxu0 %v610
    %1640 = vmatpush1.msra.mxu0 %v609
    %1641 = vmatprep.subr.mxu0 %v616
    %1642 = vmatpush1.msra.mxu0 %v615
    %1643 = vmatprep.subr.mxu0 %v622
    %1644 = vmatpush1.msra.mxu0 %v621
    %1645 = vmatprep.subr.mxu0 %v628
    %1646 = vmatpush1.msra.mxu0 %v627
    %1647 = vmatprep.subr.mxu0 %v634
    %1648 = vmatpush1.msra.mxu0 %v633
    %1649 = vmatprep.subr.mxu0 %v640
    %1650 = vmatpush1.msra.mxu0 %v639
    %1651 = vmatprep.subr.mxu0 %v646
    %1652 = vmatpush1.msra.mxu0 %v645
    %1653 = vmatprep.subr.mxu0 %v652
    %1654 = vmatpush1.msra.mxu0 %v651
    %1655 = vmatprep.subr.mxu0 %v658
    %1656 = vmatpush1.msra.mxu0 %v657
    %1657 = vmatprep.subr.mxu0 %v664
    %1658 = vmatpush1.msra.mxu0 %v663
    %1659 = vmatprep.subr.mxu0 %v670
    %1660 = vmatpush1.msra.mxu0 %v669
    %1661 = vmatprep.subr.mxu0 %v676
    %1662 = vmatpush1.msra.mxu0 %v675
    %1663 = vmatprep.subr.mxu0 %v682
    %1664 = vmatpush1.msra.mxu0 %v681
    %1665 = vmatprep.subr.mxu0 %v688
    %1666 = vmatpush1.msra.mxu0 %v687
    %1667 = vmatprep.subr.mxu0 %v694
    %1668 = vmatpush1.msra.mxu0 %v693
    %1669 = vmatprep.subr.mxu0 %v700
    %1670 = vmatpush1.msra.mxu0 %v699
    %1671 = vmatprep.subr.mxu0 %v706
    %1672 = vmatpush1.msra.mxu0 %v705
    %1673 = vmatprep.subr.mxu0 %v712
    %1674 = vmatpush1.msra.mxu0 %v711
    %1675 = vmatprep.subr.mxu0 %v718
    %1676 = vmatpush1.msra.mxu0 %v717
    %1677 = vmatprep.subr.mxu0 %v724
    %1678 = vmatpush1.msra.mxu0 %v723
    %1679 = vmatprep.subr.mxu0 %v730
    %1680 = vmatpush1.msra.mxu0 %v729
    %1681 = vmatprep.subr.mxu0 %v736
    %1682 = vmatpush1.msra.mxu0 %v735
    %1683 = vmatprep.subr.mxu0 %v742
    %1684 = vmatpush1.msra.mxu0 %v741
    %1685 = vmatprep.subr.mxu0 %v748
    %1686 = vmatpush1.msra.mxu0 %v747
    %1687 = vmatprep.subr.mxu0 %v754
    %1688 = vmatpush1.msra.mxu0 %v753
    %1689 = vmatprep.subr.mxu0 %v760
    %1690 = vmatpush1.msra.mxu0 %v759
    %1691 = vmatprep.mubr.f32.mxu0 %v1553
    %1692 = vmatmul.mubr.f32.gmra.mrb[0].mxu0 %v1532
    %v1693 = vpop.f32.mrb[0].mxu0
    %v1694 = vadd.f32 0.0, %v1693
    %v1695 = vpop.f32.mrb[0].mxu0
    %v1696 = vadd.f32 0.0, %v1695
    %1697 = vdwg.mxu0
    %1698 = vmatprep.subr.mxu0 %v576
    %1699 = vmatpush1.msra.mxu0 %v575
    %1700 = vmatprep.subr.mxu0 %v582
    %1701 = vmatpush1.msra.mxu0 %v581
    %1702 = vmatprep.subr.mxu0 %v588
    %1703 = vmatpush1.msra.mxu0 %v587
    %1704 = vmatprep.subr.mxu0 %v594
    %1705 = vmatpush1.msra.mxu0 %v593
    %1706 = vmatprep.subr.mxu0 %v600
    %1707 = vmatpush1.msra.mxu0 %v599
    %1708 = vmatprep.subr.mxu0 %v606
    %1709 = vmatpush1.msra.mxu0 %v605
    %1710 = vmatprep.subr.mxu0 %v612
    %1711 = vmatpush1.msra.mxu0 %v611
    %1712 = vmatprep.subr.mxu0 %v618
    %1713 = vmatpush1.msra.mxu0 %v617
    %1714 = vmatprep.subr.mxu0 %v624
    %1715 = vmatpush1.msra.mxu0 %v623
    %1716 = vmatprep.subr.mxu0 %v630
    %1717 = vmatpush1.msra.mxu0 %v629
    %1718 = vmatprep.subr.mxu0 %v636
    %1719 = vmatpush1.msra.mxu0 %v635
    %1720 = vmatprep.subr.mxu0 %v642
    %1721 = vmatpush1.msra.mxu0 %v641
    %1722 = vmatprep.subr.mxu0 %v648
    %1723 = vmatpush1.msra.mxu0 %v647
    %1724 = vmatprep.subr.mxu0 %v654
    %1725 = vmatpush1.msra.mxu0 %v653
    %1726 = vmatprep.subr.mxu0 %v660
    %1727 = vmatpush1.msra.mxu0 %v659
    %1728 = vmatprep.subr.mxu0 %v666
    %1729 = vmatpush1.msra.mxu0 %v665
    %1730 = vmatprep.subr.mxu0 %v672
    %1731 = vmatpush1.msra.mxu0 %v671
    %1732 = vmatprep.subr.mxu0 %v678
    %1733 = vmatpush1.msra.mxu0 %v677
    %1734 = vmatprep.subr.mxu0 %v684
    %1735 = vmatpush1.msra.mxu0 %v683
    %1736 = vmatprep.subr.mxu0 %v690
    %1737 = vmatpush1.msra.mxu0 %v689
    %1738 = vmatprep.subr.mxu0 %v696
    %1739 = vmatpush1.msra.mxu0 %v695
    %1740 = vmatprep.subr.mxu0 %v702
    %1741 = vmatpush1.msra.mxu0 %v701
    %1742 = vmatprep.subr.mxu0 %v708
    %1743 = vmatpush1.msra.mxu0 %v707
    %1744 = vmatprep.subr.mxu0 %v714
    %1745 = vmatpush1.msra.mxu0 %v713
    %1746 = vmatprep.subr.mxu0 %v720
    %1747 = vmatpush1.msra.mxu0 %v719
    %1748 = vmatprep.subr.mxu0 %v726
    %1749 = vmatpush1.msra.mxu0 %v725
    %1750 = vmatprep.subr.mxu0 %v732
    %1751 = vmatpush1.msra.mxu0 %v731
    %1752 = vmatprep.subr.mxu0 %v738
    %1753 = vmatpush1.msra.mxu0 %v737
    %1754 = vmatprep.subr.mxu0 %v744
    %1755 = vmatpush1.msra.mxu0 %v743
    %1756 = vmatprep.subr.mxu0 %v750
    %1757 = vmatpush1.msra.mxu0 %v749
    %1758 = vmatprep.subr.mxu0 %v756
    %1759 = vmatpush1.msra.mxu0 %v755
    %1760 = vmatprep.subr.mxu0 %v762
    %1761 = vmatpush1.msra.mxu0 %v761
    %1762 = vmatprep.mubr.f32.mxu0 %v1553
    %1763 = vmatmul.mubr.f32.gmra.mrb[0].mxu0 %v1532
    %v1764 = vpop.f32.mrb[0].mxu0
    %v1765 = vadd.f32 0.0, %v1764
    %v1766 = vpop.f32.mrb[0].mxu0
    %v1767 = vadd.f32 0.0, %v1766
    %1768 = vdwg.mxu0
    %v1769 = vld [vmem:[#allocation2 + $0x90] sm:$0xff]
    %v1770 = vld [vmem:[#allocation2 + $0x98] sm:$0xff]
    %v1771 = vld [vmem:[#allocation2 + $0xa0] sm:$0xff]
    %v1772 = vld [vmem:[#allocation2 + $0xd8] sm:$0xff]
    %v1773 = vld [vmem:[#allocation2 + $0xe0] sm:$0xff]
    %v1774 = vld [vmem:[#allocation2 + $0xe8] sm:$0xff]
    %v1775 = vadd.f32 %v1769, %v1623
    %v1776 = vxor.u32 %v1775, 2147483648
    %v1777 = vmul.f32 %v1776, 1.442695
    %v1778 = vpow.pop %v1777
    %v1779 = vadd.f32 %v1778, 1.0
    %v1780 = vrcp.pop %v1779
    %v1781 = vmul.f32 1.0, %v1780
    %v1782 = vadd.f32 %v1770, %v1625
    %v1783 = vxor.u32 %v1782, 2147483648
    %v1784 = vmul.f32 %v1783, 1.442695
    %v1785 = vpow.pop %v1784
    %v1786 = vadd.f32 %v1785, 1.0
    %v1787 = vrcp.pop %v1786
    %v1788 = vmul.f32 1.0, %v1787
    %v1789 = vadd.f32 %v1694, %v763
    %v1790 = vmul.f32 %v1781, %v1789
    %v1791 = vadd.f32 %v1771, %v1790
    %v1792 = vtanh.pop %v1791
    %v1793 = vsub.f32 %v1532, %v1792
    %v1794 = vmul.f32 %v1788, %v1793
    %v1795 = vadd.f32 %v1792, %v1794
    %v1796 = vadd.f32 %v1772, %v1696
    %v1797 = vxor.u32 %v1796, 2147483648
    %v1798 = vmul.f32 %v1797, 1.442695
    %v1799 = vpow.pop %v1798
    %v1800 = vadd.f32 %v1799, 1.0
    %v1801 = vrcp.pop %v1800
    %v1802 = vmul.f32 1.0, %v1801
    %v1803 = vadd.f32 %v1773, %v1765
    %v1804 = vxor.u32 %v1803, 2147483648
    %v1805 = vmul.f32 %v1804, 1.442695
    %v1806 = vpow.pop %v1805
    %v1807 = vadd.f32 %v1806, 1.0
    %v1808 = vrcp.pop %v1807
    %v1809 = vmul.f32 1.0, %v1808
    %v1810 = vadd.f32 %v1767, %v764
    %v1811 = vmul.f32 %v1802, %v1810
    %v1812 = vadd.f32 %v1774, %v1811
    %v1813 = vtanh.pop %v1812
    %v1814 = vsub.f32 %v1553, %v1813
    %v1815 = vmul.f32 %v1809, %v1814
    %v1816 = vadd.f32 %v1813, %v1815
    %1817 = vst [vmem:[#allocation3 + $0x30] sm:$0xff] %v1795
    %1818 = vst [vmem:[#allocation3 + $0x48] sm:$0xff] %v1816
    %1819 = vmatprep.subr.mxu0 %v572
    %1820 = vmatpush1.msra.mxu0 %v571
    %1821 = vmatprep.subr.mxu0 %v578
    %1822 = vmatpush1.msra.mxu0 %v577
    %1823 = vmatprep.subr.mxu0 %v584
    %1824 = vmatpush1.msra.mxu0 %v583
    %1825 = vmatprep.subr.mxu0 %v590
    %1826 = vmatpush1.msra.mxu0 %v589
    %1827 = vmatprep.subr.mxu0 %v596
    %1828 = vmatpush1.msra.mxu0 %v595
    %1829 = vmatprep.subr.mxu0 %v602
    %1830 = vmatpush1.msra.mxu0 %v601
    %1831 = vmatprep.subr.mxu0 %v608
    %1832 = vmatpush1.msra.mxu0 %v607
    %1833 = vmatprep.subr.mxu0 %v614
    %1834 = vmatpush1.msra.mxu0 %v613
    %1835 = vmatprep.subr.mxu0 %v620
    %1836 = vmatpush1.msra.mxu0 %v619
    %1837 = vmatprep.subr.mxu0 %v626
    %1838 = vmatpush1.msra.mxu0 %v625
    %1839 = vmatprep.subr.mxu0 %v632
    %1840 = vmatpush1.msra.mxu0 %v631
    %1841 = vmatprep.subr.mxu0 %v638
    %1842 = vmatpush1.msra.mxu0 %v637
    %1843 = vmatprep.subr.mxu0 %v644
    %1844 = vmatpush1.msra.mxu0 %v643
    %1845 = vmatprep.subr.mxu0 %v650
    %1846 = vmatpush1.msra.mxu0 %v649
    %1847 = vmatprep.subr.mxu0 %v656
    %1848 = vmatpush1.msra.mxu0 %v655
    %1849 = vmatprep.subr.mxu0 %v662
    %1850 = vmatpush1.msra.mxu0 %v661
    %1851 = vmatprep.subr.mxu0 %v668
    %1852 = vmatpush1.msra.mxu0 %v667
    %1853 = vmatprep.subr.mxu0 %v674
    %1854 = vmatpush1.msra.mxu0 %v673
    %1855 = vmatprep.subr.mxu0 %v680
    %1856 = vmatpush1.msra.mxu0 %v679
    %1857 = vmatprep.subr.mxu0 %v686
    %1858 = vmatpush1.msra.mxu0 %v685
    %1859 = vmatprep.subr.mxu0 %v692
    %1860 = vmatpush1.msra.mxu0 %v691
    %1861 = vmatprep.subr.mxu0 %v698
    %1862 = vmatpush1.msra.mxu0 %v697
    %1863 = vmatprep.subr.mxu0 %v704
    %1864 = vmatpush1.msra.mxu0 %v703
    %1865 = vmatprep.subr.mxu0 %v710
    %1866 = vmatpush1.msra.mxu0 %v709
    %1867 = vmatprep.subr.mxu0 %v716
    %1868 = vmatpush1.msra.mxu0 %v715
    %1869 = vmatprep.subr.mxu0 %v722
    %1870 = vmatpush1.msra.mxu0 %v721
    %1871 = vmatprep.subr.mxu0 %v728
    %1872 = vmatpush1.msra.mxu0 %v727
    %1873 = vmatprep.subr.mxu0 %v734
    %1874 = vmatpush1.msra.mxu0 %v733
    %1875 = vmatprep.subr.mxu0 %v740
    %1876 = vmatpush1.msra.mxu0 %v739
    %1877 = vmatprep.subr.mxu0 %v746
    %1878 = vmatpush1.msra.mxu0 %v745
    %1879 = vmatprep.subr.mxu0 %v752
    %1880 = vmatpush1.msra.mxu0 %v751
    %1881 = vmatprep.subr.mxu0 %v758
    %1882 = vmatpush1.msra.mxu0 %v757
    %1883 = vmatprep.mubr.f32.mxu0 %v1816
    %1884 = vmatmul.mubr.f32.gmra.mrb[0].mxu0 %v1795
    %v1885 = vpop.f32.mrb[0].mxu0
    %v1886 = vadd.f32 0.0, %v1885
    %v1887 = vpop.f32.mrb[0].mxu0
    %v1888 = vadd.f32 0.0, %v1887
    %1889 = vdwg.mxu0
    %1890 = vmatprep.subr.mxu0 %v574
    %1891 = vmatpush1.msra.mxu0 %v573
    %1892 = vmatprep.subr.mxu0 %v580
    %1893 = vmatpush1.msra.mxu0 %v579
    %1894 = vmatprep.subr.mxu0 %v586
    %1895 = vmatpush1.msra.mxu0 %v585
    %1896 = vmatprep.subr.mxu0 %v592
    %1897 = vmatpush1.msra.mxu0 %v591
    %1898 = vmatprep.subr.mxu0 %v598
    %1899 = vmatpush1.msra.mxu0 %v597
    %1900 = vmatprep.subr.mxu0 %v604
    %1901 = vmatpush1.msra.mxu0 %v603
    %1902 = vmatprep.subr.mxu0 %v610
    %1903 = vmatpush1.msra.mxu0 %v609
    %1904 = vmatprep.subr.mxu0 %v616
    %1905 = vmatpush1.msra.mxu0 %v615
    %1906 = vmatprep.subr.mxu0 %v622
    %1907 = vmatpush1.msra.mxu0 %v621
    %1908 = vmatprep.subr.mxu0 %v628
    %1909 = vmatpush1.msra.mxu0 %v627
    %1910 = vmatprep.subr.mxu0 %v634
    %1911 = vmatpush1.msra.mxu0 %v633
    %1912 = vmatprep.subr.mxu0 %v640
    %1913 = vmatpush1.msra.mxu0 %v639
    %1914 = vmatprep.subr.mxu0 %v646
    %1915 = vmatpush1.msra.mxu0 %v645
    %1916 = vmatprep.subr.mxu0 %v652
    %1917 = vmatpush1.msra.mxu0 %v651
    %1918 = vmatprep.subr.mxu0 %v658
    %1919 = vmatpush1.msra.mxu0 %v657
    %1920 = vmatprep.subr.mxu0 %v664
    %1921 = vmatpush1.msra.mxu0 %v663
    %1922 = vmatprep.subr.mxu0 %v670
    %1923 = vmatpush1.msra.mxu0 %v669
    %1924 = vmatprep.subr.mxu0 %v676
    %1925 = vmatpush1.msra.mxu0 %v675
    %1926 = vmatprep.subr.mxu0 %v682
    %1927 = vmatpush1.msra.mxu0 %v681
    %1928 = vmatprep.subr.mxu0 %v688
    %1929 = vmatpush1.msra.mxu0 %v687
    %1930 = vmatprep.subr.mxu0 %v694
    %1931 = vmatpush1.msra.mxu0 %v693
    %1932 = vmatprep.subr.mxu0 %v700
    %1933 = vmatpush1.msra.mxu0 %v699
    %1934 = vmatprep.subr.mxu0 %v706
    %1935 = vmatpush1.msra.mxu0 %v705
    %1936 = vmatprep.subr.mxu0 %v712
    %1937 = vmatpush1.msra.mxu0 %v711
    %1938 = vmatprep.subr.mxu0 %v718
    %1939 = vmatpush1.msra.mxu0 %v717
    %1940 = vmatprep.subr.mxu0 %v724
    %1941 = vmatpush1.msra.mxu0 %v723
    %1942 = vmatprep.subr.mxu0 %v730
    %1943 = vmatpush1.msra.mxu0 %v729
    %1944 = vmatprep.subr.mxu0 %v736
    %1945 = vmatpush1.msra.mxu0 %v735
    %1946 = vmatprep.subr.mxu0 %v742
    %1947 = vmatpush1.msra.mxu0 %v741
    %1948 = vmatprep.subr.mxu0 %v748
    %1949 = vmatpush1.msra.mxu0 %v747
    %1950 = vmatprep.subr.mxu0 %v754
    %1951 = vmatpush1.msra.mxu0 %v753
    %1952 = vmatprep.subr.mxu0 %v760
    %1953 = vmatpush1.msra.mxu0 %v759
    %1954 = vmatprep.mubr.f32.mxu0 %v1816
    %1955 = vmatmul.mubr.f32.gmra.mrb[0].mxu0 %v1795
    %v1956 = vpop.f32.mrb[0].mxu0
    %v1957 = vadd.f32 0.0, %v1956
    %v1958 = vpop.f32.mrb[0].mxu0
    %v1959 = vadd.f32 0.0, %v1958
    %1960 = vdwg.mxu0
    %1961 = vmatprep.subr.mxu0 %v576
    %1962 = vmatpush1.msra.mxu0 %v575
    %1963 = vmatprep.subr.mxu0 %v582
    %1964 = vmatpush1.msra.mxu0 %v581
    %1965 = vmatprep.subr.mxu0 %v588
    %1966 = vmatpush1.msra.mxu0 %v587
    %1967 = vmatprep.subr.mxu0 %v594
    %1968 = vmatpush1.msra.mxu0 %v593
    %1969 = vmatprep.subr.mxu0 %v600
    %1970 = vmatpush1.msra.mxu0 %v599
    %1971 = vmatprep.subr.mxu0 %v606
    %1972 = vmatpush1.msra.mxu0 %v605
    %1973 = vmatprep.subr.mxu0 %v612
    %1974 = vmatpush1.msra.mxu0 %v611
    %1975 = vmatprep.subr.mxu0 %v618
    %1976 = vmatpush1.msra.mxu0 %v617
    %1977 = vmatprep.subr.mxu0 %v624
    %1978 = vmatpush1.msra.mxu0 %v623
    %1979 = vmatprep.subr.mxu0 %v630
    %1980 = vmatpush1.msra.mxu0 %v629
    %1981 = vmatprep.subr.mxu0 %v636
    %1982 = vmatpush1.msra.mxu0 %v635
    %1983 = vmatprep.subr.mxu0 %v642
    %1984 = vmatpush1.msra.mxu0 %v641
    %1985 = vmatprep.subr.mxu0 %v648
    %1986 = vmatpush1.msra.mxu0 %v647
    %1987 = vmatprep.subr.mxu0 %v654
    %1988 = vmatpush1.msra.mxu0 %v653
    %1989 = vmatprep.subr.mxu0 %v660
    %1990 = vmatpush1.msra.mxu0 %v659
    %1991 = vmatprep.subr.mxu0 %v666
    %1992 = vmatpush1.msra.mxu0 %v665
    %1993 = vmatprep.subr.mxu0 %v672
    %1994 = vmatpush1.msra.mxu0 %v671
    %1995 = vmatprep.subr.mxu0 %v678
    %1996 = vmatpush1.msra.mxu0 %v677
    %1997 = vmatprep.subr.mxu0 %v684
    %1998 = vmatpush1.msra.mxu0 %v683
    %1999 = vmatprep.subr.mxu0 %v690
    %2000 = vmatpush1.msra.mxu0 %v689
    %2001 = vmatprep.subr.mxu0 %v696
    %2002 = vmatpush1.msra.mxu0 %v695
    %2003 = vmatprep.subr.mxu0 %v702
    %2004 = vmatpush1.msra.mxu0 %v701
    %2005 = vmatprep.subr.mxu0 %v708
    %2006 = vmatpush1.msra.mxu0 %v707
    %2007 = vmatprep.subr.mxu0 %v714
    %2008 = vmatpush1.msra.mxu0 %v713
    %2009 = vmatprep.subr.mxu0 %v720
    %2010 = vmatpush1.msra.mxu0 %v719
    %2011 = vmatprep.subr.mxu0 %v726
    %2012 = vmatpush1.msra.mxu0 %v725
    %2013 = vmatprep.subr.mxu0 %v732
    %2014 = vmatpush1.msra.mxu0 %v731
    %2015 = vmatprep.subr.mxu0 %v738
    %2016 = vmatpush1.msra.mxu0 %v737
    %2017 = vmatprep.subr.mxu0 %v744
    %2018 = vmatpush1.msra.mxu0 %v743
    %2019 = vmatprep.subr.mxu0 %v750
    %2020 = vmatpush1.msra.mxu0 %v749
    %2021 = vmatprep.subr.mxu0 %v756
    %2022 = vmatpush1.msra.mxu0 %v755
    %2023 = vmatprep.subr.mxu0 %v762
    %2024 = vmatpush1.msra.mxu0 %v761
    %2025 = vmatprep.mubr.f32.mxu0 %v1816
    %2026 = vmatmul.mubr.f32.gmra.mrb[0].mxu0 %v1795
    %v2027 = vpop.f32.mrb[0].mxu0
    %v2028 = vadd.f32 0.0, %v2027
    %v2029 = vpop.f32.mrb[0].mxu0
    %v2030 = vadd.f32 0.0, %v2029
    %2031 = vdwg.mxu0
    %v2032 = vld [vmem:[#allocation2 + $0xc0] sm:$0xff]
    %v2033 = vld [vmem:[#allocation2 + $0xc8] sm:$0xff]
    %v2034 = vld [vmem:[#allocation2 + $0xd0] sm:$0xff]
    %v2035 = vld [vmem:[#allocation2 + $0xa8] sm:$0xff]
    %v2036 = vld [vmem:[#allocation2 + $0xb0] sm:$0xff]
    %v2037 = vld [vmem:[#allocation2 + $0xb8] sm:$0xff]
    %v2038 = vadd.f32 %v2032, %v1886
    %v2039 = vxor.u32 %v2038, 2147483648
    %v2040 = vmul.f32 %v2039, 1.442695
    %v2041 = vpow.pop %v2040
    %v2042 = vadd.f32 %v2041, 1.0
    %v2043 = vrcp.pop %v2042
    %v2044 = vmul.f32 1.0, %v2043
    %v2045 = vadd.f32 %v2033, %v1888
    %v2046 = vxor.u32 %v2045, 2147483648
    %v2047 = vmul.f32 %v2046, 1.442695
    %v2048 = vpow.pop %v2047
    %v2049 = vadd.f32 %v2048, 1.0
    %v2050 = vrcp.pop %v2049
    %v2051 = vmul.f32 1.0, %v2050
    %v2052 = vadd.f32 %v1957, %v763
    %v2053 = vmul.f32 %v2044, %v2052
    %v2054 = vadd.f32 %v2034, %v2053
    %v2055 = vtanh.pop %v2054
    %v2056 = vsub.f32 %v1795, %v2055
    %v2057 = vmul.f32 %v2051, %v2056
    %v2058 = vadd.f32 %v2055, %v2057
    %v2059 = vadd.f32 %v2035, %v1959
    %v2060 = vxor.u32 %v2059, 2147483648
    %v2061 = vmul.f32 %v2060, 1.442695
    %v2062 = vpow.pop %v2061
    %v2063 = vadd.f32 %v2062, 1.0
    %v2064 = vrcp.pop %v2063
    %v2065 = vmul.f32 1.0, %v2064
    %v2066 = vadd.f32 %v2036, %v2028
    %v2067 = vxor.u32 %v2066, 2147483648
    %v2068 = vmul.f32 %v2067, 1.442695
    %v2069 = vpow.pop %v2068
    %v2070 = vadd.f32 %v2069, 1.0
    %v2071 = vrcp.pop %v2070
    %v2072 = vmul.f32 1.0, %v2071
    %v2073 = vadd.f32 %v2030, %v764
    %v2074 = vmul.f32 %v2065, %v2073
    %v2075 = vadd.f32 %v2037, %v2074
    %v2076 = vtanh.pop %v2075
    %v2077 = vsub.f32 %v1816, %v2076
    %v2078 = vmul.f32 %v2072, %v2077
    %v2079 = vadd.f32 %v2076, %v2078
    %2080 = vst [vmem:[#allocation3 + $0x40] sm:$0xff] %v2058
    %2081 = vst [vmem:[#allocation3 + $0x38] sm:$0xff] %v2079
    %2082 = vmatprep.subr.mxu0 %v572
    %2083 = vmatpush1.msra.mxu0 %v571
    %2084 = vmatprep.subr.mxu0 %v578
    %2085 = vmatpush1.msra.mxu0 %v577
    %2086 = vmatprep.subr.mxu0 %v584
    %2087 = vmatpush1.msra.mxu0 %v583
    %2088 = vmatprep.subr.mxu0 %v590
    %2089 = vmatpush1.msra.mxu0 %v589
    %2090 = vmatprep.subr.mxu0 %v596
    %2091 = vmatpush1.msra.mxu0 %v595
    %2092 = vmatprep.subr.mxu0 %v602
    %2093 = vmatpush1.msra.mxu0 %v601
    %2094 = vmatprep.subr.mxu0 %v608
    %2095 = vmatpush1.msra.mxu0 %v607
    %2096 = vmatprep.subr.mxu0 %v614
    %2097 = vmatpush1.msra.mxu0 %v613
    %2098 = vmatprep.subr.mxu0 %v620
    %2099 = vmatpush1.msra.mxu0 %v619
    %2100 = vmatprep.subr.mxu0 %v626
    %2101 = vmatpush1.msra.mxu0 %v625
    %2102 = vmatprep.subr.mxu0 %v632
    %2103 = vmatpush1.msra.mxu0 %v631
    %2104 = vmatprep.subr.mxu0 %v638
    %2105 = vmatpush1.msra.mxu0 %v637
    %2106 = vmatprep.subr.mxu0 %v644
    %2107 = vmatpush1.msra.mxu0 %v643
    %2108 = vmatprep.subr.mxu0 %v650
    %2109 = vmatpush1.msra.mxu0 %v649
    %2110 = vmatprep.subr.mxu0 %v656
    %2111 = vmatpush1.msra.mxu0 %v655
    %2112 = vmatprep.subr.mxu0 %v662
    %2113 = vmatpush1.msra.mxu0 %v661
    %2114 = vmatprep.subr.mxu0 %v668
    %2115 = vmatpush1.msra.mxu0 %v667
    %2116 = vmatprep.subr.mxu0 %v674
    %2117 = vmatpush1.msra.mxu0 %v673
    %2118 = vmatprep.subr.mxu0 %v680
    %2119 = vmatpush1.msra.mxu0 %v679
    %2120 = vmatprep.subr.mxu0 %v686
    %2121 = vmatpush1.msra.mxu0 %v685
    %2122 = vmatprep.subr.mxu0 %v692
    %2123 = vmatpush1.msra.mxu0 %v691
    %2124 = vmatprep.subr.mxu0 %v698
    %2125 = vmatpush1.msra.mxu0 %v697
    %2126 = vmatprep.subr.mxu0 %v704
    %2127 = vmatpush1.msra.mxu0 %v703
    %2128 = vmatprep.subr.mxu0 %v710
    %2129 = vmatpush1.msra.mxu0 %v709
    %2130 = vmatprep.subr.mxu0 %v716
    %2131 = vmatpush1.msra.mxu0 %v715
    %2132 = vmatprep.subr.mxu0 %v722
    %2133 = vmatpush1.msra.mxu0 %v721
    %2134 = vmatprep.subr.mxu0 %v728
    %2135 = vmatpush1.msra.mxu0 %v727
    %2136 = vmatprep.subr.mxu0 %v734
    %2137 = vmatpush1.msra.mxu0 %v733
    %2138 = vmatprep.subr.mxu0 %v740
    %2139 = vmatpush1.msra.mxu0 %v739
    %2140 = vmatprep.subr.mxu0 %v746
    %2141 = vmatpush1.msra.mxu0 %v745
    %2142 = vmatprep.subr.mxu0 %v752
    %2143 = vmatpush1.msra.mxu0 %v751
    %2144 = vmatprep.subr.mxu0 %v758
    %2145 = vmatpush1.msra.mxu0 %v757
    %2146 = vmatprep.mubr.f32.mxu0 %v2079
    %2147 = vmatmul.mubr.f32.gmra.mrb[0].mxu0 %v2058
    %v2148 = vpop.f32.mrb[0].mxu0
    %v2149 = vadd.f32 0.0, %v2148
    %v2150 = vpop.f32.mrb[0].mxu0
    %v2151 = vadd.f32 0.0, %v2150
    %2152 = vdwg.mxu0
    %2153 = vmatprep.subr.mxu0 %v574
    %2154 = vmatpush1.msra.mxu0 %v573
    %2155 = vmatprep.subr.mxu0 %v580
    %2156 = vmatpush1.msra.mxu0 %v579
    %2157 = vmatprep.subr.mxu0 %v586
    %2158 = vmatpush1.msra.mxu0 %v585
    %2159 = vmatprep.subr.mxu0 %v592
    %2160 = vmatpush1.msra.mxu0 %v591
    %2161 = vmatprep.subr.mxu0 %v598
    %2162 = vmatpush1.msra.mxu0 %v597
    %2163 = vmatprep.subr.mxu0 %v604
    %2164 = vmatpush1.msra.mxu0 %v603
    %2165 = vmatprep.subr.mxu0 %v610
    %2166 = vmatpush1.msra.mxu0 %v609
    %2167 = vmatprep.subr.mxu0 %v616
    %2168 = vmatpush1.msra.mxu0 %v615
    %2169 = vmatprep.subr.mxu0 %v622
    %2170 = vmatpush1.msra.mxu0 %v621
    %2171 = vmatprep.subr.mxu0 %v628
    %2172 = vmatpush1.msra.mxu0 %v627
    %2173 = vmatprep.subr.mxu0 %v634
    %2174 = vmatpush1.msra.mxu0 %v633
    %2175 = vmatprep.subr.mxu0 %v640
    %2176 = vmatpush1.msra.mxu0 %v639
    %2177 = vmatprep.subr.mxu0 %v646
    %2178 = vmatpush1.msra.mxu0 %v645
    %2179 = vmatprep.subr.mxu0 %v652
    %2180 = vmatpush1.msra.mxu0 %v651
    %2181 = vmatprep.subr.mxu0 %v658
    %2182 = vmatpush1.msra.mxu0 %v657
    %2183 = vmatprep.subr.mxu0 %v664
    %2184 = vmatpush1.msra.mxu0 %v663
    %2185 = vmatprep.subr.mxu0 %v670
    %2186 = vmatpush1.msra.mxu0 %v669
    %2187 = vmatprep.subr.mxu0 %v676
    %2188 = vmatpush1.msra.mxu0 %v675
    %2189 = vmatprep.subr.mxu0 %v682
    %2190 = vmatpush1.msra.mxu0 %v681
    %2191 = vmatprep.subr.mxu0 %v688
    %2192 = vmatpush1.msra.mxu0 %v687
    %2193 = vmatprep.subr.mxu0 %v694
    %2194 = vmatpush1.msra.mxu0 %v693
    %2195 = vmatprep.subr.mxu0 %v700
    %2196 = vmatpush1.msra.mxu0 %v699
    %2197 = vmatprep.subr.mxu0 %v706
    %2198 = vmatpush1.msra.mxu0 %v705
    %2199 = vmatprep.subr.mxu0 %v712
    %2200 = vmatpush1.msra.mxu0 %v711
    %2201 = vmatprep.subr.mxu0 %v718
    %2202 = vmatpush1.msra.mxu0 %v717
    %2203 = vmatprep.subr.mxu0 %v724
    %2204 = vmatpush1.msra.mxu0 %v723
    %2205 = vmatprep.subr.mxu0 %v730
    %2206 = vmatpush1.msra.mxu0 %v729
    %2207 = vmatprep.subr.mxu0 %v736
    %2208 = vmatpush1.msra.mxu0 %v735
    %2209 = vmatprep.subr.mxu0 %v742
    %2210 = vmatpush1.msra.mxu0 %v741
    %2211 = vmatprep.subr.mxu0 %v748
    %2212 = vmatpush1.msra.mxu0 %v747
    %2213 = vmatprep.subr.mxu0 %v754
    %2214 = vmatpush1.msra.mxu0 %v753
    %2215 = vmatprep.subr.mxu0 %v760
    %2216 = vmatpush1.msra.mxu0 %v759
    %2217 = vmatprep.mubr.f32.mxu0 %v2079
    %2218 = vmatmul.mubr.f32.gmra.mrb[0].mxu0 %v2058
    %v2219 = vpop.f32.mrb[0].mxu0
    %v2220 = vadd.f32 0.0, %v2219
    %v2221 = vpop.f32.mrb[0].mxu0
    %v2222 = vadd.f32 0.0, %v2221
    %2223 = vdwg.mxu0
    %2224 = vmatprep.subr.mxu0 %v576
    %2225 = vmatpush1.msra.mxu0 %v575
    %2226 = vmatprep.subr.mxu0 %v582
    %2227 = vmatpush1.msra.mxu0 %v581
    %2228 = vmatprep.subr.mxu0 %v588
    %2229 = vmatpush1.msra.mxu0 %v587
    %2230 = vmatprep.subr.mxu0 %v594
    %2231 = vmatpush1.msra.mxu0 %v593
    %2232 = vmatprep.subr.mxu0 %v600
    %2233 = vmatpush1.msra.mxu0 %v599
    %2234 = vmatprep.subr.mxu0 %v606
    %2235 = vmatpush1.msra.mxu0 %v605
    %2236 = vmatprep.subr.mxu0 %v612
    %2237 = vmatpush1.msra.mxu0 %v611
    %2238 = vmatprep.subr.mxu0 %v618
    %2239 = vmatpush1.msra.mxu0 %v617
    %2240 = vmatprep.subr.mxu0 %v624
    %2241 = vmatpush1.msra.mxu0 %v623
    %2242 = vmatprep.subr.mxu0 %v630
    %2243 = vmatpush1.msra.mxu0 %v629
    %2244 = vmatprep.subr.mxu0 %v636
    %2245 = vmatpush1.msra.mxu0 %v635
    %2246 = vmatprep.subr.mxu0 %v642
    %2247 = vmatpush1.msra.mxu0 %v641
    %2248 = vmatprep.subr.mxu0 %v648
    %2249 = vmatpush1.msra.mxu0 %v647
    %2250 = vmatprep.subr.mxu0 %v654
    %2251 = vmatpush1.msra.mxu0 %v653
    %2252 = vmatprep.subr.mxu0 %v660
    %2253 = vmatpush1.msra.mxu0 %v659
    %2254 = vmatprep.subr.mxu0 %v666
    %2255 = vmatpush1.msra.mxu0 %v665
    %2256 = vmatprep.subr.mxu0 %v672
    %2257 = vmatpush1.msra.mxu0 %v671
    %2258 = vmatprep.subr.mxu0 %v678
    %2259 = vmatpush1.msra.mxu0 %v677
    %2260 = vmatprep.subr.mxu0 %v684
    %2261 = vmatpush1.msra.mxu0 %v683
    %2262 = vmatprep.subr.mxu0 %v690
    %2263 = vmatpush1.msra.mxu0 %v689
    %2264 = vmatprep.subr.mxu0 %v696
    %2265 = vmatpush1.msra.mxu0 %v695
    %2266 = vmatprep.subr.mxu0 %v702
    %2267 = vmatpush1.msra.mxu0 %v701
    %2268 = vmatprep.subr.mxu0 %v708
    %2269 = vmatpush1.msra.mxu0 %v707
    %2270 = vmatprep.subr.mxu0 %v714
    %2271 = vmatpush1.msra.mxu0 %v713
    %2272 = vmatprep.subr.mxu0 %v720
    %2273 = vmatpush1.msra.mxu0 %v719
    %2274 = vmatprep.subr.mxu0 %v726
    %2275 = vmatpush1.msra.mxu0 %v725
    %2276 = vmatprep.subr.mxu0 %v732
    %2277 = vmatpush1.msra.mxu0 %v731
    %2278 = vmatprep.subr.mxu0 %v738
    %2279 = vmatpush1.msra.mxu0 %v737
    %2280 = vmatprep.subr.mxu0 %v744
    %2281 = vmatpush1.msra.mxu0 %v743
    %2282 = vmatprep.subr.mxu0 %v750
    %2283 = vmatpush1.msra.mxu0 %v749
    %2284 = vmatprep.subr.mxu0 %v756
    %2285 = vmatpush1.msra.mxu0 %v755
    %2286 = vmatprep.subr.mxu0 %v762
    %2287 = vmatpush1.msra.mxu0 %v761
    %2288 = vmatprep.mubr.f32.mxu0 %v2079
    %2289 = vmatmul.mubr.f32.gmra.mrb[0].mxu0 %v2058
    %v2290 = vpop.f32.mrb[0].mxu0
    %v2291 = vadd.f32 0.0, %v2290
    %v2292 = vpop.f32.mrb[0].mxu0
    %v2293 = vadd.f32 0.0, %v2292
    %2294 = vdwg.mxu0
    %v2295 = vld [vmem:[#allocation2 + $0xf0] sm:$0xff]
    %v2296 = vld [vmem:[#allocation2 + $0xf8] sm:$0xff]
    %v2297 = vld [vmem:[#allocation2 + $0x100] sm:$0xff]
    %v2298 = vld [vmem:[#allocation2 + $0x78] sm:$0xff]
    %v2299 = vld [vmem:[#allocation2 + $0x80] sm:$0xff]
    %v2300 = vld [vmem:[#allocation2 + $0x88] sm:$0xff]
    %v2301 = vadd.f32 %v2295, %v2149
    %v2302 = vxor.u32 %v2301, 2147483648
    %v2303 = vmul.f32 %v2302, 1.442695
    %v2304 = vpow.pop %v2303
    %v2305 = vadd.f32 %v2304, 1.0
    %v2306 = vrcp.pop %v2305
    %v2307 = vmul.f32 1.0, %v2306
    %v2308 = vadd.f32 %v2296, %v2151
    %v2309 = vxor.u32 %v2308, 2147483648
    %v2310 = vmul.f32 %v2309, 1.442695
    %v2311 = vpow.pop %v2310
    %v2312 = vadd.f32 %v2311, 1.0
    %v2313 = vrcp.pop %v2312
    %v2314 = vmul.f32 1.0, %v2313
    %v2315 = vadd.f32 %v2220, %v763
    %v2316 = vmul.f32 %v2307, %v2315
    %v2317 = vadd.f32 %v2297, %v2316
    %v2318 = vtanh.pop %v2317
    %v2319 = vsub.f32 %v2058, %v2318
    %v2320 = vmul.f32 %v2314, %v2319
    %v2321 = vadd.f32 %v2318, %v2320
    %v2322 = vadd.f32 %v2298, %v2222
    %v2323 = vxor.u32 %v2322, 2147483648
    %v2324 = vmul.f32 %v2323, 1.442695
    %v2325 = vpow.pop %v2324
    %v2326 = vadd.f32 %v2325, 1.0
    %v2327 = vrcp.pop %v2326
    %v2328 = vmul.f32 1.0, %v2327
    %v2329 = vadd.f32 %v2299, %v2291
    %v2330 = vxor.u32 %v2329, 2147483648
    %v2331 = vmul.f32 %v2330, 1.442695
    %v2332 = vpow.pop %v2331
    %v2333 = vadd.f32 %v2332, 1.0
    %v2334 = vrcp.pop %v2333
    %v2335 = vmul.f32 1.0, %v2334
    %v2336 = vadd.f32 %v2293, %v764
    %v2337 = vmul.f32 %v2328, %v2336
    %v2338 = vadd.f32 %v2300, %v2337
    %v2339 = vtanh.pop %v2338
    %v2340 = vsub.f32 %v2079, %v2339
    %v2341 = vmul.f32 %v2335, %v2340
    %v2342 = vadd.f32 %v2339, %v2341
    %2343 = vst [vmem:[#allocation3 + $0x50] sm:$0xff] %v2321
    %2344 = vst [vmem:[#allocation3 + $0x28] sm:$0xff] %v2342
    %2345 = vmatprep.subr.mxu0 %v572
    %2346 = vmatpush1.msra.mxu0 %v571
    %2347 = vmatprep.subr.mxu0 %v578
    %2348 = vmatpush1.msra.mxu0 %v577
    %2349 = vmatprep.subr.mxu0 %v584
    %2350 = vmatpush1.msra.mxu0 %v583
    %2351 = vmatprep.subr.mxu0 %v590
    %2352 = vmatpush1.msra.mxu0 %v589
    %2353 = vmatprep.subr.mxu0 %v596
    %2354 = vmatpush1.msra.mxu0 %v595
    %2355 = vmatprep.subr.mxu0 %v602
    %2356 = vmatpush1.msra.mxu0 %v601
    %2357 = vmatprep.subr.mxu0 %v608
    %2358 = vmatpush1.msra.mxu0 %v607
    %2359 = vmatprep.subr.mxu0 %v614
    %2360 = vmatpush1.msra.mxu0 %v613
    %2361 = vmatprep.subr.mxu0 %v620
    %2362 = vmatpush1.msra.mxu0 %v619
    %2363 = vmatprep.subr.mxu0 %v626
    %2364 = vmatpush1.msra.mxu0 %v625
    %2365 = vmatprep.subr.mxu0 %v632
    %2366 = vmatpush1.msra.mxu0 %v631
    %2367 = vmatprep.subr.mxu0 %v638
    %2368 = vmatpush1.msra.mxu0 %v637
    %2369 = vmatprep.subr.mxu0 %v644
    %2370 = vmatpush1.msra.mxu0 %v643
    %2371 = vmatprep.subr.mxu0 %v650
    %2372 = vmatpush1.msra.mxu0 %v649
    %2373 = vmatprep.subr.mxu0 %v656
    %2374 = vmatpush1.msra.mxu0 %v655
    %2375 = vmatprep.subr.mxu0 %v662
    %2376 = vmatpush1.msra.mxu0 %v661
    %2377 = vmatprep.subr.mxu0 %v668
    %2378 = vmatpush1.msra.mxu0 %v667
    %2379 = vmatprep.subr.mxu0 %v674
    %2380 = vmatpush1.msra.mxu0 %v673
    %2381 = vmatprep.subr.mxu0 %v680
    %2382 = vmatpush1.msra.mxu0 %v679
    %2383 = vmatprep.subr.mxu0 %v686
    %2384 = vmatpush1.msra.mxu0 %v685
    %2385 = vmatprep.subr.mxu0 %v692
    %2386 = vmatpush1.msra.mxu0 %v691
    %2387 = vmatprep.subr.mxu0 %v698
    %2388 = vmatpush1.msra.mxu0 %v697
    %2389 = vmatprep.subr.mxu0 %v704
    %2390 = vmatpush1.msra.mxu0 %v703
    %2391 = vmatprep.subr.mxu0 %v710
    %2392 = vmatpush1.msra.mxu0 %v709
    %2393 = vmatprep.subr.mxu0 %v716
    %2394 = vmatpush1.msra.mxu0 %v715
    %2395 = vmatprep.subr.mxu0 %v722
    %2396 = vmatpush1.msra.mxu0 %v721
    %2397 = vmatprep.subr.mxu0 %v728
    %2398 = vmatpush1.msra.mxu0 %v727
    %2399 = vmatprep.subr.mxu0 %v734
    %2400 = vmatpush1.msra.mxu0 %v733
    %2401 = vmatprep.subr.mxu0 %v740
    %2402 = vmatpush1.msra.mxu0 %v739
    %2403 = vmatprep.subr.mxu0 %v746
    %2404 = vmatpush1.msra.mxu0 %v745
    %2405 = vmatprep.subr.mxu0 %v752
    %2406 = vmatpush1.msra.mxu0 %v751
    %2407 = vmatprep.subr.mxu0 %v758
    %2408 = vmatpush1.msra.mxu0 %v757
    %2409 = vmatprep.mubr.f32.mxu0 %v2342
    %2410 = vmatmul.mubr.f32.gmra.mrb[0].mxu0 %v2321
    %v2411 = vpop.f32.mrb[0].mxu0
    %v2412 = vadd.f32 0.0, %v2411
    %v2413 = vpop.f32.mrb[0].mxu0
    %v2414 = vadd.f32 0.0, %v2413
    %2415 = vdwg.mxu0
    %2416 = vmatprep.subr.mxu0 %v574
    %2417 = vmatpush1.msra.mxu0 %v573
    %2418 = vmatprep.subr.mxu0 %v580
    %2419 = vmatpush1.msra.mxu0 %v579
    %2420 = vmatprep.subr.mxu0 %v586
    %2421 = vmatpush1.msra.mxu0 %v585
    %2422 = vmatprep.subr.mxu0 %v592
    %2423 = vmatpush1.msra.mxu0 %v591
    %2424 = vmatprep.subr.mxu0 %v598
    %2425 = vmatpush1.msra.mxu0 %v597
    %2426 = vmatprep.subr.mxu0 %v604
    %2427 = vmatpush1.msra.mxu0 %v603
    %2428 = vmatprep.subr.mxu0 %v610
    %2429 = vmatpush1.msra.mxu0 %v609
    %2430 = vmatprep.subr.mxu0 %v616
    %2431 = vmatpush1.msra.mxu0 %v615
    %2432 = vmatprep.subr.mxu0 %v622
    %2433 = vmatpush1.msra.mxu0 %v621
    %2434 = vmatprep.subr.mxu0 %v628
    %2435 = vmatpush1.msra.mxu0 %v627
    %2436 = vmatprep.subr.mxu0 %v634
    %2437 = vmatpush1.msra.mxu0 %v633
    %2438 = vmatprep.subr.mxu0 %v640
    %2439 = vmatpush1.msra.mxu0 %v639
    %2440 = vmatprep.subr.mxu0 %v646
    %2441 = vmatpush1.msra.mxu0 %v645
    %2442 = vmatprep.subr.mxu0 %v652
    %2443 = vmatpush1.msra.mxu0 %v651
    %2444 = vmatprep.subr.mxu0 %v658
    %2445 = vmatpush1.msra.mxu0 %v657
    %2446 = vmatprep.subr.mxu0 %v664
    %2447 = vmatpush1.msra.mxu0 %v663
    %2448 = vmatprep.subr.mxu0 %v670
    %2449 = vmatpush1.msra.mxu0 %v669
    %2450 = vmatprep.subr.mxu0 %v676
    %2451 = vmatpush1.msra.mxu0 %v675
    %2452 = vmatprep.subr.mxu0 %v682
    %2453 = vmatpush1.msra.mxu0 %v681
    %2454 = vmatprep.subr.mxu0 %v688
    %2455 = vmatpush1.msra.mxu0 %v687
    %2456 = vmatprep.subr.mxu0 %v694
    %2457 = vmatpush1.msra.mxu0 %v693
    %2458 = vmatprep.subr.mxu0 %v700
    %2459 = vmatpush1.msra.mxu0 %v699
    %2460 = vmatprep.subr.mxu0 %v706
    %2461 = vmatpush1.msra.mxu0 %v705
    %2462 = vmatprep.subr.mxu0 %v712
    %2463 = vmatpush1.msra.mxu0 %v711
    %2464 = vmatprep.subr.mxu0 %v718
    %2465 = vmatpush1.msra.mxu0 %v717
    %2466 = vmatprep.subr.mxu0 %v724
    %2467 = vmatpush1.msra.mxu0 %v723
    %2468 = vmatprep.subr.mxu0 %v730
    %2469 = vmatpush1.msra.mxu0 %v729
    %2470 = vmatprep.subr.mxu0 %v736
    %2471 = vmatpush1.msra.mxu0 %v735
    %2472 = vmatprep.subr.mxu0 %v742
    %2473 = vmatpush1.msra.mxu0 %v741
    %2474 = vmatprep.subr.mxu0 %v748
    %2475 = vmatpush1.msra.mxu0 %v747
    %2476 = vmatprep.subr.mxu0 %v754
    %2477 = vmatpush1.msra.mxu0 %v753
    %2478 = vmatprep.subr.mxu0 %v760
    %2479 = vmatpush1.msra.mxu0 %v759
    %2480 = vmatprep.mubr.f32.mxu0 %v2342
    %2481 = vmatmul.mubr.f32.gmra.mrb[0].mxu0 %v2321
    %v2482 = vpop.f32.mrb[0].mxu0
    %v2483 = vadd.f32 0.0, %v2482
    %v2484 = vpop.f32.mrb[0].mxu0
    %v2485 = vadd.f32 0.0, %v2484
    %2486 = vdwg.mxu0
    %2487 = vmatprep.subr.mxu0 %v576
    %2488 = vmatpush1.msra.mxu0 %v575
    %2489 = vmatprep.subr.mxu0 %v582
    %2490 = vmatpush1.msra.mxu0 %v581
    %2491 = vmatprep.subr.mxu0 %v588
    %2492 = vmatpush1.msra.mxu0 %v587
    %2493 = vmatprep.subr.mxu0 %v594
    %2494 = vmatpush1.msra.mxu0 %v593
    %2495 = vmatprep.subr.mxu0 %v600
    %2496 = vmatpush1.msra.mxu0 %v599
    %2497 = vmatprep.subr.mxu0 %v606
    %2498 = vmatpush1.msra.mxu0 %v605
    %2499 = vmatprep.subr.mxu0 %v612
    %2500 = vmatpush1.msra.mxu0 %v611
    %2501 = vmatprep.subr.mxu0 %v618
    %2502 = vmatpush1.msra.mxu0 %v617
    %2503 = vmatprep.subr.mxu0 %v624
    %2504 = vmatpush1.msra.mxu0 %v623
    %2505 = vmatprep.subr.mxu0 %v630
    %2506 = vmatpush1.msra.mxu0 %v629
    %2507 = vmatprep.subr.mxu0 %v636
    %2508 = vmatpush1.msra.mxu0 %v635
    %2509 = vmatprep.subr.mxu0 %v642
    %2510 = vmatpush1.msra.mxu0 %v641
    %2511 = vmatprep.subr.mxu0 %v648
    %2512 = vmatpush1.msra.mxu0 %v647
    %2513 = vmatprep.subr.mxu0 %v654
    %2514 = vmatpush1.msra.mxu0 %v653
    %2515 = vmatprep.subr.mxu0 %v660
    %2516 = vmatpush1.msra.mxu0 %v659
    %2517 = vmatprep.subr.mxu0 %v666
    %2518 = vmatpush1.msra.mxu0 %v665
    %2519 = vmatprep.subr.mxu0 %v672
    %2520 = vmatpush1.msra.mxu0 %v671
    %2521 = vmatprep.subr.mxu0 %v678
    %2522 = vmatpush1.msra.mxu0 %v677
    %2523 = vmatprep.subr.mxu0 %v684
    %2524 = vmatpush1.msra.mxu0 %v683
    %2525 = vmatprep.subr.mxu0 %v690
    %2526 = vmatpush1.msra.mxu0 %v689
    %2527 = vmatprep.subr.mxu0 %v696
    %2528 = vmatpush1.msra.mxu0 %v695
    %2529 = vmatprep.subr.mxu0 %v702
    %2530 = vmatpush1.msra.mxu0 %v701
    %2531 = vmatprep.subr.mxu0 %v708
    %2532 = vmatpush1.msra.mxu0 %v707
    %2533 = vmatprep.subr.mxu0 %v714
    %2534 = vmatpush1.msra.mxu0 %v713
    %2535 = vmatprep.subr.mxu0 %v720
    %2536 = vmatpush1.msra.mxu0 %v719
    %2537 = vmatprep.subr.mxu0 %v726
    %2538 = vmatpush1.msra.mxu0 %v725
    %2539 = vmatprep.subr.mxu0 %v732
    %2540 = vmatpush1.msra.mxu0 %v731
    %2541 = vmatprep.subr.mxu0 %v738
    %2542 = vmatpush1.msra.mxu0 %v737
    %2543 = vmatprep.subr.mxu0 %v744
    %2544 = vmatpush1.msra.mxu0 %v743
    %2545 = vmatprep.subr.mxu0 %v750
    %2546 = vmatpush1.msra.mxu0 %v749
    %2547 = vmatprep.subr.mxu0 %v756
    %2548 = vmatpush1.msra.mxu0 %v755
    %2549 = vmatprep.subr.mxu0 %v762
    %2550 = vmatpush1.msra.mxu0 %v761
    %2551 = vmatprep.mubr.f32.mxu0 %v2342
    %2552 = vmatmul.mubr.f32.gmra.mrb[0].mxu0 %v2321
    %v2553 = vpop.f32.mrb[0].mxu0
    %v2554 = vadd.f32 0.0, %v2553
    %v2555 = vpop.f32.mrb[0].mxu0
    %v2556 = vadd.f32 0.0, %v2555
    %2557 = vdwg.mxu0
    %v2558 = vld [vmem:[#allocation2 + $0x120] sm:$0xff]
    %v2559 = vld [vmem:[#allocation2 + $0x128] sm:$0xff]
    %v2560 = vld [vmem:[#allocation2 + $0x130] sm:$0xff]
    %v2561 = vld [vmem:[#allocation2 + $0x48] sm:$0xff]
    %v2562 = vld [vmem:[#allocation2 + $0x50] sm:$0xff]
    %v2563 = vld [vmem:[#allocation2 + $0x58] sm:$0xff]
    %v2564 = vadd.f32 %v2558, %v2412
    %v2565 = vxor.u32 %v2564, 2147483648
    %v2566 = vmul.f32 %v2565, 1.442695
    %v2567 = vpow.pop %v2566
    %v2568 = vadd.f32 %v2567, 1.0
    %v2569 = vrcp.pop %v2568
    %v2570 = vmul.f32 1.0, %v2569
    %v2571 = vadd.f32 %v2559, %v2414
    %v2572 = vxor.u32 %v2571, 2147483648
    %v2573 = vmul.f32 %v2572, 1.442695
    %v2574 = vpow.pop %v2573
    %v2575 = vadd.f32 %v2574, 1.0
    %v2576 = vrcp.pop %v2575
    %v2577 = vmul.f32 1.0, %v2576
    %v2578 = vadd.f32 %v2483, %v763
    %v2579 = vmul.f32 %v2570, %v2578
    %v2580 = vadd.f32 %v2560, %v2579
    %v2581 = vtanh.pop %v2580
    %v2582 = vsub.f32 %v2321, %v2581
    %v2583 = vmul.f32 %v2577, %v2582
    %v2584 = vadd.f32 %v2581, %v2583
    %v2585 = vadd.f32 %v2561, %v2485
    %v2586 = vxor.u32 %v2585, 2147483648
    %v2587 = vmul.f32 %v2586, 1.442695
    %v2588 = vpow.pop %v2587
    %v2589 = vadd.f32 %v2588, 1.0
    %v2590 = vrcp.pop %v2589
    %v2591 = vmul.f32 1.0, %v2590
    %v2592 = vadd.f32 %v2562, %v2554
    %v2593 = vxor.u32 %v2592, 2147483648
    %v2594 = vmul.f32 %v2593, 1.442695
    %v2595 = vpow.pop %v2594
    %v2596 = vadd.f32 %v2595, 1.0
    %v2597 = vrcp.pop %v2596
    %v2598 = vmul.f32 1.0, %v2597
    %v2599 = vadd.f32 %v2556, %v764
    %v2600 = vmul.f32 %v2591, %v2599
    %v2601 = vadd.f32 %v2563, %v2600
    %v2602 = vtanh.pop %v2601
    %v2603 = vsub.f32 %v2342, %v2602
    %v2604 = vmul.f32 %v2598, %v2603
    %v2605 = vadd.f32 %v2602, %v2604
    %2606 = vst [vmem:[#allocation3 + $0x60] sm:$0xff] %v2584
    %2607 = vst [vmem:[#allocation3 + $0x18] sm:$0xff] %v2605
    %2608 = vmatprep.subr.mxu0 %v572
    %2609 = vmatpush1.msra.mxu0 %v571
    %2610 = vmatprep.subr.mxu0 %v578
    %2611 = vmatpush1.msra.mxu0 %v577
    %2612 = vmatprep.subr.mxu0 %v584
    %2613 = vmatpush1.msra.mxu0 %v583
    %2614 = vmatprep.subr.mxu0 %v590
    %2615 = vmatpush1.msra.mxu0 %v589
    %2616 = vmatprep.subr.mxu0 %v596
    %2617 = vmatpush1.msra.mxu0 %v595
    %2618 = vmatprep.subr.mxu0 %v602
    %2619 = vmatpush1.msra.mxu0 %v601
    %2620 = vmatprep.subr.mxu0 %v608
    %2621 = vmatpush1.msra.mxu0 %v607
    %2622 = vmatprep.subr.mxu0 %v614
    %2623 = vmatpush1.msra.mxu0 %v613
    %2624 = vmatprep.subr.mxu0 %v620
    %2625 = vmatpush1.msra.mxu0 %v619
    %2626 = vmatprep.subr.mxu0 %v626
    %2627 = vmatpush1.msra.mxu0 %v625
    %2628 = vmatprep.subr.mxu0 %v632
    %2629 = vmatpush1.msra.mxu0 %v631
    %2630 = vmatprep.subr.mxu0 %v638
    %2631 = vmatpush1.msra.mxu0 %v637
    %2632 = vmatprep.subr.mxu0 %v644
    %2633 = vmatpush1.msra.mxu0 %v643
    %2634 = vmatprep.subr.mxu0 %v650
    %2635 = vmatpush1.msra.mxu0 %v649
    %2636 = vmatprep.subr.mxu0 %v656
    %2637 = vmatpush1.msra.mxu0 %v655
    %2638 = vmatprep.subr.mxu0 %v662
    %2639 = vmatpush1.msra.mxu0 %v661
    %2640 = vmatprep.subr.mxu0 %v668
    %2641 = vmatpush1.msra.mxu0 %v667
    %2642 = vmatprep.subr.mxu0 %v674
    %2643 = vmatpush1.msra.mxu0 %v673
    %2644 = vmatprep.subr.mxu0 %v680
    %2645 = vmatpush1.msra.mxu0 %v679
    %2646 = vmatprep.subr.mxu0 %v686
    %2647 = vmatpush1.msra.mxu0 %v685
    %2648 = vmatprep.subr.mxu0 %v692
    %2649 = vmatpush1.msra.mxu0 %v691
    %2650 = vmatprep.subr.mxu0 %v698
    %2651 = vmatpush1.msra.mxu0 %v697
    %2652 = vmatprep.subr.mxu0 %v704
    %2653 = vmatpush1.msra.mxu0 %v703
    %2654 = vmatprep.subr.mxu0 %v710
    %2655 = vmatpush1.msra.mxu0 %v709
    %2656 = vmatprep.subr.mxu0 %v716
    %2657 = vmatpush1.msra.mxu0 %v715
    %2658 = vmatprep.subr.mxu0 %v722
    %2659 = vmatpush1.msra.mxu0 %v721
    %2660 = vmatprep.subr.mxu0 %v728
    %2661 = vmatpush1.msra.mxu0 %v727
    %2662 = vmatprep.subr.mxu0 %v734
    %2663 = vmatpush1.msra.mxu0 %v733
    %2664 = vmatprep.subr.mxu0 %v740
    %2665 = vmatpush1.msra.mxu0 %v739
    %2666 = vmatprep.subr.mxu0 %v746
    %2667 = vmatpush1.msra.mxu0 %v745
    %2668 = vmatprep.subr.mxu0 %v752
    %2669 = vmatpush1.msra.mxu0 %v751
    %2670 = vmatprep.subr.mxu0 %v758
    %2671 = vmatpush1.msra.mxu0 %v757
    %2672 = vmatprep.mubr.f32.mxu0 %v2605
    %2673 = vmatmul.mubr.f32.gmra.mrb[0].mxu0 %v2584
    %v2674 = vpop.f32.mrb[0].mxu0
    %v2675 = vadd.f32 0.0, %v2674
    %v2676 = vpop.f32.mrb[0].mxu0
    %v2677 = vadd.f32 0.0, %v2676
    %2678 = vdwg.mxu0
    %2679 = vmatprep.subr.mxu0 %v574
    %2680 = vmatpush1.msra.mxu0 %v573
    %2681 = vmatprep.subr.mxu0 %v580
    %2682 = vmatpush1.msra.mxu0 %v579
    %2683 = vmatprep.subr.mxu0 %v586
    %2684 = vmatpush1.msra.mxu0 %v585
    %2685 = vmatprep.subr.mxu0 %v592
    %2686 = vmatpush1.msra.mxu0 %v591
    %2687 = vmatprep.subr.mxu0 %v598
    %2688 = vmatpush1.msra.mxu0 %v597
    %2689 = vmatprep.subr.mxu0 %v604
    %2690 = vmatpush1.msra.mxu0 %v603
    %2691 = vmatprep.subr.mxu0 %v610
    %2692 = vmatpush1.msra.mxu0 %v609
    %2693 = vmatprep.subr.mxu0 %v616
    %2694 = vmatpush1.msra.mxu0 %v615
    %2695 = vmatprep.subr.mxu0 %v622
    %2696 = vmatpush1.msra.mxu0 %v621
    %2697 = vmatprep.subr.mxu0 %v628
    %2698 = vmatpush1.msra.mxu0 %v627
    %2699 = vmatprep.subr.mxu0 %v634
    %2700 = vmatpush1.msra.mxu0 %v633
    %2701 = vmatprep.subr.mxu0 %v640
    %2702 = vmatpush1.msra.mxu0 %v639
    %2703 = vmatprep.subr.mxu0 %v646
    %2704 = vmatpush1.msra.mxu0 %v645
    %2705 = vmatprep.subr.mxu0 %v652
    %2706 = vmatpush1.msra.mxu0 %v651
    %2707 = vmatprep.subr.mxu0 %v658
    %2708 = vmatpush1.msra.mxu0 %v657
    %2709 = vmatprep.subr.mxu0 %v664
    %2710 = vmatpush1.msra.mxu0 %v663
    %2711 = vmatprep.subr.mxu0 %v670
    %2712 = vmatpush1.msra.mxu0 %v669
    %2713 = vmatprep.subr.mxu0 %v676
    %2714 = vmatpush1.msra.mxu0 %v675
    %2715 = vmatprep.subr.mxu0 %v682
    %2716 = vmatpush1.msra.mxu0 %v681
    %2717 = vmatprep.subr.mxu0 %v688
    %2718 = vmatpush1.msra.mxu0 %v687
    %2719 = vmatprep.subr.mxu0 %v694
    %2720 = vmatpush1.msra.mxu0 %v693
    %2721 = vmatprep.subr.mxu0 %v700
    %2722 = vmatpush1.msra.mxu0 %v699
    %2723 = vmatprep.subr.mxu0 %v706
    %2724 = vmatpush1.msra.mxu0 %v705
    %2725 = vmatprep.subr.mxu0 %v712
    %2726 = vmatpush1.msra.mxu0 %v711
    %2727 = vmatprep.subr.mxu0 %v718
    %2728 = vmatpush1.msra.mxu0 %v717
    %2729 = vmatprep.subr.mxu0 %v724
    %2730 = vmatpush1.msra.mxu0 %v723
    %2731 = vmatprep.subr.mxu0 %v730
    %2732 = vmatpush1.msra.mxu0 %v729
    %2733 = vmatprep.subr.mxu0 %v736
    %2734 = vmatpush1.msra.mxu0 %v735
    %2735 = vmatprep.subr.mxu0 %v742
    %2736 = vmatpush1.msra.mxu0 %v741
    %2737 = vmatprep.subr.mxu0 %v748
    %2738 = vmatpush1.msra.mxu0 %v747
    %2739 = vmatprep.subr.mxu0 %v754
    %2740 = vmatpush1.msra.mxu0 %v753
    %2741 = vmatprep.subr.mxu0 %v760
    %2742 = vmatpush1.msra.mxu0 %v759
    %2743 = vmatprep.mubr.f32.mxu0 %v2605
    %2744 = vmatmul.mubr.f32.gmra.mrb[0].mxu0 %v2584
    %v2745 = vpop.f32.mrb[0].mxu0
    %v2746 = vadd.f32 0.0, %v2745
    %v2747 = vpop.f32.mrb[0].mxu0
    %v2748 = vadd.f32 0.0, %v2747
    %2749 = vdwg.mxu0
    %2750 = vmatprep.subr.mxu0 %v576
    %2751 = vmatpush1.msra.mxu0 %v575
    %2752 = vmatprep.subr.mxu0 %v582
    %2753 = vmatpush1.msra.mxu0 %v581
    %2754 = vmatprep.subr.mxu0 %v588
    %2755 = vmatpush1.msra.mxu0 %v587
    %2756 = vmatprep.subr.mxu0 %v594
    %2757 = vmatpush1.msra.mxu0 %v593
    %2758 = vmatprep.subr.mxu0 %v600
    %2759 = vmatpush1.msra.mxu0 %v599
    %2760 = vmatprep.subr.mxu0 %v606
    %2761 = vmatpush1.msra.mxu0 %v605
    %2762 = vmatprep.subr.mxu0 %v612
    %2763 = vmatpush1.msra.mxu0 %v611
    %2764 = vmatprep.subr.mxu0 %v618
    %2765 = vmatpush1.msra.mxu0 %v617
    %2766 = vmatprep.subr.mxu0 %v624
    %2767 = vmatpush1.msra.mxu0 %v623
    %2768 = vmatprep.subr.mxu0 %v630
    %2769 = vmatpush1.msra.mxu0 %v629
    %2770 = vmatprep.subr.mxu0 %v636
    %2771 = vmatpush1.msra.mxu0 %v635
    %2772 = vmatprep.subr.mxu0 %v642
    %2773 = vmatpush1.msra.mxu0 %v641
    %2774 = vmatprep.subr.mxu0 %v648
    %2775 = vmatpush1.msra.mxu0 %v647
    %2776 = vmatprep.subr.mxu0 %v654
    %2777 = vmatpush1.msra.mxu0 %v653
    %2778 = vmatprep.subr.mxu0 %v660
    %2779 = vmatpush1.msra.mxu0 %v659
    %2780 = vmatprep.subr.mxu0 %v666
    %2781 = vmatpush1.msra.mxu0 %v665
    %2782 = vmatprep.subr.mxu0 %v672
    %2783 = vmatpush1.msra.mxu0 %v671
    %2784 = vmatprep.subr.mxu0 %v678
    %2785 = vmatpush1.msra.mxu0 %v677
    %2786 = vmatprep.subr.mxu0 %v684
    %2787 = vmatpush1.msra.mxu0 %v683
    %2788 = vmatprep.subr.mxu0 %v690
    %2789 = vmatpush1.msra.mxu0 %v689
    %2790 = vmatprep.subr.mxu0 %v696
    %2791 = vmatpush1.msra.mxu0 %v695
    %2792 = vmatprep.subr.mxu0 %v702
    %2793 = vmatpush1.msra.mxu0 %v701
    %2794 = vmatprep.subr.mxu0 %v708
    %2795 = vmatpush1.msra.mxu0 %v707
    %2796 = vmatprep.subr.mxu0 %v714
    %2797 = vmatpush1.msra.mxu0 %v713
    %2798 = vmatprep.subr.mxu0 %v720
    %2799 = vmatpush1.msra.mxu0 %v719
    %2800 = vmatprep.subr.mxu0 %v726
    %2801 = vmatpush1.msra.mxu0 %v725
    %2802 = vmatprep.subr.mxu0 %v732
    %2803 = vmatpush1.msra.mxu0 %v731
    %2804 = vmatprep.subr.mxu0 %v738
    %2805 = vmatpush1.msra.mxu0 %v737
    %2806 = vmatprep.subr.mxu0 %v744
    %2807 = vmatpush1.msra.mxu0 %v743
    %2808 = vmatprep.subr.mxu0 %v750
    %2809 = vmatpush1.msra.mxu0 %v749
    %2810 = vmatprep.subr.mxu0 %v756
    %2811 = vmatpush1.msra.mxu0 %v755
    %2812 = vmatprep.subr.mxu0 %v762
    %2813 = vmatpush1.msra.mxu0 %v761
    %2814 = vmatprep.mubr.f32.mxu0 %v2605
    %2815 = vmatmul.mubr.f32.gmra.mrb[0].mxu0 %v2584
    %v2816 = vpop.f32.mrb[0].mxu0
    %v2817 = vadd.f32 0.0, %v2816
    %v2818 = vpop.f32.mrb[0].mxu0
    %v2819 = vadd.f32 0.0, %v2818
    %2820 = vdwg.mxu0
    %v2821 = vld [vmem:[#allocation2 + $0x150] sm:$0xff]
    %v2822 = vld [vmem:[#allocation2 + $0x158] sm:$0xff]
    %v2823 = vld [vmem:[#allocation2 + $0x160] sm:$0xff]
    %v2824 = vld [vmem:[#allocation2 + $0x18] sm:$0xff]
    %v2825 = vld [vmem:[#allocation2 + $0x20] sm:$0xff]
    %v2826 = vld [vmem:[#allocation2 + $0x28] sm:$0xff]
    %v2827 = vadd.f32 %v2821, %v2675
    %v2828 = vxor.u32 %v2827, 2147483648
    %v2829 = vmul.f32 %v2828, 1.442695
    %v2830 = vpow.pop %v2829
    %v2831 = vadd.f32 %v2830, 1.0
    %v2832 = vrcp.pop %v2831
    %v2833 = vmul.f32 1.0, %v2832
    %v2834 = vadd.f32 %v2822, %v2677
    %v2835 = vxor.u32 %v2834, 2147483648
    %v2836 = vmul.f32 %v2835, 1.442695
    %v2837 = vpow.pop %v2836
    %v2838 = vadd.f32 %v2837, 1.0
    %v2839 = vrcp.pop %v2838
    %v2840 = vmul.f32 1.0, %v2839
    %v2841 = vadd.f32 %v2746, %v763
    %v2842 = vmul.f32 %v2833, %v2841
    %v2843 = vadd.f32 %v2823, %v2842
    %v2844 = vtanh.pop %v2843
    %v2845 = vsub.f32 %v2584, %v2844
    %v2846 = vmul.f32 %v2840, %v2845
    %v2847 = vadd.f32 %v2844, %v2846
    %v2848 = vadd.f32 %v2824, %v2748
    %v2849 = vxor.u32 %v2848, 2147483648
    %v2850 = vmul.f32 %v2849, 1.442695
    %v2851 = vpow.pop %v2850
    %v2852 = vadd.f32 %v2851, 1.0
    %v2853 = vrcp.pop %v2852
    %v2854 = vmul.f32 1.0, %v2853
    %v2855 = vadd.f32 %v2825, %v2817
    %v2856 = vxor.u32 %v2855, 2147483648
    %v2857 = vmul.f32 %v2856, 1.442695
    %v2858 = vpow.pop %v2857
    %v2859 = vadd.f32 %v2858, 1.0
    %v2860 = vrcp.pop %v2859
    %v2861 = vmul.f32 1.0, %v2860
    %v2862 = vadd.f32 %v2819, %v764
    %v2863 = vmul.f32 %v2854, %v2862
    %v2864 = vadd.f32 %v2826, %v2863
    %v2865 = vtanh.pop %v2864
    %v2866 = vsub.f32 %v2605, %v2865
    %v2867 = vmul.f32 %v2861, %v2866
    %v2868 = vadd.f32 %v2865, %v2867
    %2869 = vst [vmem:[#allocation3 + $0x70] sm:$0xff] %v2847
    %2870 = vst [vmem:[#allocation3 + $0x8] sm:$0xff] %v2868
    %2871 = vst [vmem:[#allocation15] sm:$0xff] %v2847
    %2872 = vst [vmem:[#allocation15 + $0x8] sm:$0xff] %v2868
    %v2873 = vld [vmem:[#allocation3] sm:$0xff]
    %v2874 = vld [vmem:[#allocation3 + $0x8] sm:$0xff]
    %v2875 = vld [vmem:[#allocation3 + $0x10] sm:$0xff]
    %v2876 = vld [vmem:[#allocation3 + $0x18] sm:$0xff]
    %v2877 = vld [vmem:[#allocation3 + $0x20] sm:$0xff]
    %v2878 = vld [vmem:[#allocation3 + $0x28] sm:$0xff]
    %v2879 = vld [vmem:[#allocation3 + $0x30] sm:$0xff]
    %v2880 = vld [vmem:[#allocation3 + $0x38] sm:$0xff]
    %v2881 = vld [vmem:[#allocation3 + $0x40] sm:$0xff]
    %v2882 = vld [vmem:[#allocation3 + $0x48] sm:$0xff]
    %v2883 = vld [vmem:[#allocation3 + $0x50] sm:$0xff]
    %v2884 = vld [vmem:[#allocation3 + $0x58] sm:$0xff]
    %v2885 = vld [vmem:[#allocation3 + $0x60] sm:$0xff]
    %v2886 = vld [vmem:[#allocation3 + $0x68] sm:$0xff]
    %v2887 = vld [vmem:[#allocation3 + $0x70] sm:$0xff]
    %v2888 = vld [vmem:[#allocation3 + $0x78] sm:$0xff]
    %v2889 = vld [vmem:[#allocation10] sm:$0xff]
    %v2890 = vld [vmem:[#allocation10 + $0x8] sm:$0xff]
    %v2891 = vld [vmem:[#allocation10 + $0x10] sm:$0xff]
    %v2892 = vld [vmem:[#allocation10 + $0x18] sm:$0xff]
    %v2893 = vld [vmem:[#allocation10 + $0x20] sm:$0xff]
    %v2894 = vld [vmem:[#allocation10 + $0x28] sm:$0xff]
    %v2895 = vld [vmem:[#allocation10 + $0x30] sm:$0xff]
    %v2896 = vld [vmem:[#allocation10 + $0x38] sm:$0xff]
    %v2897 = vld [vmem:[#allocation10 + $0x40] sm:$0xff]
    %v2898 = vld [vmem:[#allocation10 + $0x48] sm:$0xff]
    %v2899 = vld [vmem:[#allocation10 + $0x50] sm:$0xff]
    %v2900 = vld [vmem:[#allocation10 + $0x58] sm:$0xff]
    %v2901 = vld [vmem:[#allocation10 + $0x60] sm:$0xff]
    %v2902 = vld [vmem:[#allocation10 + $0x68] sm:$0xff]
    %v2903 = vld [vmem:[#allocation10 + $0x70] sm:$0xff]
    %v2904 = vld [vmem:[#allocation10 + $0x78] sm:$0xff]
    %v2905 = vld [vmem:[#allocation10 + $0x80] sm:$0xff]
    %v2906 = vld [vmem:[#allocation10 + $0x88] sm:$0xff]
    %v2907 = vld [vmem:[#allocation10 + $0x90] sm:$0xff]
    %v2908 = vld [vmem:[#allocation10 + $0x98] sm:$0xff]
    %v2909 = vld [vmem:[#allocation10 + $0xa0] sm:$0xff]
    %v2910 = vld [vmem:[#allocation10 + $0xa8] sm:$0xff]
    %v2911 = vld [vmem:[#allocation10 + $0xb0] sm:$0xff]
    %v2912 = vld [vmem:[#allocation10 + $0xb8] sm:$0xff]
    %v2913 = vld [vmem:[#allocation10 + $0xc0] sm:$0xff]
    %v2914 = vld [vmem:[#allocation10 + $0xc8] sm:$0xff]
    %v2915 = vld [vmem:[#allocation10 + $0xd0] sm:$0xff]
    %v2916 = vld [vmem:[#allocation10 + $0xd8] sm:$0xff]
    %v2917 = vld [vmem:[#allocation10 + $0xe0] sm:$0xff]
    %v2918 = vld [vmem:[#allocation10 + $0xe8] sm:$0xff]
    %v2919 = vld [vmem:[#allocation10 + $0xf0] sm:$0xff]
    %v2920 = vld [vmem:[#allocation10 + $0xf8] sm:$0xff]
    %v2921 = vld [vmem:[#allocation10 + $0x100] sm:$0xff]
    %v2922 = vld [vmem:[#allocation10 + $0x108] sm:$0xff]
    %v2923 = vld [vmem:[#allocation10 + $0x110] sm:$0xff]
    %v2924 = vld [vmem:[#allocation10 + $0x118] sm:$0xff]
    %v2925 = vld [vmem:[#allocation10 + $0x120] sm:$0xff]
    %v2926 = vld [vmem:[#allocation10 + $0x128] sm:$0xff]
    %v2927 = vld [vmem:[#allocation10 + $0x130] sm:$0xff]
    %v2928 = vld [vmem:[#allocation10 + $0x138] sm:$0xff]
    %v2929 = vld [vmem:[#allocation10 + $0x140] sm:$0xff]
    %v2930 = vld [vmem:[#allocation10 + $0x148] sm:$0xff]
    %v2931 = vld [vmem:[#allocation10 + $0x150] sm:$0xff]
    %v2932 = vld [vmem:[#allocation10 + $0x158] sm:$0xff]
    %v2933 = vld [vmem:[#allocation10 + $0x160] sm:$0xff]
    %v2934 = vld [vmem:[#allocation10 + $0x168] sm:$0xff]
    %v2935 = vld [vmem:[#allocation10 + $0x170] sm:$0xff]
    %v2936 = vld [vmem:[#allocation10 + $0x178] sm:$0xff]
    %v2937 = vld [vmem:[#allocation10 + $0x180] sm:$0xff]
    %v2938 = vld [vmem:[#allocation10 + $0x188] sm:$0xff]
    %v2939 = vld [vmem:[#allocation10 + $0x190] sm:$0xff]
    %v2940 = vld [vmem:[#allocation10 + $0x198] sm:$0xff]
    %v2941 = vld [vmem:[#allocation10 + $0x1a0] sm:$0xff]
    %v2942 = vld [vmem:[#allocation10 + $0x1a8] sm:$0xff]
    %v2943 = vld [vmem:[#allocation10 + $0x1b0] sm:$0xff]
    %v2944 = vld [vmem:[#allocation10 + $0x1b8] sm:$0xff]
    %v2945 = vld [vmem:[#allocation10 + $0x1c0] sm:$0xff]
    %v2946 = vld [vmem:[#allocation10 + $0x1c8] sm:$0xff]
    %v2947 = vld [vmem:[#allocation10 + $0x1d0] sm:$0xff]
    %v2948 = vld [vmem:[#allocation10 + $0x1d8] sm:$0xff]
    %v2949 = vld [vmem:[#allocation10 + $0x1e0] sm:$0xff]
    %v2950 = vld [vmem:[#allocation10 + $0x1e8] sm:$0xff]
    %v2951 = vld [vmem:[#allocation10 + $0x1f0] sm:$0xff]
    %v2952 = vld [vmem:[#allocation10 + $0x1f8] sm:$0xff]
    %v2953 = vld [vmem:[#allocation10 + $0x200] sm:$0xff]
    %v2954 = vld [vmem:[#allocation10 + $0x208] sm:$0xff]
    %v2955 = vld [vmem:[#allocation10 + $0x210] sm:$0xff]
    %v2956 = vld [vmem:[#allocation10 + $0x218] sm:$0xff]
    %v2957 = vld [vmem:[#allocation10 + $0x220] sm:$0xff]
    %v2958 = vld [vmem:[#allocation10 + $0x228] sm:$0xff]
    %v2959 = vld [vmem:[#allocation10 + $0x230] sm:$0xff]
    %v2960 = vld [vmem:[#allocation10 + $0x238] sm:$0xff]
    %v2961 = vld [vmem:[#allocation10 + $0x240] sm:$0xff]
    %v2962 = vld [vmem:[#allocation10 + $0x248] sm:$0xff]
    %v2963 = vld [vmem:[#allocation10 + $0x250] sm:$0xff]
    %v2964 = vld [vmem:[#allocation10 + $0x258] sm:$0xff]
    %v2965 = vld [vmem:[#allocation10 + $0x260] sm:$0xff]
    %v2966 = vld [vmem:[#allocation10 + $0x268] sm:$0xff]
    %v2967 = vld [vmem:[#allocation10 + $0x270] sm:$0xff]
    %v2968 = vld [vmem:[#allocation10 + $0x278] sm:$0xff]
    %v2969 = vld [vmem:[#allocation10 + $0x280] sm:$0xff]
    %v2970 = vld [vmem:[#allocation10 + $0x288] sm:$0xff]
    %v2971 = vld [vmem:[#allocation10 + $0x290] sm:$0xff]
    %v2972 = vld [vmem:[#allocation10 + $0x298] sm:$0xff]
    %v2973 = vld [vmem:[#allocation10 + $0x2a0] sm:$0xff]
    %v2974 = vld [vmem:[#allocation10 + $0x2a8] sm:$0xff]
    %v2975 = vld [vmem:[#allocation10 + $0x2b0] sm:$0xff]
    %v2976 = vld [vmem:[#allocation10 + $0x2b8] sm:$0xff]
    %v2977 = vld [vmem:[#allocation10 + $0x2c0] sm:$0xff]
    %v2978 = vld [vmem:[#allocation10 + $0x2c8] sm:$0xff]
    %v2979 = vld [vmem:[#allocation10 + $0x2d0] sm:$0xff]
    %v2980 = vld [vmem:[#allocation10 + $0x2d8] sm:$0xff]
    %v2981 = vld [vmem:[#allocation10 + $0x2e0] sm:$0xff]
    %v2982 = vld [vmem:[#allocation10 + $0x2e8] sm:$0xff]
    %v2983 = vld [vmem:[#allocation10 + $0x2f0] sm:$0xff]
    %v2984 = vld [vmem:[#allocation10 + $0x2f8] sm:$0xff]
    %v2985 = vld [vmem:[#allocation10 + $0x300] sm:$0xff]
    %v2986 = vld [vmem:[#allocation10 + $0x308] sm:$0xff]
    %v2987 = vld [vmem:[#allocation10 + $0x310] sm:$0xff]
    %v2988 = vld [vmem:[#allocation10 + $0x318] sm:$0xff]
    %v2989 = vld [vmem:[#allocation10 + $0x320] sm:$0xff]
    %v2990 = vld [vmem:[#allocation10 + $0x328] sm:$0xff]
    %v2991 = vld [vmem:[#allocation10 + $0x330] sm:$0xff]
    %v2992 = vld [vmem:[#allocation10 + $0x338] sm:$0xff]
    %v2993 = vld [vmem:[#allocation10 + $0x340] sm:$0xff]
    %v2994 = vld [vmem:[#allocation10 + $0x348] sm:$0xff]
    %v2995 = vld [vmem:[#allocation10 + $0x350] sm:$0xff]
    %v2996 = vld [vmem:[#allocation10 + $0x358] sm:$0xff]
    %v2997 = vld [vmem:[#allocation10 + $0x360] sm:$0xff]
    %v2998 = vld [vmem:[#allocation10 + $0x368] sm:$0xff]
    %v2999 = vld [vmem:[#allocation10 + $0x370] sm:$0xff]
    %v3000 = vld [vmem:[#allocation10 + $0x378] sm:$0xff]
    %v3001 = vld [vmem:[#allocation10 + $0x380] sm:$0xff]
    %v3002 = vld [vmem:[#allocation10 + $0x388] sm:$0xff]
    %v3003 = vld [vmem:[#allocation10 + $0x390] sm:$0xff]
    %v3004 = vld [vmem:[#allocation10 + $0x398] sm:$0xff]
    %v3005 = vld [vmem:[#allocation10 + $0x3a0] sm:$0xff]
    %v3006 = vld [vmem:[#allocation10 + $0x3a8] sm:$0xff]
    %v3007 = vld [vmem:[#allocation10 + $0x3b0] sm:$0xff]
    %v3008 = vld [vmem:[#allocation10 + $0x3b8] sm:$0xff]
    %v3009 = vld [vmem:[#allocation10 + $0x3c0] sm:$0xff]
    %v3010 = vld [vmem:[#allocation10 + $0x3c8] sm:$0xff]
    %v3011 = vld [vmem:[#allocation10 + $0x3d0] sm:$0xff]
    %v3012 = vld [vmem:[#allocation10 + $0x3d8] sm:$0xff]
    %v3013 = vld [vmem:[#allocation10 + $0x3e0] sm:$0xff]
    %v3014 = vld [vmem:[#allocation10 + $0x3e8] sm:$0xff]
    %v3015 = vld [vmem:[#allocation10 + $0x3f0] sm:$0xff]
    %v3016 = vld [vmem:[#allocation10 + $0x3f8] sm:$0xff]
    %v3017 = vld [vmem:[#allocation10 + $0x400] sm:$0xff]
    %v3018 = vld [vmem:[#allocation10 + $0x408] sm:$0xff]
    %v3019 = vld [vmem:[#allocation10 + $0x410] sm:$0xff]
    %v3020 = vld [vmem:[#allocation10 + $0x418] sm:$0xff]
    %v3021 = vld [vmem:[#allocation10 + $0x420] sm:$0xff]
    %v3022 = vld [vmem:[#allocation10 + $0x428] sm:$0xff]
    %v3023 = vld [vmem:[#allocation10 + $0x430] sm:$0xff]
    %v3024 = vld [vmem:[#allocation10 + $0x438] sm:$0xff]
    %v3025 = vld [vmem:[#allocation10 + $0x440] sm:$0xff]
    %v3026 = vld [vmem:[#allocation10 + $0x448] sm:$0xff]
    %v3027 = vld [vmem:[#allocation10 + $0x450] sm:$0xff]
    %v3028 = vld [vmem:[#allocation10 + $0x458] sm:$0xff]
    %v3029 = vld [vmem:[#allocation10 + $0x460] sm:$0xff]
    %v3030 = vld [vmem:[#allocation10 + $0x468] sm:$0xff]
    %v3031 = vld [vmem:[#allocation10 + $0x470] sm:$0xff]
    %v3032 = vld [vmem:[#allocation10 + $0x478] sm:$0xff]
    %v3033 = vld [vmem:[#allocation10 + $0x480] sm:$0xff]
    %v3034 = vld [vmem:[#allocation10 + $0x488] sm:$0xff]
    %v3035 = vld [vmem:[#allocation10 + $0x490] sm:$0xff]
    %v3036 = vld [vmem:[#allocation10 + $0x498] sm:$0xff]
    %v3037 = vld [vmem:[#allocation10 + $0x4a0] sm:$0xff]
    %v3038 = vld [vmem:[#allocation10 + $0x4a8] sm:$0xff]
    %v3039 = vld [vmem:[#allocation10 + $0x4b0] sm:$0xff]
    %v3040 = vld [vmem:[#allocation10 + $0x4b8] sm:$0xff]
    %v3041 = vld [vmem:[#allocation10 + $0x4c0] sm:$0xff]
    %v3042 = vld [vmem:[#allocation10 + $0x4c8] sm:$0xff]
    %v3043 = vld [vmem:[#allocation10 + $0x4d0] sm:$0xff]
    %v3044 = vld [vmem:[#allocation10 + $0x4d8] sm:$0xff]
    %v3045 = vld [vmem:[#allocation10 + $0x4e0] sm:$0xff]
    %v3046 = vld [vmem:[#allocation10 + $0x4e8] sm:$0xff]
    %v3047 = vld [vmem:[#allocation10 + $0x4f0] sm:$0xff]
    %v3048 = vld [vmem:[#allocation10 + $0x4f8] sm:$0xff]
    %v3049 = vld [vmem:[#allocation10 + $0x500] sm:$0xff]
    %v3050 = vld [vmem:[#allocation10 + $0x508] sm:$0xff]
    %v3051 = vld [vmem:[#allocation10 + $0x510] sm:$0xff]
    %v3052 = vld [vmem:[#allocation10 + $0x518] sm:$0xff]
    %v3053 = vld [vmem:[#allocation10 + $0x520] sm:$0xff]
    %v3054 = vld [vmem:[#allocation10 + $0x528] sm:$0xff]
    %v3055 = vld [vmem:[#allocation10 + $0x530] sm:$0xff]
    %v3056 = vld [vmem:[#allocation10 + $0x538] sm:$0xff]
    %v3057 = vld [vmem:[#allocation10 + $0x540] sm:$0xff]
    %v3058 = vld [vmem:[#allocation10 + $0x548] sm:$0xff]
    %v3059 = vld [vmem:[#allocation10 + $0x550] sm:$0xff]
    %v3060 = vld [vmem:[#allocation10 + $0x558] sm:$0xff]
    %v3061 = vld [vmem:[#allocation10 + $0x560] sm:$0xff]
    %v3062 = vld [vmem:[#allocation10 + $0x568] sm:$0xff]
    %v3063 = vld [vmem:[#allocation10 + $0x570] sm:$0xff]
    %v3064 = vld [vmem:[#allocation10 + $0x578] sm:$0xff]
    %v3065 = vld [vmem:[#allocation10 + $0x580] sm:$0xff]
    %v3066 = vld [vmem:[#allocation10 + $0x588] sm:$0xff]
    %v3067 = vld [vmem:[#allocation10 + $0x590] sm:$0xff]
    %v3068 = vld [vmem:[#allocation10 + $0x598] sm:$0xff]
    %v3069 = vld [vmem:[#allocation10 + $0x5a0] sm:$0xff]
    %v3070 = vld [vmem:[#allocation10 + $0x5a8] sm:$0xff]
    %v3071 = vld [vmem:[#allocation10 + $0x5b0] sm:$0xff]
    %v3072 = vld [vmem:[#allocation10 + $0x5b8] sm:$0xff]
    %v3073 = vld [vmem:[#allocation10 + $0x5c0] sm:$0xff]
    %v3074 = vld [vmem:[#allocation10 + $0x5c8] sm:$0xff]
    %v3075 = vld [vmem:[#allocation10 + $0x5d0] sm:$0xff]
    %v3076 = vld [vmem:[#allocation10 + $0x5d8] sm:$0xff]
    %v3077 = vld [vmem:[#allocation10 + $0x5e0] sm:$0xff]
    %v3078 = vld [vmem:[#allocation10 + $0x5e8] sm:$0xff]
    %v3079 = vld [vmem:[#allocation10 + $0x5f0] sm:$0xff]
    %v3080 = vld [vmem:[#allocation10 + $0x5f8] sm:$0xff]
    %v3081 = vld [vmem:[%s8] sm:$0x3f]
    %v3083 = vlaneseq
    %v3084 = vshrl.u32 %v3083, 7
    %v3085 = vsub.s32 0, %v3084
    %v3086 = vrot.slane %v3081, %v3085
    %v3087 = vlaneseq
    %v3088 = vshrl.u32 %v3087, 7
    %v3089 = vsub.s32 1, %v3088
    %v3090 = vrot.slane %v3081, %v3089
    %v3091 = vlaneseq
    %v3092 = vshrl.u32 %v3091, 7
    %v3093 = vsub.s32 2, %v3092
    %v3094 = vrot.slane %v3081, %v3093
    %v3095 = vlaneseq
    %v3096 = vshrl.u32 %v3095, 7
    %v3097 = vsub.s32 3, %v3096
    %v3098 = vrot.slane %v3081, %v3097
    %v3099 = vlaneseq
    %v3100 = vshrl.u32 %v3099, 7
    %v3101 = vsub.s32 4, %v3100
    %v3102 = vrot.slane %v3081, %v3101
    %v3103 = vlaneseq
    %v3104 = vshrl.u32 %v3103, 7
    %v3105 = vsub.s32 5, %v3104
    %v3106 = vrot.slane %v3081, %v3105
    %3113 = vmatprep.subr.mxu0 %v2890
    %3114 = vmatpush1.msra.mxu0 %v2889
    %3115 = vmatprep.subr.mxu0 %v2896
    %3116 = vmatpush1.msra.mxu0 %v2895
    %3117 = vmatprep.subr.mxu0 %v2902
    %3118 = vmatpush1.msra.mxu0 %v2901
    %3119 = vmatprep.subr.mxu0 %v2908
    %3120 = vmatpush1.msra.mxu0 %v2907
    %3121 = vmatprep.subr.mxu0 %v2914
    %3122 = vmatpush1.msra.mxu0 %v2913
    %3123 = vmatprep.subr.mxu0 %v2920
    %3124 = vmatpush1.msra.mxu0 %v2919
    %3125 = vmatprep.subr.mxu0 %v2926
    %3126 = vmatpush1.msra.mxu0 %v2925
    %3127 = vmatprep.subr.mxu0 %v2932
    %3128 = vmatpush1.msra.mxu0 %v2931
    %3129 = vmatprep.subr.mxu0 %v2938
    %3130 = vmatpush1.msra.mxu0 %v2937
    %3131 = vmatprep.subr.mxu0 %v2944
    %3132 = vmatpush1.msra.mxu0 %v2943
    %3133 = vmatprep.subr.mxu0 %v2950
    %3134 = vmatpush1.msra.mxu0 %v2949
    %3135 = vmatprep.subr.mxu0 %v2956
    %3136 = vmatpush1.msra.mxu0 %v2955
    %3137 = vmatprep.subr.mxu0 %v2962
    %3138 = vmatpush1.msra.mxu0 %v2961
    %3139 = vmatprep.subr.mxu0 %v2968
    %3140 = vmatpush1.msra.mxu0 %v2967
    %3141 = vmatprep.subr.mxu0 %v2974
    %3142 = vmatpush1.msra.mxu0 %v2973
    %3143 = vmatprep.subr.mxu0 %v2980
    %3144 = vmatpush1.msra.mxu0 %v2979
    %3145 = vmatprep.subr.mxu0 %v2986
    %3146 = vmatpush1.msra.mxu0 %v2985
    %3147 = vmatprep.subr.mxu0 %v2992
    %3148 = vmatpush1.msra.mxu0 %v2991
    %3149 = vmatprep.subr.mxu0 %v2998
    %3150 = vmatpush1.msra.mxu0 %v2997
    %3151 = vmatprep.subr.mxu0 %v3004
    %3152 = vmatpush1.msra.mxu0 %v3003
    %3153 = vmatprep.subr.mxu0 %v3010
    %3154 = vmatpush1.msra.mxu0 %v3009
    %3155 = vmatprep.subr.mxu0 %v3016
    %3156 = vmatpush1.msra.mxu0 %v3015
    %3157 = vmatprep.subr.mxu0 %v3022
    %3158 = vmatpush1.msra.mxu0 %v3021
    %3159 = vmatprep.subr.mxu0 %v3028
    %3160 = vmatpush1.msra.mxu0 %v3027
    %3161 = vmatprep.subr.mxu0 %v3034
    %3162 = vmatpush1.msra.mxu0 %v3033
    %3163 = vmatprep.subr.mxu0 %v3040
    %3164 = vmatpush1.msra.mxu0 %v3039
    %3165 = vmatprep.subr.mxu0 %v3046
    %3166 = vmatpush1.msra.mxu0 %v3045
    %3167 = vmatprep.subr.mxu0 %v3052
    %3168 = vmatpush1.msra.mxu0 %v3051
    %3169 = vmatprep.subr.mxu0 %v3058
    %3170 = vmatpush1.msra.mxu0 %v3057
    %3171 = vmatprep.subr.mxu0 %v3064
    %3172 = vmatpush1.msra.mxu0 %v3063
    %3173 = vmatprep.subr.mxu0 %v3070
    %3174 = vmatpush1.msra.mxu0 %v3069
    %3175 = vmatprep.subr.mxu0 %v3076
    %3176 = vmatpush1.msra.mxu0 %v3075
    %3177 = vmatprep.mubr.f32.mxu0 %v2874
    %3178 = vmatmul.mubr.f32.gmra.mrb[0].mxu0 %v2873
    %v3179 = vpop.f32.mrb[0].mxu0
    %v3180 = vadd.f32 %v3086, %v3179
    %v3181 = vpop.f32.mrb[0].mxu0
    %v3182 = vadd.f32 %v3090, %v3181
    %3183 = vmatprep.mubr.f32.mxu0 %v2876
    %3184 = vmatmul.mubr.f32.gmra.mrb[0].mxu0 %v2875
    %v3185 = vpop.f32.mrb[0].mxu0
    %v3186 = vadd.f32 %v3086, %v3185
    %v3187 = vpop.f32.mrb[0].mxu0
    %v3188 = vadd.f32 %v3090, %v3187
    %3189 = vmatprep.mubr.f32.mxu0 %v2878
    %3190 = vmatmul.mubr.f32.gmra.mrb[0].mxu0 %v2877
    %v3191 = vpop.f32.mrb[0].mxu0
    %v3192 = vadd.f32 %v3086, %v3191
    %v3193 = vpop.f32.mrb[0].mxu0
    %v3194 = vadd.f32 %v3090, %v3193
    %3195 = vmatprep.mubr.f32.mxu0 %v2880
    %3196 = vmatmul.mubr.f32.gmra.mrb[0].mxu0 %v2879
    %v3197 = vpop.f32.mrb[0].mxu0
    %v3198 = vadd.f32 %v3086, %v3197
    %v3199 = vpop.f32.mrb[0].mxu0
    %v3200 = vadd.f32 %v3090, %v3199
    %3201 = vmatprep.mubr.f32.mxu0 %v2882
    %3202 = vmatmul.mubr.f32.gmra.mrb[0].mxu0 %v2881
    %v3203 = vpop.f32.mrb[0].mxu0
    %v3204 = vadd.f32 %v3086, %v3203
    %v3205 = vpop.f32.mrb[0].mxu0
    %v3206 = vadd.f32 %v3090, %v3205
    %3207 = vmatprep.mubr.f32.mxu0 %v2884
    %3208 = vmatmul.mubr.f32.gmra.mrb[0].mxu0 %v2883
    %v3209 = vpop.f32.mrb[0].mxu0
    %v3210 = vadd.f32 %v3086, %v3209
    %v3211 = vpop.f32.mrb[0].mxu0
    %v3212 = vadd.f32 %v3090, %v3211
    %3213 = vmatprep.mubr.f32.mxu0 %v2886
    %3214 = vmatmul.mubr.f32.gmra.mrb[0].mxu0 %v2885
    %v3215 = vpop.f32.mrb[0].mxu0
    %v3216 = vadd.f32 %v3086, %v3215
    %v3217 = vpop.f32.mrb[0].mxu0
    %v3218 = vadd.f32 %v3090, %v3217
    %3219 = vmatprep.mubr.f32.mxu0 %v2888
    %3220 = vmatmul.mubr.f32.gmra.mrb[0].mxu0 %v2887
    %v3221 = vpop.f32.mrb[0].mxu0
    %v3222 = vadd.f32 %v3086, %v3221
    %v3223 = vpop.f32.mrb[0].mxu0
    %v3224 = vadd.f32 %v3090, %v3223
    %3225 = vdwg.mxu0
    %3226 = vmatprep.subr.mxu0 %v2892
    %3227 = vmatpush1.msra.mxu0 %v2891
    %3228 = vmatprep.subr.mxu0 %v2898
    %3229 = vmatpush1.msra.mxu0 %v2897
    %3230 = vmatprep.subr.mxu0 %v2904
    %3231 = vmatpush1.msra.mxu0 %v2903
    %3232 = vmatprep.subr.mxu0 %v2910
    %3233 = vmatpush1.msra.mxu0 %v2909
    %3234 = vmatprep.subr.mxu0 %v2916
    %3235 = vmatpush1.msra.mxu0 %v2915
    %3236 = vmatprep.subr.mxu0 %v2922
    %3237 = vmatpush1.msra.mxu0 %v2921
    %3238 = vmatprep.subr.mxu0 %v2928
    %3239 = vmatpush1.msra.mxu0 %v2927
    %3240 = vmatprep.subr.mxu0 %v2934
    %3241 = vmatpush1.msra.mxu0 %v2933
    %3242 = vmatprep.subr.mxu0 %v2940
    %3243 = vmatpush1.msra.mxu0 %v2939
    %3244 = vmatprep.subr.mxu0 %v2946
    %3245 = vmatpush1.msra.mxu0 %v2945
    %3246 = vmatprep.subr.mxu0 %v2952
    %3247 = vmatpush1.msra.mxu0 %v2951
    %3248 = vmatprep.subr.mxu0 %v2958
    %3249 = vmatpush1.msra.mxu0 %v2957
    %3250 = vmatprep.subr.mxu0 %v2964
    %3251 = vmatpush1.msra.mxu0 %v2963
    %3252 = vmatprep.subr.mxu0 %v2970
    %3253 = vmatpush1.msra.mxu0 %v2969
    %3254 = vmatprep.subr.mxu0 %v2976
    %3255 = vmatpush1.msra.mxu0 %v2975
    %3256 = vmatprep.subr.mxu0 %v2982
    %3257 = vmatpush1.msra.mxu0 %v2981
    %3258 = vmatprep.subr.mxu0 %v2988
    %3259 = vmatpush1.msra.mxu0 %v2987
    %3260 = vmatprep.subr.mxu0 %v2994
    %3261 = vmatpush1.msra.mxu0 %v2993
    %3262 = vmatprep.subr.mxu0 %v3000
    %3263 = vmatpush1.msra.mxu0 %v2999
    %3264 = vmatprep.subr.mxu0 %v3006
    %3265 = vmatpush1.msra.mxu0 %v3005
    %3266 = vmatprep.subr.mxu0 %v3012
    %3267 = vmatpush1.msra.mxu0 %v3011
    %3268 = vmatprep.subr.mxu0 %v3018
    %3269 = vmatpush1.msra.mxu0 %v3017
    %3270 = vmatprep.subr.mxu0 %v3024
    %3271 = vmatpush1.msra.mxu0 %v3023
    %3272 = vmatprep.subr.mxu0 %v3030
    %3273 = vmatpush1.msra.mxu0 %v3029
    %3274 = vmatprep.subr.mxu0 %v3036
    %3275 = vmatpush1.msra.mxu0 %v3035
    %3276 = vmatprep.subr.mxu0 %v3042
    %3277 = vmatpush1.msra.mxu0 %v3041
    %3278 = vmatprep.subr.mxu0 %v3048
    %3279 = vmatpush1.msra.mxu0 %v3047
    %3280 = vmatprep.subr.mxu0 %v3054
    %3281 = vmatpush1.msra.mxu0 %v3053
    %3282 = vmatprep.subr.mxu0 %v3060
    %3283 = vmatpush1.msra.mxu0 %v3059
    %3284 = vmatprep.subr.mxu0 %v3066
    %3285 = vmatpush1.msra.mxu0 %v3065
    %3286 = vmatprep.subr.mxu0 %v3072
    %3287 = vmatpush1.msra.mxu0 %v3071
    %3288 = vmatprep.subr.mxu0 %v3078
    %3289 = vmatpush1.msra.mxu0 %v3077
    %3290 = vmatprep.mubr.f32.mxu0 %v2874
    %3291 = vmatmul.mubr.f32.gmra.mrb[0].mxu0 %v2873
    %v3292 = vpop.f32.mrb[0].mxu0
    %v3293 = vadd.f32 %v3094, %v3292
    %v3294 = vpop.f32.mrb[0].mxu0
    %v3295 = vadd.f32 %v3098, %v3294
    %3296 = vmatprep.mubr.f32.mxu0 %v2876
    %3297 = vmatmul.mubr.f32.gmra.mrb[0].mxu0 %v2875
    %v3298 = vpop.f32.mrb[0].mxu0
    %v3299 = vadd.f32 %v3094, %v3298
    %v3300 = vpop.f32.mrb[0].mxu0
    %v3301 = vadd.f32 %v3098, %v3300
    %3302 = vmatprep.mubr.f32.mxu0 %v2878
    %3303 = vmatmul.mubr.f32.gmra.mrb[0].mxu0 %v2877
    %v3304 = vpop.f32.mrb[0].mxu0
    %v3305 = vadd.f32 %v3094, %v3304
    %v3306 = vpop.f32.mrb[0].mxu0
    %v3307 = vadd.f32 %v3098, %v3306
    %3308 = vmatprep.mubr.f32.mxu0 %v2880
    %3309 = vmatmul.mubr.f32.gmra.mrb[0].mxu0 %v2879
    %v3310 = vpop.f32.mrb[0].mxu0
    %v3311 = vadd.f32 %v3094, %v3310
    %v3312 = vpop.f32.mrb[0].mxu0
    %v3313 = vadd.f32 %v3098, %v3312
    %3314 = vmatprep.mubr.f32.mxu0 %v2882
    %3315 = vmatmul.mubr.f32.gmra.mrb[0].mxu0 %v2881
    %v3316 = vpop.f32.mrb[0].mxu0
    %v3317 = vadd.f32 %v3094, %v3316
    %v3318 = vpop.f32.mrb[0].mxu0
    %v3319 = vadd.f32 %v3098, %v3318
    %3320 = vmatprep.mubr.f32.mxu0 %v2884
    %3321 = vmatmul.mubr.f32.gmra.mrb[0].mxu0 %v2883
    %v3322 = vpop.f32.mrb[0].mxu0
    %v3323 = vadd.f32 %v3094, %v3322
    %v3324 = vpop.f32.mrb[0].mxu0
    %v3325 = vadd.f32 %v3098, %v3324
    %3326 = vmatprep.mubr.f32.mxu0 %v2886
    %3327 = vmatmul.mubr.f32.gmra.mrb[0].mxu0 %v2885
    %v3328 = vpop.f32.mrb[0].mxu0
    %v3329 = vadd.f32 %v3094, %v3328
    %v3330 = vpop.f32.mrb[0].mxu0
    %v3331 = vadd.f32 %v3098, %v3330
    %3332 = vmatprep.mubr.f32.mxu0 %v2888
    %3333 = vmatmul.mubr.f32.gmra.mrb[0].mxu0 %v2887
    %v3334 = vpop.f32.mrb[0].mxu0
    %v3335 = vadd.f32 %v3094, %v3334
    %v3336 = vpop.f32.mrb[0].mxu0
    %v3337 = vadd.f32 %v3098, %v3336
    %3338 = vdwg.mxu0
    %3339 = vmatprep.subr.mxu0 %v2894
    %3340 = vmatpush1.msra.mxu0 %v2893
    %3341 = vmatprep.subr.mxu0 %v2900
    %3342 = vmatpush1.msra.mxu0 %v2899
    %3343 = vmatprep.subr.mxu0 %v2906
    %3344 = vmatpush1.msra.mxu0 %v2905
    %3345 = vmatprep.subr.mxu0 %v2912
    %3346 = vmatpush1.msra.mxu0 %v2911
    %3347 = vmatprep.subr.mxu0 %v2918
    %3348 = vmatpush1.msra.mxu0 %v2917
    %3349 = vmatprep.subr.mxu0 %v2924
    %3350 = vmatpush1.msra.mxu0 %v2923
    %3351 = vmatprep.subr.mxu0 %v2930
    %3352 = vmatpush1.msra.mxu0 %v2929
    %3353 = vmatprep.subr.mxu0 %v2936
    %3354 = vmatpush1.msra.mxu0 %v2935
    %3355 = vmatprep.subr.mxu0 %v2942
    %3356 = vmatpush1.msra.mxu0 %v2941
    %3357 = vmatprep.subr.mxu0 %v2948
    %3358 = vmatpush1.msra.mxu0 %v2947
    %3359 = vmatprep.subr.mxu0 %v2954
    %3360 = vmatpush1.msra.mxu0 %v2953
    %3361 = vmatprep.subr.mxu0 %v2960
    %3362 = vmatpush1.msra.mxu0 %v2959
    %3363 = vmatprep.subr.mxu0 %v2966
    %3364 = vmatpush1.msra.mxu0 %v2965
    %3365 = vmatprep.subr.mxu0 %v2972
    %3366 = vmatpush1.msra.mxu0 %v2971
    %3367 = vmatprep.subr.mxu0 %v2978
    %3368 = vmatpush1.msra.mxu0 %v2977
    %3369 = vmatprep.subr.mxu0 %v2984
    %3370 = vmatpush1.msra.mxu0 %v2983
    %3371 = vmatprep.subr.mxu0 %v2990
    %3372 = vmatpush1.msra.mxu0 %v2989
    %3373 = vmatprep.subr.mxu0 %v2996
    %3374 = vmatpush1.msra.mxu0 %v2995
    %3375 = vmatprep.subr.mxu0 %v3002
    %3376 = vmatpush1.msra.mxu0 %v3001
    %3377 = vmatprep.subr.mxu0 %v3008
    %3378 = vmatpush1.msra.mxu0 %v3007
    %3379 = vmatprep.subr.mxu0 %v3014
    %3380 = vmatpush1.msra.mxu0 %v3013
    %3381 = vmatprep.subr.mxu0 %v3020
    %3382 = vmatpush1.msra.mxu0 %v3019
    %3383 = vmatprep.subr.mxu0 %v3026
    %3384 = vmatpush1.msra.mxu0 %v3025
    %3385 = vmatprep.subr.mxu0 %v3032
    %3386 = vmatpush1.msra.mxu0 %v3031
    %3387 = vmatprep.subr.mxu0 %v3038
    %3388 = vmatpush1.msra.mxu0 %v3037
    %3389 = vmatprep.subr.mxu0 %v3044
    %3390 = vmatpush1.msra.mxu0 %v3043
    %3391 = vmatprep.subr.mxu0 %v3050
    %3392 = vmatpush1.msra.mxu0 %v3049
    %3393 = vmatprep.subr.mxu0 %v3056
    %3394 = vmatpush1.msra.mxu0 %v3055
    %3395 = vmatprep.subr.mxu0 %v3062
    %3396 = vmatpush1.msra.mxu0 %v3061
    %3397 = vmatprep.subr.mxu0 %v3068
    %3398 = vmatpush1.msra.mxu0 %v3067
    %3399 = vmatprep.subr.mxu0 %v3074
    %3400 = vmatpush1.msra.mxu0 %v3073
    %3401 = vmatprep.subr.mxu0 %v3080
    %3402 = vmatpush1.msra.mxu0 %v3079
    %3403 = vmatprep.mubr.f32.mxu0 %v2874
    %3404 = vmatmul.mubr.f32.gmra.mrb[0].mxu0 %v2873
    %v3405 = vpop.f32.mrb[0].mxu0
    %v3406 = vadd.f32 %v3102, %v3405
    %v3407 = vpop.f32.mrb[0].mxu0
    %v3408 = vadd.f32 %v3106, %v3407
    %3409 = vmatprep.mubr.f32.mxu0 %v2876
    %3410 = vmatmul.mubr.f32.gmra.mrb[0].mxu0 %v2875
    %v3411 = vpop.f32.mrb[0].mxu0
    %v3412 = vadd.f32 %v3102, %v3411
    %v3413 = vpop.f32.mrb[0].mxu0
    %v3414 = vadd.f32 %v3106, %v3413
    %3415 = vmatprep.mubr.f32.mxu0 %v2878
    %3416 = vmatmul.mubr.f32.gmra.mrb[0].mxu0 %v2877
    %v3417 = vpop.f32.mrb[0].mxu0
    %v3418 = vadd.f32 %v3102, %v3417
    %v3419 = vpop.f32.mrb[0].mxu0
    %v3420 = vadd.f32 %v3106, %v3419
    %3421 = vmatprep.mubr.f32.mxu0 %v2880
    %3422 = vmatmul.mubr.f32.gmra.mrb[0].mxu0 %v2879
    %v3423 = vpop.f32.mrb[0].mxu0
    %v3424 = vadd.f32 %v3102, %v3423
    %v3425 = vpop.f32.mrb[0].mxu0
    %v3426 = vadd.f32 %v3106, %v3425
    %3427 = vmatprep.mubr.f32.mxu0 %v2882
    %3428 = vmatmul.mubr.f32.gmra.mrb[0].mxu0 %v2881
    %v3429 = vpop.f32.mrb[0].mxu0
    %v3430 = vadd.f32 %v3102, %v3429
    %v3431 = vpop.f32.mrb[0].mxu0
    %v3432 = vadd.f32 %v3106, %v3431
    %3433 = vmatprep.mubr.f32.mxu0 %v2884
    %3434 = vmatmul.mubr.f32.gmra.mrb[0].mxu0 %v2883
    %v3435 = vpop.f32.mrb[0].mxu0
    %v3436 = vadd.f32 %v3102, %v3435
    %v3437 = vpop.f32.mrb[0].mxu0
    %v3438 = vadd.f32 %v3106, %v3437
    %3439 = vmatprep.mubr.f32.mxu0 %v2886
    %3440 = vmatmul.mubr.f32.gmra.mrb[0].mxu0 %v2885
    %v3441 = vpop.f32.mrb[0].mxu0
    %v3442 = vadd.f32 %v3102, %v3441
    %v3443 = vpop.f32.mrb[0].mxu0
    %v3444 = vadd.f32 %v3106, %v3443
    %3445 = vmatprep.mubr.f32.mxu0 %v2888
    %3446 = vmatmul.mubr.f32.gmra.mrb[0].mxu0 %v2887
    %v3447 = vpop.f32.mrb[0].mxu0
    %v3448 = vadd.f32 %v3102, %v3447
    %v3449 = vpop.f32.mrb[0].mxu0
    %v3450 = vadd.f32 %v3106, %v3449
    %3451 = vdwg.mxu0
    %3452 = vst [vmem:[#allocation2] sm:$0xff] %v3180
    %3453 = vst [vmem:[#allocation2 + $0x8] sm:$0xff] %v3182
    %3454 = vst [vmem:[#allocation2 + $0x10] sm:$0xff] %v3293
    %3455 = vst [vmem:[#allocation2 + $0x18] sm:$0xff] %v3295
    %3456 = vst [vmem:[#allocation2 + $0x20] sm:$0xff] %v3406
    %3457 = vst [vmem:[#allocation2 + $0x28] sm:$0xff] %v3408
    %3458 = vst [vmem:[#allocation2 + $0x30] sm:$0xff] %v3186
    %3459 = vst [vmem:[#allocation2 + $0x38] sm:$0xff] %v3188
    %3460 = vst [vmem:[#allocation2 + $0x40] sm:$0xff] %v3299
    %3461 = vst [vmem:[#allocation2 + $0x48] sm:$0xff] %v3301
    %3462 = vst [vmem:[#allocation2 + $0x50] sm:$0xff] %v3412
    %3463 = vst [vmem:[#allocation2 + $0x58] sm:$0xff] %v3414
    %3464 = vst [vmem:[#allocation2 + $0x60] sm:$0xff] %v3192
    %3465 = vst [vmem:[#allocation2 + $0x68] sm:$0xff] %v3194
    %3466 = vst [vmem:[#allocation2 + $0x70] sm:$0xff] %v3305
    %3467 = vst [vmem:[#allocation2 + $0x78] sm:$0xff] %v3307
    %3468 = vst [vmem:[#allocation2 + $0x80] sm:$0xff] %v3418
    %3469 = vst [vmem:[#allocation2 + $0x88] sm:$0xff] %v3420
    %3470 = vst [vmem:[#allocation2 + $0x90] sm:$0xff] %v3198
    %3471 = vst [vmem:[#allocation2 + $0x98] sm:$0xff] %v3200
    %3472 = vst [vmem:[#allocation2 + $0xa0] sm:$0xff] %v3311
    %3473 = vst [vmem:[#allocation2 + $0xa8] sm:$0xff] %v3313
    %3474 = vst [vmem:[#allocation2 + $0xb0] sm:$0xff] %v3424
    %3475 = vst [vmem:[#allocation2 + $0xb8] sm:$0xff] %v3426
    %3476 = vst [vmem:[#allocation2 + $0xc0] sm:$0xff] %v3204
    %3477 = vst [vmem:[#allocation2 + $0xc8] sm:$0xff] %v3206
    %3478 = vst [vmem:[#allocation2 + $0xd0] sm:$0xff] %v3317
    %3479 = vst [vmem:[#allocation2 + $0xd8] sm:$0xff] %v3319
    %3480 = vst [vmem:[#allocation2 + $0xe0] sm:$0xff] %v3430
    %3481 = vst [vmem:[#allocation2 + $0xe8] sm:$0xff] %v3432
    %3482 = vst [vmem:[#allocation2 + $0xf0] sm:$0xff] %v3210
    %3483 = vst [vmem:[#allocation2 + $0xf8] sm:$0xff] %v3212
    %3484 = vst [vmem:[#allocation2 + $0x100] sm:$0xff] %v3323
    %3485 = vst [vmem:[#allocation2 + $0x108] sm:$0xff] %v3325
    %3486 = vst [vmem:[#allocation2 + $0x110] sm:$0xff] %v3436
    %3487 = vst [vmem:[#allocation2 + $0x118] sm:$0xff] %v3438
    %3488 = vst [vmem:[#allocation2 + $0x120] sm:$0xff] %v3216
    %3489 = vst [vmem:[#allocation2 + $0x128] sm:$0xff] %v3218
    %3490 = vst [vmem:[#allocation2 + $0x130] sm:$0xff] %v3329
    %3491 = vst [vmem:[#allocation2 + $0x138] sm:$0xff] %v3331
    %3492 = vst [vmem:[#allocation2 + $0x140] sm:$0xff] %v3442
    %3493 = vst [vmem:[#allocation2 + $0x148] sm:$0xff] %v3444
    %3494 = vst [vmem:[#allocation2 + $0x150] sm:$0xff] %v3222
    %3495 = vst [vmem:[#allocation2 + $0x158] sm:$0xff] %v3224
    %3496 = vst [vmem:[#allocation2 + $0x160] sm:$0xff] %v3335
    %3497 = vst [vmem:[#allocation2 + $0x168] sm:$0xff] %v3337
    %3498 = vst [vmem:[#allocation2 + $0x170] sm:$0xff] %v3448
    %3499 = vst [vmem:[#allocation2 + $0x178] sm:$0xff] %v3450
    %v3500 = vld [vmem:[#allocation11] sm:$0xff]
    %v3501 = vld [vmem:[#allocation11 + $0x8] sm:$0xff]
    %v3502 = vld [vmem:[#allocation11 + $0x10] sm:$0xff]
    %v3503 = vld [vmem:[#allocation11 + $0x18] sm:$0xff]
    %v3504 = vld [vmem:[#allocation11 + $0x20] sm:$0xff]
    %v3505 = vld [vmem:[#allocation11 + $0x28] sm:$0xff]
    %v3506 = vld [vmem:[#allocation11 + $0x30] sm:$0xff]
    %v3507 = vld [vmem:[#allocation11 + $0x38] sm:$0xff]
    %v3508 = vld [vmem:[#allocation11 + $0x40] sm:$0xff]
    %v3509 = vld [vmem:[#allocation11 + $0x48] sm:$0xff]
    %v3510 = vld [vmem:[#allocation11 + $0x50] sm:$0xff]
    %v3511 = vld [vmem:[#allocation11 + $0x58] sm:$0xff]
    %v3512 = vld [vmem:[#allocation11 + $0x60] sm:$0xff]
    %v3513 = vld [vmem:[#allocation11 + $0x68] sm:$0xff]
    %v3514 = vld [vmem:[#allocation11 + $0x70] sm:$0xff]
    %v3515 = vld [vmem:[#allocation11 + $0x78] sm:$0xff]
    %v3516 = vld [vmem:[#allocation11 + $0x80] sm:$0xff]
    %v3517 = vld [vmem:[#allocation11 + $0x88] sm:$0xff]
    %v3518 = vld [vmem:[#allocation11 + $0x90] sm:$0xff]
    %v3519 = vld [vmem:[#allocation11 + $0x98] sm:$0xff]
    %v3520 = vld [vmem:[#allocation11 + $0xa0] sm:$0xff]
    %v3521 = vld [vmem:[#allocation11 + $0xa8] sm:$0xff]
    %v3522 = vld [vmem:[#allocation11 + $0xb0] sm:$0xff]
    %v3523 = vld [vmem:[#allocation11 + $0xb8] sm:$0xff]
    %v3524 = vld [vmem:[#allocation11 + $0xc0] sm:$0xff]
    %v3525 = vld [vmem:[#allocation11 + $0xc8] sm:$0xff]
    %v3526 = vld [vmem:[#allocation11 + $0xd0] sm:$0xff]
    %v3527 = vld [vmem:[#allocation11 + $0xd8] sm:$0xff]
    %v3528 = vld [vmem:[#allocation11 + $0xe0] sm:$0xff]
    %v3529 = vld [vmem:[#allocation11 + $0xe8] sm:$0xff]
    %v3530 = vld [vmem:[#allocation11 + $0xf0] sm:$0xff]
    %v3531 = vld [vmem:[#allocation11 + $0xf8] sm:$0xff]
    %v3532 = vld [vmem:[#allocation11 + $0x100] sm:$0xff]
    %v3533 = vld [vmem:[#allocation11 + $0x108] sm:$0xff]
    %v3534 = vld [vmem:[#allocation11 + $0x110] sm:$0xff]
    %v3535 = vld [vmem:[#allocation11 + $0x118] sm:$0xff]
    %v3536 = vld [vmem:[#allocation11 + $0x120] sm:$0xff]
    %v3537 = vld [vmem:[#allocation11 + $0x128] sm:$0xff]
    %v3538 = vld [vmem:[#allocation11 + $0x130] sm:$0xff]
    %v3539 = vld [vmem:[#allocation11 + $0x138] sm:$0xff]
    %v3540 = vld [vmem:[#allocation11 + $0x140] sm:$0xff]
    %v3541 = vld [vmem:[#allocation11 + $0x148] sm:$0xff]
    %v3542 = vld [vmem:[#allocation11 + $0x150] sm:$0xff]
    %v3543 = vld [vmem:[#allocation11 + $0x158] sm:$0xff]
    %v3544 = vld [vmem:[#allocation11 + $0x160] sm:$0xff]
    %v3545 = vld [vmem:[#allocation11 + $0x168] sm:$0xff]
    %v3546 = vld [vmem:[#allocation11 + $0x170] sm:$0xff]
    %v3547 = vld [vmem:[#allocation11 + $0x178] sm:$0xff]
    %v3548 = vld [vmem:[#allocation11 + $0x180] sm:$0xff]
    %v3549 = vld [vmem:[#allocation11 + $0x188] sm:$0xff]
    %v3550 = vld [vmem:[#allocation11 + $0x190] sm:$0xff]
    %v3551 = vld [vmem:[#allocation11 + $0x198] sm:$0xff]
    %v3552 = vld [vmem:[#allocation11 + $0x1a0] sm:$0xff]
    %v3553 = vld [vmem:[#allocation11 + $0x1a8] sm:$0xff]
    %v3554 = vld [vmem:[#allocation11 + $0x1b0] sm:$0xff]
    %v3555 = vld [vmem:[#allocation11 + $0x1b8] sm:$0xff]
    %v3556 = vld [vmem:[#allocation11 + $0x1c0] sm:$0xff]
    %v3557 = vld [vmem:[#allocation11 + $0x1c8] sm:$0xff]
    %v3558 = vld [vmem:[#allocation11 + $0x1d0] sm:$0xff]
    %v3559 = vld [vmem:[#allocation11 + $0x1d8] sm:$0xff]
    %v3560 = vld [vmem:[#allocation11 + $0x1e0] sm:$0xff]
    %v3561 = vld [vmem:[#allocation11 + $0x1e8] sm:$0xff]
    %v3562 = vld [vmem:[#allocation11 + $0x1f0] sm:$0xff]
    %v3563 = vld [vmem:[#allocation11 + $0x1f8] sm:$0xff]
    %v3564 = vld [vmem:[#allocation11 + $0x200] sm:$0xff]
    %v3565 = vld [vmem:[#allocation11 + $0x208] sm:$0xff]
    %v3566 = vld [vmem:[#allocation11 + $0x210] sm:$0xff]
    %v3567 = vld [vmem:[#allocation11 + $0x218] sm:$0xff]
    %v3568 = vld [vmem:[#allocation11 + $0x220] sm:$0xff]
    %v3569 = vld [vmem:[#allocation11 + $0x228] sm:$0xff]
    %v3570 = vld [vmem:[#allocation11 + $0x230] sm:$0xff]
    %v3571 = vld [vmem:[#allocation11 + $0x238] sm:$0xff]
    %v3572 = vld [vmem:[#allocation11 + $0x240] sm:$0xff]
    %v3573 = vld [vmem:[#allocation11 + $0x248] sm:$0xff]
    %v3574 = vld [vmem:[#allocation11 + $0x250] sm:$0xff]
    %v3575 = vld [vmem:[#allocation11 + $0x258] sm:$0xff]
    %v3576 = vld [vmem:[#allocation11 + $0x260] sm:$0xff]
    %v3577 = vld [vmem:[#allocation11 + $0x268] sm:$0xff]
    %v3578 = vld [vmem:[#allocation11 + $0x270] sm:$0xff]
    %v3579 = vld [vmem:[#allocation11 + $0x278] sm:$0xff]
    %v3580 = vld [vmem:[#allocation11 + $0x280] sm:$0xff]
    %v3581 = vld [vmem:[#allocation11 + $0x288] sm:$0xff]
    %v3582 = vld [vmem:[#allocation11 + $0x290] sm:$0xff]
    %v3583 = vld [vmem:[#allocation11 + $0x298] sm:$0xff]
    %v3584 = vld [vmem:[#allocation11 + $0x2a0] sm:$0xff]
    %v3585 = vld [vmem:[#allocation11 + $0x2a8] sm:$0xff]
    %v3586 = vld [vmem:[#allocation11 + $0x2b0] sm:$0xff]
    %v3587 = vld [vmem:[#allocation11 + $0x2b8] sm:$0xff]
    %v3588 = vld [vmem:[#allocation11 + $0x2c0] sm:$0xff]
    %v3589 = vld [vmem:[#allocation11 + $0x2c8] sm:$0xff]
    %v3590 = vld [vmem:[#allocation11 + $0x2d0] sm:$0xff]
    %v3591 = vld [vmem:[#allocation11 + $0x2d8] sm:$0xff]
    %v3592 = vld [vmem:[#allocation11 + $0x2e0] sm:$0xff]
    %v3593 = vld [vmem:[#allocation11 + $0x2e8] sm:$0xff]
    %v3594 = vld [vmem:[#allocation11 + $0x2f0] sm:$0xff]
    %v3595 = vld [vmem:[#allocation11 + $0x2f8] sm:$0xff]
    %v3596 = vld [vmem:[#allocation11 + $0x300] sm:$0xff]
    %v3597 = vld [vmem:[#allocation11 + $0x308] sm:$0xff]
    %v3598 = vld [vmem:[#allocation11 + $0x310] sm:$0xff]
    %v3599 = vld [vmem:[#allocation11 + $0x318] sm:$0xff]
    %v3600 = vld [vmem:[#allocation11 + $0x320] sm:$0xff]
    %v3601 = vld [vmem:[#allocation11 + $0x328] sm:$0xff]
    %v3602 = vld [vmem:[#allocation11 + $0x330] sm:$0xff]
    %v3603 = vld [vmem:[#allocation11 + $0x338] sm:$0xff]
    %v3604 = vld [vmem:[#allocation11 + $0x340] sm:$0xff]
    %v3605 = vld [vmem:[#allocation11 + $0x348] sm:$0xff]
    %v3606 = vld [vmem:[#allocation11 + $0x350] sm:$0xff]
    %v3607 = vld [vmem:[#allocation11 + $0x358] sm:$0xff]
    %v3608 = vld [vmem:[#allocation11 + $0x360] sm:$0xff]
    %v3609 = vld [vmem:[#allocation11 + $0x368] sm:$0xff]
    %v3610 = vld [vmem:[#allocation11 + $0x370] sm:$0xff]
    %v3611 = vld [vmem:[#allocation11 + $0x378] sm:$0xff]
    %v3612 = vld [vmem:[#allocation11 + $0x380] sm:$0xff]
    %v3613 = vld [vmem:[#allocation11 + $0x388] sm:$0xff]
    %v3614 = vld [vmem:[#allocation11 + $0x390] sm:$0xff]
    %v3615 = vld [vmem:[#allocation11 + $0x398] sm:$0xff]
    %v3616 = vld [vmem:[#allocation11 + $0x3a0] sm:$0xff]
    %v3617 = vld [vmem:[#allocation11 + $0x3a8] sm:$0xff]
    %v3618 = vld [vmem:[#allocation11 + $0x3b0] sm:$0xff]
    %v3619 = vld [vmem:[#allocation11 + $0x3b8] sm:$0xff]
    %v3620 = vld [vmem:[#allocation11 + $0x3c0] sm:$0xff]
    %v3621 = vld [vmem:[#allocation11 + $0x3c8] sm:$0xff]
    %v3622 = vld [vmem:[#allocation11 + $0x3d0] sm:$0xff]
    %v3623 = vld [vmem:[#allocation11 + $0x3d8] sm:$0xff]
    %v3624 = vld [vmem:[#allocation11 + $0x3e0] sm:$0xff]
    %v3625 = vld [vmem:[#allocation11 + $0x3e8] sm:$0xff]
    %v3626 = vld [vmem:[#allocation11 + $0x3f0] sm:$0xff]
    %v3627 = vld [vmem:[#allocation11 + $0x3f8] sm:$0xff]
    %v3628 = vld [vmem:[#allocation11 + $0x400] sm:$0xff]
    %v3629 = vld [vmem:[#allocation11 + $0x408] sm:$0xff]
    %v3630 = vld [vmem:[#allocation11 + $0x410] sm:$0xff]
    %v3631 = vld [vmem:[#allocation11 + $0x418] sm:$0xff]
    %v3632 = vld [vmem:[#allocation11 + $0x420] sm:$0xff]
    %v3633 = vld [vmem:[#allocation11 + $0x428] sm:$0xff]
    %v3634 = vld [vmem:[#allocation11 + $0x430] sm:$0xff]
    %v3635 = vld [vmem:[#allocation11 + $0x438] sm:$0xff]
    %v3636 = vld [vmem:[#allocation11 + $0x440] sm:$0xff]
    %v3637 = vld [vmem:[#allocation11 + $0x448] sm:$0xff]
    %v3638 = vld [vmem:[#allocation11 + $0x450] sm:$0xff]
    %v3639 = vld [vmem:[#allocation11 + $0x458] sm:$0xff]
    %v3640 = vld [vmem:[#allocation11 + $0x460] sm:$0xff]
    %v3641 = vld [vmem:[#allocation11 + $0x468] sm:$0xff]
    %v3642 = vld [vmem:[#allocation11 + $0x470] sm:$0xff]
    %v3643 = vld [vmem:[#allocation11 + $0x478] sm:$0xff]
    %v3644 = vld [vmem:[#allocation11 + $0x480] sm:$0xff]
    %v3645 = vld [vmem:[#allocation11 + $0x488] sm:$0xff]
    %v3646 = vld [vmem:[#allocation11 + $0x490] sm:$0xff]
    %v3647 = vld [vmem:[#allocation11 + $0x498] sm:$0xff]
    %v3648 = vld [vmem:[#allocation11 + $0x4a0] sm:$0xff]
    %v3649 = vld [vmem:[#allocation11 + $0x4a8] sm:$0xff]
    %v3650 = vld [vmem:[#allocation11 + $0x4b0] sm:$0xff]
    %v3651 = vld [vmem:[#allocation11 + $0x4b8] sm:$0xff]
    %v3652 = vld [vmem:[#allocation11 + $0x4c0] sm:$0xff]
    %v3653 = vld [vmem:[#allocation11 + $0x4c8] sm:$0xff]
    %v3654 = vld [vmem:[#allocation11 + $0x4d0] sm:$0xff]
    %v3655 = vld [vmem:[#allocation11 + $0x4d8] sm:$0xff]
    %v3656 = vld [vmem:[#allocation11 + $0x4e0] sm:$0xff]
    %v3657 = vld [vmem:[#allocation11 + $0x4e8] sm:$0xff]
    %v3658 = vld [vmem:[#allocation11 + $0x4f0] sm:$0xff]
    %v3659 = vld [vmem:[#allocation11 + $0x4f8] sm:$0xff]
    %v3660 = vld [vmem:[#allocation11 + $0x500] sm:$0xff]
    %v3661 = vld [vmem:[#allocation11 + $0x508] sm:$0xff]
    %v3662 = vld [vmem:[#allocation11 + $0x510] sm:$0xff]
    %v3663 = vld [vmem:[#allocation11 + $0x518] sm:$0xff]
    %v3664 = vld [vmem:[#allocation11 + $0x520] sm:$0xff]
    %v3665 = vld [vmem:[#allocation11 + $0x528] sm:$0xff]
    %v3666 = vld [vmem:[#allocation11 + $0x530] sm:$0xff]
    %v3667 = vld [vmem:[#allocation11 + $0x538] sm:$0xff]
    %v3668 = vld [vmem:[#allocation11 + $0x540] sm:$0xff]
    %v3669 = vld [vmem:[#allocation11 + $0x548] sm:$0xff]
    %v3670 = vld [vmem:[#allocation11 + $0x550] sm:$0xff]
    %v3671 = vld [vmem:[#allocation11 + $0x558] sm:$0xff]
    %v3672 = vld [vmem:[#allocation11 + $0x560] sm:$0xff]
    %v3673 = vld [vmem:[#allocation11 + $0x568] sm:$0xff]
    %v3674 = vld [vmem:[#allocation11 + $0x570] sm:$0xff]
    %v3675 = vld [vmem:[#allocation11 + $0x578] sm:$0xff]
    %v3676 = vld [vmem:[#allocation11 + $0x580] sm:$0xff]
    %v3677 = vld [vmem:[#allocation11 + $0x588] sm:$0xff]
    %v3678 = vld [vmem:[#allocation11 + $0x590] sm:$0xff]
    %v3679 = vld [vmem:[#allocation11 + $0x598] sm:$0xff]
    %v3680 = vld [vmem:[#allocation11 + $0x5a0] sm:$0xff]
    %v3681 = vld [vmem:[#allocation11 + $0x5a8] sm:$0xff]
    %v3682 = vld [vmem:[#allocation11 + $0x5b0] sm:$0xff]
    %v3683 = vld [vmem:[#allocation11 + $0x5b8] sm:$0xff]
    %v3684 = vld [vmem:[#allocation11 + $0x5c0] sm:$0xff]
    %v3685 = vld [vmem:[#allocation11 + $0x5c8] sm:$0xff]
    %v3686 = vld [vmem:[#allocation11 + $0x5d0] sm:$0xff]
    %v3687 = vld [vmem:[#allocation11 + $0x5d8] sm:$0xff]
    %v3688 = vld [vmem:[#allocation11 + $0x5e0] sm:$0xff]
    %v3689 = vld [vmem:[#allocation11 + $0x5e8] sm:$0xff]
    %v3690 = vld [vmem:[#allocation11 + $0x5f0] sm:$0xff]
    %v3691 = vld [vmem:[#allocation11 + $0x5f8] sm:$0xff]
    %v3692 = vld [vmem:[%s9] sm:$0xff]
    %v3693 = vld [vmem:[%s9 + $0x8] sm:$0xff]
    %s3694 = scalar_lea.vmem [#allocation5], 16
    %v3695 = vld [vmem:[%s3694] sm:$0xff]
    %v3696 = vld [vmem:[%s3694 + $0x8] sm:$0xff]
    %3697 = vmatprep.subr.mxu0 %v3501
    %3698 = vmatpush1.msra.mxu0 %v3500
    %3699 = vmatprep.subr.mxu0 %v3507
    %3700 = vmatpush1.msra.mxu0 %v3506
    %3701 = vmatprep.subr.mxu0 %v3513
    %3702 = vmatpush1.msra.mxu0 %v3512
    %3703 = vmatprep.subr.mxu0 %v3519
    %3704 = vmatpush1.msra.mxu0 %v3518
    %3705 = vmatprep.subr.mxu0 %v3525
    %3706 = vmatpush1.msra.mxu0 %v3524
    %3707 = vmatprep.subr.mxu0 %v3531
    %3708 = vmatpush1.msra.mxu0 %v3530
    %3709 = vmatprep.subr.mxu0 %v3537
    %3710 = vmatpush1.msra.mxu0 %v3536
    %3711 = vmatprep.subr.mxu0 %v3543
    %3712 = vmatpush1.msra.mxu0 %v3542
    %3713 = vmatprep.subr.mxu0 %v3549
    %3714 = vmatpush1.msra.mxu0 %v3548
    %3715 = vmatprep.subr.mxu0 %v3555
    %3716 = vmatpush1.msra.mxu0 %v3554
    %3717 = vmatprep.subr.mxu0 %v3561
    %3718 = vmatpush1.msra.mxu0 %v3560
    %3719 = vmatprep.subr.mxu0 %v3567
    %3720 = vmatpush1.msra.mxu0 %v3566
    %3721 = vmatprep.subr.mxu0 %v3573
    %3722 = vmatpush1.msra.mxu0 %v3572
    %3723 = vmatprep.subr.mxu0 %v3579
    %3724 = vmatpush1.msra.mxu0 %v3578
    %3725 = vmatprep.subr.mxu0 %v3585
    %3726 = vmatpush1.msra.mxu0 %v3584
    %3727 = vmatprep.subr.mxu0 %v3591
    %3728 = vmatpush1.msra.mxu0 %v3590
    %3729 = vmatprep.subr.mxu0 %v3597
    %3730 = vmatpush1.msra.mxu0 %v3596
    %3731 = vmatprep.subr.mxu0 %v3603
    %3732 = vmatpush1.msra.mxu0 %v3602
    %3733 = vmatprep.subr.mxu0 %v3609
    %3734 = vmatpush1.msra.mxu0 %v3608
    %3735 = vmatprep.subr.mxu0 %v3615
    %3736 = vmatpush1.msra.mxu0 %v3614
    %3737 = vmatprep.subr.mxu0 %v3621
    %3738 = vmatpush1.msra.mxu0 %v3620
    %3739 = vmatprep.subr.mxu0 %v3627
    %3740 = vmatpush1.msra.mxu0 %v3626
    %3741 = vmatprep.subr.mxu0 %v3633
    %3742 = vmatpush1.msra.mxu0 %v3632
    %3743 = vmatprep.subr.mxu0 %v3639
    %3744 = vmatpush1.msra.mxu0 %v3638
    %3745 = vmatprep.subr.mxu0 %v3645
    %3746 = vmatpush1.msra.mxu0 %v3644
    %3747 = vmatprep.subr.mxu0 %v3651
    %3748 = vmatpush1.msra.mxu0 %v3650
    %3749 = vmatprep.subr.mxu0 %v3657
    %3750 = vmatpush1.msra.mxu0 %v3656
    %3751 = vmatprep.subr.mxu0 %v3663
    %3752 = vmatpush1.msra.mxu0 %v3662
    %3753 = vmatprep.subr.mxu0 %v3669
    %3754 = vmatpush1.msra.mxu0 %v3668
    %3755 = vmatprep.subr.mxu0 %v3675
    %3756 = vmatpush1.msra.mxu0 %v3674
    %3757 = vmatprep.subr.mxu0 %v3681
    %3758 = vmatpush1.msra.mxu0 %v3680
    %3759 = vmatprep.subr.mxu0 %v3687
    %3760 = vmatpush1.msra.mxu0 %v3686
    %3761 = vmatprep.mubr.f32.mxu0 %v3696
    %3762 = vmatmul.mubr.f32.gmra.mrb[0].mxu0 %v3695
    %v3763 = vpop.f32.mrb[0].mxu0
    %v3764 = vadd.f32 0.0, %v3763
    %v3765 = vpop.f32.mrb[0].mxu0
    %v3766 = vadd.f32 0.0, %v3765
    %3767 = vdwg.mxu0
    %3768 = vmatprep.subr.mxu0 %v3503
    %3769 = vmatpush1.msra.mxu0 %v3502
    %3770 = vmatprep.subr.mxu0 %v3509
    %3771 = vmatpush1.msra.mxu0 %v3508
    %3772 = vmatprep.subr.mxu0 %v3515
    %3773 = vmatpush1.msra.mxu0 %v3514
    %3774 = vmatprep.subr.mxu0 %v3521
    %3775 = vmatpush1.msra.mxu0 %v3520
    %3776 = vmatprep.subr.mxu0 %v3527
    %3777 = vmatpush1.msra.mxu0 %v3526
    %3778 = vmatprep.subr.mxu0 %v3533
    %3779 = vmatpush1.msra.mxu0 %v3532
    %3780 = vmatprep.subr.mxu0 %v3539
    %3781 = vmatpush1.msra.mxu0 %v3538
    %3782 = vmatprep.subr.mxu0 %v3545
    %3783 = vmatpush1.msra.mxu0 %v3544
    %3784 = vmatprep.subr.mxu0 %v3551
    %3785 = vmatpush1.msra.mxu0 %v3550
    %3786 = vmatprep.subr.mxu0 %v3557
    %3787 = vmatpush1.msra.mxu0 %v3556
    %3788 = vmatprep.subr.mxu0 %v3563
    %3789 = vmatpush1.msra.mxu0 %v3562
    %3790 = vmatprep.subr.mxu0 %v3569
    %3791 = vmatpush1.msra.mxu0 %v3568
    %3792 = vmatprep.subr.mxu0 %v3575
    %3793 = vmatpush1.msra.mxu0 %v3574
    %3794 = vmatprep.subr.mxu0 %v3581
    %3795 = vmatpush1.msra.mxu0 %v3580
    %3796 = vmatprep.subr.mxu0 %v3587
    %3797 = vmatpush1.msra.mxu0 %v3586
    %3798 = vmatprep.subr.mxu0 %v3593
    %3799 = vmatpush1.msra.mxu0 %v3592
    %3800 = vmatprep.subr.mxu0 %v3599
    %3801 = vmatpush1.msra.mxu0 %v3598
    %3802 = vmatprep.subr.mxu0 %v3605
    %3803 = vmatpush1.msra.mxu0 %v3604
    %3804 = vmatprep.subr.mxu0 %v3611
    %3805 = vmatpush1.msra.mxu0 %v3610
    %3806 = vmatprep.subr.mxu0 %v3617
    %3807 = vmatpush1.msra.mxu0 %v3616
    %3808 = vmatprep.subr.mxu0 %v3623
    %3809 = vmatpush1.msra.mxu0 %v3622
    %3810 = vmatprep.subr.mxu0 %v3629
    %3811 = vmatpush1.msra.mxu0 %v3628
    %3812 = vmatprep.subr.mxu0 %v3635
    %3813 = vmatpush1.msra.mxu0 %v3634
    %3814 = vmatprep.subr.mxu0 %v3641
    %3815 = vmatpush1.msra.mxu0 %v3640
    %3816 = vmatprep.subr.mxu0 %v3647
    %3817 = vmatpush1.msra.mxu0 %v3646
    %3818 = vmatprep.subr.mxu0 %v3653
    %3819 = vmatpush1.msra.mxu0 %v3652
    %3820 = vmatprep.subr.mxu0 %v3659
    %3821 = vmatpush1.msra.mxu0 %v3658
    %3822 = vmatprep.subr.mxu0 %v3665
    %3823 = vmatpush1.msra.mxu0 %v3664
    %3824 = vmatprep.subr.mxu0 %v3671
    %3825 = vmatpush1.msra.mxu0 %v3670
    %3826 = vmatprep.subr.mxu0 %v3677
    %3827 = vmatpush1.msra.mxu0 %v3676
    %3828 = vmatprep.subr.mxu0 %v3683
    %3829 = vmatpush1.msra.mxu0 %v3682
    %3830 = vmatprep.subr.mxu0 %v3689
    %3831 = vmatpush1.msra.mxu0 %v3688
    %3832 = vmatprep.mubr.f32.mxu0 %v3696
    %3833 = vmatmul.mubr.f32.gmra.mrb[0].mxu0 %v3695
    %v3834 = vpop.f32.mrb[0].mxu0
    %v3835 = vadd.f32 0.0, %v3834
    %v3836 = vpop.f32.mrb[0].mxu0
    %v3837 = vadd.f32 0.0, %v3836
    %3838 = vdwg.mxu0
    %3839 = vmatprep.subr.mxu0 %v3505
    %3840 = vmatpush1.msra.mxu0 %v3504
    %3841 = vmatprep.subr.mxu0 %v3511
    %3842 = vmatpush1.msra.mxu0 %v3510
    %3843 = vmatprep.subr.mxu0 %v3517
    %3844 = vmatpush1.msra.mxu0 %v3516
    %3845 = vmatprep.subr.mxu0 %v3523
    %3846 = vmatpush1.msra.mxu0 %v3522
    %3847 = vmatprep.subr.mxu0 %v3529
    %3848 = vmatpush1.msra.mxu0 %v3528
    %3849 = vmatprep.subr.mxu0 %v3535
    %3850 = vmatpush1.msra.mxu0 %v3534
    %3851 = vmatprep.subr.mxu0 %v3541
    %3852 = vmatpush1.msra.mxu0 %v3540
    %3853 = vmatprep.subr.mxu0 %v3547
    %3854 = vmatpush1.msra.mxu0 %v3546
    %3855 = vmatprep.subr.mxu0 %v3553
    %3856 = vmatpush1.msra.mxu0 %v3552
    %3857 = vmatprep.subr.mxu0 %v3559
    %3858 = vmatpush1.msra.mxu0 %v3558
    %3859 = vmatprep.subr.mxu0 %v3565
    %3860 = vmatpush1.msra.mxu0 %v3564
    %3861 = vmatprep.subr.mxu0 %v3571
    %3862 = vmatpush1.msra.mxu0 %v3570
    %3863 = vmatprep.subr.mxu0 %v3577
    %3864 = vmatpush1.msra.mxu0 %v3576
    %3865 = vmatprep.subr.mxu0 %v3583
    %3866 = vmatpush1.msra.mxu0 %v3582
    %3867 = vmatprep.subr.mxu0 %v3589
    %3868 = vmatpush1.msra.mxu0 %v3588
    %3869 = vmatprep.subr.mxu0 %v3595
    %3870 = vmatpush1.msra.mxu0 %v3594
    %3871 = vmatprep.subr.mxu0 %v3601
    %3872 = vmatpush1.msra.mxu0 %v3600
    %3873 = vmatprep.subr.mxu0 %v3607
    %3874 = vmatpush1.msra.mxu0 %v3606
    %3875 = vmatprep.subr.mxu0 %v3613
    %3876 = vmatpush1.msra.mxu0 %v3612
    %3877 = vmatprep.subr.mxu0 %v3619
    %3878 = vmatpush1.msra.mxu0 %v3618
    %3879 = vmatprep.subr.mxu0 %v3625
    %3880 = vmatpush1.msra.mxu0 %v3624
    %3881 = vmatprep.subr.mxu0 %v3631
    %3882 = vmatpush1.msra.mxu0 %v3630
    %3883 = vmatprep.subr.mxu0 %v3637
    %3884 = vmatpush1.msra.mxu0 %v3636
    %3885 = vmatprep.subr.mxu0 %v3643
    %3886 = vmatpush1.msra.mxu0 %v3642
    %3887 = vmatprep.subr.mxu0 %v3649
    %3888 = vmatpush1.msra.mxu0 %v3648
    %3889 = vmatprep.subr.mxu0 %v3655
    %3890 = vmatpush1.msra.mxu0 %v3654
    %3891 = vmatprep.subr.mxu0 %v3661
    %3892 = vmatpush1.msra.mxu0 %v3660
    %3893 = vmatprep.subr.mxu0 %v3667
    %3894 = vmatpush1.msra.mxu0 %v3666
    %3895 = vmatprep.subr.mxu0 %v3673
    %3896 = vmatpush1.msra.mxu0 %v3672
    %3897 = vmatprep.subr.mxu0 %v3679
    %3898 = vmatpush1.msra.mxu0 %v3678
    %3899 = vmatprep.subr.mxu0 %v3685
    %3900 = vmatpush1.msra.mxu0 %v3684
    %3901 = vmatprep.subr.mxu0 %v3691
    %3902 = vmatpush1.msra.mxu0 %v3690
    %3903 = vmatprep.mubr.f32.mxu0 %v3696
    %3904 = vmatmul.mubr.f32.gmra.mrb[0].mxu0 %v3695
    %v3905 = vpop.f32.mrb[0].mxu0
    %v3906 = vadd.f32 0.0, %v3905
    %v3907 = vpop.f32.mrb[0].mxu0
    %v3908 = vadd.f32 0.0, %v3907
    %3909 = vdwg.mxu0
    %v3910 = vld [vmem:[#allocation2] sm:$0xff]
    %v3911 = vld [vmem:[#allocation2 + $0x8] sm:$0xff]
    %v3912 = vld [vmem:[#allocation2 + $0x10] sm:$0xff]
    %v3913 = vld [vmem:[#allocation2 + $0x168] sm:$0xff]
    %v3914 = vld [vmem:[#allocation2 + $0x170] sm:$0xff]
    %v3915 = vld [vmem:[#allocation2 + $0x178] sm:$0xff]
    %v3916 = vadd.f32 %v3910, %v3764
    %v3917 = vxor.u32 %v3916, 2147483648
    %v3918 = vmul.f32 %v3917, 1.442695
    %v3919 = vpow.pop %v3918
    %v3920 = vadd.f32 %v3919, 1.0
    %v3921 = vrcp.pop %v3920
    %v3922 = vmul.f32 1.0, %v3921
    %v3923 = vadd.f32 %v3911, %v3766
    %v3924 = vxor.u32 %v3923, 2147483648
    %v3925 = vmul.f32 %v3924, 1.442695
    %v3926 = vpow.pop %v3925
    %v3927 = vadd.f32 %v3926, 1.0
    %v3928 = vrcp.pop %v3927
    %v3929 = vmul.f32 1.0, %v3928
    %v3930 = vadd.f32 %v3835, %v3692
    %v3931 = vmul.f32 %v3922, %v3930
    %v3932 = vadd.f32 %v3912, %v3931
    %v3933 = vtanh.pop %v3932
    %v3934 = vsub.f32 %v3695, %v3933
    %v3935 = vmul.f32 %v3929, %v3934
    %v3936 = vadd.f32 %v3933, %v3935
    %v3937 = vadd.f32 %v3913, %v3837
    %v3938 = vxor.u32 %v3937, 2147483648
    %v3939 = vmul.f32 %v3938, 1.442695
    %v3940 = vpow.pop %v3939
    %v3941 = vadd.f32 %v3940, 1.0
    %v3942 = vrcp.pop %v3941
    %v3943 = vmul.f32 1.0, %v3942
    %v3944 = vadd.f32 %v3914, %v3906
    %v3945 = vxor.u32 %v3944, 2147483648
    %v3946 = vmul.f32 %v3945, 1.442695
    %v3947 = vpow.pop %v3946
    %v3948 = vadd.f32 %v3947, 1.0
    %v3949 = vrcp.pop %v3948
    %v3950 = vmul.f32 1.0, %v3949
    %v3951 = vadd.f32 %v3908, %v3693
    %v3952 = vmul.f32 %v3943, %v3951
    %v3953 = vadd.f32 %v3915, %v3952
    %v3954 = vtanh.pop %v3953
    %v3955 = vsub.f32 %v3696, %v3954
    %v3956 = vmul.f32 %v3950, %v3955
    %v3957 = vadd.f32 %v3954, %v3956
    %3958 = vst [vmem:[#allocation4] sm:$0xff] %v3936
    %3959 = vst [vmem:[#allocation4 + $0x78] sm:$0xff] %v3957
    %3960 = vmatprep.subr.mxu0 %v3501
    %3961 = vmatpush1.msra.mxu0 %v3500
    %3962 = vmatprep.subr.mxu0 %v3507
    %3963 = vmatpush1.msra.mxu0 %v3506
    %3964 = vmatprep.subr.mxu0 %v3513
    %3965 = vmatpush1.msra.mxu0 %v3512
    %3966 = vmatprep.subr.mxu0 %v3519
    %3967 = vmatpush1.msra.mxu0 %v3518
    %3968 = vmatprep.subr.mxu0 %v3525
    %3969 = vmatpush1.msra.mxu0 %v3524
    %3970 = vmatprep.subr.mxu0 %v3531
    %3971 = vmatpush1.msra.mxu0 %v3530
    %3972 = vmatprep.subr.mxu0 %v3537
    %3973 = vmatpush1.msra.mxu0 %v3536
    %3974 = vmatprep.subr.mxu0 %v3543
    %3975 = vmatpush1.msra.mxu0 %v3542
    %3976 = vmatprep.subr.mxu0 %v3549
    %3977 = vmatpush1.msra.mxu0 %v3548
    %3978 = vmatprep.subr.mxu0 %v3555
    %3979 = vmatpush1.msra.mxu0 %v3554
    %3980 = vmatprep.subr.mxu0 %v3561
    %3981 = vmatpush1.msra.mxu0 %v3560
    %3982 = vmatprep.subr.mxu0 %v3567
    %3983 = vmatpush1.msra.mxu0 %v3566
    %3984 = vmatprep.subr.mxu0 %v3573
    %3985 = vmatpush1.msra.mxu0 %v3572
    %3986 = vmatprep.subr.mxu0 %v3579
    %3987 = vmatpush1.msra.mxu0 %v3578
    %3988 = vmatprep.subr.mxu0 %v3585
    %3989 = vmatpush1.msra.mxu0 %v3584
    %3990 = vmatprep.subr.mxu0 %v3591
    %3991 = vmatpush1.msra.mxu0 %v3590
    %3992 = vmatprep.subr.mxu0 %v3597
    %3993 = vmatpush1.msra.mxu0 %v3596
    %3994 = vmatprep.subr.mxu0 %v3603
    %3995 = vmatpush1.msra.mxu0 %v3602
    %3996 = vmatprep.subr.mxu0 %v3609
    %3997 = vmatpush1.msra.mxu0 %v3608
    %3998 = vmatprep.subr.mxu0 %v3615
    %3999 = vmatpush1.msra.mxu0 %v3614
    %4000 = vmatprep.subr.mxu0 %v3621
    %4001 = vmatpush1.msra.mxu0 %v3620
    %4002 = vmatprep.subr.mxu0 %v3627
    %4003 = vmatpush1.msra.mxu0 %v3626
    %4004 = vmatprep.subr.mxu0 %v3633
    %4005 = vmatpush1.msra.mxu0 %v3632
    %4006 = vmatprep.subr.mxu0 %v3639
    %4007 = vmatpush1.msra.mxu0 %v3638
    %4008 = vmatprep.subr.mxu0 %v3645
    %4009 = vmatpush1.msra.mxu0 %v3644
    %4010 = vmatprep.subr.mxu0 %v3651
    %4011 = vmatpush1.msra.mxu0 %v3650
    %4012 = vmatprep.subr.mxu0 %v3657
    %4013 = vmatpush1.msra.mxu0 %v3656
    %4014 = vmatprep.subr.mxu0 %v3663
    %4015 = vmatpush1.msra.mxu0 %v3662
    %4016 = vmatprep.subr.mxu0 %v3669
    %4017 = vmatpush1.msra.mxu0 %v3668
    %4018 = vmatprep.subr.mxu0 %v3675
    %4019 = vmatpush1.msra.mxu0 %v3674
    %4020 = vmatprep.subr.mxu0 %v3681
    %4021 = vmatpush1.msra.mxu0 %v3680
    %4022 = vmatprep.subr.mxu0 %v3687
    %4023 = vmatpush1.msra.mxu0 %v3686
    %4024 = vmatprep.mubr.f32.mxu0 %v3957
    %4025 = vmatmul.mubr.f32.gmra.mrb[0].mxu0 %v3936
    %v4026 = vpop.f32.mrb[0].mxu0
    %v4027 = vadd.f32 0.0, %v4026
    %v4028 = vpop.f32.mrb[0].mxu0
    %v4029 = vadd.f32 0.0, %v4028
    %4030 = vdwg.mxu0
    %4031 = vmatprep.subr.mxu0 %v3503
    %4032 = vmatpush1.msra.mxu0 %v3502
    %4033 = vmatprep.subr.mxu0 %v3509
    %4034 = vmatpush1.msra.mxu0 %v3508
    %4035 = vmatprep.subr.mxu0 %v3515
    %4036 = vmatpush1.msra.mxu0 %v3514
    %4037 = vmatprep.subr.mxu0 %v3521
    %4038 = vmatpush1.msra.mxu0 %v3520
    %4039 = vmatprep.subr.mxu0 %v3527
    %4040 = vmatpush1.msra.mxu0 %v3526
    %4041 = vmatprep.subr.mxu0 %v3533
    %4042 = vmatpush1.msra.mxu0 %v3532
    %4043 = vmatprep.subr.mxu0 %v3539
    %4044 = vmatpush1.msra.mxu0 %v3538
    %4045 = vmatprep.subr.mxu0 %v3545
    %4046 = vmatpush1.msra.mxu0 %v3544
    %4047 = vmatprep.subr.mxu0 %v3551
    %4048 = vmatpush1.msra.mxu0 %v3550
    %4049 = vmatprep.subr.mxu0 %v3557
    %4050 = vmatpush1.msra.mxu0 %v3556
    %4051 = vmatprep.subr.mxu0 %v3563
    %4052 = vmatpush1.msra.mxu0 %v3562
    %4053 = vmatprep.subr.mxu0 %v3569
    %4054 = vmatpush1.msra.mxu0 %v3568
    %4055 = vmatprep.subr.mxu0 %v3575
    %4056 = vmatpush1.msra.mxu0 %v3574
    %4057 = vmatprep.subr.mxu0 %v3581
    %4058 = vmatpush1.msra.mxu0 %v3580
    %4059 = vmatprep.subr.mxu0 %v3587
    %4060 = vmatpush1.msra.mxu0 %v3586
    %4061 = vmatprep.subr.mxu0 %v3593
    %4062 = vmatpush1.msra.mxu0 %v3592
    %4063 = vmatprep.subr.mxu0 %v3599
    %4064 = vmatpush1.msra.mxu0 %v3598
    %4065 = vmatprep.subr.mxu0 %v3605
    %4066 = vmatpush1.msra.mxu0 %v3604
    %4067 = vmatprep.subr.mxu0 %v3611
    %4068 = vmatpush1.msra.mxu0 %v3610
    %4069 = vmatprep.subr.mxu0 %v3617
    %4070 = vmatpush1.msra.mxu0 %v3616
    %4071 = vmatprep.subr.mxu0 %v3623
    %4072 = vmatpush1.msra.mxu0 %v3622
    %4073 = vmatprep.subr.mxu0 %v3629
    %4074 = vmatpush1.msra.mxu0 %v3628
    %4075 = vmatprep.subr.mxu0 %v3635
    %4076 = vmatpush1.msra.mxu0 %v3634
    %4077 = vmatprep.subr.mxu0 %v3641
    %4078 = vmatpush1.msra.mxu0 %v3640
    %4079 = vmatprep.subr.mxu0 %v3647
    %4080 = vmatpush1.msra.mxu0 %v3646
    %4081 = vmatprep.subr.mxu0 %v3653
    %4082 = vmatpush1.msra.mxu0 %v3652
    %4083 = vmatprep.subr.mxu0 %v3659
    %4084 = vmatpush1.msra.mxu0 %v3658
    %4085 = vmatprep.subr.mxu0 %v3665
    %4086 = vmatpush1.msra.mxu0 %v3664
    %4087 = vmatprep.subr.mxu0 %v3671
    %4088 = vmatpush1.msra.mxu0 %v3670
    %4089 = vmatprep.subr.mxu0 %v3677
    %4090 = vmatpush1.msra.mxu0 %v3676
    %4091 = vmatprep.subr.mxu0 %v3683
    %4092 = vmatpush1.msra.mxu0 %v3682
    %4093 = vmatprep.subr.mxu0 %v3689
    %4094 = vmatpush1.msra.mxu0 %v3688
    %4095 = vmatprep.mubr.f32.mxu0 %v3957
    %4096 = vmatmul.mubr.f32.gmra.mrb[0].mxu0 %v3936
    %v4097 = vpop.f32.mrb[0].mxu0
    %v4098 = vadd.f32 0.0, %v4097
    %v4099 = vpop.f32.mrb[0].mxu0
    %v4100 = vadd.f32 0.0, %v4099
    %4101 = vdwg.mxu0
    %4102 = vmatprep.subr.mxu0 %v3505
    %4103 = vmatpush1.msra.mxu0 %v3504
    %4104 = vmatprep.subr.mxu0 %v3511
    %4105 = vmatpush1.msra.mxu0 %v3510
    %4106 = vmatprep.subr.mxu0 %v3517
    %4107 = vmatpush1.msra.mxu0 %v3516
    %4108 = vmatprep.subr.mxu0 %v3523
    %4109 = vmatpush1.msra.mxu0 %v3522
    %4110 = vmatprep.subr.mxu0 %v3529
    %4111 = vmatpush1.msra.mxu0 %v3528
    %4112 = vmatprep.subr.mxu0 %v3535
    %4113 = vmatpush1.msra.mxu0 %v3534
    %4114 = vmatprep.subr.mxu0 %v3541
    %4115 = vmatpush1.msra.mxu0 %v3540
    %4116 = vmatprep.subr.mxu0 %v3547
    %4117 = vmatpush1.msra.mxu0 %v3546
    %4118 = vmatprep.subr.mxu0 %v3553
    %4119 = vmatpush1.msra.mxu0 %v3552
    %4120 = vmatprep.subr.mxu0 %v3559
    %4121 = vmatpush1.msra.mxu0 %v3558
    %4122 = vmatprep.subr.mxu0 %v3565
    %4123 = vmatpush1.msra.mxu0 %v3564
    %4124 = vmatprep.subr.mxu0 %v3571
    %4125 = vmatpush1.msra.mxu0 %v3570
    %4126 = vmatprep.subr.mxu0 %v3577
    %4127 = vmatpush1.msra.mxu0 %v3576
    %4128 = vmatprep.subr.mxu0 %v3583
    %4129 = vmatpush1.msra.mxu0 %v3582
    %4130 = vmatprep.subr.mxu0 %v3589
    %4131 = vmatpush1.msra.mxu0 %v3588
    %4132 = vmatprep.subr.mxu0 %v3595
    %4133 = vmatpush1.msra.mxu0 %v3594
    %4134 = vmatprep.subr.mxu0 %v3601
    %4135 = vmatpush1.msra.mxu0 %v3600
    %4136 = vmatprep.subr.mxu0 %v3607
    %4137 = vmatpush1.msra.mxu0 %v3606
    %4138 = vmatprep.subr.mxu0 %v3613
    %4139 = vmatpush1.msra.mxu0 %v3612
    %4140 = vmatprep.subr.mxu0 %v3619
    %4141 = vmatpush1.msra.mxu0 %v3618
    %4142 = vmatprep.subr.mxu0 %v3625
    %4143 = vmatpush1.msra.mxu0 %v3624
    %4144 = vmatprep.subr.mxu0 %v3631
    %4145 = vmatpush1.msra.mxu0 %v3630
    %4146 = vmatprep.subr.mxu0 %v3637
    %4147 = vmatpush1.msra.mxu0 %v3636
    %4148 = vmatprep.subr.mxu0 %v3643
    %4149 = vmatpush1.msra.mxu0 %v3642
    %4150 = vmatprep.subr.mxu0 %v3649
    %4151 = vmatpush1.msra.mxu0 %v3648
    %4152 = vmatprep.subr.mxu0 %v3655
    %4153 = vmatpush1.msra.mxu0 %v3654
    %4154 = vmatprep.subr.mxu0 %v3661
    %4155 = vmatpush1.msra.mxu0 %v3660
    %4156 = vmatprep.subr.mxu0 %v3667
    %4157 = vmatpush1.msra.mxu0 %v3666
    %4158 = vmatprep.subr.mxu0 %v3673
    %4159 = vmatpush1.msra.mxu0 %v3672
    %4160 = vmatprep.subr.mxu0 %v3679
    %4161 = vmatpush1.msra.mxu0 %v3678
    %4162 = vmatprep.subr.mxu0 %v3685
    %4163 = vmatpush1.msra.mxu0 %v3684
    %4164 = vmatprep.subr.mxu0 %v3691
    %4165 = vmatpush1.msra.mxu0 %v3690
    %4166 = vmatprep.mubr.f32.mxu0 %v3957
    %4167 = vmatmul.mubr.f32.gmra.mrb[0].mxu0 %v3936
    %v4168 = vpop.f32.mrb[0].mxu0
    %v4169 = vadd.f32 0.0, %v4168
    %v4170 = vpop.f32.mrb[0].mxu0
    %v4171 = vadd.f32 0.0, %v4170
    %4172 = vdwg.mxu0
    %v4173 = vld [vmem:[#allocation2 + $0x30] sm:$0xff]
    %v4174 = vld [vmem:[#allocation2 + $0x38] sm:$0xff]
    %v4175 = vld [vmem:[#allocation2 + $0x40] sm:$0xff]
    %v4176 = vld [vmem:[#allocation2 + $0x138] sm:$0xff]
    %v4177 = vld [vmem:[#allocation2 + $0x140] sm:$0xff]
    %v4178 = vld [vmem:[#allocation2 + $0x148] sm:$0xff]
    %v4179 = vadd.f32 %v4173, %v4027
    %v4180 = vxor.u32 %v4179, 2147483648
    %v4181 = vmul.f32 %v4180, 1.442695
    %v4182 = vpow.pop %v4181
    %v4183 = vadd.f32 %v4182, 1.0
    %v4184 = vrcp.pop %v4183
    %v4185 = vmul.f32 1.0, %v4184
    %v4186 = vadd.f32 %v4174, %v4029
    %v4187 = vxor.u32 %v4186, 2147483648
    %v4188 = vmul.f32 %v4187, 1.442695
    %v4189 = vpow.pop %v4188
    %v4190 = vadd.f32 %v4189, 1.0
    %v4191 = vrcp.pop %v4190
    %v4192 = vmul.f32 1.0, %v4191
    %v4193 = vadd.f32 %v4098, %v3692
    %v4194 = vmul.f32 %v4185, %v4193
    %v4195 = vadd.f32 %v4175, %v4194
    %v4196 = vtanh.pop %v4195
    %v4197 = vsub.f32 %v3936, %v4196
    %v4198 = vmul.f32 %v4192, %v4197
    %v4199 = vadd.f32 %v4196, %v4198
    %v4200 = vadd.f32 %v4176, %v4100
    %v4201 = vxor.u32 %v4200, 2147483648
    %v4202 = vmul.f32 %v4201, 1.442695
    %v4203 = vpow.pop %v4202
    %v4204 = vadd.f32 %v4203, 1.0
    %v4205 = vrcp.pop %v4204
    %v4206 = vmul.f32 1.0, %v4205
    %v4207 = vadd.f32 %v4177, %v4169
    %v4208 = vxor.u32 %v4207, 2147483648
    %v4209 = vmul.f32 %v4208, 1.442695
    %v4210 = vpow.pop %v4209
    %v4211 = vadd.f32 %v4210, 1.0
    %v4212 = vrcp.pop %v4211
    %v4213 = vmul.f32 1.0, %v4212
    %v4214 = vadd.f32 %v4171, %v3693
    %v4215 = vmul.f32 %v4206, %v4214
    %v4216 = vadd.f32 %v4178, %v4215
    %v4217 = vtanh.pop %v4216
    %v4218 = vsub.f32 %v3957, %v4217
    %v4219 = vmul.f32 %v4213, %v4218
    %v4220 = vadd.f32 %v4217, %v4219
    %4221 = vst [vmem:[#allocation4 + $0x10] sm:$0xff] %v4199
    %4222 = vst [vmem:[#allocation4 + $0x68] sm:$0xff] %v4220
    %4223 = vmatprep.subr.mxu0 %v3501
    %4224 = vmatpush1.msra.mxu0 %v3500
    %4225 = vmatprep.subr.mxu0 %v3507
    %4226 = vmatpush1.msra.mxu0 %v3506
    %4227 = vmatprep.subr.mxu0 %v3513
    %4228 = vmatpush1.msra.mxu0 %v3512
    %4229 = vmatprep.subr.mxu0 %v3519
    %4230 = vmatpush1.msra.mxu0 %v3518
    %4231 = vmatprep.subr.mxu0 %v3525
    %4232 = vmatpush1.msra.mxu0 %v3524
    %4233 = vmatprep.subr.mxu0 %v3531
    %4234 = vmatpush1.msra.mxu0 %v3530
    %4235 = vmatprep.subr.mxu0 %v3537
    %4236 = vmatpush1.msra.mxu0 %v3536
    %4237 = vmatprep.subr.mxu0 %v3543
    %4238 = vmatpush1.msra.mxu0 %v3542
    %4239 = vmatprep.subr.mxu0 %v3549
    %4240 = vmatpush1.msra.mxu0 %v3548
    %4241 = vmatprep.subr.mxu0 %v3555
    %4242 = vmatpush1.msra.mxu0 %v3554
    %4243 = vmatprep.subr.mxu0 %v3561
    %4244 = vmatpush1.msra.mxu0 %v3560
    %4245 = vmatprep.subr.mxu0 %v3567
    %4246 = vmatpush1.msra.mxu0 %v3566
    %4247 = vmatprep.subr.mxu0 %v3573
    %4248 = vmatpush1.msra.mxu0 %v3572
    %4249 = vmatprep.subr.mxu0 %v3579
    %4250 = vmatpush1.msra.mxu0 %v3578
    %4251 = vmatprep.subr.mxu0 %v3585
    %4252 = vmatpush1.msra.mxu0 %v3584
    %4253 = vmatprep.subr.mxu0 %v3591
    %4254 = vmatpush1.msra.mxu0 %v3590
    %4255 = vmatprep.subr.mxu0 %v3597
    %4256 = vmatpush1.msra.mxu0 %v3596
    %4257 = vmatprep.subr.mxu0 %v3603
    %4258 = vmatpush1.msra.mxu0 %v3602
    %4259 = vmatprep.subr.mxu0 %v3609
    %4260 = vmatpush1.msra.mxu0 %v3608
    %4261 = vmatprep.subr.mxu0 %v3615
    %4262 = vmatpush1.msra.mxu0 %v3614
    %4263 = vmatprep.subr.mxu0 %v3621
    %4264 = vmatpush1.msra.mxu0 %v3620
    %4265 = vmatprep.subr.mxu0 %v3627
    %4266 = vmatpush1.msra.mxu0 %v3626
    %4267 = vmatprep.subr.mxu0 %v3633
    %4268 = vmatpush1.msra.mxu0 %v3632
    %4269 = vmatprep.subr.mxu0 %v3639
    %4270 = vmatpush1.msra.mxu0 %v3638
    %4271 = vmatprep.subr.mxu0 %v3645
    %4272 = vmatpush1.msra.mxu0 %v3644
    %4273 = vmatprep.subr.mxu0 %v3651
    %4274 = vmatpush1.msra.mxu0 %v3650
    %4275 = vmatprep.subr.mxu0 %v3657
    %4276 = vmatpush1.msra.mxu0 %v3656
    %4277 = vmatprep.subr.mxu0 %v3663
    %4278 = vmatpush1.msra.mxu0 %v3662
    %4279 = vmatprep.subr.mxu0 %v3669
    %4280 = vmatpush1.msra.mxu0 %v3668
    %4281 = vmatprep.subr.mxu0 %v3675
    %4282 = vmatpush1.msra.mxu0 %v3674
    %4283 = vmatprep.subr.mxu0 %v3681
    %4284 = vmatpush1.msra.mxu0 %v3680
    %4285 = vmatprep.subr.mxu0 %v3687
    %4286 = vmatpush1.msra.mxu0 %v3686
    %4287 = vmatprep.mubr.f32.mxu0 %v4220
    %4288 = vmatmul.mubr.f32.gmra.mrb[0].mxu0 %v4199
    %v4289 = vpop.f32.mrb[0].mxu0
    %v4290 = vadd.f32 0.0, %v4289
    %v4291 = vpop.f32.mrb[0].mxu0
    %v4292 = vadd.f32 0.0, %v4291
    %4293 = vdwg.mxu0
    %4294 = vmatprep.subr.mxu0 %v3503
    %4295 = vmatpush1.msra.mxu0 %v3502
    %4296 = vmatprep.subr.mxu0 %v3509
    %4297 = vmatpush1.msra.mxu0 %v3508
    %4298 = vmatprep.subr.mxu0 %v3515
    %4299 = vmatpush1.msra.mxu0 %v3514
    %4300 = vmatprep.subr.mxu0 %v3521
    %4301 = vmatpush1.msra.mxu0 %v3520
    %4302 = vmatprep.subr.mxu0 %v3527
    %4303 = vmatpush1.msra.mxu0 %v3526
    %4304 = vmatprep.subr.mxu0 %v3533
    %4305 = vmatpush1.msra.mxu0 %v3532
    %4306 = vmatprep.subr.mxu0 %v3539
    %4307 = vmatpush1.msra.mxu0 %v3538
    %4308 = vmatprep.subr.mxu0 %v3545
    %4309 = vmatpush1.msra.mxu0 %v3544
    %4310 = vmatprep.subr.mxu0 %v3551
    %4311 = vmatpush1.msra.mxu0 %v3550
    %4312 = vmatprep.subr.mxu0 %v3557
    %4313 = vmatpush1.msra.mxu0 %v3556
    %4314 = vmatprep.subr.mxu0 %v3563
    %4315 = vmatpush1.msra.mxu0 %v3562
    %4316 = vmatprep.subr.mxu0 %v3569
    %4317 = vmatpush1.msra.mxu0 %v3568
    %4318 = vmatprep.subr.mxu0 %v3575
    %4319 = vmatpush1.msra.mxu0 %v3574
    %4320 = vmatprep.subr.mxu0 %v3581
    %4321 = vmatpush1.msra.mxu0 %v3580
    %4322 = vmatprep.subr.mxu0 %v3587
    %4323 = vmatpush1.msra.mxu0 %v3586
    %4324 = vmatprep.subr.mxu0 %v3593
    %4325 = vmatpush1.msra.mxu0 %v3592
    %4326 = vmatprep.subr.mxu0 %v3599
    %4327 = vmatpush1.msra.mxu0 %v3598
    %4328 = vmatprep.subr.mxu0 %v3605
    %4329 = vmatpush1.msra.mxu0 %v3604
    %4330 = vmatprep.subr.mxu0 %v3611
    %4331 = vmatpush1.msra.mxu0 %v3610
    %4332 = vmatprep.subr.mxu0 %v3617
    %4333 = vmatpush1.msra.mxu0 %v3616
    %4334 = vmatprep.subr.mxu0 %v3623
    %4335 = vmatpush1.msra.mxu0 %v3622
    %4336 = vmatprep.subr.mxu0 %v3629
    %4337 = vmatpush1.msra.mxu0 %v3628
    %4338 = vmatprep.subr.mxu0 %v3635
    %4339 = vmatpush1.msra.mxu0 %v3634
    %4340 = vmatprep.subr.mxu0 %v3641
    %4341 = vmatpush1.msra.mxu0 %v3640
    %4342 = vmatprep.subr.mxu0 %v3647
    %4343 = vmatpush1.msra.mxu0 %v3646
    %4344 = vmatprep.subr.mxu0 %v3653
    %4345 = vmatpush1.msra.mxu0 %v3652
    %4346 = vmatprep.subr.mxu0 %v3659
    %4347 = vmatpush1.msra.mxu0 %v3658
    %4348 = vmatprep.subr.mxu0 %v3665
    %4349 = vmatpush1.msra.mxu0 %v3664
    %4350 = vmatprep.subr.mxu0 %v3671
    %4351 = vmatpush1.msra.mxu0 %v3670
    %4352 = vmatprep.subr.mxu0 %v3677
    %4353 = vmatpush1.msra.mxu0 %v3676
    %4354 = vmatprep.subr.mxu0 %v3683
    %4355 = vmatpush1.msra.mxu0 %v3682
    %4356 = vmatprep.subr.mxu0 %v3689
    %4357 = vmatpush1.msra.mxu0 %v3688
    %4358 = vmatprep.mubr.f32.mxu0 %v4220
    %4359 = vmatmul.mubr.f32.gmra.mrb[0].mxu0 %v4199
    %v4360 = vpop.f32.mrb[0].mxu0
    %v4361 = vadd.f32 0.0, %v4360
    %v4362 = vpop.f32.mrb[0].mxu0
    %v4363 = vadd.f32 0.0, %v4362
    %4364 = vdwg.mxu0
    %4365 = vmatprep.subr.mxu0 %v3505
    %4366 = vmatpush1.msra.mxu0 %v3504
    %4367 = vmatprep.subr.mxu0 %v3511
    %4368 = vmatpush1.msra.mxu0 %v3510
    %4369 = vmatprep.subr.mxu0 %v3517
    %4370 = vmatpush1.msra.mxu0 %v3516
    %4371 = vmatprep.subr.mxu0 %v3523
    %4372 = vmatpush1.msra.mxu0 %v3522
    %4373 = vmatprep.subr.mxu0 %v3529
    %4374 = vmatpush1.msra.mxu0 %v3528
    %4375 = vmatprep.subr.mxu0 %v3535
    %4376 = vmatpush1.msra.mxu0 %v3534
    %4377 = vmatprep.subr.mxu0 %v3541
    %4378 = vmatpush1.msra.mxu0 %v3540
    %4379 = vmatprep.subr.mxu0 %v3547
    %4380 = vmatpush1.msra.mxu0 %v3546
    %4381 = vmatprep.subr.mxu0 %v3553
    %4382 = vmatpush1.msra.mxu0 %v3552
    %4383 = vmatprep.subr.mxu0 %v3559
    %4384 = vmatpush1.msra.mxu0 %v3558
    %4385 = vmatprep.subr.mxu0 %v3565
    %4386 = vmatpush1.msra.mxu0 %v3564
    %4387 = vmatprep.subr.mxu0 %v3571
    %4388 = vmatpush1.msra.mxu0 %v3570
    %4389 = vmatprep.subr.mxu0 %v3577
    %4390 = vmatpush1.msra.mxu0 %v3576
    %4391 = vmatprep.subr.mxu0 %v3583
    %4392 = vmatpush1.msra.mxu0 %v3582
    %4393 = vmatprep.subr.mxu0 %v3589
    %4394 = vmatpush1.msra.mxu0 %v3588
    %4395 = vmatprep.subr.mxu0 %v3595
    %4396 = vmatpush1.msra.mxu0 %v3594
    %4397 = vmatprep.subr.mxu0 %v3601
    %4398 = vmatpush1.msra.mxu0 %v3600
    %4399 = vmatprep.subr.mxu0 %v3607
    %4400 = vmatpush1.msra.mxu0 %v3606
    %4401 = vmatprep.subr.mxu0 %v3613
    %4402 = vmatpush1.msra.mxu0 %v3612
    %4403 = vmatprep.subr.mxu0 %v3619
    %4404 = vmatpush1.msra.mxu0 %v3618
    %4405 = vmatprep.subr.mxu0 %v3625
    %4406 = vmatpush1.msra.mxu0 %v3624
    %4407 = vmatprep.subr.mxu0 %v3631
    %4408 = vmatpush1.msra.mxu0 %v3630
    %4409 = vmatprep.subr.mxu0 %v3637
    %4410 = vmatpush1.msra.mxu0 %v3636
    %4411 = vmatprep.subr.mxu0 %v3643
    %4412 = vmatpush1.msra.mxu0 %v3642
    %4413 = vmatprep.subr.mxu0 %v3649
    %4414 = vmatpush1.msra.mxu0 %v3648
    %4415 = vmatprep.subr.mxu0 %v3655
    %4416 = vmatpush1.msra.mxu0 %v3654
    %4417 = vmatprep.subr.mxu0 %v3661
    %4418 = vmatpush1.msra.mxu0 %v3660
    %4419 = vmatprep.subr.mxu0 %v3667
    %4420 = vmatpush1.msra.mxu0 %v3666
    %4421 = vmatprep.subr.mxu0 %v3673
    %4422 = vmatpush1.msra.mxu0 %v3672
    %4423 = vmatprep.subr.mxu0 %v3679
    %4424 = vmatpush1.msra.mxu0 %v3678
    %4425 = vmatprep.subr.mxu0 %v3685
    %4426 = vmatpush1.msra.mxu0 %v3684
    %4427 = vmatprep.subr.mxu0 %v3691
    %4428 = vmatpush1.msra.mxu0 %v3690
    %4429 = vmatprep.mubr.f32.mxu0 %v4220
    %4430 = vmatmul.mubr.f32.gmra.mrb[0].mxu0 %v4199
    %v4431 = vpop.f32.mrb[0].mxu0
    %v4432 = vadd.f32 0.0, %v4431
    %v4433 = vpop.f32.mrb[0].mxu0
    %v4434 = vadd.f32 0.0, %v4433
    %4435 = vdwg.mxu0
    %v4436 = vld [vmem:[#allocation2 + $0x60] sm:$0xff]
    %v4437 = vld [vmem:[#allocation2 + $0x68] sm:$0xff]
    %v4438 = vld [vmem:[#allocation2 + $0x70] sm:$0xff]
    %v4439 = vld [vmem:[#allocation2 + $0x108] sm:$0xff]
    %v4440 = vld [vmem:[#allocation2 + $0x110] sm:$0xff]
    %v4441 = vld [vmem:[#allocation2 + $0x118] sm:$0xff]
    %v4442 = vadd.f32 %v4436, %v4290
    %v4443 = vxor.u32 %v4442, 2147483648
    %v4444 = vmul.f32 %v4443, 1.442695
    %v4445 = vpow.pop %v4444
    %v4446 = vadd.f32 %v4445, 1.0
    %v4447 = vrcp.pop %v4446
    %v4448 = vmul.f32 1.0, %v4447
    %v4449 = vadd.f32 %v4437, %v4292
    %v4450 = vxor.u32 %v4449, 2147483648
    %v4451 = vmul.f32 %v4450, 1.442695
    %v4452 = vpow.pop %v4451
    %v4453 = vadd.f32 %v4452, 1.0
    %v4454 = vrcp.pop %v4453
    %v4455 = vmul.f32 1.0, %v4454
    %v4456 = vadd.f32 %v4361, %v3692
    %v4457 = vmul.f32 %v4448, %v4456
    %v4458 = vadd.f32 %v4438, %v4457
    %v4459 = vtanh.pop %v4458
    %v4460 = vsub.f32 %v4199, %v4459
    %v4461 = vmul.f32 %v4455, %v4460
    %v4462 = vadd.f32 %v4459, %v4461
    %v4463 = vadd.f32 %v4439, %v4363
    %v4464 = vxor.u32 %v4463, 2147483648
    %v4465 = vmul.f32 %v4464, 1.442695
    %v4466 = vpow.pop %v4465
    %v4467 = vadd.f32 %v4466, 1.0
    %v4468 = vrcp.pop %v4467
    %v4469 = vmul.f32 1.0, %v4468
    %v4470 = vadd.f32 %v4440, %v4432
    %v4471 = vxor.u32 %v4470, 2147483648
    %v4472 = vmul.f32 %v4471, 1.442695
    %v4473 = vpow.pop %v4472
    %v4474 = vadd.f32 %v4473, 1.0
    %v4475 = vrcp.pop %v4474
    %v4476 = vmul.f32 1.0, %v4475
    %v4477 = vadd.f32 %v4434, %v3693
    %v4478 = vmul.f32 %v4469, %v4477
    %v4479 = vadd.f32 %v4441, %v4478
    %v4480 = vtanh.pop %v4479
    %v4481 = vsub.f32 %v4220, %v4480
    %v4482 = vmul.f32 %v4476, %v4481
    %v4483 = vadd.f32 %v4480, %v4482
    %4484 = vst [vmem:[#allocation4 + $0x20] sm:$0xff] %v4462
    %4485 = vst [vmem:[#allocation4 + $0x58] sm:$0xff] %v4483
    %4486 = vmatprep.subr.mxu0 %v3501
    %4487 = vmatpush1.msra.mxu0 %v3500
    %4488 = vmatprep.subr.mxu0 %v3507
    %4489 = vmatpush1.msra.mxu0 %v3506
    %4490 = vmatprep.subr.mxu0 %v3513
    %4491 = vmatpush1.msra.mxu0 %v3512
    %4492 = vmatprep.subr.mxu0 %v3519
    %4493 = vmatpush1.msra.mxu0 %v3518
    %4494 = vmatprep.subr.mxu0 %v3525
    %4495 = vmatpush1.msra.mxu0 %v3524
    %4496 = vmatprep.subr.mxu0 %v3531
    %4497 = vmatpush1.msra.mxu0 %v3530
    %4498 = vmatprep.subr.mxu0 %v3537
    %4499 = vmatpush1.msra.mxu0 %v3536
    %4500 = vmatprep.subr.mxu0 %v3543
    %4501 = vmatpush1.msra.mxu0 %v3542
    %4502 = vmatprep.subr.mxu0 %v3549
    %4503 = vmatpush1.msra.mxu0 %v3548
    %4504 = vmatprep.subr.mxu0 %v3555
    %4505 = vmatpush1.msra.mxu0 %v3554
    %4506 = vmatprep.subr.mxu0 %v3561
    %4507 = vmatpush1.msra.mxu0 %v3560
    %4508 = vmatprep.subr.mxu0 %v3567
    %4509 = vmatpush1.msra.mxu0 %v3566
    %4510 = vmatprep.subr.mxu0 %v3573
    %4511 = vmatpush1.msra.mxu0 %v3572
    %4512 = vmatprep.subr.mxu0 %v3579
    %4513 = vmatpush1.msra.mxu0 %v3578
    %4514 = vmatprep.subr.mxu0 %v3585
    %4515 = vmatpush1.msra.mxu0 %v3584
    %4516 = vmatprep.subr.mxu0 %v3591
    %4517 = vmatpush1.msra.mxu0 %v3590
    %4518 = vmatprep.subr.mxu0 %v3597
    %4519 = vmatpush1.msra.mxu0 %v3596
    %4520 = vmatprep.subr.mxu0 %v3603
    %4521 = vmatpush1.msra.mxu0 %v3602
    %4522 = vmatprep.subr.mxu0 %v3609
    %4523 = vmatpush1.msra.mxu0 %v3608
    %4524 = vmatprep.subr.mxu0 %v3615
    %4525 = vmatpush1.msra.mxu0 %v3614
    %4526 = vmatprep.subr.mxu0 %v3621
    %4527 = vmatpush1.msra.mxu0 %v3620
    %4528 = vmatprep.subr.mxu0 %v3627
    %4529 = vmatpush1.msra.mxu0 %v3626
    %4530 = vmatprep.subr.mxu0 %v3633
    %4531 = vmatpush1.msra.mxu0 %v3632
    %4532 = vmatprep.subr.mxu0 %v3639
    %4533 = vmatpush1.msra.mxu0 %v3638
    %4534 = vmatprep.subr.mxu0 %v3645
    %4535 = vmatpush1.msra.mxu0 %v3644
    %4536 = vmatprep.subr.mxu0 %v3651
    %4537 = vmatpush1.msra.mxu0 %v3650
    %4538 = vmatprep.subr.mxu0 %v3657
    %4539 = vmatpush1.msra.mxu0 %v3656
    %4540 = vmatprep.subr.mxu0 %v3663
    %4541 = vmatpush1.msra.mxu0 %v3662
    %4542 = vmatprep.subr.mxu0 %v3669
    %4543 = vmatpush1.msra.mxu0 %v3668
    %4544 = vmatprep.subr.mxu0 %v3675
    %4545 = vmatpush1.msra.mxu0 %v3674
    %4546 = vmatprep.subr.mxu0 %v3681
    %4547 = vmatpush1.msra.mxu0 %v3680
    %4548 = vmatprep.subr.mxu0 %v3687
    %4549 = vmatpush1.msra.mxu0 %v3686
    %4550 = vmatprep.mubr.f32.mxu0 %v4483
    %4551 = vmatmul.mubr.f32.gmra.mrb[0].mxu0 %v4462
    %v4552 = vpop.f32.mrb[0].mxu0
    %v4553 = vadd.f32 0.0, %v4552
    %v4554 = vpop.f32.mrb[0].mxu0
    %v4555 = vadd.f32 0.0, %v4554
    %4556 = vdwg.mxu0
    %4557 = vmatprep.subr.mxu0 %v3503
    %4558 = vmatpush1.msra.mxu0 %v3502
    %4559 = vmatprep.subr.mxu0 %v3509
    %4560 = vmatpush1.msra.mxu0 %v3508
    %4561 = vmatprep.subr.mxu0 %v3515
    %4562 = vmatpush1.msra.mxu0 %v3514
    %4563 = vmatprep.subr.mxu0 %v3521
    %4564 = vmatpush1.msra.mxu0 %v3520
    %4565 = vmatprep.subr.mxu0 %v3527
    %4566 = vmatpush1.msra.mxu0 %v3526
    %4567 = vmatprep.subr.mxu0 %v3533
    %4568 = vmatpush1.msra.mxu0 %v3532
    %4569 = vmatprep.subr.mxu0 %v3539
    %4570 = vmatpush1.msra.mxu0 %v3538
    %4571 = vmatprep.subr.mxu0 %v3545
    %4572 = vmatpush1.msra.mxu0 %v3544
    %4573 = vmatprep.subr.mxu0 %v3551
    %4574 = vmatpush1.msra.mxu0 %v3550
    %4575 = vmatprep.subr.mxu0 %v3557
    %4576 = vmatpush1.msra.mxu0 %v3556
    %4577 = vmatprep.subr.mxu0 %v3563
    %4578 = vmatpush1.msra.mxu0 %v3562
    %4579 = vmatprep.subr.mxu0 %v3569
    %4580 = vmatpush1.msra.mxu0 %v3568
    %4581 = vmatprep.subr.mxu0 %v3575
    %4582 = vmatpush1.msra.mxu0 %v3574
    %4583 = vmatprep.subr.mxu0 %v3581
    %4584 = vmatpush1.msra.mxu0 %v3580
    %4585 = vmatprep.subr.mxu0 %v3587
    %4586 = vmatpush1.msra.mxu0 %v3586
    %4587 = vmatprep.subr.mxu0 %v3593
    %4588 = vmatpush1.msra.mxu0 %v3592
    %4589 = vmatprep.subr.mxu0 %v3599
    %4590 = vmatpush1.msra.mxu0 %v3598
    %4591 = vmatprep.subr.mxu0 %v3605
    %4592 = vmatpush1.msra.mxu0 %v3604
    %4593 = vmatprep.subr.mxu0 %v3611
    %4594 = vmatpush1.msra.mxu0 %v3610
    %4595 = vmatprep.subr.mxu0 %v3617
    %4596 = vmatpush1.msra.mxu0 %v3616
    %4597 = vmatprep.subr.mxu0 %v3623
    %4598 = vmatpush1.msra.mxu0 %v3622
    %4599 = vmatprep.subr.mxu0 %v3629
    %4600 = vmatpush1.msra.mxu0 %v3628
    %4601 = vmatprep.subr.mxu0 %v3635
    %4602 = vmatpush1.msra.mxu0 %v3634
    %4603 = vmatprep.subr.mxu0 %v3641
    %4604 = vmatpush1.msra.mxu0 %v3640
    %4605 = vmatprep.subr.mxu0 %v3647
    %4606 = vmatpush1.msra.mxu0 %v3646
    %4607 = vmatprep.subr.mxu0 %v3653
    %4608 = vmatpush1.msra.mxu0 %v3652
    %4609 = vmatprep.subr.mxu0 %v3659
    %4610 = vmatpush1.msra.mxu0 %v3658
    %4611 = vmatprep.subr.mxu0 %v3665
    %4612 = vmatpush1.msra.mxu0 %v3664
    %4613 = vmatprep.subr.mxu0 %v3671
    %4614 = vmatpush1.msra.mxu0 %v3670
    %4615 = vmatprep.subr.mxu0 %v3677
    %4616 = vmatpush1.msra.mxu0 %v3676
    %4617 = vmatprep.subr.mxu0 %v3683
    %4618 = vmatpush1.msra.mxu0 %v3682
    %4619 = vmatprep.subr.mxu0 %v3689
    %4620 = vmatpush1.msra.mxu0 %v3688
    %4621 = vmatprep.mubr.f32.mxu0 %v4483
    %4622 = vmatmul.mubr.f32.gmra.mrb[0].mxu0 %v4462
    %v4623 = vpop.f32.mrb[0].mxu0
    %v4624 = vadd.f32 0.0, %v4623
    %v4625 = vpop.f32.mrb[0].mxu0
    %v4626 = vadd.f32 0.0, %v4625
    %4627 = vdwg.mxu0
    %4628 = vmatprep.subr.mxu0 %v3505
    %4629 = vmatpush1.msra.mxu0 %v3504
    %4630 = vmatprep.subr.mxu0 %v3511
    %4631 = vmatpush1.msra.mxu0 %v3510
    %4632 = vmatprep.subr.mxu0 %v3517
    %4633 = vmatpush1.msra.mxu0 %v3516
    %4634 = vmatprep.subr.mxu0 %v3523
    %4635 = vmatpush1.msra.mxu0 %v3522
    %4636 = vmatprep.subr.mxu0 %v3529
    %4637 = vmatpush1.msra.mxu0 %v3528
    %4638 = vmatprep.subr.mxu0 %v3535
    %4639 = vmatpush1.msra.mxu0 %v3534
    %4640 = vmatprep.subr.mxu0 %v3541
    %4641 = vmatpush1.msra.mxu0 %v3540
    %4642 = vmatprep.subr.mxu0 %v3547
    %4643 = vmatpush1.msra.mxu0 %v3546
    %4644 = vmatprep.subr.mxu0 %v3553
    %4645 = vmatpush1.msra.mxu0 %v3552
    %4646 = vmatprep.subr.mxu0 %v3559
    %4647 = vmatpush1.msra.mxu0 %v3558
    %4648 = vmatprep.subr.mxu0 %v3565
    %4649 = vmatpush1.msra.mxu0 %v3564
    %4650 = vmatprep.subr.mxu0 %v3571
    %4651 = vmatpush1.msra.mxu0 %v3570
    %4652 = vmatprep.subr.mxu0 %v3577
    %4653 = vmatpush1.msra.mxu0 %v3576
    %4654 = vmatprep.subr.mxu0 %v3583
    %4655 = vmatpush1.msra.mxu0 %v3582
    %4656 = vmatprep.subr.mxu0 %v3589
    %4657 = vmatpush1.msra.mxu0 %v3588
    %4658 = vmatprep.subr.mxu0 %v3595
    %4659 = vmatpush1.msra.mxu0 %v3594
    %4660 = vmatprep.subr.mxu0 %v3601
    %4661 = vmatpush1.msra.mxu0 %v3600
    %4662 = vmatprep.subr.mxu0 %v3607
    %4663 = vmatpush1.msra.mxu0 %v3606
    %4664 = vmatprep.subr.mxu0 %v3613
    %4665 = vmatpush1.msra.mxu0 %v3612
    %4666 = vmatprep.subr.mxu0 %v3619
    %4667 = vmatpush1.msra.mxu0 %v3618
    %4668 = vmatprep.subr.mxu0 %v3625
    %4669 = vmatpush1.msra.mxu0 %v3624
    %4670 = vmatprep.subr.mxu0 %v3631
    %4671 = vmatpush1.msra.mxu0 %v3630
    %4672 = vmatprep.subr.mxu0 %v3637
    %4673 = vmatpush1.msra.mxu0 %v3636
    %4674 = vmatprep.subr.mxu0 %v3643
    %4675 = vmatpush1.msra.mxu0 %v3642
    %4676 = vmatprep.subr.mxu0 %v3649
    %4677 = vmatpush1.msra.mxu0 %v3648
    %4678 = vmatprep.subr.mxu0 %v3655
    %4679 = vmatpush1.msra.mxu0 %v3654
    %4680 = vmatprep.subr.mxu0 %v3661
    %4681 = vmatpush1.msra.mxu0 %v3660
    %4682 = vmatprep.subr.mxu0 %v3667
    %4683 = vmatpush1.msra.mxu0 %v3666
    %4684 = vmatprep.subr.mxu0 %v3673
    %4685 = vmatpush1.msra.mxu0 %v3672
    %4686 = vmatprep.subr.mxu0 %v3679
    %4687 = vmatpush1.msra.mxu0 %v3678
    %4688 = vmatprep.subr.mxu0 %v3685
    %4689 = vmatpush1.msra.mxu0 %v3684
    %4690 = vmatprep.subr.mxu0 %v3691
    %4691 = vmatpush1.msra.mxu0 %v3690
    %4692 = vmatprep.mubr.f32.mxu0 %v4483
    %4693 = vmatmul.mubr.f32.gmra.mrb[0].mxu0 %v4462
    %v4694 = vpop.f32.mrb[0].mxu0
    %v4695 = vadd.f32 0.0, %v4694
    %v4696 = vpop.f32.mrb[0].mxu0
    %v4697 = vadd.f32 0.0, %v4696
    %4698 = vdwg.mxu0
    %v4699 = vld [vmem:[#allocation2 + $0x90] sm:$0xff]
    %v4700 = vld [vmem:[#allocation2 + $0x98] sm:$0xff]
    %v4701 = vld [vmem:[#allocation2 + $0xa0] sm:$0xff]
    %v4702 = vld [vmem:[#allocation2 + $0xd8] sm:$0xff]
    %v4703 = vld [vmem:[#allocation2 + $0xe0] sm:$0xff]
    %v4704 = vld [vmem:[#allocation2 + $0xe8] sm:$0xff]
    %v4705 = vadd.f32 %v4699, %v4553
    %v4706 = vxor.u32 %v4705, 2147483648
    %v4707 = vmul.f32 %v4706, 1.442695
    %v4708 = vpow.pop %v4707
    %v4709 = vadd.f32 %v4708, 1.0
    %v4710 = vrcp.pop %v4709
    %v4711 = vmul.f32 1.0, %v4710
    %v4712 = vadd.f32 %v4700, %v4555
    %v4713 = vxor.u32 %v4712, 2147483648
    %v4714 = vmul.f32 %v4713, 1.442695
    %v4715 = vpow.pop %v4714
    %v4716 = vadd.f32 %v4715, 1.0
    %v4717 = vrcp.pop %v4716
    %v4718 = vmul.f32 1.0, %v4717
    %v4719 = vadd.f32 %v4624, %v3692
    %v4720 = vmul.f32 %v4711, %v4719
    %v4721 = vadd.f32 %v4701, %v4720
    %v4722 = vtanh.pop %v4721
    %v4723 = vsub.f32 %v4462, %v4722
    %v4724 = vmul.f32 %v4718, %v4723
    %v4725 = vadd.f32 %v4722, %v4724
    %v4726 = vadd.f32 %v4702, %v4626
    %v4727 = vxor.u32 %v4726, 2147483648
    %v4728 = vmul.f32 %v4727, 1.442695
    %v4729 = vpow.pop %v4728
    %v4730 = vadd.f32 %v4729, 1.0
    %v4731 = vrcp.pop %v4730
    %v4732 = vmul.f32 1.0, %v4731
    %v4733 = vadd.f32 %v4703, %v4695
    %v4734 = vxor.u32 %v4733, 2147483648
    %v4735 = vmul.f32 %v4734, 1.442695
    %v4736 = vpow.pop %v4735
    %v4737 = vadd.f32 %v4736, 1.0
    %v4738 = vrcp.pop %v4737
    %v4739 = vmul.f32 1.0, %v4738
    %v4740 = vadd.f32 %v4697, %v3693
    %v4741 = vmul.f32 %v4732, %v4740
    %v4742 = vadd.f32 %v4704, %v4741
    %v4743 = vtanh.pop %v4742
    %v4744 = vsub.f32 %v4483, %v4743
    %v4745 = vmul.f32 %v4739, %v4744
    %v4746 = vadd.f32 %v4743, %v4745
    %4747 = vst [vmem:[#allocation4 + $0x30] sm:$0xff] %v4725
    %4748 = vst [vmem:[#allocation4 + $0x48] sm:$0xff] %v4746
    %4749 = vmatprep.subr.mxu0 %v3501
    %4750 = vmatpush1.msra.mxu0 %v3500
    %4751 = vmatprep.subr.mxu0 %v3507
    %4752 = vmatpush1.msra.mxu0 %v3506
    %4753 = vmatprep.subr.mxu0 %v3513
    %4754 = vmatpush1.msra.mxu0 %v3512
    %4755 = vmatprep.subr.mxu0 %v3519
    %4756 = vmatpush1.msra.mxu0 %v3518
    %4757 = vmatprep.subr.mxu0 %v3525
    %4758 = vmatpush1.msra.mxu0 %v3524
    %4759 = vmatprep.subr.mxu0 %v3531
    %4760 = vmatpush1.msra.mxu0 %v3530
    %4761 = vmatprep.subr.mxu0 %v3537
    %4762 = vmatpush1.msra.mxu0 %v3536
    %4763 = vmatprep.subr.mxu0 %v3543
    %4764 = vmatpush1.msra.mxu0 %v3542
    %4765 = vmatprep.subr.mxu0 %v3549
    %4766 = vmatpush1.msra.mxu0 %v3548
    %4767 = vmatprep.subr.mxu0 %v3555
    %4768 = vmatpush1.msra.mxu0 %v3554
    %4769 = vmatprep.subr.mxu0 %v3561
    %4770 = vmatpush1.msra.mxu0 %v3560
    %4771 = vmatprep.subr.mxu0 %v3567
    %4772 = vmatpush1.msra.mxu0 %v3566
    %4773 = vmatprep.subr.mxu0 %v3573
    %4774 = vmatpush1.msra.mxu0 %v3572
    %4775 = vmatprep.subr.mxu0 %v3579
    %4776 = vmatpush1.msra.mxu0 %v3578
    %4777 = vmatprep.subr.mxu0 %v3585
    %4778 = vmatpush1.msra.mxu0 %v3584
    %4779 = vmatprep.subr.mxu0 %v3591
    %4780 = vmatpush1.msra.mxu0 %v3590
    %4781 = vmatprep.subr.mxu0 %v3597
    %4782 = vmatpush1.msra.mxu0 %v3596
    %4783 = vmatprep.subr.mxu0 %v3603
    %4784 = vmatpush1.msra.mxu0 %v3602
    %4785 = vmatprep.subr.mxu0 %v3609
    %4786 = vmatpush1.msra.mxu0 %v3608
    %4787 = vmatprep.subr.mxu0 %v3615
    %4788 = vmatpush1.msra.mxu0 %v3614
    %4789 = vmatprep.subr.mxu0 %v3621
    %4790 = vmatpush1.msra.mxu0 %v3620
    %4791 = vmatprep.subr.mxu0 %v3627
    %4792 = vmatpush1.msra.mxu0 %v3626
    %4793 = vmatprep.subr.mxu0 %v3633
    %4794 = vmatpush1.msra.mxu0 %v3632
    %4795 = vmatprep.subr.mxu0 %v3639
    %4796 = vmatpush1.msra.mxu0 %v3638
    %4797 = vmatprep.subr.mxu0 %v3645
    %4798 = vmatpush1.msra.mxu0 %v3644
    %4799 = vmatprep.subr.mxu0 %v3651
    %4800 = vmatpush1.msra.mxu0 %v3650
    %4801 = vmatprep.subr.mxu0 %v3657
    %4802 = vmatpush1.msra.mxu0 %v3656
    %4803 = vmatprep.subr.mxu0 %v3663
    %4804 = vmatpush1.msra.mxu0 %v3662
    %4805 = vmatprep.subr.mxu0 %v3669
    %4806 = vmatpush1.msra.mxu0 %v3668
    %4807 = vmatprep.subr.mxu0 %v3675
    %4808 = vmatpush1.msra.mxu0 %v3674
    %4809 = vmatprep.subr.mxu0 %v3681
    %4810 = vmatpush1.msra.mxu0 %v3680
    %4811 = vmatprep.subr.mxu0 %v3687
    %4812 = vmatpush1.msra.mxu0 %v3686
    %4813 = vmatprep.mubr.f32.mxu0 %v4746
    %4814 = vmatmul.mubr.f32.gmra.mrb[0].mxu0 %v4725
    %v4815 = vpop.f32.mrb[0].mxu0
    %v4816 = vadd.f32 0.0, %v4815
    %v4817 = vpop.f32.mrb[0].mxu0
    %v4818 = vadd.f32 0.0, %v4817
    %4819 = vdwg.mxu0
    %4820 = vmatprep.subr.mxu0 %v3503
    %4821 = vmatpush1.msra.mxu0 %v3502
    %4822 = vmatprep.subr.mxu0 %v3509
    %4823 = vmatpush1.msra.mxu0 %v3508
    %4824 = vmatprep.subr.mxu0 %v3515
    %4825 = vmatpush1.msra.mxu0 %v3514
    %4826 = vmatprep.subr.mxu0 %v3521
    %4827 = vmatpush1.msra.mxu0 %v3520
    %4828 = vmatprep.subr.mxu0 %v3527
    %4829 = vmatpush1.msra.mxu0 %v3526
    %4830 = vmatprep.subr.mxu0 %v3533
    %4831 = vmatpush1.msra.mxu0 %v3532
    %4832 = vmatprep.subr.mxu0 %v3539
    %4833 = vmatpush1.msra.mxu0 %v3538
    %4834 = vmatprep.subr.mxu0 %v3545
    %4835 = vmatpush1.msra.mxu0 %v3544
    %4836 = vmatprep.subr.mxu0 %v3551
    %4837 = vmatpush1.msra.mxu0 %v3550
    %4838 = vmatprep.subr.mxu0 %v3557
    %4839 = vmatpush1.msra.mxu0 %v3556
    %4840 = vmatprep.subr.mxu0 %v3563
    %4841 = vmatpush1.msra.mxu0 %v3562
    %4842 = vmatprep.subr.mxu0 %v3569
    %4843 = vmatpush1.msra.mxu0 %v3568
    %4844 = vmatprep.subr.mxu0 %v3575
    %4845 = vmatpush1.msra.mxu0 %v3574
    %4846 = vmatprep.subr.mxu0 %v3581
    %4847 = vmatpush1.msra.mxu0 %v3580
    %4848 = vmatprep.subr.mxu0 %v3587
    %4849 = vmatpush1.msra.mxu0 %v3586
    %4850 = vmatprep.subr.mxu0 %v3593
    %4851 = vmatpush1.msra.mxu0 %v3592
    %4852 = vmatprep.subr.mxu0 %v3599
    %4853 = vmatpush1.msra.mxu0 %v3598
    %4854 = vmatprep.subr.mxu0 %v3605
    %4855 = vmatpush1.msra.mxu0 %v3604
    %4856 = vmatprep.subr.mxu0 %v3611
    %4857 = vmatpush1.msra.mxu0 %v3610
    %4858 = vmatprep.subr.mxu0 %v3617
    %4859 = vmatpush1.msra.mxu0 %v3616
    %4860 = vmatprep.subr.mxu0 %v3623
    %4861 = vmatpush1.msra.mxu0 %v3622
    %4862 = vmatprep.subr.mxu0 %v3629
    %4863 = vmatpush1.msra.mxu0 %v3628
    %4864 = vmatprep.subr.mxu0 %v3635
    %4865 = vmatpush1.msra.mxu0 %v3634
    %4866 = vmatprep.subr.mxu0 %v3641
    %4867 = vmatpush1.msra.mxu0 %v3640
    %4868 = vmatprep.subr.mxu0 %v3647
    %4869 = vmatpush1.msra.mxu0 %v3646
    %4870 = vmatprep.subr.mxu0 %v3653
    %4871 = vmatpush1.msra.mxu0 %v3652
    %4872 = vmatprep.subr.mxu0 %v3659
    %4873 = vmatpush1.msra.mxu0 %v3658
    %4874 = vmatprep.subr.mxu0 %v3665
    %4875 = vmatpush1.msra.mxu0 %v3664
    %4876 = vmatprep.subr.mxu0 %v3671
    %4877 = vmatpush1.msra.mxu0 %v3670
    %4878 = vmatprep.subr.mxu0 %v3677
    %4879 = vmatpush1.msra.mxu0 %v3676
    %4880 = vmatprep.subr.mxu0 %v3683
    %4881 = vmatpush1.msra.mxu0 %v3682
    %4882 = vmatprep.subr.mxu0 %v3689
    %4883 = vmatpush1.msra.mxu0 %v3688
    %4884 = vmatprep.mubr.f32.mxu0 %v4746
    %4885 = vmatmul.mubr.f32.gmra.mrb[0].mxu0 %v4725
    %v4886 = vpop.f32.mrb[0].mxu0
    %v4887 = vadd.f32 0.0, %v4886
    %v4888 = vpop.f32.mrb[0].mxu0
    %v4889 = vadd.f32 0.0, %v4888
    %4890 = vdwg.mxu0
    %4891 = vmatprep.subr.mxu0 %v3505
    %4892 = vmatpush1.msra.mxu0 %v3504
    %4893 = vmatprep.subr.mxu0 %v3511
    %4894 = vmatpush1.msra.mxu0 %v3510
    %4895 = vmatprep.subr.mxu0 %v3517
    %4896 = vmatpush1.msra.mxu0 %v3516
    %4897 = vmatprep.subr.mxu0 %v3523
    %4898 = vmatpush1.msra.mxu0 %v3522
    %4899 = vmatprep.subr.mxu0 %v3529
    %4900 = vmatpush1.msra.mxu0 %v3528
    %4901 = vmatprep.subr.mxu0 %v3535
    %4902 = vmatpush1.msra.mxu0 %v3534
    %4903 = vmatprep.subr.mxu0 %v3541
    %4904 = vmatpush1.msra.mxu0 %v3540
    %4905 = vmatprep.subr.mxu0 %v3547
    %4906 = vmatpush1.msra.mxu0 %v3546
    %4907 = vmatprep.subr.mxu0 %v3553
    %4908 = vmatpush1.msra.mxu0 %v3552
    %4909 = vmatprep.subr.mxu0 %v3559
    %4910 = vmatpush1.msra.mxu0 %v3558
    %4911 = vmatprep.subr.mxu0 %v3565
    %4912 = vmatpush1.msra.mxu0 %v3564
    %4913 = vmatprep.subr.mxu0 %v3571
    %4914 = vmatpush1.msra.mxu0 %v3570
    %4915 = vmatprep.subr.mxu0 %v3577
    %4916 = vmatpush1.msra.mxu0 %v3576
    %4917 = vmatprep.subr.mxu0 %v3583
    %4918 = vmatpush1.msra.mxu0 %v3582
    %4919 = vmatprep.subr.mxu0 %v3589
    %4920 = vmatpush1.msra.mxu0 %v3588
    %4921 = vmatprep.subr.mxu0 %v3595
    %4922 = vmatpush1.msra.mxu0 %v3594
    %4923 = vmatprep.subr.mxu0 %v3601
    %4924 = vmatpush1.msra.mxu0 %v3600
    %4925 = vmatprep.subr.mxu0 %v3607
    %4926 = vmatpush1.msra.mxu0 %v3606
    %4927 = vmatprep.subr.mxu0 %v3613
    %4928 = vmatpush1.msra.mxu0 %v3612
    %4929 = vmatprep.subr.mxu0 %v3619
    %4930 = vmatpush1.msra.mxu0 %v3618
    %4931 = vmatprep.subr.mxu0 %v3625
    %4932 = vmatpush1.msra.mxu0 %v3624
    %4933 = vmatprep.subr.mxu0 %v3631
    %4934 = vmatpush1.msra.mxu0 %v3630
    %4935 = vmatprep.subr.mxu0 %v3637
    %4936 = vmatpush1.msra.mxu0 %v3636
    %4937 = vmatprep.subr.mxu0 %v3643
    %4938 = vmatpush1.msra.mxu0 %v3642
    %4939 = vmatprep.subr.mxu0 %v3649
    %4940 = vmatpush1.msra.mxu0 %v3648
    %4941 = vmatprep.subr.mxu0 %v3655
    %4942 = vmatpush1.msra.mxu0 %v3654
    %4943 = vmatprep.subr.mxu0 %v3661
    %4944 = vmatpush1.msra.mxu0 %v3660
    %4945 = vmatprep.subr.mxu0 %v3667
    %4946 = vmatpush1.msra.mxu0 %v3666
    %4947 = vmatprep.subr.mxu0 %v3673
    %4948 = vmatpush1.msra.mxu0 %v3672
    %4949 = vmatprep.subr.mxu0 %v3679
    %4950 = vmatpush1.msra.mxu0 %v3678
    %4951 = vmatprep.subr.mxu0 %v3685
    %4952 = vmatpush1.msra.mxu0 %v3684
    %4953 = vmatprep.subr.mxu0 %v3691
    %4954 = vmatpush1.msra.mxu0 %v3690
    %4955 = vmatprep.mubr.f32.mxu0 %v4746
    %4956 = vmatmul.mubr.f32.gmra.mrb[0].mxu0 %v4725
    %v4957 = vpop.f32.mrb[0].mxu0
    %v4958 = vadd.f32 0.0, %v4957
    %v4959 = vpop.f32.mrb[0].mxu0
    %v4960 = vadd.f32 0.0, %v4959
    %4961 = vdwg.mxu0
    %v4962 = vld [vmem:[#allocation2 + $0xc0] sm:$0xff]
    %v4963 = vld [vmem:[#allocation2 + $0xc8] sm:$0xff]
    %v4964 = vld [vmem:[#allocation2 + $0xd0] sm:$0xff]
    %v4965 = vld [vmem:[#allocation2 + $0xa8] sm:$0xff]
    %v4966 = vld [vmem:[#allocation2 + $0xb0] sm:$0xff]
    %v4967 = vld [vmem:[#allocation2 + $0xb8] sm:$0xff]
    %v4968 = vadd.f32 %v4962, %v4816
    %v4969 = vxor.u32 %v4968, 2147483648
    %v4970 = vmul.f32 %v4969, 1.442695
    %v4971 = vpow.pop %v4970
    %v4972 = vadd.f32 %v4971, 1.0
    %v4973 = vrcp.pop %v4972
    %v4974 = vmul.f32 1.0, %v4973
    %v4975 = vadd.f32 %v4963, %v4818
    %v4976 = vxor.u32 %v4975, 2147483648
    %v4977 = vmul.f32 %v4976, 1.442695
    %v4978 = vpow.pop %v4977
    %v4979 = vadd.f32 %v4978, 1.0
    %v4980 = vrcp.pop %v4979
    %v4981 = vmul.f32 1.0, %v4980
    %v4982 = vadd.f32 %v4887, %v3692
    %v4983 = vmul.f32 %v4974, %v4982
    %v4984 = vadd.f32 %v4964, %v4983
    %v4985 = vtanh.pop %v4984
    %v4986 = vsub.f32 %v4725, %v4985
    %v4987 = vmul.f32 %v4981, %v4986
    %v4988 = vadd.f32 %v4985, %v4987
    %v4989 = vadd.f32 %v4965, %v4889
    %v4990 = vxor.u32 %v4989, 2147483648
    %v4991 = vmul.f32 %v4990, 1.442695
    %v4992 = vpow.pop %v4991
    %v4993 = vadd.f32 %v4992, 1.0
    %v4994 = vrcp.pop %v4993
    %v4995 = vmul.f32 1.0, %v4994
    %v4996 = vadd.f32 %v4966, %v4958
    %v4997 = vxor.u32 %v4996, 2147483648
    %v4998 = vmul.f32 %v4997, 1.442695
    %v4999 = vpow.pop %v4998
    %v5000 = vadd.f32 %v4999, 1.0
    %v5001 = vrcp.pop %v5000
    %v5002 = vmul.f32 1.0, %v5001
    %v5003 = vadd.f32 %v4960, %v3693
    %v5004 = vmul.f32 %v4995, %v5003
    %v5005 = vadd.f32 %v4967, %v5004
    %v5006 = vtanh.pop %v5005
    %v5007 = vsub.f32 %v4746, %v5006
    %v5008 = vmul.f32 %v5002, %v5007
    %v5009 = vadd.f32 %v5006, %v5008
    %5010 = vst [vmem:[#allocation4 + $0x40] sm:$0xff] %v4988
    %5011 = vst [vmem:[#allocation4 + $0x38] sm:$0xff] %v5009
    %5012 = vmatprep.subr.mxu0 %v3501
    %5013 = vmatpush1.msra.mxu0 %v3500
    %5014 = vmatprep.subr.mxu0 %v3507
    %5015 = vmatpush1.msra.mxu0 %v3506
    %5016 = vmatprep.subr.mxu0 %v3513
    %5017 = vmatpush1.msra.mxu0 %v3512
    %5018 = vmatprep.subr.mxu0 %v3519
    %5019 = vmatpush1.msra.mxu0 %v3518
    %5020 = vmatprep.subr.mxu0 %v3525
    %5021 = vmatpush1.msra.mxu0 %v3524
    %5022 = vmatprep.subr.mxu0 %v3531
    %5023 = vmatpush1.msra.mxu0 %v3530
    %5024 = vmatprep.subr.mxu0 %v3537
    %5025 = vmatpush1.msra.mxu0 %v3536
    %5026 = vmatprep.subr.mxu0 %v3543
    %5027 = vmatpush1.msra.mxu0 %v3542
    %5028 = vmatprep.subr.mxu0 %v3549
    %5029 = vmatpush1.msra.mxu0 %v3548
    %5030 = vmatprep.subr.mxu0 %v3555
    %5031 = vmatpush1.msra.mxu0 %v3554
    %5032 = vmatprep.subr.mxu0 %v3561
    %5033 = vmatpush1.msra.mxu0 %v3560
    %5034 = vmatprep.subr.mxu0 %v3567
    %5035 = vmatpush1.msra.mxu0 %v3566
    %5036 = vmatprep.subr.mxu0 %v3573
    %5037 = vmatpush1.msra.mxu0 %v3572
    %5038 = vmatprep.subr.mxu0 %v3579
    %5039 = vmatpush1.msra.mxu0 %v3578
    %5040 = vmatprep.subr.mxu0 %v3585
    %5041 = vmatpush1.msra.mxu0 %v3584
    %5042 = vmatprep.subr.mxu0 %v3591
    %5043 = vmatpush1.msra.mxu0 %v3590
    %5044 = vmatprep.subr.mxu0 %v3597
    %5045 = vmatpush1.msra.mxu0 %v3596
    %5046 = vmatprep.subr.mxu0 %v3603
    %5047 = vmatpush1.msra.mxu0 %v3602
    %5048 = vmatprep.subr.mxu0 %v3609
    %5049 = vmatpush1.msra.mxu0 %v3608
    %5050 = vmatprep.subr.mxu0 %v3615
    %5051 = vmatpush1.msra.mxu0 %v3614
    %5052 = vmatprep.subr.mxu0 %v3621
    %5053 = vmatpush1.msra.mxu0 %v3620
    %5054 = vmatprep.subr.mxu0 %v3627
    %5055 = vmatpush1.msra.mxu0 %v3626
    %5056 = vmatprep.subr.mxu0 %v3633
    %5057 = vmatpush1.msra.mxu0 %v3632
    %5058 = vmatprep.subr.mxu0 %v3639
    %5059 = vmatpush1.msra.mxu0 %v3638
    %5060 = vmatprep.subr.mxu0 %v3645
    %5061 = vmatpush1.msra.mxu0 %v3644
    %5062 = vmatprep.subr.mxu0 %v3651
    %5063 = vmatpush1.msra.mxu0 %v3650
    %5064 = vmatprep.subr.mxu0 %v3657
    %5065 = vmatpush1.msra.mxu0 %v3656
    %5066 = vmatprep.subr.mxu0 %v3663
    %5067 = vmatpush1.msra.mxu0 %v3662
    %5068 = vmatprep.subr.mxu0 %v3669
    %5069 = vmatpush1.msra.mxu0 %v3668
    %5070 = vmatprep.subr.mxu0 %v3675
    %5071 = vmatpush1.msra.mxu0 %v3674
    %5072 = vmatprep.subr.mxu0 %v3681
    %5073 = vmatpush1.msra.mxu0 %v3680
    %5074 = vmatprep.subr.mxu0 %v3687
    %5075 = vmatpush1.msra.mxu0 %v3686
    %5076 = vmatprep.mubr.f32.mxu0 %v5009
    %5077 = vmatmul.mubr.f32.gmra.mrb[0].mxu0 %v4988
    %v5078 = vpop.f32.mrb[0].mxu0
    %v5079 = vadd.f32 0.0, %v5078
    %v5080 = vpop.f32.mrb[0].mxu0
    %v5081 = vadd.f32 0.0, %v5080
    %5082 = vdwg.mxu0
    %5083 = vmatprep.subr.mxu0 %v3503
    %5084 = vmatpush1.msra.mxu0 %v3502
    %5085 = vmatprep.subr.mxu0 %v3509
    %5086 = vmatpush1.msra.mxu0 %v3508
    %5087 = vmatprep.subr.mxu0 %v3515
    %5088 = vmatpush1.msra.mxu0 %v3514
    %5089 = vmatprep.subr.mxu0 %v3521
    %5090 = vmatpush1.msra.mxu0 %v3520
    %5091 = vmatprep.subr.mxu0 %v3527
    %5092 = vmatpush1.msra.mxu0 %v3526
    %5093 = vmatprep.subr.mxu0 %v3533
    %5094 = vmatpush1.msra.mxu0 %v3532
    %5095 = vmatprep.subr.mxu0 %v3539
    %5096 = vmatpush1.msra.mxu0 %v3538
    %5097 = vmatprep.subr.mxu0 %v3545
    %5098 = vmatpush1.msra.mxu0 %v3544
    %5099 = vmatprep.subr.mxu0 %v3551
    %5100 = vmatpush1.msra.mxu0 %v3550
    %5101 = vmatprep.subr.mxu0 %v3557
    %5102 = vmatpush1.msra.mxu0 %v3556
    %5103 = vmatprep.subr.mxu0 %v3563
    %5104 = vmatpush1.msra.mxu0 %v3562
    %5105 = vmatprep.subr.mxu0 %v3569
    %5106 = vmatpush1.msra.mxu0 %v3568
    %5107 = vmatprep.subr.mxu0 %v3575
    %5108 = vmatpush1.msra.mxu0 %v3574
    %5109 = vmatprep.subr.mxu0 %v3581
    %5110 = vmatpush1.msra.mxu0 %v3580
    %5111 = vmatprep.subr.mxu0 %v3587
    %5112 = vmatpush1.msra.mxu0 %v3586
    %5113 = vmatprep.subr.mxu0 %v3593
    %5114 = vmatpush1.msra.mxu0 %v3592
    %5115 = vmatprep.subr.mxu0 %v3599
    %5116 = vmatpush1.msra.mxu0 %v3598
    %5117 = vmatprep.subr.mxu0 %v3605
    %5118 = vmatpush1.msra.mxu0 %v3604
    %5119 = vmatprep.subr.mxu0 %v3611
    %5120 = vmatpush1.msra.mxu0 %v3610
    %5121 = vmatprep.subr.mxu0 %v3617
    %5122 = vmatpush1.msra.mxu0 %v3616
    %5123 = vmatprep.subr.mxu0 %v3623
    %5124 = vmatpush1.msra.mxu0 %v3622
    %5125 = vmatprep.subr.mxu0 %v3629
    %5126 = vmatpush1.msra.mxu0 %v3628
    %5127 = vmatprep.subr.mxu0 %v3635
    %5128 = vmatpush1.msra.mxu0 %v3634
    %5129 = vmatprep.subr.mxu0 %v3641
    %5130 = vmatpush1.msra.mxu0 %v3640
    %5131 = vmatprep.subr.mxu0 %v3647
    %5132 = vmatpush1.msra.mxu0 %v3646
    %5133 = vmatprep.subr.mxu0 %v3653
    %5134 = vmatpush1.msra.mxu0 %v3652
    %5135 = vmatprep.subr.mxu0 %v3659
    %5136 = vmatpush1.msra.mxu0 %v3658
    %5137 = vmatprep.subr.mxu0 %v3665
    %5138 = vmatpush1.msra.mxu0 %v3664
    %5139 = vmatprep.subr.mxu0 %v3671
    %5140 = vmatpush1.msra.mxu0 %v3670
    %5141 = vmatprep.subr.mxu0 %v3677
    %5142 = vmatpush1.msra.mxu0 %v3676
    %5143 = vmatprep.subr.mxu0 %v3683
    %5144 = vmatpush1.msra.mxu0 %v3682
    %5145 = vmatprep.subr.mxu0 %v3689
    %5146 = vmatpush1.msra.mxu0 %v3688
    %5147 = vmatprep.mubr.f32.mxu0 %v5009
    %5148 = vmatmul.mubr.f32.gmra.mrb[0].mxu0 %v4988
    %v5149 = vpop.f32.mrb[0].mxu0
    %v5150 = vadd.f32 0.0, %v5149
    %v5151 = vpop.f32.mrb[0].mxu0
    %v5152 = vadd.f32 0.0, %v5151
    %5153 = vdwg.mxu0
    %5154 = vmatprep.subr.mxu0 %v3505
    %5155 = vmatpush1.msra.mxu0 %v3504
    %5156 = vmatprep.subr.mxu0 %v3511
    %5157 = vmatpush1.msra.mxu0 %v3510
    %5158 = vmatprep.subr.mxu0 %v3517
    %5159 = vmatpush1.msra.mxu0 %v3516
    %5160 = vmatprep.subr.mxu0 %v3523
    %5161 = vmatpush1.msra.mxu0 %v3522
    %5162 = vmatprep.subr.mxu0 %v3529
    %5163 = vmatpush1.msra.mxu0 %v3528
    %5164 = vmatprep.subr.mxu0 %v3535
    %5165 = vmatpush1.msra.mxu0 %v3534
    %5166 = vmatprep.subr.mxu0 %v3541
    %5167 = vmatpush1.msra.mxu0 %v3540
    %5168 = vmatprep.subr.mxu0 %v3547
    %5169 = vmatpush1.msra.mxu0 %v3546
    %5170 = vmatprep.subr.mxu0 %v3553
    %5171 = vmatpush1.msra.mxu0 %v3552
    %5172 = vmatprep.subr.mxu0 %v3559
    %5173 = vmatpush1.msra.mxu0 %v3558
    %5174 = vmatprep.subr.mxu0 %v3565
    %5175 = vmatpush1.msra.mxu0 %v3564
    %5176 = vmatprep.subr.mxu0 %v3571
    %5177 = vmatpush1.msra.mxu0 %v3570
    %5178 = vmatprep.subr.mxu0 %v3577
    %5179 = vmatpush1.msra.mxu0 %v3576
    %5180 = vmatprep.subr.mxu0 %v3583
    %5181 = vmatpush1.msra.mxu0 %v3582
    %5182 = vmatprep.subr.mxu0 %v3589
    %5183 = vmatpush1.msra.mxu0 %v3588
    %5184 = vmatprep.subr.mxu0 %v3595
    %5185 = vmatpush1.msra.mxu0 %v3594
    %5186 = vmatprep.subr.mxu0 %v3601
    %5187 = vmatpush1.msra.mxu0 %v3600
    %5188 = vmatprep.subr.mxu0 %v3607
    %5189 = vmatpush1.msra.mxu0 %v3606
    %5190 = vmatprep.subr.mxu0 %v3613
    %5191 = vmatpush1.msra.mxu0 %v3612
    %5192 = vmatprep.subr.mxu0 %v3619
    %5193 = vmatpush1.msra.mxu0 %v3618
    %5194 = vmatprep.subr.mxu0 %v3625
    %5195 = vmatpush1.msra.mxu0 %v3624
    %5196 = vmatprep.subr.mxu0 %v3631
    %5197 = vmatpush1.msra.mxu0 %v3630
    %5198 = vmatprep.subr.mxu0 %v3637
    %5199 = vmatpush1.msra.mxu0 %v3636
    %5200 = vmatprep.subr.mxu0 %v3643
    %5201 = vmatpush1.msra.mxu0 %v3642
    %5202 = vmatprep.subr.mxu0 %v3649
    %5203 = vmatpush1.msra.mxu0 %v3648
    %5204 = vmatprep.subr.mxu0 %v3655
    %5205 = vmatpush1.msra.mxu0 %v3654
    %5206 = vmatprep.subr.mxu0 %v3661
    %5207 = vmatpush1.msra.mxu0 %v3660
    %5208 = vmatprep.subr.mxu0 %v3667
    %5209 = vmatpush1.msra.mxu0 %v3666
    %5210 = vmatprep.subr.mxu0 %v3673
    %5211 = vmatpush1.msra.mxu0 %v3672
    %5212 = vmatprep.subr.mxu0 %v3679
    %5213 = vmatpush1.msra.mxu0 %v3678
    %5214 = vmatprep.subr.mxu0 %v3685
    %5215 = vmatpush1.msra.mxu0 %v3684
    %5216 = vmatprep.subr.mxu0 %v3691
    %5217 = vmatpush1.msra.mxu0 %v3690
    %5218 = vmatprep.mubr.f32.mxu0 %v5009
    %5219 = vmatmul.mubr.f32.gmra.mrb[0].mxu0 %v4988
    %v5220 = vpop.f32.mrb[0].mxu0
    %v5221 = vadd.f32 0.0, %v5220
    %v5222 = vpop.f32.mrb[0].mxu0
    %v5223 = vadd.f32 0.0, %v5222
    %5224 = vdwg.mxu0
    %v5225 = vld [vmem:[#allocation2 + $0xf0] sm:$0xff]
    %v5226 = vld [vmem:[#allocation2 + $0xf8] sm:$0xff]
    %v5227 = vld [vmem:[#allocation2 + $0x100] sm:$0xff]
    %v5228 = vld [vmem:[#allocation2 + $0x78] sm:$0xff]
    %v5229 = vld [vmem:[#allocation2 + $0x80] sm:$0xff]
    %v5230 = vld [vmem:[#allocation2 + $0x88] sm:$0xff]
    %v5231 = vadd.f32 %v5225, %v5079
    %v5232 = vxor.u32 %v5231, 2147483648
    %v5233 = vmul.f32 %v5232, 1.442695
    %v5234 = vpow.pop %v5233
    %v5235 = vadd.f32 %v5234, 1.0
    %v5236 = vrcp.pop %v5235
    %v5237 = vmul.f32 1.0, %v5236
    %v5238 = vadd.f32 %v5226, %v5081
    %v5239 = vxor.u32 %v5238, 2147483648
    %v5240 = vmul.f32 %v5239, 1.442695
    %v5241 = vpow.pop %v5240
    %v5242 = vadd.f32 %v5241, 1.0
    %v5243 = vrcp.pop %v5242
    %v5244 = vmul.f32 1.0, %v5243
    %v5245 = vadd.f32 %v5150, %v3692
    %v5246 = vmul.f32 %v5237, %v5245
    %v5247 = vadd.f32 %v5227, %v5246
    %v5248 = vtanh.pop %v5247
    %v5249 = vsub.f32 %v4988, %v5248
    %v5250 = vmul.f32 %v5244, %v5249
    %v5251 = vadd.f32 %v5248, %v5250
    %v5252 = vadd.f32 %v5228, %v5152
    %v5253 = vxor.u32 %v5252, 2147483648
    %v5254 = vmul.f32 %v5253, 1.442695
    %v5255 = vpow.pop %v5254
    %v5256 = vadd.f32 %v5255, 1.0
    %v5257 = vrcp.pop %v5256
    %v5258 = vmul.f32 1.0, %v5257
    %v5259 = vadd.f32 %v5229, %v5221
    %v5260 = vxor.u32 %v5259, 2147483648
    %v5261 = vmul.f32 %v5260, 1.442695
    %v5262 = vpow.pop %v5261
    %v5263 = vadd.f32 %v5262, 1.0
    %v5264 = vrcp.pop %v5263
    %v5265 = vmul.f32 1.0, %v5264
    %v5266 = vadd.f32 %v5223, %v3693
    %v5267 = vmul.f32 %v5258, %v5266
    %v5268 = vadd.f32 %v5230, %v5267
    %v5269 = vtanh.pop %v5268
    %v5270 = vsub.f32 %v5009, %v5269
    %v5271 = vmul.f32 %v5265, %v5270
    %v5272 = vadd.f32 %v5269, %v5271
    %5273 = vst [vmem:[#allocation4 + $0x50] sm:$0xff] %v5251
    %5274 = vst [vmem:[#allocation4 + $0x28] sm:$0xff] %v5272
    %5275 = vmatprep.subr.mxu0 %v3501
    %5276 = vmatpush1.msra.mxu0 %v3500
    %5277 = vmatprep.subr.mxu0 %v3507
    %5278 = vmatpush1.msra.mxu0 %v3506
    %5279 = vmatprep.subr.mxu0 %v3513
    %5280 = vmatpush1.msra.mxu0 %v3512
    %5281 = vmatprep.subr.mxu0 %v3519
    %5282 = vmatpush1.msra.mxu0 %v3518
    %5283 = vmatprep.subr.mxu0 %v3525
    %5284 = vmatpush1.msra.mxu0 %v3524
    %5285 = vmatprep.subr.mxu0 %v3531
    %5286 = vmatpush1.msra.mxu0 %v3530
    %5287 = vmatprep.subr.mxu0 %v3537
    %5288 = vmatpush1.msra.mxu0 %v3536
    %5289 = vmatprep.subr.mxu0 %v3543
    %5290 = vmatpush1.msra.mxu0 %v3542
    %5291 = vmatprep.subr.mxu0 %v3549
    %5292 = vmatpush1.msra.mxu0 %v3548
    %5293 = vmatprep.subr.mxu0 %v3555
    %5294 = vmatpush1.msra.mxu0 %v3554
    %5295 = vmatprep.subr.mxu0 %v3561
    %5296 = vmatpush1.msra.mxu0 %v3560
    %5297 = vmatprep.subr.mxu0 %v3567
    %5298 = vmatpush1.msra.mxu0 %v3566
    %5299 = vmatprep.subr.mxu0 %v3573
    %5300 = vmatpush1.msra.mxu0 %v3572
    %5301 = vmatprep.subr.mxu0 %v3579
    %5302 = vmatpush1.msra.mxu0 %v3578
    %5303 = vmatprep.subr.mxu0 %v3585
    %5304 = vmatpush1.msra.mxu0 %v3584
    %5305 = vmatprep.subr.mxu0 %v3591
    %5306 = vmatpush1.msra.mxu0 %v3590
    %5307 = vmatprep.subr.mxu0 %v3597
    %5308 = vmatpush1.msra.mxu0 %v3596
    %5309 = vmatprep.subr.mxu0 %v3603
    %5310 = vmatpush1.msra.mxu0 %v3602
    %5311 = vmatprep.subr.mxu0 %v3609
    %5312 = vmatpush1.msra.mxu0 %v3608
    %5313 = vmatprep.subr.mxu0 %v3615
    %5314 = vmatpush1.msra.mxu0 %v3614
    %5315 = vmatprep.subr.mxu0 %v3621
    %5316 = vmatpush1.msra.mxu0 %v3620
    %5317 = vmatprep.subr.mxu0 %v3627
    %5318 = vmatpush1.msra.mxu0 %v3626
    %5319 = vmatprep.subr.mxu0 %v3633
    %5320 = vmatpush1.msra.mxu0 %v3632
    %5321 = vmatprep.subr.mxu0 %v3639
    %5322 = vmatpush1.msra.mxu0 %v3638
    %5323 = vmatprep.subr.mxu0 %v3645
    %5324 = vmatpush1.msra.mxu0 %v3644
    %5325 = vmatprep.subr.mxu0 %v3651
    %5326 = vmatpush1.msra.mxu0 %v3650
    %5327 = vmatprep.subr.mxu0 %v3657
    %5328 = vmatpush1.msra.mxu0 %v3656
    %5329 = vmatprep.subr.mxu0 %v3663
    %5330 = vmatpush1.msra.mxu0 %v3662
    %5331 = vmatprep.subr.mxu0 %v3669
    %5332 = vmatpush1.msra.mxu0 %v3668
    %5333 = vmatprep.subr.mxu0 %v3675
    %5334 = vmatpush1.msra.mxu0 %v3674
    %5335 = vmatprep.subr.mxu0 %v3681
    %5336 = vmatpush1.msra.mxu0 %v3680
    %5337 = vmatprep.subr.mxu0 %v3687
    %5338 = vmatpush1.msra.mxu0 %v3686
    %5339 = vmatprep.mubr.f32.mxu0 %v5272
    %5340 = vmatmul.mubr.f32.gmra.mrb[0].mxu0 %v5251
    %v5341 = vpop.f32.mrb[0].mxu0
    %v5342 = vadd.f32 0.0, %v5341
    %v5343 = vpop.f32.mrb[0].mxu0
    %v5344 = vadd.f32 0.0, %v5343
    %5345 = vdwg.mxu0
    %5346 = vmatprep.subr.mxu0 %v3503
    %5347 = vmatpush1.msra.mxu0 %v3502
    %5348 = vmatprep.subr.mxu0 %v3509
    %5349 = vmatpush1.msra.mxu0 %v3508
    %5350 = vmatprep.subr.mxu0 %v3515
    %5351 = vmatpush1.msra.mxu0 %v3514
    %5352 = vmatprep.subr.mxu0 %v3521
    %5353 = vmatpush1.msra.mxu0 %v3520
    %5354 = vmatprep.subr.mxu0 %v3527
    %5355 = vmatpush1.msra.mxu0 %v3526
    %5356 = vmatprep.subr.mxu0 %v3533
    %5357 = vmatpush1.msra.mxu0 %v3532
    %5358 = vmatprep.subr.mxu0 %v3539
    %5359 = vmatpush1.msra.mxu0 %v3538
    %5360 = vmatprep.subr.mxu0 %v3545
    %5361 = vmatpush1.msra.mxu0 %v3544
    %5362 = vmatprep.subr.mxu0 %v3551
    %5363 = vmatpush1.msra.mxu0 %v3550
    %5364 = vmatprep.subr.mxu0 %v3557
    %5365 = vmatpush1.msra.mxu0 %v3556
    %5366 = vmatprep.subr.mxu0 %v3563
    %5367 = vmatpush1.msra.mxu0 %v3562
    %5368 = vmatprep.subr.mxu0 %v3569
    %5369 = vmatpush1.msra.mxu0 %v3568
    %5370 = vmatprep.subr.mxu0 %v3575
    %5371 = vmatpush1.msra.mxu0 %v3574
    %5372 = vmatprep.subr.mxu0 %v3581
    %5373 = vmatpush1.msra.mxu0 %v3580
    %5374 = vmatprep.subr.mxu0 %v3587
    %5375 = vmatpush1.msra.mxu0 %v3586
    %5376 = vmatprep.subr.mxu0 %v3593
    %5377 = vmatpush1.msra.mxu0 %v3592
    %5378 = vmatprep.subr.mxu0 %v3599
    %5379 = vmatpush1.msra.mxu0 %v3598
    %5380 = vmatprep.subr.mxu0 %v3605
    %5381 = vmatpush1.msra.mxu0 %v3604
    %5382 = vmatprep.subr.mxu0 %v3611
    %5383 = vmatpush1.msra.mxu0 %v3610
    %5384 = vmatprep.subr.mxu0 %v3617
    %5385 = vmatpush1.msra.mxu0 %v3616
    %5386 = vmatprep.subr.mxu0 %v3623
    %5387 = vmatpush1.msra.mxu0 %v3622
    %5388 = vmatprep.subr.mxu0 %v3629
    %5389 = vmatpush1.msra.mxu0 %v3628
    %5390 = vmatprep.subr.mxu0 %v3635
    %5391 = vmatpush1.msra.mxu0 %v3634
    %5392 = vmatprep.subr.mxu0 %v3641
    %5393 = vmatpush1.msra.mxu0 %v3640
    %5394 = vmatprep.subr.mxu0 %v3647
    %5395 = vmatpush1.msra.mxu0 %v3646
    %5396 = vmatprep.subr.mxu0 %v3653
    %5397 = vmatpush1.msra.mxu0 %v3652
    %5398 = vmatprep.subr.mxu0 %v3659
    %5399 = vmatpush1.msra.mxu0 %v3658
    %5400 = vmatprep.subr.mxu0 %v3665
    %5401 = vmatpush1.msra.mxu0 %v3664
    %5402 = vmatprep.subr.mxu0 %v3671
    %5403 = vmatpush1.msra.mxu0 %v3670
    %5404 = vmatprep.subr.mxu0 %v3677
    %5405 = vmatpush1.msra.mxu0 %v3676
    %5406 = vmatprep.subr.mxu0 %v3683
    %5407 = vmatpush1.msra.mxu0 %v3682
    %5408 = vmatprep.subr.mxu0 %v3689
    %5409 = vmatpush1.msra.mxu0 %v3688
    %5410 = vmatprep.mubr.f32.mxu0 %v5272
    %5411 = vmatmul.mubr.f32.gmra.mrb[0].mxu0 %v5251
    %v5412 = vpop.f32.mrb[0].mxu0
    %v5413 = vadd.f32 0.0, %v5412
    %v5414 = vpop.f32.mrb[0].mxu0
    %v5415 = vadd.f32 0.0, %v5414
    %5416 = vdwg.mxu0
    %5417 = vmatprep.subr.mxu0 %v3505
    %5418 = vmatpush1.msra.mxu0 %v3504
    %5419 = vmatprep.subr.mxu0 %v3511
    %5420 = vmatpush1.msra.mxu0 %v3510
    %5421 = vmatprep.subr.mxu0 %v3517
    %5422 = vmatpush1.msra.mxu0 %v3516
    %5423 = vmatprep.subr.mxu0 %v3523
    %5424 = vmatpush1.msra.mxu0 %v3522
    %5425 = vmatprep.subr.mxu0 %v3529
    %5426 = vmatpush1.msra.mxu0 %v3528
    %5427 = vmatprep.subr.mxu0 %v3535
    %5428 = vmatpush1.msra.mxu0 %v3534
    %5429 = vmatprep.subr.mxu0 %v3541
    %5430 = vmatpush1.msra.mxu0 %v3540
    %5431 = vmatprep.subr.mxu0 %v3547
    %5432 = vmatpush1.msra.mxu0 %v3546
    %5433 = vmatprep.subr.mxu0 %v3553
    %5434 = vmatpush1.msra.mxu0 %v3552
    %5435 = vmatprep.subr.mxu0 %v3559
    %5436 = vmatpush1.msra.mxu0 %v3558
    %5437 = vmatprep.subr.mxu0 %v3565
    %5438 = vmatpush1.msra.mxu0 %v3564
    %5439 = vmatprep.subr.mxu0 %v3571
    %5440 = vmatpush1.msra.mxu0 %v3570
    %5441 = vmatprep.subr.mxu0 %v3577
    %5442 = vmatpush1.msra.mxu0 %v3576
    %5443 = vmatprep.subr.mxu0 %v3583
    %5444 = vmatpush1.msra.mxu0 %v3582
    %5445 = vmatprep.subr.mxu0 %v3589
    %5446 = vmatpush1.msra.mxu0 %v3588
    %5447 = vmatprep.subr.mxu0 %v3595
    %5448 = vmatpush1.msra.mxu0 %v3594
    %5449 = vmatprep.subr.mxu0 %v3601
    %5450 = vmatpush1.msra.mxu0 %v3600
    %5451 = vmatprep.subr.mxu0 %v3607
    %5452 = vmatpush1.msra.mxu0 %v3606
    %5453 = vmatprep.subr.mxu0 %v3613
    %5454 = vmatpush1.msra.mxu0 %v3612
    %5455 = vmatprep.subr.mxu0 %v3619
    %5456 = vmatpush1.msra.mxu0 %v3618
    %5457 = vmatprep.subr.mxu0 %v3625
    %5458 = vmatpush1.msra.mxu0 %v3624
    %5459 = vmatprep.subr.mxu0 %v3631
    %5460 = vmatpush1.msra.mxu0 %v3630
    %5461 = vmatprep.subr.mxu0 %v3637
    %5462 = vmatpush1.msra.mxu0 %v3636
    %5463 = vmatprep.subr.mxu0 %v3643
    %5464 = vmatpush1.msra.mxu0 %v3642
    %5465 = vmatprep.subr.mxu0 %v3649
    %5466 = vmatpush1.msra.mxu0 %v3648
    %5467 = vmatprep.subr.mxu0 %v3655
    %5468 = vmatpush1.msra.mxu0 %v3654
    %5469 = vmatprep.subr.mxu0 %v3661
    %5470 = vmatpush1.msra.mxu0 %v3660
    %5471 = vmatprep.subr.mxu0 %v3667
    %5472 = vmatpush1.msra.mxu0 %v3666
    %5473 = vmatprep.subr.mxu0 %v3673
    %5474 = vmatpush1.msra.mxu0 %v3672
    %5475 = vmatprep.subr.mxu0 %v3679
    %5476 = vmatpush1.msra.mxu0 %v3678
    %5477 = vmatprep.subr.mxu0 %v3685
    %5478 = vmatpush1.msra.mxu0 %v3684
    %5479 = vmatprep.subr.mxu0 %v3691
    %5480 = vmatpush1.msra.mxu0 %v3690
    %5481 = vmatprep.mubr.f32.mxu0 %v5272
    %5482 = vmatmul.mubr.f32.gmra.mrb[0].mxu0 %v5251
    %v5483 = vpop.f32.mrb[0].mxu0
    %v5484 = vadd.f32 0.0, %v5483
    %v5485 = vpop.f32.mrb[0].mxu0
    %v5486 = vadd.f32 0.0, %v5485
    %5487 = vdwg.mxu0
    %v5488 = vld [vmem:[#allocation2 + $0x120] sm:$0xff]
    %v5489 = vld [vmem:[#allocation2 + $0x128] sm:$0xff]
    %v5490 = vld [vmem:[#allocation2 + $0x130] sm:$0xff]
    %v5491 = vld [vmem:[#allocation2 + $0x48] sm:$0xff]
    %v5492 = vld [vmem:[#allocation2 + $0x50] sm:$0xff]
    %v5493 = vld [vmem:[#allocation2 + $0x58] sm:$0xff]
    %v5494 = vadd.f32 %v5488, %v5342
    %v5495 = vxor.u32 %v5494, 2147483648
    %v5496 = vmul.f32 %v5495, 1.442695
    %v5497 = vpow.pop %v5496
    %v5498 = vadd.f32 %v5497, 1.0
    %v5499 = vrcp.pop %v5498
    %v5500 = vmul.f32 1.0, %v5499
    %v5501 = vadd.f32 %v5489, %v5344
    %v5502 = vxor.u32 %v5501, 2147483648
    %v5503 = vmul.f32 %v5502, 1.442695
    %v5504 = vpow.pop %v5503
    %v5505 = vadd.f32 %v5504, 1.0
    %v5506 = vrcp.pop %v5505
    %v5507 = vmul.f32 1.0, %v5506
    %v5508 = vadd.f32 %v5413, %v3692
    %v5509 = vmul.f32 %v5500, %v5508
    %v5510 = vadd.f32 %v5490, %v5509
    %v5511 = vtanh.pop %v5510
    %v5512 = vsub.f32 %v5251, %v5511
    %v5513 = vmul.f32 %v5507, %v5512
    %v5514 = vadd.f32 %v5511, %v5513
    %v5515 = vadd.f32 %v5491, %v5415
    %v5516 = vxor.u32 %v5515, 2147483648
    %v5517 = vmul.f32 %v5516, 1.442695
    %v5518 = vpow.pop %v5517
    %v5519 = vadd.f32 %v5518, 1.0
    %v5520 = vrcp.pop %v5519
    %v5521 = vmul.f32 1.0, %v5520
    %v5522 = vadd.f32 %v5492, %v5484
    %v5523 = vxor.u32 %v5522, 2147483648
    %v5524 = vmul.f32 %v5523, 1.442695
    %v5525 = vpow.pop %v5524
    %v5526 = vadd.f32 %v5525, 1.0
    %v5527 = vrcp.pop %v5526
    %v5528 = vmul.f32 1.0, %v5527
    %v5529 = vadd.f32 %v5486, %v3693
    %v5530 = vmul.f32 %v5521, %v5529
    %v5531 = vadd.f32 %v5493, %v5530
    %v5532 = vtanh.pop %v5531
    %v5533 = vsub.f32 %v5272, %v5532
    %v5534 = vmul.f32 %v5528, %v5533
    %v5535 = vadd.f32 %v5532, %v5534
    %5536 = vst [vmem:[#allocation4 + $0x60] sm:$0xff] %v5514
    %5537 = vst [vmem:[#allocation4 + $0x18] sm:$0xff] %v5535
    %5538 = vmatprep.subr.mxu0 %v3501
    %5539 = vmatpush1.msra.mxu0 %v3500
    %5540 = vmatprep.subr.mxu0 %v3507
    %5541 = vmatpush1.msra.mxu0 %v3506
    %5542 = vmatprep.subr.mxu0 %v3513
    %5543 = vmatpush1.msra.mxu0 %v3512
    %5544 = vmatprep.subr.mxu0 %v3519
    %5545 = vmatpush1.msra.mxu0 %v3518
    %5546 = vmatprep.subr.mxu0 %v3525
    %5547 = vmatpush1.msra.mxu0 %v3524
    %5548 = vmatprep.subr.mxu0 %v3531
    %5549 = vmatpush1.msra.mxu0 %v3530
    %5550 = vmatprep.subr.mxu0 %v3537
    %5551 = vmatpush1.msra.mxu0 %v3536
    %5552 = vmatprep.subr.mxu0 %v3543
    %5553 = vmatpush1.msra.mxu0 %v3542
    %5554 = vmatprep.subr.mxu0 %v3549
    %5555 = vmatpush1.msra.mxu0 %v3548
    %5556 = vmatprep.subr.mxu0 %v3555
    %5557 = vmatpush1.msra.mxu0 %v3554
    %5558 = vmatprep.subr.mxu0 %v3561
    %5559 = vmatpush1.msra.mxu0 %v3560
    %5560 = vmatprep.subr.mxu0 %v3567
    %5561 = vmatpush1.msra.mxu0 %v3566
    %5562 = vmatprep.subr.mxu0 %v3573
    %5563 = vmatpush1.msra.mxu0 %v3572
    %5564 = vmatprep.subr.mxu0 %v3579
    %5565 = vmatpush1.msra.mxu0 %v3578
    %5566 = vmatprep.subr.mxu0 %v3585
    %5567 = vmatpush1.msra.mxu0 %v3584
    %5568 = vmatprep.subr.mxu0 %v3591
    %5569 = vmatpush1.msra.mxu0 %v3590
    %5570 = vmatprep.subr.mxu0 %v3597
    %5571 = vmatpush1.msra.mxu0 %v3596
    %5572 = vmatprep.subr.mxu0 %v3603
    %5573 = vmatpush1.msra.mxu0 %v3602
    %5574 = vmatprep.subr.mxu0 %v3609
    %5575 = vmatpush1.msra.mxu0 %v3608
    %5576 = vmatprep.subr.mxu0 %v3615
    %5577 = vmatpush1.msra.mxu0 %v3614
    %5578 = vmatprep.subr.mxu0 %v3621
    %5579 = vmatpush1.msra.mxu0 %v3620
    %5580 = vmatprep.subr.mxu0 %v3627
    %5581 = vmatpush1.msra.mxu0 %v3626
    %5582 = vmatprep.subr.mxu0 %v3633
    %5583 = vmatpush1.msra.mxu0 %v3632
    %5584 = vmatprep.subr.mxu0 %v3639
    %5585 = vmatpush1.msra.mxu0 %v3638
    %5586 = vmatprep.subr.mxu0 %v3645
    %5587 = vmatpush1.msra.mxu0 %v3644
    %5588 = vmatprep.subr.mxu0 %v3651
    %5589 = vmatpush1.msra.mxu0 %v3650
    %5590 = vmatprep.subr.mxu0 %v3657
    %5591 = vmatpush1.msra.mxu0 %v3656
    %5592 = vmatprep.subr.mxu0 %v3663
    %5593 = vmatpush1.msra.mxu0 %v3662
    %5594 = vmatprep.subr.mxu0 %v3669
    %5595 = vmatpush1.msra.mxu0 %v3668
    %5596 = vmatprep.subr.mxu0 %v3675
    %5597 = vmatpush1.msra.mxu0 %v3674
    %5598 = vmatprep.subr.mxu0 %v3681
    %5599 = vmatpush1.msra.mxu0 %v3680
    %5600 = vmatprep.subr.mxu0 %v3687
    %5601 = vmatpush1.msra.mxu0 %v3686
    %5602 = vmatprep.mubr.f32.mxu0 %v5535
    %5603 = vmatmul.mubr.f32.gmra.mrb[0].mxu0 %v5514
    %v5604 = vpop.f32.mrb[0].mxu0
    %v5605 = vadd.f32 0.0, %v5604
    %v5606 = vpop.f32.mrb[0].mxu0
    %v5607 = vadd.f32 0.0, %v5606
    %5608 = vdwg.mxu0
    %5609 = vmatprep.subr.mxu0 %v3503
    %5610 = vmatpush1.msra.mxu0 %v3502
    %5611 = vmatprep.subr.mxu0 %v3509
    %5612 = vmatpush1.msra.mxu0 %v3508
    %5613 = vmatprep.subr.mxu0 %v3515
    %5614 = vmatpush1.msra.mxu0 %v3514
    %5615 = vmatprep.subr.mxu0 %v3521
    %5616 = vmatpush1.msra.mxu0 %v3520
    %5617 = vmatprep.subr.mxu0 %v3527
    %5618 = vmatpush1.msra.mxu0 %v3526
    %5619 = vmatprep.subr.mxu0 %v3533
    %5620 = vmatpush1.msra.mxu0 %v3532
    %5621 = vmatprep.subr.mxu0 %v3539
    %5622 = vmatpush1.msra.mxu0 %v3538
    %5623 = vmatprep.subr.mxu0 %v3545
    %5624 = vmatpush1.msra.mxu0 %v3544
    %5625 = vmatprep.subr.mxu0 %v3551
    %5626 = vmatpush1.msra.mxu0 %v3550
    %5627 = vmatprep.subr.mxu0 %v3557
    %5628 = vmatpush1.msra.mxu0 %v3556
    %5629 = vmatprep.subr.mxu0 %v3563
    %5630 = vmatpush1.msra.mxu0 %v3562
    %5631 = vmatprep.subr.mxu0 %v3569
    %5632 = vmatpush1.msra.mxu0 %v3568
    %5633 = vmatprep.subr.mxu0 %v3575
    %5634 = vmatpush1.msra.mxu0 %v3574
    %5635 = vmatprep.subr.mxu0 %v3581
    %5636 = vmatpush1.msra.mxu0 %v3580
    %5637 = vmatprep.subr.mxu0 %v3587
    %5638 = vmatpush1.msra.mxu0 %v3586
    %5639 = vmatprep.subr.mxu0 %v3593
    %5640 = vmatpush1.msra.mxu0 %v3592
    %5641 = vmatprep.subr.mxu0 %v3599
    %5642 = vmatpush1.msra.mxu0 %v3598
    %5643 = vmatprep.subr.mxu0 %v3605
    %5644 = vmatpush1.msra.mxu0 %v3604
    %5645 = vmatprep.subr.mxu0 %v3611
    %5646 = vmatpush1.msra.mxu0 %v3610
    %5647 = vmatprep.subr.mxu0 %v3617
    %5648 = vmatpush1.msra.mxu0 %v3616
    %5649 = vmatprep.subr.mxu0 %v3623
    %5650 = vmatpush1.msra.mxu0 %v3622
    %5651 = vmatprep.subr.mxu0 %v3629
    %5652 = vmatpush1.msra.mxu0 %v3628
    %5653 = vmatprep.subr.mxu0 %v3635
    %5654 = vmatpush1.msra.mxu0 %v3634
    %5655 = vmatprep.subr.mxu0 %v3641
    %5656 = vmatpush1.msra.mxu0 %v3640
    %5657 = vmatprep.subr.mxu0 %v3647
    %5658 = vmatpush1.msra.mxu0 %v3646
    %5659 = vmatprep.subr.mxu0 %v3653
    %5660 = vmatpush1.msra.mxu0 %v3652
    %5661 = vmatprep.subr.mxu0 %v3659
    %5662 = vmatpush1.msra.mxu0 %v3658
    %5663 = vmatprep.subr.mxu0 %v3665
    %5664 = vmatpush1.msra.mxu0 %v3664
    %5665 = vmatprep.subr.mxu0 %v3671
    %5666 = vmatpush1.msra.mxu0 %v3670
    %5667 = vmatprep.subr.mxu0 %v3677
    %5668 = vmatpush1.msra.mxu0 %v3676
    %5669 = vmatprep.subr.mxu0 %v3683
    %5670 = vmatpush1.msra.mxu0 %v3682
    %5671 = vmatprep.subr.mxu0 %v3689
    %5672 = vmatpush1.msra.mxu0 %v3688
    %5673 = vmatprep.mubr.f32.mxu0 %v5535
    %5674 = vmatmul.mubr.f32.gmra.mrb[0].mxu0 %v5514
    %v5675 = vpop.f32.mrb[0].mxu0
    %v5676 = vadd.f32 0.0, %v5675
    %v5677 = vpop.f32.mrb[0].mxu0
    %v5678 = vadd.f32 0.0, %v5677
    %5679 = vdwg.mxu0
    %5680 = vmatprep.subr.mxu0 %v3505
    %5681 = vmatpush1.msra.mxu0 %v3504
    %5682 = vmatprep.subr.mxu0 %v3511
    %5683 = vmatpush1.msra.mxu0 %v3510
    %5684 = vmatprep.subr.mxu0 %v3517
    %5685 = vmatpush1.msra.mxu0 %v3516
    %5686 = vmatprep.subr.mxu0 %v3523
    %5687 = vmatpush1.msra.mxu0 %v3522
    %5688 = vmatprep.subr.mxu0 %v3529
    %5689 = vmatpush1.msra.mxu0 %v3528
    %5690 = vmatprep.subr.mxu0 %v3535
    %5691 = vmatpush1.msra.mxu0 %v3534
    %5692 = vmatprep.subr.mxu0 %v3541
    %5693 = vmatpush1.msra.mxu0 %v3540
    %5694 = vmatprep.subr.mxu0 %v3547
    %5695 = vmatpush1.msra.mxu0 %v3546
    %5696 = vmatprep.subr.mxu0 %v3553
    %5697 = vmatpush1.msra.mxu0 %v3552
    %5698 = vmatprep.subr.mxu0 %v3559
    %5699 = vmatpush1.msra.mxu0 %v3558
    %5700 = vmatprep.subr.mxu0 %v3565
    %5701 = vmatpush1.msra.mxu0 %v3564
    %5702 = vmatprep.subr.mxu0 %v3571
    %5703 = vmatpush1.msra.mxu0 %v3570
    %5704 = vmatprep.subr.mxu0 %v3577
    %5705 = vmatpush1.msra.mxu0 %v3576
    %5706 = vmatprep.subr.mxu0 %v3583
    %5707 = vmatpush1.msra.mxu0 %v3582
    %5708 = vmatprep.subr.mxu0 %v3589
    %5709 = vmatpush1.msra.mxu0 %v3588
    %5710 = vmatprep.subr.mxu0 %v3595
    %5711 = vmatpush1.msra.mxu0 %v3594
    %5712 = vmatprep.subr.mxu0 %v3601
    %5713 = vmatpush1.msra.mxu0 %v3600
    %5714 = vmatprep.subr.mxu0 %v3607
    %5715 = vmatpush1.msra.mxu0 %v3606
    %5716 = vmatprep.subr.mxu0 %v3613
    %5717 = vmatpush1.msra.mxu0 %v3612
    %5718 = vmatprep.subr.mxu0 %v3619
    %5719 = vmatpush1.msra.mxu0 %v3618
    %5720 = vmatprep.subr.mxu0 %v3625
    %5721 = vmatpush1.msra.mxu0 %v3624
    %5722 = vmatprep.subr.mxu0 %v3631
    %5723 = vmatpush1.msra.mxu0 %v3630
    %5724 = vmatprep.subr.mxu0 %v3637
    %5725 = vmatpush1.msra.mxu0 %v3636
    %5726 = vmatprep.subr.mxu0 %v3643
    %5727 = vmatpush1.msra.mxu0 %v3642
    %5728 = vmatprep.subr.mxu0 %v3649
    %5729 = vmatpush1.msra.mxu0 %v3648
    %5730 = vmatprep.subr.mxu0 %v3655
    %5731 = vmatpush1.msra.mxu0 %v3654
    %5732 = vmatprep.subr.mxu0 %v3661
    %5733 = vmatpush1.msra.mxu0 %v3660
    %5734 = vmatprep.subr.mxu0 %v3667
    %5735 = vmatpush1.msra.mxu0 %v3666
    %5736 = vmatprep.subr.mxu0 %v3673
    %5737 = vmatpush1.msra.mxu0 %v3672
    %5738 = vmatprep.subr.mxu0 %v3679
    %5739 = vmatpush1.msra.mxu0 %v3678
    %5740 = vmatprep.subr.mxu0 %v3685
    %5741 = vmatpush1.msra.mxu0 %v3684
    %5742 = vmatprep.subr.mxu0 %v3691
    %5743 = vmatpush1.msra.mxu0 %v3690
    %5744 = vmatprep.mubr.f32.mxu0 %v5535
    %5745 = vmatmul.mubr.f32.gmra.mrb[0].mxu0 %v5514
    %v5746 = vpop.f32.mrb[0].mxu0
    %v5747 = vadd.f32 0.0, %v5746
    %v5748 = vpop.f32.mrb[0].mxu0
    %v5749 = vadd.f32 0.0, %v5748
    %5750 = vdwg.mxu0
    %v5751 = vld [vmem:[#allocation2 + $0x150] sm:$0xff]
    %v5752 = vld [vmem:[#allocation2 + $0x158] sm:$0xff]
    %v5753 = vld [vmem:[#allocation2 + $0x160] sm:$0xff]
    %v5754 = vld [vmem:[#allocation2 + $0x18] sm:$0xff]
    %v5755 = vld [vmem:[#allocation2 + $0x20] sm:$0xff]
    %v5756 = vld [vmem:[#allocation2 + $0x28] sm:$0xff]
    %v5757 = vadd.f32 %v5751, %v5605
    %v5758 = vxor.u32 %v5757, 2147483648
    %v5759 = vmul.f32 %v5758, 1.442695
    %v5760 = vpow.pop %v5759
    %v5761 = vadd.f32 %v5760, 1.0
    %v5762 = vrcp.pop %v5761
    %v5763 = vmul.f32 1.0, %v5762
    %v5764 = vadd.f32 %v5752, %v5607
    %v5765 = vxor.u32 %v5764, 2147483648
    %v5766 = vmul.f32 %v5765, 1.442695
    %v5767 = vpow.pop %v5766
    %v5768 = vadd.f32 %v5767, 1.0
    %v5769 = vrcp.pop %v5768
    %v5770 = vmul.f32 1.0, %v5769
    %v5771 = vadd.f32 %v5676, %v3692
    %v5772 = vmul.f32 %v5763, %v5771
    %v5773 = vadd.f32 %v5753, %v5772
    %v5774 = vtanh.pop %v5773
    %v5775 = vsub.f32 %v5514, %v5774
    %v5776 = vmul.f32 %v5770, %v5775
    %v5777 = vadd.f32 %v5774, %v5776
    %v5778 = vadd.f32 %v5754, %v5678
    %v5779 = vxor.u32 %v5778, 2147483648
    %v5780 = vmul.f32 %v5779, 1.442695
    %v5781 = vpow.pop %v5780
    %v5782 = vadd.f32 %v5781, 1.0
    %v5783 = vrcp.pop %v5782
    %v5784 = vmul.f32 1.0, %v5783
    %v5785 = vadd.f32 %v5755, %v5747
    %v5786 = vxor.u32 %v5785, 2147483648
    %v5787 = vmul.f32 %v5786, 1.442695
    %v5788 = vpow.pop %v5787
    %v5789 = vadd.f32 %v5788, 1.0
    %v5790 = vrcp.pop %v5789
    %v5791 = vmul.f32 1.0, %v5790
    %v5792 = vadd.f32 %v5749, %v3693
    %v5793 = vmul.f32 %v5784, %v5792
    %v5794 = vadd.f32 %v5756, %v5793
    %v5795 = vtanh.pop %v5794
    %v5796 = vsub.f32 %v5535, %v5795
    %v5797 = vmul.f32 %v5791, %v5796
    %v5798 = vadd.f32 %v5795, %v5797
    %5799 = vst [vmem:[#allocation4 + $0x70] sm:$0xff] %v5777
    %5800 = vst [vmem:[#allocation4 + $0x8] sm:$0xff] %v5798
    %s5801 = scalar_lea.vmem [#allocation15], 16
    %5802 = vst [vmem:[%s5801] sm:$0xff] %v5777
    %5803 = vst [vmem:[%s5801 + $0x8] sm:$0xff] %v5798
    %v5804 = vld [vmem:[#allocation4] sm:$0xff]
    %v5805 = vld [vmem:[#allocation4 + $0x8] sm:$0xff]
    %v5806 = vld [vmem:[#allocation4 + $0x10] sm:$0xff]
    %v5807 = vld [vmem:[#allocation4 + $0x18] sm:$0xff]
    %v5808 = vld [vmem:[#allocation4 + $0x20] sm:$0xff]
    %v5809 = vld [vmem:[#allocation4 + $0x28] sm:$0xff]
    %v5810 = vld [vmem:[#allocation4 + $0x30] sm:$0xff]
    %v5811 = vld [vmem:[#allocation4 + $0x38] sm:$0xff]
    %v5812 = vld [vmem:[#allocation4 + $0x40] sm:$0xff]
    %v5813 = vld [vmem:[#allocation4 + $0x48] sm:$0xff]
    %v5814 = vld [vmem:[#allocation4 + $0x50] sm:$0xff]
    %v5815 = vld [vmem:[#allocation4 + $0x58] sm:$0xff]
    %v5816 = vld [vmem:[#allocation4 + $0x60] sm:$0xff]
    %v5817 = vld [vmem:[#allocation4 + $0x68] sm:$0xff]
    %v5818 = vld [vmem:[#allocation4 + $0x70] sm:$0xff]
    %v5819 = vld [vmem:[#allocation4 + $0x78] sm:$0xff]
    %v5820 = vld [vmem:[#allocation13] sm:$0xff]
    %v5821 = vld [vmem:[#allocation13 + $0x8] sm:$0xff]
    %v5822 = vld [vmem:[#allocation13 + $0x10] sm:$0xff]
    %v5823 = vld [vmem:[#allocation13 + $0x18] sm:$0xff]
    %v5824 = vld [vmem:[#allocation13 + $0x20] sm:$0xff]
    %v5825 = vld [vmem:[#allocation13 + $0x28] sm:$0xff]
    %v5826 = vld [vmem:[#allocation13 + $0x30] sm:$0xff]
    %v5827 = vld [vmem:[#allocation13 + $0x38] sm:$0xff]
    %v5828 = vld [vmem:[#allocation13 + $0x40] sm:$0xff]
    %v5829 = vld [vmem:[#allocation13 + $0x48] sm:$0xff]
    %v5830 = vld [vmem:[#allocation13 + $0x50] sm:$0xff]
    %v5831 = vld [vmem:[#allocation13 + $0x58] sm:$0xff]
    %v5832 = vld [vmem:[#allocation13 + $0x60] sm:$0xff]
    %v5833 = vld [vmem:[#allocation13 + $0x68] sm:$0xff]
    %v5834 = vld [vmem:[#allocation13 + $0x70] sm:$0xff]
    %v5835 = vld [vmem:[#allocation13 + $0x78] sm:$0xff]
    %v5836 = vld [vmem:[#allocation13 + $0x80] sm:$0xff]
    %v5837 = vld [vmem:[#allocation13 + $0x88] sm:$0xff]
    %v5838 = vld [vmem:[#allocation13 + $0x90] sm:$0xff]
    %v5839 = vld [vmem:[#allocation13 + $0x98] sm:$0xff]
    %v5840 = vld [vmem:[#allocation13 + $0xa0] sm:$0xff]
    %v5841 = vld [vmem:[#allocation13 + $0xa8] sm:$0xff]
    %v5842 = vld [vmem:[#allocation13 + $0xb0] sm:$0xff]
    %v5843 = vld [vmem:[#allocation13 + $0xb8] sm:$0xff]
    %v5844 = vld [vmem:[#allocation13 + $0xc0] sm:$0xff]
    %v5845 = vld [vmem:[#allocation13 + $0xc8] sm:$0xff]
    %v5846 = vld [vmem:[#allocation13 + $0xd0] sm:$0xff]
    %v5847 = vld [vmem:[#allocation13 + $0xd8] sm:$0xff]
    %v5848 = vld [vmem:[#allocation13 + $0xe0] sm:$0xff]
    %v5849 = vld [vmem:[#allocation13 + $0xe8] sm:$0xff]
    %v5850 = vld [vmem:[#allocation13 + $0xf0] sm:$0xff]
    %v5851 = vld [vmem:[#allocation13 + $0xf8] sm:$0xff]
    %v5852 = vld [vmem:[%s11] sm:$0x1]
    %v5854 = vlaneseq
    %v5855 = vshrl.u32 %v5854, 7
    %v5856 = vsub.s32 0, %v5855
    %v5857 = vrot.slane %v5852, %v5856
    %5859 = vmatprep.subr.mxu0 0.0
    %5860 = vmatpush1.msra.mxu0 %v5820
    %5861 = vmatprep.subr.mxu0 0.0
    %5862 = vmatpush1.msra.mxu0 %v5821
    %5863 = vmatprep.subr.mxu0 0.0
    %5864 = vmatpush1.msra.mxu0 %v5822
    %5865 = vmatprep.subr.mxu0 0.0
    %5866 = vmatpush1.msra.mxu0 %v5823
    %5867 = vmatprep.subr.mxu0 0.0
    %5868 = vmatpush1.msra.mxu0 %v5824
    %5869 = vmatprep.subr.mxu0 0.0
    %5870 = vmatpush1.msra.mxu0 %v5825
    %5871 = vmatprep.subr.mxu0 0.0
    %5872 = vmatpush1.msra.mxu0 %v5826
    %5873 = vmatprep.subr.mxu0 0.0
    %5874 = vmatpush1.msra.mxu0 %v5827
    %5875 = vmatprep.subr.mxu0 0.0
    %5876 = vmatpush1.msra.mxu0 %v5828
    %5877 = vmatprep.subr.mxu0 0.0
    %5878 = vmatpush1.msra.mxu0 %v5829
    %5879 = vmatprep.subr.mxu0 0.0
    %5880 = vmatpush1.msra.mxu0 %v5830
    %5881 = vmatprep.subr.mxu0 0.0
    %5882 = vmatpush1.msra.mxu0 %v5831
    %5883 = vmatprep.subr.mxu0 0.0
    %5884 = vmatpush1.msra.mxu0 %v5832
    %5885 = vmatprep.subr.mxu0 0.0
    %5886 = vmatpush1.msra.mxu0 %v5833
    %5887 = vmatprep.subr.mxu0 0.0
    %5888 = vmatpush1.msra.mxu0 %v5834
    %5889 = vmatprep.subr.mxu0 0.0
    %5890 = vmatpush1.msra.mxu0 %v5835
    %5891 = vmatprep.subr.mxu0 0.0
    %5892 = vmatpush1.msra.mxu0 %v5836
    %5893 = vmatprep.subr.mxu0 0.0
    %5894 = vmatpush1.msra.mxu0 %v5837
    %5895 = vmatprep.subr.mxu0 0.0
    %5896 = vmatpush1.msra.mxu0 %v5838
    %5897 = vmatprep.subr.mxu0 0.0
    %5898 = vmatpush1.msra.mxu0 %v5839
    %5899 = vmatprep.subr.mxu0 0.0
    %5900 = vmatpush1.msra.mxu0 %v5840
    %5901 = vmatprep.subr.mxu0 0.0
    %5902 = vmatpush1.msra.mxu0 %v5841
    %5903 = vmatprep.subr.mxu0 0.0
    %5904 = vmatpush1.msra.mxu0 %v5842
    %5905 = vmatprep.subr.mxu0 0.0
    %5906 = vmatpush1.msra.mxu0 %v5843
    %5907 = vmatprep.subr.mxu0 0.0
    %5908 = vmatpush1.msra.mxu0 %v5844
    %5909 = vmatprep.subr.mxu0 0.0
    %5910 = vmatpush1.msra.mxu0 %v5845
    %5911 = vmatprep.subr.mxu0 0.0
    %5912 = vmatpush1.msra.mxu0 %v5846
    %5913 = vmatprep.subr.mxu0 0.0
    %5914 = vmatpush1.msra.mxu0 %v5847
    %5915 = vmatprep.subr.mxu0 0.0
    %5916 = vmatpush1.msra.mxu0 %v5848
    %5917 = vmatprep.subr.mxu0 0.0
    %5918 = vmatpush1.msra.mxu0 %v5849
    %5919 = vmatprep.subr.mxu0 0.0
    %5920 = vmatpush1.msra.mxu0 %v5850
    %5921 = vmatprep.subr.mxu0 0.0
    %5922 = vmatpush1.msra.mxu0 %v5851
    %5923 = vmatprep.mubr.f32.mxu0 %v5805
    %5924 = vmatmul.mubr.f32.gmra.mrb[0].mxu0 %v5804
    %v5925 = vpop.f32.mrb[0].mxu0
    %v5926 = vadd.f32 %v5857, %v5925
    %v5927 = vpop.f32.mrb[0].mxu0
    %5928 = vmatprep.mubr.f32.mxu0 %v5807
    %5929 = vmatmul.mubr.f32.gmra.mrb[0].mxu0 %v5806
    %v5930 = vpop.f32.mrb[0].mxu0
    %v5931 = vadd.f32 %v5857, %v5930
    %v5932 = vpop.f32.mrb[0].mxu0
    %5933 = vmatprep.mubr.f32.mxu0 %v5809
    %5934 = vmatmul.mubr.f32.gmra.mrb[0].mxu0 %v5808
    %v5935 = vpop.f32.mrb[0].mxu0
    %v5936 = vadd.f32 %v5857, %v5935
    %v5937 = vpop.f32.mrb[0].mxu0
    %5938 = vmatprep.mubr.f32.mxu0 %v5811
    %5939 = vmatmul.mubr.f32.gmra.mrb[0].mxu0 %v5810
    %v5940 = vpop.f32.mrb[0].mxu0
    %v5941 = vadd.f32 %v5857, %v5940
    %v5942 = vpop.f32.mrb[0].mxu0
    %5943 = vmatprep.mubr.f32.mxu0 %v5813
    %5944 = vmatmul.mubr.f32.gmra.mrb[0].mxu0 %v5812
    %v5945 = vpop.f32.mrb[0].mxu0
    %v5946 = vadd.f32 %v5857, %v5945
    %v5947 = vpop.f32.mrb[0].mxu0
    %5948 = vmatprep.mubr.f32.mxu0 %v5815
    %5949 = vmatmul.mubr.f32.gmra.mrb[0].mxu0 %v5814
    %v5950 = vpop.f32.mrb[0].mxu0
    %v5951 = vadd.f32 %v5857, %v5950
    %v5952 = vpop.f32.mrb[0].mxu0
    %5953 = vmatprep.mubr.f32.mxu0 %v5817
    %5954 = vmatmul.mubr.f32.gmra.mrb[0].mxu0 %v5816
    %v5955 = vpop.f32.mrb[0].mxu0
    %v5956 = vadd.f32 %v5857, %v5955
    %v5957 = vpop.f32.mrb[0].mxu0
    %5958 = vmatprep.mubr.f32.mxu0 %v5819
    %5959 = vmatmul.mubr.f32.gmra.mrb[0].mxu0 %v5818
    %v5960 = vpop.f32.mrb[0].mxu0
    %v5961 = vadd.f32 %v5857, %v5960
    %v5962 = vpop.f32.mrb[0].mxu0
    %5963 = vdwg.mxu0
    %5964 = vst [vmem:[#allocation14] sm:$0xff] %v5926
    %5965 = vst [vmem:[#allocation14 + $0x8] sm:$0xff] %v5931
    %5966 = vst [vmem:[#allocation14 + $0x10] sm:$0xff] %v5936
    %5967 = vst [vmem:[#allocation14 + $0x18] sm:$0xff] %v5941
    %5968 = vst [vmem:[#allocation14 + $0x20] sm:$0xff] %v5946
    %5969 = vst [vmem:[#allocation14 + $0x28] sm:$0xff] %v5951
    %5970 = vst [vmem:[#allocation14 + $0x30] sm:$0xff] %v5956
    %5971 = vst [vmem:[#allocation14 + $0x38] sm:$0xff] %v5961
    // Predicated region
    $region70: #{tpu_custom_call.1} parent=1 // pred_check
      _
    $region71: #{tpu_custom_call.1} parent=1 // pred_check_branch
      %5973 = sbr.rel (0) target = $region73
    $region72: #{tpu_custom_call.1} parent=1 // pred_region
      %s5975 = ssub.s32 1024, 1024
      %5976 = vsyncadd [#allocation7], %s5975
      %s5977 = sshll.u32 [#allocation14], 4
      %s5978 = int_to_ptr.vmem [resolvable:$true] %s5977
      %5983 = dma.vmem_to_hbm [thread:$0]  %s5978, 1024, %s12, [#allocation7], 128, 128, 8
    $region73: #{tpu_custom_call.1} parent=1 // pred_fallthru
      _
    // Predicated region
    $region74: #{tpu_custom_call.1} parent=1 // pred_check
      _
    $region75: #{tpu_custom_call.1} parent=1 // pred_check_branch
      %5985 = sbr.rel (0) target = $region77
    $region76: #{tpu_custom_call.1} parent=1 // pred_region
      %s5987 = ssub.s32 512, 512
      %5988 = vsyncadd [#allocation16], %s5987
      %s5989 = sshll.u32 [#allocation15], 4
      %s5990 = int_to_ptr.vmem [resolvable:$true] %s5989
      %5995 = dma.vmem_to_hbm [thread:$0]  %s5990, 512, %s13, [#allocation16], 256, 256, 16
    $region77: #{tpu_custom_call.1} parent=1 // pred_fallthru
      _
    // Predicated region
    $region78: #{tpu_custom_call.1} parent=1 // pred_check
      _
    $region79: #{tpu_custom_call.1} parent=1 // pred_check_branch
      %5997 = sbr.rel (0) target = $region81
    $region80: #{tpu_custom_call.1} parent=1 // pred_region
      %5998 = dma.done [#allocation7], 1024
    $region81: #{tpu_custom_call.1} parent=1 // pred_fallthru
      _
    // Predicated region
    $region82: #{tpu_custom_call.1} parent=1 // pred_check
      _
    $region83: #{tpu_custom_call.1} parent=1 // pred_check_branch
      %6000 = sbr.rel (0) target = $region85
    $region84: #{tpu_custom_call.1} parent=1 // pred_region
      %6001 = dma.done [#allocation16], 512
    $region85: #{tpu_custom_call.1} parent=1 // pred_fallthru
      _
    %6002 = vsyncpa [#allocation6], 1
    %6003 = vsyncpa [#allocation9], 1
    %6004 = vsyncpa [#allocation12], 1
    %6005 = vsyncpa [#allocation7], 1
    %6006 = vsyncpa [#allocation16], 1

</llo_original>
